<compile_context>
chip_gen: v6e
topology: v6e:2x2x1
jax: 0.10.0
libtpu: 0.0.40
codegen_flags: <defaults>
</compile_context>

<pallas_src>
import functools

import jax
import jax.numpy as jnp
from jax.experimental import pallas as pl
from jax.experimental.pallas import tpu as pltpu


def _upsample_kernel(x_ref, o_ref, *, factor: int):
    """Zero-insertion upsample of one (Cb, Wb, H) block -> (Cb, Wb*f, H*f)."""
    f = factor
    x = x_ref[...]                                  # (Cb, Wb, H)
    cb, wb, h = x.shape
    ho = h * f

    # H-axis (lane) zero insertion:
    #   (Cb, Wb, H) -> (Cb, Wb, H, f) -> (Cb, Wb, H*f); x lands at columns h*f.
    xh = jnp.concatenate(
        [x[..., None], jnp.zeros((cb, wb, h, f - 1), x.dtype)], axis=3
    ).reshape(cb, wb, ho)

    # W-axis (sublane) zero insertion:
    #   (Cb, Wb, Ho) -> (Cb, Wb, f, Ho) -> (Cb, Wb*f, Ho); rows land at w*f.
    y = jnp.concatenate(
        [xh[:, :, None, :], jnp.zeros((cb, wb, f - 1, ho), x.dtype)], axis=2
    ).reshape(cb, wb * f, ho)

    # Single dense full-block store (no masks, no partial writes).
    o_ref[...] = y


def _largest_divisor_leq(n: int, cap: int, multiple_of: int = 1):
    """Largest d with n % d == 0, d <= cap, d % multiple_of == 0 (else None)."""
    best = None
    for d in range(1, n + 1):
        if d > cap:
            break
        if n % d == 0 and d % multiple_of == 0:
            best = d
    return best


def p_upsample(x: jax.Array, factor: int) -> jax.Array:
    """Pallas implementation of PUpsample.forward (NCHW zero-insertion)."""
    N, C, W, H = x.shape
    f = int(factor)
    if f == 1:
        # ::1 strided scatter of x into zeros is the identity.
        return x

    Wo, Ho = W * f, H * f
    itemsize = jnp.dtype(x.dtype).itemsize

    NC = N * C
    x3 = x.reshape(NC, W, H)  # free (leading-dim) reshape

    # ---- tile-size selection: target ~2 MiB output tiles ----------------
    TARGET_OUT_TILE = 2 * 1024 * 1024
    per_ch_out = Wo * Ho * itemsize
    if per_ch_out <= TARGET_OUT_TILE:
        wb = W
        cb = _largest_divisor_leq(NC, max(1, TARGET_OUT_TILE // per_ch_out)) or 1
    else:
        # One channel slab is already big: tile W (8-row aligned for sublanes).
        cb = 1
        cap_rows = max(1, TARGET_OUT_TILE // (f * Ho * itemsize))
        wb = _largest_divisor_leq(W, cap_rows, multiple_of=8) or W

    # Keep at least 2 grid steps when possible (megacore / v7x dual-TC).
    if (NC // cb) * (W // wb) < 2 and NC >= 2:
        cb = _largest_divisor_leq(NC, NC // 2) or 1

    grid = (NC // cb, W // wb)
    kernel = functools.partial(_upsample_kernel, factor=f)

    out3 = pl.pallas_call(
        kernel,
        out_shape=jax.ShapeDtypeStruct((NC, Wo, Ho), x.dtype),
        grid_spec=pltpu.PrefetchScalarGridSpec(
            num_scalar_prefetch=0,
            grid=grid,
            in_specs=[pl.BlockSpec((cb, wb, H), lambda i, j: (i, j, 0))],
            out_specs=pl.BlockSpec((cb, wb * f, Ho), lambda i, j: (i, j, 0)),
        ),
        compiler_params=pltpu.CompilerParams(
            dimension_semantics=("parallel", "parallel"),
        ),
        cost_estimate=pl.CostEstimate(
            flops=0,
            transcendentals=0,
            bytes_accessed=int(x.size * itemsize * (1 + f * f)),
        ),
    )(x3)

    return out3.reshape(N, C, Wo, Ho)  # free (leading/split-dim) reshape


def p_upsample_ref(x: jax.Array, factor: int) -> jax.Array:
    """Pure-JAX reference matching the PyTorch module."""
    N, C, W, H = x.shape
    out = jnp.zeros((N, C, W * factor, H * factor), dtype=x.dtype)
    return out.at[:, :, ::factor, ::factor].set(x)


if __name__ == "__main__":
    key = jax.random.PRNGKey(0)
    k0, k1 = jax.random.split(key)

    # Primary check: module-consistent small NCHW input, factor=2.
    x = jax.random.normal(k0, (2, 4, 16, 16), dtype=jnp.float32)
    out = jax.block_until_ready(p_upsample(x, 2))
    ref = p_upsample_ref(x, 2)
    assert out.shape == (2, 4, 32, 32), out.shape
    assert out.dtype == jnp.float32, out.dtype
    assert jnp.array_equal(out, ref), "Pallas output mismatch vs reference (factor=2)"

    # Secondary check: different factor / shape to exercise generality.
    x2 = jax.random.normal(k1, (1, 2, 8, 8), dtype=jnp.float32)
    out2 = jax.block_until_ready(p_upsample(x2, 4))
    assert jnp.array_equal(out2, p_upsample_ref(x2, 4)), "mismatch (factor=4)"

    print("KERNEL_OK")
</pallas_src>

<mosaic_0001>
module attributes {stable_mosaic.version = 11 : i64} {
  func.func @_upsample_kernel(%arg0: i32, %arg1: i32, %arg2: memref<4x16x16xf32, #tpu.memory_space<vmem>>, %arg3: memref<4x32x32xf32, #tpu.memory_space<vmem>>) attributes {dimension_semantics = [#tpu.dimension_semantics<parallel>, #tpu.dimension_semantics<parallel>], iteration_bounds = array<i64: 2, 1>, scalar_prefetch = 0 : i64, scratch_operands = 0 : i64, tpu.core_type = #tpu.core_type<tc>, window_params = [{transform_indices = @transform_0, window_bounds = array<i64: 4, 16, 16>}, {transform_indices = @transform_1, window_bounds = array<i64: 4, 32, 32>}]} {
    %c0 = arith.constant 0 : index
    %c0_0 = arith.constant 0 : index
    %c0_1 = arith.constant 0 : index
    %0 = vector.load %arg2[%c0, %c0_0, %c0_1] : memref<4x16x16xf32, #tpu.memory_space<vmem>>, vector<4x16x16xf32>
    %1 = vector.shape_cast %0 : vector<4x16x16xf32> to vector<4x16x16x1xf32>
    %cst = arith.constant 0.000000e+00 : f32
    %2 = vector.broadcast %cst : f32 to vector<4x16x16x1xf32>
    %3 = tpu.concatenate %1, %2 in 3 : vector<4x16x16x1xf32>, vector<4x16x16x1xf32> -> vector<4x16x16x2xf32>
    %4 = vector.shape_cast %3 : vector<4x16x16x2xf32> to vector<4x16x32xf32>
    %5 = vector.shape_cast %4 : vector<4x16x32xf32> to vector<4x16x1x32xf32>
    %cst_2 = arith.constant 0.000000e+00 : f32
    %6 = vector.broadcast %cst_2 : f32 to vector<4x16x1x32xf32>
    %7 = tpu.concatenate %5, %6 in 2 : vector<4x16x1x32xf32>, vector<4x16x1x32xf32> -> vector<4x16x2x32xf32>
    %8 = vector.shape_cast %7 : vector<4x16x2x32xf32> to vector<4x32x32xf32>
    %c0_3 = arith.constant 0 : index
    %c0_4 = arith.constant 0 : index
    %c0_5 = arith.constant 0 : index
    %9 = vector.load %arg3[%c0_3, %c0_4, %c0_5] : memref<4x32x32xf32, #tpu.memory_space<vmem>>, vector<4x32x32xf32>
    tpu.vector_store %arg3[%c0_3, %c0_4, %c0_5], %8 {strides = array<i32>} : memref<4x32x32xf32, #tpu.memory_space<vmem>>, vector<4x32x32xf32>,
    return
  }
  func.func @transform_0(%arg0: i32, %arg1: i32) -> (i32, i32, i32) {
    %c0_i32 = arith.constant 0 : i32
    %c0_i32_0 = arith.constant 0 : i32
    return %arg0, %arg1, %c0_i32 : i32, i32, i32
  }
  func.func @transform_1(%arg0: i32, %arg1: i32) -> (i32, i32, i32) {
    %c0_i32 = arith.constant 0 : i32
    %c0_i32_0 = arith.constant 0 : i32
    return %arg0, %arg1, %c0_i32 : i32, i32, i32
  }
}

</mosaic_0001>

<llo_original>
// kernel: tpu_custom_call.1
$region0: #{tpu_custom_call.1}
  #allocation0 [shape = 'u32[]', space=smem, size = 0x4, offset = 0x4, fixed_abs, tag = 'smem constant byte address 0x4 - core index']
  #allocation1 [shape = 'u32[144,128]{1,0:T(1,128)}', space=vmem, size = 0x12000, scoped, tag = 'internal scratch']
  %s0 = inlined_call_operand.hbm [shape: f32[8,16,16], index: 0, kind: input, shape index: {}]
  %s1 = inlined_call_operand.hbm [shape: f32[8,32,32], index: 1, kind: output, shape index: {}]
  %s2 = sld [smem:[#allocation0]]
  $region41: #{tpu_custom_call.1} parent=0
    _
  %s4 = ssub.s32 1, %s2
  %s5 = scalar_select 0, %s4, %s2
  $region1: #{tpu_custom_call.1} parent=0
    #allocation2 [shape = 'u8[65536]{0}', space=vmem, size = 0x10000, scoped, tag = 'input window, operand 0']
    #allocation3 [shape = 's32[2]{0}', space=sflag, size = 0x8, scoped, tag = 'scoped memory for tpu_custom_call.1']
    #allocation4 [shape = 's32[2]{0}', space=sflag, size = 0x8, scoped, tag = 'scoped memory for tpu_custom_call.1']
    #allocation5 [shape = 'u8[131072]{0}', space=vmem, size = 0x20000, scoped, tag = 'output window, operand 0']
    %6 = vsyncpa [#allocation3], 0
    %s7 = scalar_lea.sflag [#allocation3], 1
    %8 = vsyncpa %s7, 0
    %9 = vsyncpa [#allocation4], 0
    %s10 = scalar_lea.sflag [#allocation4], 1
    %11 = vsyncpa %s10, 0
    loop: start=0, step=1, limit=4
    $region2: #{tpu_custom_call.1} parent=1 // loop_pre_header
      _
    $region3: #{tpu_custom_call.1} parent=1 // loop_header
      %s13 = sphi 0, %s17
      %p14 = scmp.ge.s32.totalorder %s13, 4
      %s20 = sphi 0, %s32
      %s21 = sphi 0, %s28
      %s22 = sphi 0, %s20
      %s23 = sphi 0, %s21
      %s24 = sphi 0, %s22
      %s25 = sphi 0, %s23
      %s37 = sphi 0, %s39
      %s40 = sphi 0, %s37
      %s41 = sphi 0, %s40
      %s57 = sphi 0, %s41
      %s65 = sphi 0, %s67
      %s68 = sphi 0, %s65
      %s69 = sphi 0, %s68
      %s85 = sphi 0, %s69
    $region4: #{tpu_custom_call.1} parent=1 // loop_header_branch
      %16 = sbr.rel (%p14) target = $region8
    $region5: #{tpu_custom_call.1} parent=1 // loop_body
      %s18 = ssub.s32 %s13, 1
      %s19 = ssub.s32 %s13, 2
      %s26 = sadd.s32 1, %s21
      %p27 = scmp.ge.s32.totalorder %s26, 1
      %s28 = scalar_select %p27, 0, %s26
      %s29 = sadd.s32 1, %s20
      %s30 = scalar_select %p27, %s29, %s20
      %p31 = scmp.ge.s32.totalorder %s30, 2
      %s32 = scalar_select %p31, 0, %s30
      %s33 = ssub.s32 %s20, %s32
      %s34 = ssub.s32 %s21, %s28
      %s35 = sor.u32 %s33, %s34
      %p36 = scmp.eq.s32.totalorder %s35, 0
      %s38 = sadd.s32 %s37, 1
      %s39 = scalar_select %p36, %s37, %s38
      %p42 = pneg %p36
      %p43 = scmp.eq.s32.totalorder %s13, 1
      %p44 = por %p42, %p43
      %p45 = scmp.ne.s32.totalorder %s37, %s40
      %p46 = scmp.eq.s32.totalorder %s13, 0
      %p47 = por %p45, %p46
      %p48 = scmp.ne.s32.totalorder %s37, %s40
      %p49 = scmp.eq.s32.totalorder %s18, 1
      %p50 = por %p48, %p49
      %p51 = scmp.ne.s32.totalorder %s40, %s41
      %p52 = scmp.eq.s32.totalorder %s18, 0
      %p53 = por %p51, %p52
      %p54 = scmp.ne.s32.totalorder %s40, %s41
      %p55 = scmp.eq.s32.totalorder %s19, 1
      %p56 = por %p54, %p55
      %p58 = scmp.ne.s32.totalorder %s41, %s57
      %p59 = scmp.eq.s32.totalorder %s19, 0
      %p60 = por %p58, %p59
      %s61 = ssub.s32 %s20, %s32
      %s62 = ssub.s32 %s21, %s28
      %s63 = sor.u32 %s61, %s62
      %p64 = scmp.eq.s32.totalorder %s63, 0
      %s66 = sadd.s32 %s65, 1
      %s67 = scalar_select %p64, %s65, %s66
      %p70 = pneg %p64
      %p71 = scmp.eq.s32.totalorder %s13, 1
      %p72 = por %p70, %p71
      %p73 = scmp.ne.s32.totalorder %s65, %s68
      %p74 = scmp.eq.s32.totalorder %s13, 0
      %p75 = por %p73, %p74
      %p76 = scmp.ne.s32.totalorder %s65, %s68
      %p77 = scmp.eq.s32.totalorder %s18, 1
      %p78 = por %p76, %p77
      %p79 = scmp.ne.s32.totalorder %s68, %s69
      %p80 = scmp.eq.s32.totalorder %s18, 0
      %p81 = por %p79, %p80
      %p82 = scmp.ne.s32.totalorder %s68, %s69
      %p83 = scmp.eq.s32.totalorder %s19, 1
      %p84 = por %p82, %p83
      %p86 = scmp.ne.s32.totalorder %s69, %s85
      %p87 = scmp.eq.s32.totalorder %s19, 0
      %p88 = por %p86, %p87
      %p89 = scmp.le.s32.totalorder 1, %s13
      %p90 = scmp.lt.s32.totalorder %s13, 3
      %p91 = pnand %p89, %p90
      %p92 = pneg %p91
      // Predicated region
      $region9: #{tpu_custom_call.1} parent=5 // pred_check
        _
      $region10: #{tpu_custom_call.1} parent=5 // pred_check_branch
        %94 = sbr.rel (%p91) target = $region12
      $region11: #{tpu_custom_call.1} parent=5 // pred_region
        %s95 = ssub.s32 %s13, 1
      $region12: #{tpu_custom_call.1} parent=5 // pred_fallthru
        _
      %p96 = scmp.lt.s32.totalorder %s13, 2
      // Predicated region
      $region13: #{tpu_custom_call.1} parent=5 // pred_check
        %p97 = pneg %p96
      $region14: #{tpu_custom_call.1} parent=5 // pred_check_branch
        %99 = sbr.rel (%p97) target = $region16
      $region15: #{tpu_custom_call.1} parent=5 // pred_region
        // Predicated region
        $region17: #{tpu_custom_call.1} parent=15 // pred_check
          %p100 = pneg %p47
        $region18: #{tpu_custom_call.1} parent=15 // pred_check_branch
          %102 = sbr.rel (%p100) target = $region20
        $region19: #{tpu_custom_call.1} parent=15 // pred_region
          %s103 = sand.u32 %s37, 1
          %s104 = scalar_lea.sflag [#allocation3], %s103
          %s105 = sand.u32 %s37, 1
          %s106 = smul.addr %s105, 64
          %s107 = scalar_lea.vmem [#allocation2], %s106
          %s108 = smul.u32 4, %s20
          %s109 = smul.u32 2, %s21
          %s111 = ssub.s32 1024, 1024
          %112 = vsyncadd %s104, %s111
          %s113 = smul.addr %s108, 2
          %s114 = sadd.s32 %s109, %s113
          %s115 = smul.addr %s114, 128
          %s116 = scalar_lea.hbm %s0, %s115
          %s117 = sshll.u32 %s107, 4
          %s118 = int_to_ptr.vmem [resolvable:$true] %s117
          %123 = dma.hbm_to_vmem [thread:$0]  %s116, 1024, %s118, %s104, 128, 128, 8
        $region20: #{tpu_custom_call.1} parent=15 // pred_fallthru
          _
      $region16: #{tpu_custom_call.1} parent=5 // pred_fallthru
        _
      %p124 = scmp.le.s32.totalorder 1, %s13
      %p125 = scmp.lt.s32.totalorder %s13, 3
      %p126 = pnand %p124, %p125
      %p127 = pneg %p126
      // Predicated region
      $region21: #{tpu_custom_call.1} parent=5 // pred_check
        _
      $region22: #{tpu_custom_call.1} parent=5 // pred_check_branch
        %129 = sbr.rel (%p126) target = $region24
      $region23: #{tpu_custom_call.1} parent=5 // pred_region
        %s130 = ssub.s32 %s13, 1
        %s131 = sand.u32 %s40, 1
        %s132 = scalar_lea.sflag [#allocation3], %s131
        %s133 = sand.u32 %s40, 1
        %s134 = smul.addr %s133, 64
        %s135 = scalar_lea.vmem [#allocation2], %s134
        // Predicated region
        $region25: #{tpu_custom_call.1} parent=23 // pred_check
          %p136 = pneg %p53
        $region26: #{tpu_custom_call.1} parent=23 // pred_check_branch
          %138 = sbr.rel (%p136) target = $region28
        $region27: #{tpu_custom_call.1} parent=23 // pred_region
          %139 = dma.done %s132, 1024
        $region28: #{tpu_custom_call.1} parent=23 // pred_fallthru
          _
        %s140 = sand.u32 %s40, 1
        %s141 = scalar_lea.sflag [#allocation3], %s140
        %s142 = sand.u32 %s40, 1
        %s143 = smul.addr %s142, 64
        %s144 = scalar_lea.vmem [#allocation2], %s143
        %p145 = pneg %p53
        %p146 = pneg %p50
        %p147 = pneg %p81
        %p148 = pneg %p78
        %s149 = sand.u32 %s68, 1
        %s150 = scalar_lea.sflag [#allocation4], %s149
        %s151 = sand.u32 %s68, 1
        %s152 = smul.addr %s151, 128
        %s153 = scalar_lea.vmem [#allocation5], %s152
        %s154 = smul.u32 4, %s22
        %s155 = smul.u32 2, %s23
        %s156 = smul.u32 4, %s22
        %s157 = smul.u32 4, %s23
        %v158 = vld [vmem:[%s135] sm:$0xff]
        %v159 = vld [vmem:[%s135 + $0x8] sm:$0xff]
        %v160 = vld [vmem:[%s135 + $0x10] sm:$0xff]
        %v161 = vld [vmem:[%s135 + $0x18] sm:$0xff]
        %v162 = vld [vmem:[%s135 + $0x20] sm:$0xff]
        %v163 = vld [vmem:[%s135 + $0x28] sm:$0xff]
        %v164 = vld [vmem:[%s135 + $0x30] sm:$0xff]
        %v165 = vld [vmem:[%s135 + $0x38] sm:$0xff]
        %v166 = vlaneseq
        %v167 = vshrl.u32 %v166, 7
        %v168 = vsub.s32 0, %v167
        %v169 = vrot.slane %v158, %v168
        %171 = vbcast.lane.b32.xlu0 %v169, 256
        %v172 = vpop.permute.xlu0 %171
        %s174 = sor.u32 256, 8
        %175 = vbcast.lane.b32.xlu0 %v169, %s174
        %v176 = vpop.permute.xlu0 %175
        %v177 = vlaneseq
        %v178 = vshrl.u32 %v177, 7
        %v179 = vsub.s32 1, %v178
        %v180 = vrot.slane %v158, %v179
        %182 = vbcast.lane.b32.xlu0 %v180, 256
        %v183 = vpop.permute.xlu0 %182
        %s185 = sor.u32 256, 8
        %186 = vbcast.lane.b32.xlu0 %v180, %s185
        %v187 = vpop.permute.xlu0 %186
        %v188 = vlaneseq
        %v189 = vshrl.u32 %v188, 7
        %v190 = vsub.s32 2, %v189
        %v191 = vrot.slane %v158, %v190
        %193 = vbcast.lane.b32.xlu0 %v191, 256
        %v194 = vpop.permute.xlu0 %193
        %s196 = sor.u32 256, 8
        %197 = vbcast.lane.b32.xlu0 %v191, %s196
        %v198 = vpop.permute.xlu0 %197
        %v199 = vlaneseq
        %v200 = vshrl.u32 %v199, 7
        %v201 = vsub.s32 3, %v200
        %v202 = vrot.slane %v158, %v201
        %204 = vbcast.lane.b32.xlu0 %v202, 256
        %v205 = vpop.permute.xlu0 %204
        %s207 = sor.u32 256, 8
        %208 = vbcast.lane.b32.xlu0 %v202, %s207
        %v209 = vpop.permute.xlu0 %208
        %v210 = vlaneseq
        %v211 = vshrl.u32 %v210, 7
        %v212 = vsub.s32 4, %v211
        %v213 = vrot.slane %v158, %v212
        %215 = vbcast.lane.b32.xlu0 %v213, 256
        %v216 = vpop.permute.xlu0 %215
        %s218 = sor.u32 256, 8
        %219 = vbcast.lane.b32.xlu0 %v213, %s218
        %v220 = vpop.permute.xlu0 %219
        %v221 = vlaneseq
        %v222 = vshrl.u32 %v221, 7
        %v223 = vsub.s32 5, %v222
        %v224 = vrot.slane %v158, %v223
        %226 = vbcast.lane.b32.xlu0 %v224, 256
        %v227 = vpop.permute.xlu0 %226
        %s229 = sor.u32 256, 8
        %230 = vbcast.lane.b32.xlu0 %v224, %s229
        %v231 = vpop.permute.xlu0 %230
        %v232 = vlaneseq
        %v233 = vshrl.u32 %v232, 7
        %v234 = vsub.s32 6, %v233
        %v235 = vrot.slane %v158, %v234
        %237 = vbcast.lane.b32.xlu0 %v235, 256
        %v238 = vpop.permute.xlu0 %237
        %s240 = sor.u32 256, 8
        %241 = vbcast.lane.b32.xlu0 %v235, %s240
        %v242 = vpop.permute.xlu0 %241
        %v243 = vlaneseq
        %v244 = vshrl.u32 %v243, 7
        %v245 = vsub.s32 7, %v244
        %v246 = vrot.slane %v158, %v245
        %248 = vbcast.lane.b32.xlu0 %v246, 256
        %v249 = vpop.permute.xlu0 %248
        %s251 = sor.u32 256, 8
        %252 = vbcast.lane.b32.xlu0 %v246, %s251
        %v253 = vpop.permute.xlu0 %252
        %v254 = vlaneseq
        %v255 = vshrl.u32 %v254, 7
        %v256 = vsub.s32 0, %v255
        %v257 = vrot.slane %v159, %v256
        %259 = vbcast.lane.b32.xlu0 %v257, 256
        %v260 = vpop.permute.xlu0 %259
        %s262 = sor.u32 256, 8
        %263 = vbcast.lane.b32.xlu0 %v257, %s262
        %v264 = vpop.permute.xlu0 %263
        %v265 = vlaneseq
        %v266 = vshrl.u32 %v265, 7
        %v267 = vsub.s32 1, %v266
        %v268 = vrot.slane %v159, %v267
        %270 = vbcast.lane.b32.xlu0 %v268, 256
        %v271 = vpop.permute.xlu0 %270
        %s273 = sor.u32 256, 8
        %274 = vbcast.lane.b32.xlu0 %v268, %s273
        %v275 = vpop.permute.xlu0 %274
        %v276 = vlaneseq
        %v277 = vshrl.u32 %v276, 7
        %v278 = vsub.s32 2, %v277
        %v279 = vrot.slane %v159, %v278
        %281 = vbcast.lane.b32.xlu0 %v279, 256
        %v282 = vpop.permute.xlu0 %281
        %s284 = sor.u32 256, 8
        %285 = vbcast.lane.b32.xlu0 %v279, %s284
        %v286 = vpop.permute.xlu0 %285
        %v287 = vlaneseq
        %v288 = vshrl.u32 %v287, 7
        %v289 = vsub.s32 3, %v288
        %v290 = vrot.slane %v159, %v289
        %292 = vbcast.lane.b32.xlu0 %v290, 256
        %v293 = vpop.permute.xlu0 %292
        %s295 = sor.u32 256, 8
        %296 = vbcast.lane.b32.xlu0 %v290, %s295
        %v297 = vpop.permute.xlu0 %296
        %v298 = vlaneseq
        %v299 = vshrl.u32 %v298, 7
        %v300 = vsub.s32 4, %v299
        %v301 = vrot.slane %v159, %v300
        %303 = vbcast.lane.b32.xlu0 %v301, 256
        %v304 = vpop.permute.xlu0 %303
        %s306 = sor.u32 256, 8
        %307 = vbcast.lane.b32.xlu0 %v301, %s306
        %v308 = vpop.permute.xlu0 %307
        %v309 = vlaneseq
        %v310 = vshrl.u32 %v309, 7
        %v311 = vsub.s32 5, %v310
        %v312 = vrot.slane %v159, %v311
        %314 = vbcast.lane.b32.xlu0 %v312, 256
        %v315 = vpop.permute.xlu0 %314
        %s317 = sor.u32 256, 8
        %318 = vbcast.lane.b32.xlu0 %v312, %s317
        %v319 = vpop.permute.xlu0 %318
        %v320 = vlaneseq
        %v321 = vshrl.u32 %v320, 7
        %v322 = vsub.s32 6, %v321
        %v323 = vrot.slane %v159, %v322
        %325 = vbcast.lane.b32.xlu0 %v323, 256
        %v326 = vpop.permute.xlu0 %325
        %s328 = sor.u32 256, 8
        %329 = vbcast.lane.b32.xlu0 %v323, %s328
        %v330 = vpop.permute.xlu0 %329
        %v331 = vlaneseq
        %v332 = vshrl.u32 %v331, 7
        %v333 = vsub.s32 7, %v332
        %v334 = vrot.slane %v159, %v333
        %336 = vbcast.lane.b32.xlu0 %v334, 256
        %v337 = vpop.permute.xlu0 %336
        %s339 = sor.u32 256, 8
        %340 = vbcast.lane.b32.xlu0 %v334, %s339
        %v341 = vpop.permute.xlu0 %340
        %v342 = vlaneseq
        %v343 = vshrl.u32 %v342, 7
        %v344 = vsub.s32 0, %v343
        %v345 = vrot.slane %v160, %v344
        %347 = vbcast.lane.b32.xlu0 %v345, 256
        %v348 = vpop.permute.xlu0 %347
        %s350 = sor.u32 256, 8
        %351 = vbcast.lane.b32.xlu0 %v345, %s350
        %v352 = vpop.permute.xlu0 %351
        %v353 = vlaneseq
        %v354 = vshrl.u32 %v353, 7
        %v355 = vsub.s32 1, %v354
        %v356 = vrot.slane %v160, %v355
        %358 = vbcast.lane.b32.xlu0 %v356, 256
        %v359 = vpop.permute.xlu0 %358
        %s361 = sor.u32 256, 8
        %362 = vbcast.lane.b32.xlu0 %v356, %s361
        %v363 = vpop.permute.xlu0 %362
        %v364 = vlaneseq
        %v365 = vshrl.u32 %v364, 7
        %v366 = vsub.s32 2, %v365
        %v367 = vrot.slane %v160, %v366
        %369 = vbcast.lane.b32.xlu0 %v367, 256
        %v370 = vpop.permute.xlu0 %369
        %s372 = sor.u32 256, 8
        %373 = vbcast.lane.b32.xlu0 %v367, %s372
        %v374 = vpop.permute.xlu0 %373
        %v375 = vlaneseq
        %v376 = vshrl.u32 %v375, 7
        %v377 = vsub.s32 3, %v376
        %v378 = vrot.slane %v160, %v377
        %380 = vbcast.lane.b32.xlu0 %v378, 256
        %v381 = vpop.permute.xlu0 %380
        %s383 = sor.u32 256, 8
        %384 = vbcast.lane.b32.xlu0 %v378, %s383
        %v385 = vpop.permute.xlu0 %384
        %v386 = vlaneseq
        %v387 = vshrl.u32 %v386, 7
        %v388 = vsub.s32 4, %v387
        %v389 = vrot.slane %v160, %v388
        %391 = vbcast.lane.b32.xlu0 %v389, 256
        %v392 = vpop.permute.xlu0 %391
        %s394 = sor.u32 256, 8
        %395 = vbcast.lane.b32.xlu0 %v389, %s394
        %v396 = vpop.permute.xlu0 %395
        %v397 = vlaneseq
        %v398 = vshrl.u32 %v397, 7
        %v399 = vsub.s32 5, %v398
        %v400 = vrot.slane %v160, %v399
        %402 = vbcast.lane.b32.xlu0 %v400, 256
        %v403 = vpop.permute.xlu0 %402
        %s405 = sor.u32 256, 8
        %406 = vbcast.lane.b32.xlu0 %v400, %s405
        %v407 = vpop.permute.xlu0 %406
        %v408 = vlaneseq
        %v409 = vshrl.u32 %v408, 7
        %v410 = vsub.s32 6, %v409
        %v411 = vrot.slane %v160, %v410
        %413 = vbcast.lane.b32.xlu0 %v411, 256
        %v414 = vpop.permute.xlu0 %413
        %s416 = sor.u32 256, 8
        %417 = vbcast.lane.b32.xlu0 %v411, %s416
        %v418 = vpop.permute.xlu0 %417
        %v419 = vlaneseq
        %v420 = vshrl.u32 %v419, 7
        %v421 = vsub.s32 7, %v420
        %v422 = vrot.slane %v160, %v421
        %424 = vbcast.lane.b32.xlu0 %v422, 256
        %v425 = vpop.permute.xlu0 %424
        %s427 = sor.u32 256, 8
        %428 = vbcast.lane.b32.xlu0 %v422, %s427
        %v429 = vpop.permute.xlu0 %428
        %v430 = vlaneseq
        %v431 = vshrl.u32 %v430, 7
        %v432 = vsub.s32 0, %v431
        %v433 = vrot.slane %v161, %v432
        %435 = vbcast.lane.b32.xlu0 %v433, 256
        %v436 = vpop.permute.xlu0 %435
        %s438 = sor.u32 256, 8
        %439 = vbcast.lane.b32.xlu0 %v433, %s438
        %v440 = vpop.permute.xlu0 %439
        %v441 = vlaneseq
        %v442 = vshrl.u32 %v441, 7
        %v443 = vsub.s32 1, %v442
        %v444 = vrot.slane %v161, %v443
        %446 = vbcast.lane.b32.xlu0 %v444, 256
        %v447 = vpop.permute.xlu0 %446
        %s449 = sor.u32 256, 8
        %450 = vbcast.lane.b32.xlu0 %v444, %s449
        %v451 = vpop.permute.xlu0 %450
        %v452 = vlaneseq
        %v453 = vshrl.u32 %v452, 7
        %v454 = vsub.s32 2, %v453
        %v455 = vrot.slane %v161, %v454
        %457 = vbcast.lane.b32.xlu0 %v455, 256
        %v458 = vpop.permute.xlu0 %457
        %s460 = sor.u32 256, 8
        %461 = vbcast.lane.b32.xlu0 %v455, %s460
        %v462 = vpop.permute.xlu0 %461
        %v463 = vlaneseq
        %v464 = vshrl.u32 %v463, 7
        %v465 = vsub.s32 3, %v464
        %v466 = vrot.slane %v161, %v465
        %468 = vbcast.lane.b32.xlu0 %v466, 256
        %v469 = vpop.permute.xlu0 %468
        %s471 = sor.u32 256, 8
        %472 = vbcast.lane.b32.xlu0 %v466, %s471
        %v473 = vpop.permute.xlu0 %472
        %v474 = vlaneseq
        %v475 = vshrl.u32 %v474, 7
        %v476 = vsub.s32 4, %v475
        %v477 = vrot.slane %v161, %v476
        %479 = vbcast.lane.b32.xlu0 %v477, 256
        %v480 = vpop.permute.xlu0 %479
        %s482 = sor.u32 256, 8
        %483 = vbcast.lane.b32.xlu0 %v477, %s482
        %v484 = vpop.permute.xlu0 %483
        %v485 = vlaneseq
        %v486 = vshrl.u32 %v485, 7
        %v487 = vsub.s32 5, %v486
        %v488 = vrot.slane %v161, %v487
        %490 = vbcast.lane.b32.xlu0 %v488, 256
        %v491 = vpop.permute.xlu0 %490
        %s493 = sor.u32 256, 8
        %494 = vbcast.lane.b32.xlu0 %v488, %s493
        %v495 = vpop.permute.xlu0 %494
        %v496 = vlaneseq
        %v497 = vshrl.u32 %v496, 7
        %v498 = vsub.s32 6, %v497
        %v499 = vrot.slane %v161, %v498
        %501 = vbcast.lane.b32.xlu0 %v499, 256
        %v502 = vpop.permute.xlu0 %501
        %s504 = sor.u32 256, 8
        %505 = vbcast.lane.b32.xlu0 %v499, %s504
        %v506 = vpop.permute.xlu0 %505
        %v507 = vlaneseq
        %v508 = vshrl.u32 %v507, 7
        %v509 = vsub.s32 7, %v508
        %v510 = vrot.slane %v161, %v509
        %512 = vbcast.lane.b32.xlu0 %v510, 256
        %v513 = vpop.permute.xlu0 %512
        %s515 = sor.u32 256, 8
        %516 = vbcast.lane.b32.xlu0 %v510, %s515
        %v517 = vpop.permute.xlu0 %516
        %v518 = vlaneseq
        %v519 = vshrl.u32 %v518, 7
        %v520 = vsub.s32 0, %v519
        %v521 = vrot.slane %v162, %v520
        %523 = vbcast.lane.b32.xlu0 %v521, 256
        %v524 = vpop.permute.xlu0 %523
        %s526 = sor.u32 256, 8
        %527 = vbcast.lane.b32.xlu0 %v521, %s526
        %v528 = vpop.permute.xlu0 %527
        %v529 = vlaneseq
        %v530 = vshrl.u32 %v529, 7
        %v531 = vsub.s32 1, %v530
        %v532 = vrot.slane %v162, %v531
        %534 = vbcast.lane.b32.xlu0 %v532, 256
        %v535 = vpop.permute.xlu0 %534
        %s537 = sor.u32 256, 8
        %538 = vbcast.lane.b32.xlu0 %v532, %s537
        %v539 = vpop.permute.xlu0 %538
        %v540 = vlaneseq
        %v541 = vshrl.u32 %v540, 7
        %v542 = vsub.s32 2, %v541
        %v543 = vrot.slane %v162, %v542
        %545 = vbcast.lane.b32.xlu0 %v543, 256
        %v546 = vpop.permute.xlu0 %545
        %s548 = sor.u32 256, 8
        %549 = vbcast.lane.b32.xlu0 %v543, %s548
        %v550 = vpop.permute.xlu0 %549
        %v551 = vlaneseq
        %v552 = vshrl.u32 %v551, 7
        %v553 = vsub.s32 3, %v552
        %v554 = vrot.slane %v162, %v553
        %556 = vbcast.lane.b32.xlu0 %v554, 256
        %v557 = vpop.permute.xlu0 %556
        %s559 = sor.u32 256, 8
        %560 = vbcast.lane.b32.xlu0 %v554, %s559
        %v561 = vpop.permute.xlu0 %560
        %v562 = vlaneseq
        %v563 = vshrl.u32 %v562, 7
        %v564 = vsub.s32 4, %v563
        %v565 = vrot.slane %v162, %v564
        %567 = vbcast.lane.b32.xlu0 %v565, 256
        %v568 = vpop.permute.xlu0 %567
        %s570 = sor.u32 256, 8
        %571 = vbcast.lane.b32.xlu0 %v565, %s570
        %v572 = vpop.permute.xlu0 %571
        %v573 = vlaneseq
        %v574 = vshrl.u32 %v573, 7
        %v575 = vsub.s32 5, %v574
        %v576 = vrot.slane %v162, %v575
        %578 = vbcast.lane.b32.xlu0 %v576, 256
        %v579 = vpop.permute.xlu0 %578
        %s581 = sor.u32 256, 8
        %582 = vbcast.lane.b32.xlu0 %v576, %s581
        %v583 = vpop.permute.xlu0 %582
        %v584 = vlaneseq
        %v585 = vshrl.u32 %v584, 7
        %v586 = vsub.s32 6, %v585
        %v587 = vrot.slane %v162, %v586
        %589 = vbcast.lane.b32.xlu0 %v587, 256
        %v590 = vpop.permute.xlu0 %589
        %s592 = sor.u32 256, 8
        %593 = vbcast.lane.b32.xlu0 %v587, %s592
        %v594 = vpop.permute.xlu0 %593
        %v595 = vlaneseq
        %v596 = vshrl.u32 %v595, 7
        %v597 = vsub.s32 7, %v596
        %v598 = vrot.slane %v162, %v597
        %600 = vbcast.lane.b32.xlu0 %v598, 256
        %v601 = vpop.permute.xlu0 %600
        %s603 = sor.u32 256, 8
        %604 = vbcast.lane.b32.xlu0 %v598, %s603
        %v605 = vpop.permute.xlu0 %604
        %v606 = vlaneseq
        %v607 = vshrl.u32 %v606, 7
        %v608 = vsub.s32 0, %v607
        %v609 = vrot.slane %v163, %v608
        %611 = vbcast.lane.b32.xlu0 %v609, 256
        %v612 = vpop.permute.xlu0 %611
        %s614 = sor.u32 256, 8
        %615 = vbcast.lane.b32.xlu0 %v609, %s614
        %v616 = vpop.permute.xlu0 %615
        %v617 = vlaneseq
        %v618 = vshrl.u32 %v617, 7
        %v619 = vsub.s32 1, %v618
        %v620 = vrot.slane %v163, %v619
        %622 = vbcast.lane.b32.xlu0 %v620, 256
        %v623 = vpop.permute.xlu0 %622
        %s625 = sor.u32 256, 8
        %626 = vbcast.lane.b32.xlu0 %v620, %s625
        %v627 = vpop.permute.xlu0 %626
        %v628 = vlaneseq
        %v629 = vshrl.u32 %v628, 7
        %v630 = vsub.s32 2, %v629
        %v631 = vrot.slane %v163, %v630
        %633 = vbcast.lane.b32.xlu0 %v631, 256
        %v634 = vpop.permute.xlu0 %633
        %s636 = sor.u32 256, 8
        %637 = vbcast.lane.b32.xlu0 %v631, %s636
        %v638 = vpop.permute.xlu0 %637
        %v639 = vlaneseq
        %v640 = vshrl.u32 %v639, 7
        %v641 = vsub.s32 3, %v640
        %v642 = vrot.slane %v163, %v641
        %644 = vbcast.lane.b32.xlu0 %v642, 256
        %v645 = vpop.permute.xlu0 %644
        %s647 = sor.u32 256, 8
        %648 = vbcast.lane.b32.xlu0 %v642, %s647
        %v649 = vpop.permute.xlu0 %648
        %v650 = vlaneseq
        %v651 = vshrl.u32 %v650, 7
        %v652 = vsub.s32 4, %v651
        %v653 = vrot.slane %v163, %v652
        %655 = vbcast.lane.b32.xlu0 %v653, 256
        %v656 = vpop.permute.xlu0 %655
        %s658 = sor.u32 256, 8
        %659 = vbcast.lane.b32.xlu0 %v653, %s658
        %v660 = vpop.permute.xlu0 %659
        %v661 = vlaneseq
        %v662 = vshrl.u32 %v661, 7
        %v663 = vsub.s32 5, %v662
        %v664 = vrot.slane %v163, %v663
        %666 = vbcast.lane.b32.xlu0 %v664, 256
        %v667 = vpop.permute.xlu0 %666
        %s669 = sor.u32 256, 8
        %670 = vbcast.lane.b32.xlu0 %v664, %s669
        %v671 = vpop.permute.xlu0 %670
        %v672 = vlaneseq
        %v673 = vshrl.u32 %v672, 7
        %v674 = vsub.s32 6, %v673
        %v675 = vrot.slane %v163, %v674
        %677 = vbcast.lane.b32.xlu0 %v675, 256
        %v678 = vpop.permute.xlu0 %677
        %s680 = sor.u32 256, 8
        %681 = vbcast.lane.b32.xlu0 %v675, %s680
        %v682 = vpop.permute.xlu0 %681
        %v683 = vlaneseq
        %v684 = vshrl.u32 %v683, 7
        %v685 = vsub.s32 7, %v684
        %v686 = vrot.slane %v163, %v685
        %688 = vbcast.lane.b32.xlu0 %v686, 256
        %v689 = vpop.permute.xlu0 %688
        %s691 = sor.u32 256, 8
        %692 = vbcast.lane.b32.xlu0 %v686, %s691
        %v693 = vpop.permute.xlu0 %692
        %v694 = vlaneseq
        %v695 = vshrl.u32 %v694, 7
        %v696 = vsub.s32 0, %v695
        %v697 = vrot.slane %v164, %v696
        %699 = vbcast.lane.b32.xlu0 %v697, 256
        %v700 = vpop.permute.xlu0 %699
        %s702 = sor.u32 256, 8
        %703 = vbcast.lane.b32.xlu0 %v697, %s702
        %v704 = vpop.permute.xlu0 %703
        %v705 = vlaneseq
        %v706 = vshrl.u32 %v705, 7
        %v707 = vsub.s32 1, %v706
        %v708 = vrot.slane %v164, %v707
        %710 = vbcast.lane.b32.xlu0 %v708, 256
        %v711 = vpop.permute.xlu0 %710
        %s713 = sor.u32 256, 8
        %714 = vbcast.lane.b32.xlu0 %v708, %s713
        %v715 = vpop.permute.xlu0 %714
        %v716 = vlaneseq
        %v717 = vshrl.u32 %v716, 7
        %v718 = vsub.s32 2, %v717
        %v719 = vrot.slane %v164, %v718
        %721 = vbcast.lane.b32.xlu0 %v719, 256
        %v722 = vpop.permute.xlu0 %721
        %s724 = sor.u32 256, 8
        %725 = vbcast.lane.b32.xlu0 %v719, %s724
        %v726 = vpop.permute.xlu0 %725
        %v727 = vlaneseq
        %v728 = vshrl.u32 %v727, 7
        %v729 = vsub.s32 3, %v728
        %v730 = vrot.slane %v164, %v729
        %732 = vbcast.lane.b32.xlu0 %v730, 256
        %v733 = vpop.permute.xlu0 %732
        %s735 = sor.u32 256, 8
        %736 = vbcast.lane.b32.xlu0 %v730, %s735
        %v737 = vpop.permute.xlu0 %736
        %v738 = vlaneseq
        %v739 = vshrl.u32 %v738, 7
        %v740 = vsub.s32 4, %v739
        %v741 = vrot.slane %v164, %v740
        %743 = vbcast.lane.b32.xlu0 %v741, 256
        %v744 = vpop.permute.xlu0 %743
        %s746 = sor.u32 256, 8
        %747 = vbcast.lane.b32.xlu0 %v741, %s746
        %v748 = vpop.permute.xlu0 %747
        %v749 = vlaneseq
        %v750 = vshrl.u32 %v749, 7
        %v751 = vsub.s32 5, %v750
        %v752 = vrot.slane %v164, %v751
        %754 = vbcast.lane.b32.xlu0 %v752, 256
        %v755 = vpop.permute.xlu0 %754
        %s757 = sor.u32 256, 8
        %758 = vbcast.lane.b32.xlu0 %v752, %s757
        %v759 = vpop.permute.xlu0 %758
        %v760 = vlaneseq
        %v761 = vshrl.u32 %v760, 7
        %v762 = vsub.s32 6, %v761
        %v763 = vrot.slane %v164, %v762
        %765 = vbcast.lane.b32.xlu0 %v763, 256
        %v766 = vpop.permute.xlu0 %765
        %s768 = sor.u32 256, 8
        %769 = vbcast.lane.b32.xlu0 %v763, %s768
        %v770 = vpop.permute.xlu0 %769
        %v771 = vlaneseq
        %v772 = vshrl.u32 %v771, 7
        %v773 = vsub.s32 7, %v772
        %v774 = vrot.slane %v164, %v773
        %776 = vbcast.lane.b32.xlu0 %v774, 256
        %v777 = vpop.permute.xlu0 %776
        %s779 = sor.u32 256, 8
        %780 = vbcast.lane.b32.xlu0 %v774, %s779
        %v781 = vpop.permute.xlu0 %780
        %v782 = vlaneseq
        %v783 = vshrl.u32 %v782, 7
        %v784 = vsub.s32 0, %v783
        %v785 = vrot.slane %v165, %v784
        %787 = vbcast.lane.b32.xlu0 %v785, 256
        %v788 = vpop.permute.xlu0 %787
        %s790 = sor.u32 256, 8
        %791 = vbcast.lane.b32.xlu0 %v785, %s790
        %v792 = vpop.permute.xlu0 %791
        %v793 = vlaneseq
        %v794 = vshrl.u32 %v793, 7
        %v795 = vsub.s32 1, %v794
        %v796 = vrot.slane %v165, %v795
        %798 = vbcast.lane.b32.xlu0 %v796, 256
        %v799 = vpop.permute.xlu0 %798
        %s801 = sor.u32 256, 8
        %802 = vbcast.lane.b32.xlu0 %v796, %s801
        %v803 = vpop.permute.xlu0 %802
        %v804 = vlaneseq
        %v805 = vshrl.u32 %v804, 7
        %v806 = vsub.s32 2, %v805
        %v807 = vrot.slane %v165, %v806
        %809 = vbcast.lane.b32.xlu0 %v807, 256
        %v810 = vpop.permute.xlu0 %809
        %s812 = sor.u32 256, 8
        %813 = vbcast.lane.b32.xlu0 %v807, %s812
        %v814 = vpop.permute.xlu0 %813
        %v815 = vlaneseq
        %v816 = vshrl.u32 %v815, 7
        %v817 = vsub.s32 3, %v816
        %v818 = vrot.slane %v165, %v817
        %820 = vbcast.lane.b32.xlu0 %v818, 256
        %v821 = vpop.permute.xlu0 %820
        %s823 = sor.u32 256, 8
        %824 = vbcast.lane.b32.xlu0 %v818, %s823
        %v825 = vpop.permute.xlu0 %824
        %v826 = vlaneseq
        %v827 = vshrl.u32 %v826, 7
        %v828 = vsub.s32 4, %v827
        %v829 = vrot.slane %v165, %v828
        %831 = vbcast.lane.b32.xlu0 %v829, 256
        %v832 = vpop.permute.xlu0 %831
        %s834 = sor.u32 256, 8
        %835 = vbcast.lane.b32.xlu0 %v829, %s834
        %v836 = vpop.permute.xlu0 %835
        %v837 = vlaneseq
        %v838 = vshrl.u32 %v837, 7
        %v839 = vsub.s32 5, %v838
        %v840 = vrot.slane %v165, %v839
        %842 = vbcast.lane.b32.xlu0 %v840, 256
        %v843 = vpop.permute.xlu0 %842
        %s845 = sor.u32 256, 8
        %846 = vbcast.lane.b32.xlu0 %v840, %s845
        %v847 = vpop.permute.xlu0 %846
        %v848 = vlaneseq
        %v849 = vshrl.u32 %v848, 7
        %v850 = vsub.s32 6, %v849
        %v851 = vrot.slane %v165, %v850
        %853 = vbcast.lane.b32.xlu0 %v851, 256
        %v854 = vpop.permute.xlu0 %853
        %s856 = sor.u32 256, 8
        %857 = vbcast.lane.b32.xlu0 %v851, %s856
        %v858 = vpop.permute.xlu0 %857
        %v859 = vlaneseq
        %v860 = vshrl.u32 %v859, 7
        %v861 = vsub.s32 7, %v860
        %v862 = vrot.slane %v165, %v861
        %864 = vbcast.lane.b32.xlu0 %v862, 256
        %v865 = vpop.permute.xlu0 %864
        %s867 = sor.u32 256, 8
        %868 = vbcast.lane.b32.xlu0 %v862, %s867
        %v869 = vpop.permute.xlu0 %868
        %vm870 = vcmask 7168
        %v871 = vsel %vm870, %v172, 0.0
        %v872 = vsel %vm870, %v176, 0.0
        %v873 = vsel %vm870, %v183, 0.0
        %v874 = vsel %vm870, %v187, 0.0
        %v875 = vsel %vm870, %v194, 0.0
        %v876 = vsel %vm870, %v198, 0.0
        %v877 = vsel %vm870, %v205, 0.0
        %v878 = vsel %vm870, %v209, 0.0
        %v879 = vsel %vm870, %v216, 0.0
        %v880 = vsel %vm870, %v220, 0.0
        %v881 = vsel %vm870, %v227, 0.0
        %v882 = vsel %vm870, %v231, 0.0
        %v883 = vsel %vm870, %v238, 0.0
        %v884 = vsel %vm870, %v242, 0.0
        %v885 = vsel %vm870, %v249, 0.0
        %v886 = vsel %vm870, %v253, 0.0
        %v887 = vsel %vm870, %v260, 0.0
        %v888 = vsel %vm870, %v264, 0.0
        %v889 = vsel %vm870, %v271, 0.0
        %v890 = vsel %vm870, %v275, 0.0
        %v891 = vsel %vm870, %v282, 0.0
        %v892 = vsel %vm870, %v286, 0.0
        %v893 = vsel %vm870, %v293, 0.0
        %v894 = vsel %vm870, %v297, 0.0
        %v895 = vsel %vm870, %v304, 0.0
        %v896 = vsel %vm870, %v308, 0.0
        %v897 = vsel %vm870, %v315, 0.0
        %v898 = vsel %vm870, %v319, 0.0
        %v899 = vsel %vm870, %v326, 0.0
        %v900 = vsel %vm870, %v330, 0.0
        %v901 = vsel %vm870, %v337, 0.0
        %v902 = vsel %vm870, %v341, 0.0
        %v903 = vsel %vm870, %v348, 0.0
        %v904 = vsel %vm870, %v352, 0.0
        %v905 = vsel %vm870, %v359, 0.0
        %v906 = vsel %vm870, %v363, 0.0
        %v907 = vsel %vm870, %v370, 0.0
        %v908 = vsel %vm870, %v374, 0.0
        %v909 = vsel %vm870, %v381, 0.0
        %v910 = vsel %vm870, %v385, 0.0
        %v911 = vsel %vm870, %v392, 0.0
        %v912 = vsel %vm870, %v396, 0.0
        %v913 = vsel %vm870, %v403, 0.0
        %v914 = vsel %vm870, %v407, 0.0
        %v915 = vsel %vm870, %v414, 0.0
        %v916 = vsel %vm870, %v418, 0.0
        %v917 = vsel %vm870, %v425, 0.0
        %v918 = vsel %vm870, %v429, 0.0
        %v919 = vsel %vm870, %v436, 0.0
        %v920 = vsel %vm870, %v440, 0.0
        %v921 = vsel %vm870, %v447, 0.0
        %v922 = vsel %vm870, %v451, 0.0
        %v923 = vsel %vm870, %v458, 0.0
        %v924 = vsel %vm870, %v462, 0.0
        %v925 = vsel %vm870, %v469, 0.0
        %v926 = vsel %vm870, %v473, 0.0
        %v927 = vsel %vm870, %v480, 0.0
        %v928 = vsel %vm870, %v484, 0.0
        %v929 = vsel %vm870, %v491, 0.0
        %v930 = vsel %vm870, %v495, 0.0
        %v931 = vsel %vm870, %v502, 0.0
        %v932 = vsel %vm870, %v506, 0.0
        %v933 = vsel %vm870, %v513, 0.0
        %v934 = vsel %vm870, %v517, 0.0
        %v935 = vsel %vm870, %v524, 0.0
        %v936 = vsel %vm870, %v528, 0.0
        %v937 = vsel %vm870, %v535, 0.0
        %v938 = vsel %vm870, %v539, 0.0
        %v939 = vsel %vm870, %v546, 0.0
        %v940 = vsel %vm870, %v550, 0.0
        %v941 = vsel %vm870, %v557, 0.0
        %v942 = vsel %vm870, %v561, 0.0
        %v943 = vsel %vm870, %v568, 0.0
        %v944 = vsel %vm870, %v572, 0.0
        %v945 = vsel %vm870, %v579, 0.0
        %v946 = vsel %vm870, %v583, 0.0
        %v947 = vsel %vm870, %v590, 0.0
        %v948 = vsel %vm870, %v594, 0.0
        %v949 = vsel %vm870, %v601, 0.0
        %v950 = vsel %vm870, %v605, 0.0
        %v951 = vsel %vm870, %v612, 0.0
        %v952 = vsel %vm870, %v616, 0.0
        %v953 = vsel %vm870, %v623, 0.0
        %v954 = vsel %vm870, %v627, 0.0
        %v955 = vsel %vm870, %v634, 0.0
        %v956 = vsel %vm870, %v638, 0.0
        %v957 = vsel %vm870, %v645, 0.0
        %v958 = vsel %vm870, %v649, 0.0
        %v959 = vsel %vm870, %v656, 0.0
        %v960 = vsel %vm870, %v660, 0.0
        %v961 = vsel %vm870, %v667, 0.0
        %v962 = vsel %vm870, %v671, 0.0
        %v963 = vsel %vm870, %v678, 0.0
        %v964 = vsel %vm870, %v682, 0.0
        %v965 = vsel %vm870, %v689, 0.0
        %v966 = vsel %vm870, %v693, 0.0
        %v967 = vsel %vm870, %v700, 0.0
        %v968 = vsel %vm870, %v704, 0.0
        %v969 = vsel %vm870, %v711, 0.0
        %v970 = vsel %vm870, %v715, 0.0
        %v971 = vsel %vm870, %v722, 0.0
        %v972 = vsel %vm870, %v726, 0.0
        %v973 = vsel %vm870, %v733, 0.0
        %v974 = vsel %vm870, %v737, 0.0
        %v975 = vsel %vm870, %v744, 0.0
        %v976 = vsel %vm870, %v748, 0.0
        %v977 = vsel %vm870, %v755, 0.0
        %v978 = vsel %vm870, %v759, 0.0
        %v979 = vsel %vm870, %v766, 0.0
        %v980 = vsel %vm870, %v770, 0.0
        %v981 = vsel %vm870, %v777, 0.0
        %v982 = vsel %vm870, %v781, 0.0
        %v983 = vsel %vm870, %v788, 0.0
        %v984 = vsel %vm870, %v792, 0.0
        %v985 = vsel %vm870, %v799, 0.0
        %v986 = vsel %vm870, %v803, 0.0
        %v987 = vsel %vm870, %v810, 0.0
        %v988 = vsel %vm870, %v814, 0.0
        %v989 = vsel %vm870, %v821, 0.0
        %v990 = vsel %vm870, %v825, 0.0
        %v991 = vsel %vm870, %v832, 0.0
        %v992 = vsel %vm870, %v836, 0.0
        %v993 = vsel %vm870, %v843, 0.0
        %v994 = vsel %vm870, %v847, 0.0
        %v995 = vsel %vm870, %v854, 0.0
        %v996 = vsel %vm870, %v858, 0.0
        %v997 = vsel %vm870, %v865, 0.0
        %v998 = vsel %vm870, %v869, 0.0
        %v999 = vcombine.high %v871, 0.0
        %v1001 = vunpack.c.l.s4 1983009808
        %v1002 = vunpack.c.0.s8 %v1001
        %v1003 = vlaneseq
        %v1004 = vshrl.u32 %v1003, 7
        %v1005 = vsub.s32 %v1002, %v1004
        %v1006 = vrot.slane %v871, %v1005
        %v1008 = vunpack.c.l.s4 1983009808
        %v1009 = vunpack.c.0.s8 %v1008
        %v1010 = vlaneseq
        %v1011 = vshrl.u32 %v1010, 7
        %v1012 = vsub.s32 %v1009, %v1011
        %v1013 = vrot.slane %v999, %v1012
        %v1014 = vcombine.high %v1006, 0.0
        %v1016 = vunpack.c.l.s4 1934713408
        %v1017 = vunpack.c.0.s8 %v1016
        %v1018 = vlaneseq
        %v1019 = vshrl.u32 %v1018, 7
        %v1020 = vsub.s32 %v1017, %v1019
        %v1021 = vrot.slane %v1006, %v1020
        %v1023 = vunpack.c.l.s4 1934713408
        %v1024 = vunpack.c.0.s8 %v1023
        %v1025 = vlaneseq
        %v1026 = vshrl.u32 %v1025, 7
        %v1027 = vsub.s32 %v1024, %v1026
        %v1028 = vrot.slane %v1014, %v1027
        %v1029 = vcombine.high %v1013, 0.0
        %v1031 = vunpack.c.l.s4 1934713408
        %v1032 = vunpack.c.0.s8 %v1031
        %v1033 = vlaneseq
        %v1034 = vshrl.u32 %v1033, 7
        %v1035 = vsub.s32 %v1032, %v1034
        %v1036 = vrot.slane %v1013, %v1035
        %v1038 = vunpack.c.l.s4 1934713408
        %v1039 = vunpack.c.0.s8 %v1038
        %v1040 = vlaneseq
        %v1041 = vshrl.u32 %v1040, 7
        %v1042 = vsub.s32 %v1039, %v1041
        %v1043 = vrot.slane %v1029, %v1042
        %v1044 = vcombine.high %v1021, 0.0
        %v1045 = vcombine.high %v1028, 0.0
        %v1046 = vcombine.high %v1036, 0.0
        %v1047 = vcombine.high %v1043, 0.0
        %v1048 = vcombine.high %v872, 0.0
        %v1050 = vunpack.c.l.s4 1983009808
        %v1051 = vunpack.c.0.s8 %v1050
        %v1052 = vlaneseq
        %v1053 = vshrl.u32 %v1052, 7
        %v1054 = vsub.s32 %v1051, %v1053
        %v1055 = vrot.slane %v872, %v1054
        %v1057 = vunpack.c.l.s4 1983009808
        %v1058 = vunpack.c.0.s8 %v1057
        %v1059 = vlaneseq
        %v1060 = vshrl.u32 %v1059, 7
        %v1061 = vsub.s32 %v1058, %v1060
        %v1062 = vrot.slane %v1048, %v1061
        %v1063 = vcombine.high %v1055, 0.0
        %v1065 = vunpack.c.l.s4 1934713408
        %v1066 = vunpack.c.0.s8 %v1065
        %v1067 = vlaneseq
        %v1068 = vshrl.u32 %v1067, 7
        %v1069 = vsub.s32 %v1066, %v1068
        %v1070 = vrot.slane %v1055, %v1069
        %v1072 = vunpack.c.l.s4 1934713408
        %v1073 = vunpack.c.0.s8 %v1072
        %v1074 = vlaneseq
        %v1075 = vshrl.u32 %v1074, 7
        %v1076 = vsub.s32 %v1073, %v1075
        %v1077 = vrot.slane %v1063, %v1076
        %v1078 = vcombine.high %v1062, 0.0
        %v1080 = vunpack.c.l.s4 1934713408
        %v1081 = vunpack.c.0.s8 %v1080
        %v1082 = vlaneseq
        %v1083 = vshrl.u32 %v1082, 7
        %v1084 = vsub.s32 %v1081, %v1083
        %v1085 = vrot.slane %v1062, %v1084
        %v1087 = vunpack.c.l.s4 1934713408
        %v1088 = vunpack.c.0.s8 %v1087
        %v1089 = vlaneseq
        %v1090 = vshrl.u32 %v1089, 7
        %v1091 = vsub.s32 %v1088, %v1090
        %v1092 = vrot.slane %v1078, %v1091
        %v1093 = vcombine.high %v1070, 0.0
        %v1094 = vcombine.high %v1077, 0.0
        %v1095 = vcombine.high %v1085, 0.0
        %v1096 = vcombine.high %v1092, 0.0
        %v1097 = vcombine.high %v873, 0.0
        %v1099 = vunpack.c.l.s4 1983009808
        %v1100 = vunpack.c.0.s8 %v1099
        %v1101 = vlaneseq
        %v1102 = vshrl.u32 %v1101, 7
        %v1103 = vsub.s32 %v1100, %v1102
        %v1104 = vrot.slane %v873, %v1103
        %v1106 = vunpack.c.l.s4 1983009808
        %v1107 = vunpack.c.0.s8 %v1106
        %v1108 = vlaneseq
        %v1109 = vshrl.u32 %v1108, 7
        %v1110 = vsub.s32 %v1107, %v1109
        %v1111 = vrot.slane %v1097, %v1110
        %v1112 = vcombine.high %v1104, 0.0
        %v1114 = vunpack.c.l.s4 1934713408
        %v1115 = vunpack.c.0.s8 %v1114
        %v1116 = vlaneseq
        %v1117 = vshrl.u32 %v1116, 7
        %v1118 = vsub.s32 %v1115, %v1117
        %v1119 = vrot.slane %v1104, %v1118
        %v1121 = vunpack.c.l.s4 1934713408
        %v1122 = vunpack.c.0.s8 %v1121
        %v1123 = vlaneseq
        %v1124 = vshrl.u32 %v1123, 7
        %v1125 = vsub.s32 %v1122, %v1124
        %v1126 = vrot.slane %v1112, %v1125
        %v1127 = vcombine.high %v1111, 0.0
        %v1129 = vunpack.c.l.s4 1934713408
        %v1130 = vunpack.c.0.s8 %v1129
        %v1131 = vlaneseq
        %v1132 = vshrl.u32 %v1131, 7
        %v1133 = vsub.s32 %v1130, %v1132
        %v1134 = vrot.slane %v1111, %v1133
        %v1136 = vunpack.c.l.s4 1934713408
        %v1137 = vunpack.c.0.s8 %v1136
        %v1138 = vlaneseq
        %v1139 = vshrl.u32 %v1138, 7
        %v1140 = vsub.s32 %v1137, %v1139
        %v1141 = vrot.slane %v1127, %v1140
        %v1142 = vcombine.high %v1119, 0.0
        %v1143 = vcombine.high %v1126, 0.0
        %v1144 = vcombine.high %v1134, 0.0
        %v1145 = vcombine.high %v1141, 0.0
        %v1146 = vcombine.high %v874, 0.0
        %v1148 = vunpack.c.l.s4 1983009808
        %v1149 = vunpack.c.0.s8 %v1148
        %v1150 = vlaneseq
        %v1151 = vshrl.u32 %v1150, 7
        %v1152 = vsub.s32 %v1149, %v1151
        %v1153 = vrot.slane %v874, %v1152
        %v1155 = vunpack.c.l.s4 1983009808
        %v1156 = vunpack.c.0.s8 %v1155
        %v1157 = vlaneseq
        %v1158 = vshrl.u32 %v1157, 7
        %v1159 = vsub.s32 %v1156, %v1158
        %v1160 = vrot.slane %v1146, %v1159
        %v1161 = vcombine.high %v1153, 0.0
        %v1163 = vunpack.c.l.s4 1934713408
        %v1164 = vunpack.c.0.s8 %v1163
        %v1165 = vlaneseq
        %v1166 = vshrl.u32 %v1165, 7
        %v1167 = vsub.s32 %v1164, %v1166
        %v1168 = vrot.slane %v1153, %v1167
        %v1170 = vunpack.c.l.s4 1934713408
        %v1171 = vunpack.c.0.s8 %v1170
        %v1172 = vlaneseq
        %v1173 = vshrl.u32 %v1172, 7
        %v1174 = vsub.s32 %v1171, %v1173
        %v1175 = vrot.slane %v1161, %v1174
        %v1176 = vcombine.high %v1160, 0.0
        %v1178 = vunpack.c.l.s4 1934713408
        %v1179 = vunpack.c.0.s8 %v1178
        %v1180 = vlaneseq
        %v1181 = vshrl.u32 %v1180, 7
        %v1182 = vsub.s32 %v1179, %v1181
        %v1183 = vrot.slane %v1160, %v1182
        %v1185 = vunpack.c.l.s4 1934713408
        %v1186 = vunpack.c.0.s8 %v1185
        %v1187 = vlaneseq
        %v1188 = vshrl.u32 %v1187, 7
        %v1189 = vsub.s32 %v1186, %v1188
        %v1190 = vrot.slane %v1176, %v1189
        %v1191 = vcombine.high %v1168, 0.0
        %v1192 = vcombine.high %v1175, 0.0
        %v1193 = vcombine.high %v1183, 0.0
        %v1194 = vcombine.high %v1190, 0.0
        %v1195 = vcombine.high %v875, 0.0
        %v1197 = vunpack.c.l.s4 1983009808
        %v1198 = vunpack.c.0.s8 %v1197
        %v1199 = vlaneseq
        %v1200 = vshrl.u32 %v1199, 7
        %v1201 = vsub.s32 %v1198, %v1200
        %v1202 = vrot.slane %v875, %v1201
        %v1204 = vunpack.c.l.s4 1983009808
        %v1205 = vunpack.c.0.s8 %v1204
        %v1206 = vlaneseq
        %v1207 = vshrl.u32 %v1206, 7
        %v1208 = vsub.s32 %v1205, %v1207
        %v1209 = vrot.slane %v1195, %v1208
        %v1210 = vcombine.high %v1202, 0.0
        %v1212 = vunpack.c.l.s4 1934713408
        %v1213 = vunpack.c.0.s8 %v1212
        %v1214 = vlaneseq
        %v1215 = vshrl.u32 %v1214, 7
        %v1216 = vsub.s32 %v1213, %v1215
        %v1217 = vrot.slane %v1202, %v1216
        %v1219 = vunpack.c.l.s4 1934713408
        %v1220 = vunpack.c.0.s8 %v1219
        %v1221 = vlaneseq
        %v1222 = vshrl.u32 %v1221, 7
        %v1223 = vsub.s32 %v1220, %v1222
        %v1224 = vrot.slane %v1210, %v1223
        %v1225 = vcombine.high %v1209, 0.0
        %v1227 = vunpack.c.l.s4 1934713408
        %v1228 = vunpack.c.0.s8 %v1227
        %v1229 = vlaneseq
        %v1230 = vshrl.u32 %v1229, 7
        %v1231 = vsub.s32 %v1228, %v1230
        %v1232 = vrot.slane %v1209, %v1231
        %v1234 = vunpack.c.l.s4 1934713408
        %v1235 = vunpack.c.0.s8 %v1234
        %v1236 = vlaneseq
        %v1237 = vshrl.u32 %v1236, 7
        %v1238 = vsub.s32 %v1235, %v1237
        %v1239 = vrot.slane %v1225, %v1238
        %v1240 = vcombine.high %v1217, 0.0
        %v1241 = vcombine.high %v1224, 0.0
        %v1242 = vcombine.high %v1232, 0.0
        %v1243 = vcombine.high %v1239, 0.0
        %v1244 = vcombine.high %v876, 0.0
        %v1246 = vunpack.c.l.s4 1983009808
        %v1247 = vunpack.c.0.s8 %v1246
        %v1248 = vlaneseq
        %v1249 = vshrl.u32 %v1248, 7
        %v1250 = vsub.s32 %v1247, %v1249
        %v1251 = vrot.slane %v876, %v1250
        %v1253 = vunpack.c.l.s4 1983009808
        %v1254 = vunpack.c.0.s8 %v1253
        %v1255 = vlaneseq
        %v1256 = vshrl.u32 %v1255, 7
        %v1257 = vsub.s32 %v1254, %v1256
        %v1258 = vrot.slane %v1244, %v1257
        %v1259 = vcombine.high %v1251, 0.0
        %v1261 = vunpack.c.l.s4 1934713408
        %v1262 = vunpack.c.0.s8 %v1261
        %v1263 = vlaneseq
        %v1264 = vshrl.u32 %v1263, 7
        %v1265 = vsub.s32 %v1262, %v1264
        %v1266 = vrot.slane %v1251, %v1265
        %v1268 = vunpack.c.l.s4 1934713408
        %v1269 = vunpack.c.0.s8 %v1268
        %v1270 = vlaneseq
        %v1271 = vshrl.u32 %v1270, 7
        %v1272 = vsub.s32 %v1269, %v1271
        %v1273 = vrot.slane %v1259, %v1272
        %v1274 = vcombine.high %v1258, 0.0
        %v1276 = vunpack.c.l.s4 1934713408
        %v1277 = vunpack.c.0.s8 %v1276
        %v1278 = vlaneseq
        %v1279 = vshrl.u32 %v1278, 7
        %v1280 = vsub.s32 %v1277, %v1279
        %v1281 = vrot.slane %v1258, %v1280
        %v1283 = vunpack.c.l.s4 1934713408
        %v1284 = vunpack.c.0.s8 %v1283
        %v1285 = vlaneseq
        %v1286 = vshrl.u32 %v1285, 7
        %v1287 = vsub.s32 %v1284, %v1286
        %v1288 = vrot.slane %v1274, %v1287
        %v1289 = vcombine.high %v1266, 0.0
        %v1290 = vcombine.high %v1273, 0.0
        %v1291 = vcombine.high %v1281, 0.0
        %v1292 = vcombine.high %v1288, 0.0
        %v1293 = vcombine.high %v877, 0.0
        %v1295 = vunpack.c.l.s4 1983009808
        %v1296 = vunpack.c.0.s8 %v1295
        %v1297 = vlaneseq
        %v1298 = vshrl.u32 %v1297, 7
        %v1299 = vsub.s32 %v1296, %v1298
        %v1300 = vrot.slane %v877, %v1299
        %v1302 = vunpack.c.l.s4 1983009808
        %v1303 = vunpack.c.0.s8 %v1302
        %v1304 = vlaneseq
        %v1305 = vshrl.u32 %v1304, 7
        %v1306 = vsub.s32 %v1303, %v1305
        %v1307 = vrot.slane %v1293, %v1306
        %v1308 = vcombine.high %v1300, 0.0
        %v1310 = vunpack.c.l.s4 1934713408
        %v1311 = vunpack.c.0.s8 %v1310
        %v1312 = vlaneseq
        %v1313 = vshrl.u32 %v1312, 7
        %v1314 = vsub.s32 %v1311, %v1313
        %v1315 = vrot.slane %v1300, %v1314
        %v1317 = vunpack.c.l.s4 1934713408
        %v1318 = vunpack.c.0.s8 %v1317
        %v1319 = vlaneseq
        %v1320 = vshrl.u32 %v1319, 7
        %v1321 = vsub.s32 %v1318, %v1320
        %v1322 = vrot.slane %v1308, %v1321
        %v1323 = vcombine.high %v1307, 0.0
        %v1325 = vunpack.c.l.s4 1934713408
        %v1326 = vunpack.c.0.s8 %v1325
        %v1327 = vlaneseq
        %v1328 = vshrl.u32 %v1327, 7
        %v1329 = vsub.s32 %v1326, %v1328
        %v1330 = vrot.slane %v1307, %v1329
        %v1332 = vunpack.c.l.s4 1934713408
        %v1333 = vunpack.c.0.s8 %v1332
        %v1334 = vlaneseq
        %v1335 = vshrl.u32 %v1334, 7
        %v1336 = vsub.s32 %v1333, %v1335
        %v1337 = vrot.slane %v1323, %v1336
        %v1338 = vcombine.high %v1315, 0.0
        %v1339 = vcombine.high %v1322, 0.0
        %v1340 = vcombine.high %v1330, 0.0
        %v1341 = vcombine.high %v1337, 0.0
        %v1342 = vcombine.high %v878, 0.0
        %v1344 = vunpack.c.l.s4 1983009808
        %v1345 = vunpack.c.0.s8 %v1344
        %v1346 = vlaneseq
        %v1347 = vshrl.u32 %v1346, 7
        %v1348 = vsub.s32 %v1345, %v1347
        %v1349 = vrot.slane %v878, %v1348
        %v1351 = vunpack.c.l.s4 1983009808
        %v1352 = vunpack.c.0.s8 %v1351
        %v1353 = vlaneseq
        %v1354 = vshrl.u32 %v1353, 7
        %v1355 = vsub.s32 %v1352, %v1354
        %v1356 = vrot.slane %v1342, %v1355
        %v1357 = vcombine.high %v1349, 0.0
        %v1359 = vunpack.c.l.s4 1934713408
        %v1360 = vunpack.c.0.s8 %v1359
        %v1361 = vlaneseq
        %v1362 = vshrl.u32 %v1361, 7
        %v1363 = vsub.s32 %v1360, %v1362
        %v1364 = vrot.slane %v1349, %v1363
        %v1366 = vunpack.c.l.s4 1934713408
        %v1367 = vunpack.c.0.s8 %v1366
        %v1368 = vlaneseq
        %v1369 = vshrl.u32 %v1368, 7
        %v1370 = vsub.s32 %v1367, %v1369
        %v1371 = vrot.slane %v1357, %v1370
        %v1372 = vcombine.high %v1356, 0.0
        %v1374 = vunpack.c.l.s4 1934713408
        %v1375 = vunpack.c.0.s8 %v1374
        %v1376 = vlaneseq
        %v1377 = vshrl.u32 %v1376, 7
        %v1378 = vsub.s32 %v1375, %v1377
        %v1379 = vrot.slane %v1356, %v1378
        %v1381 = vunpack.c.l.s4 1934713408
        %v1382 = vunpack.c.0.s8 %v1381
        %v1383 = vlaneseq
        %v1384 = vshrl.u32 %v1383, 7
        %v1385 = vsub.s32 %v1382, %v1384
        %v1386 = vrot.slane %v1372, %v1385
        %v1387 = vcombine.high %v1364, 0.0
        %v1388 = vcombine.high %v1371, 0.0
        %v1389 = vcombine.high %v1379, 0.0
        %v1390 = vcombine.high %v1386, 0.0
        %v1391 = vcombine.high %v879, 0.0
        %v1393 = vunpack.c.l.s4 1983009808
        %v1394 = vunpack.c.0.s8 %v1393
        %v1395 = vlaneseq
        %v1396 = vshrl.u32 %v1395, 7
        %v1397 = vsub.s32 %v1394, %v1396
        %v1398 = vrot.slane %v879, %v1397
        %v1400 = vunpack.c.l.s4 1983009808
        %v1401 = vunpack.c.0.s8 %v1400
        %v1402 = vlaneseq
        %v1403 = vshrl.u32 %v1402, 7
        %v1404 = vsub.s32 %v1401, %v1403
        %v1405 = vrot.slane %v1391, %v1404
        %v1406 = vcombine.high %v1398, 0.0
        %v1408 = vunpack.c.l.s4 1934713408
        %v1409 = vunpack.c.0.s8 %v1408
        %v1410 = vlaneseq
        %v1411 = vshrl.u32 %v1410, 7
        %v1412 = vsub.s32 %v1409, %v1411
        %v1413 = vrot.slane %v1398, %v1412
        %v1415 = vunpack.c.l.s4 1934713408
        %v1416 = vunpack.c.0.s8 %v1415
        %v1417 = vlaneseq
        %v1418 = vshrl.u32 %v1417, 7
        %v1419 = vsub.s32 %v1416, %v1418
        %v1420 = vrot.slane %v1406, %v1419
        %v1421 = vcombine.high %v1405, 0.0
        %v1423 = vunpack.c.l.s4 1934713408
        %v1424 = vunpack.c.0.s8 %v1423
        %v1425 = vlaneseq
        %v1426 = vshrl.u32 %v1425, 7
        %v1427 = vsub.s32 %v1424, %v1426
        %v1428 = vrot.slane %v1405, %v1427
        %v1430 = vunpack.c.l.s4 1934713408
        %v1431 = vunpack.c.0.s8 %v1430
        %v1432 = vlaneseq
        %v1433 = vshrl.u32 %v1432, 7
        %v1434 = vsub.s32 %v1431, %v1433
        %v1435 = vrot.slane %v1421, %v1434
        %v1436 = vcombine.high %v1413, 0.0
        %v1437 = vcombine.high %v1420, 0.0
        %v1438 = vcombine.high %v1428, 0.0
        %v1439 = vcombine.high %v1435, 0.0
        %v1440 = vcombine.high %v880, 0.0
        %v1442 = vunpack.c.l.s4 1983009808
        %v1443 = vunpack.c.0.s8 %v1442
        %v1444 = vlaneseq
        %v1445 = vshrl.u32 %v1444, 7
        %v1446 = vsub.s32 %v1443, %v1445
        %v1447 = vrot.slane %v880, %v1446
        %v1449 = vunpack.c.l.s4 1983009808
        %v1450 = vunpack.c.0.s8 %v1449
        %v1451 = vlaneseq
        %v1452 = vshrl.u32 %v1451, 7
        %v1453 = vsub.s32 %v1450, %v1452
        %v1454 = vrot.slane %v1440, %v1453
        %v1455 = vcombine.high %v1447, 0.0
        %v1457 = vunpack.c.l.s4 1934713408
        %v1458 = vunpack.c.0.s8 %v1457
        %v1459 = vlaneseq
        %v1460 = vshrl.u32 %v1459, 7
        %v1461 = vsub.s32 %v1458, %v1460
        %v1462 = vrot.slane %v1447, %v1461
        %v1464 = vunpack.c.l.s4 1934713408
        %v1465 = vunpack.c.0.s8 %v1464
        %v1466 = vlaneseq
        %v1467 = vshrl.u32 %v1466, 7
        %v1468 = vsub.s32 %v1465, %v1467
        %v1469 = vrot.slane %v1455, %v1468
        %v1470 = vcombine.high %v1454, 0.0
        %v1472 = vunpack.c.l.s4 1934713408
        %v1473 = vunpack.c.0.s8 %v1472
        %v1474 = vlaneseq
        %v1475 = vshrl.u32 %v1474, 7
        %v1476 = vsub.s32 %v1473, %v1475
        %v1477 = vrot.slane %v1454, %v1476
        %v1479 = vunpack.c.l.s4 1934713408
        %v1480 = vunpack.c.0.s8 %v1479
        %v1481 = vlaneseq
        %v1482 = vshrl.u32 %v1481, 7
        %v1483 = vsub.s32 %v1480, %v1482
        %v1484 = vrot.slane %v1470, %v1483
        %v1485 = vcombine.high %v1462, 0.0
        %v1486 = vcombine.high %v1469, 0.0
        %v1487 = vcombine.high %v1477, 0.0
        %v1488 = vcombine.high %v1484, 0.0
        %v1489 = vcombine.high %v881, 0.0
        %v1491 = vunpack.c.l.s4 1983009808
        %v1492 = vunpack.c.0.s8 %v1491
        %v1493 = vlaneseq
        %v1494 = vshrl.u32 %v1493, 7
        %v1495 = vsub.s32 %v1492, %v1494
        %v1496 = vrot.slane %v881, %v1495
        %v1498 = vunpack.c.l.s4 1983009808
        %v1499 = vunpack.c.0.s8 %v1498
        %v1500 = vlaneseq
        %v1501 = vshrl.u32 %v1500, 7
        %v1502 = vsub.s32 %v1499, %v1501
        %v1503 = vrot.slane %v1489, %v1502
        %v1504 = vcombine.high %v1496, 0.0
        %v1506 = vunpack.c.l.s4 1934713408
        %v1507 = vunpack.c.0.s8 %v1506
        %v1508 = vlaneseq
        %v1509 = vshrl.u32 %v1508, 7
        %v1510 = vsub.s32 %v1507, %v1509
        %v1511 = vrot.slane %v1496, %v1510
        %v1513 = vunpack.c.l.s4 1934713408
        %v1514 = vunpack.c.0.s8 %v1513
        %v1515 = vlaneseq
        %v1516 = vshrl.u32 %v1515, 7
        %v1517 = vsub.s32 %v1514, %v1516
        %v1518 = vrot.slane %v1504, %v1517
        %v1519 = vcombine.high %v1503, 0.0
        %v1521 = vunpack.c.l.s4 1934713408
        %v1522 = vunpack.c.0.s8 %v1521
        %v1523 = vlaneseq
        %v1524 = vshrl.u32 %v1523, 7
        %v1525 = vsub.s32 %v1522, %v1524
        %v1526 = vrot.slane %v1503, %v1525
        %v1528 = vunpack.c.l.s4 1934713408
        %v1529 = vunpack.c.0.s8 %v1528
        %v1530 = vlaneseq
        %v1531 = vshrl.u32 %v1530, 7
        %v1532 = vsub.s32 %v1529, %v1531
        %v1533 = vrot.slane %v1519, %v1532
        %v1534 = vcombine.high %v1511, 0.0
        %v1535 = vcombine.high %v1518, 0.0
        %v1536 = vcombine.high %v1526, 0.0
        %v1537 = vcombine.high %v1533, 0.0
        %v1538 = vcombine.high %v882, 0.0
        %v1540 = vunpack.c.l.s4 1983009808
        %v1541 = vunpack.c.0.s8 %v1540
        %v1542 = vlaneseq
        %v1543 = vshrl.u32 %v1542, 7
        %v1544 = vsub.s32 %v1541, %v1543
        %v1545 = vrot.slane %v882, %v1544
        %v1547 = vunpack.c.l.s4 1983009808
        %v1548 = vunpack.c.0.s8 %v1547
        %v1549 = vlaneseq
        %v1550 = vshrl.u32 %v1549, 7
        %v1551 = vsub.s32 %v1548, %v1550
        %v1552 = vrot.slane %v1538, %v1551
        %v1553 = vcombine.high %v1545, 0.0
        %v1555 = vunpack.c.l.s4 1934713408
        %v1556 = vunpack.c.0.s8 %v1555
        %v1557 = vlaneseq
        %v1558 = vshrl.u32 %v1557, 7
        %v1559 = vsub.s32 %v1556, %v1558
        %v1560 = vrot.slane %v1545, %v1559
        %v1562 = vunpack.c.l.s4 1934713408
        %v1563 = vunpack.c.0.s8 %v1562
        %v1564 = vlaneseq
        %v1565 = vshrl.u32 %v1564, 7
        %v1566 = vsub.s32 %v1563, %v1565
        %v1567 = vrot.slane %v1553, %v1566
        %v1568 = vcombine.high %v1552, 0.0
        %v1570 = vunpack.c.l.s4 1934713408
        %v1571 = vunpack.c.0.s8 %v1570
        %v1572 = vlaneseq
        %v1573 = vshrl.u32 %v1572, 7
        %v1574 = vsub.s32 %v1571, %v1573
        %v1575 = vrot.slane %v1552, %v1574
        %v1577 = vunpack.c.l.s4 1934713408
        %v1578 = vunpack.c.0.s8 %v1577
        %v1579 = vlaneseq
        %v1580 = vshrl.u32 %v1579, 7
        %v1581 = vsub.s32 %v1578, %v1580
        %v1582 = vrot.slane %v1568, %v1581
        %v1583 = vcombine.high %v1560, 0.0
        %v1584 = vcombine.high %v1567, 0.0
        %v1585 = vcombine.high %v1575, 0.0
        %v1586 = vcombine.high %v1582, 0.0
        %v1587 = vcombine.high %v883, 0.0
        %v1589 = vunpack.c.l.s4 1983009808
        %v1590 = vunpack.c.0.s8 %v1589
        %v1591 = vlaneseq
        %v1592 = vshrl.u32 %v1591, 7
        %v1593 = vsub.s32 %v1590, %v1592
        %v1594 = vrot.slane %v883, %v1593
        %v1596 = vunpack.c.l.s4 1983009808
        %v1597 = vunpack.c.0.s8 %v1596
        %v1598 = vlaneseq
        %v1599 = vshrl.u32 %v1598, 7
        %v1600 = vsub.s32 %v1597, %v1599
        %v1601 = vrot.slane %v1587, %v1600
        %v1602 = vcombine.high %v1594, 0.0
        %v1604 = vunpack.c.l.s4 1934713408
        %v1605 = vunpack.c.0.s8 %v1604
        %v1606 = vlaneseq
        %v1607 = vshrl.u32 %v1606, 7
        %v1608 = vsub.s32 %v1605, %v1607
        %v1609 = vrot.slane %v1594, %v1608
        %v1611 = vunpack.c.l.s4 1934713408
        %v1612 = vunpack.c.0.s8 %v1611
        %v1613 = vlaneseq
        %v1614 = vshrl.u32 %v1613, 7
        %v1615 = vsub.s32 %v1612, %v1614
        %v1616 = vrot.slane %v1602, %v1615
        %v1617 = vcombine.high %v1601, 0.0
        %v1619 = vunpack.c.l.s4 1934713408
        %v1620 = vunpack.c.0.s8 %v1619
        %v1621 = vlaneseq
        %v1622 = vshrl.u32 %v1621, 7
        %v1623 = vsub.s32 %v1620, %v1622
        %v1624 = vrot.slane %v1601, %v1623
        %v1626 = vunpack.c.l.s4 1934713408
        %v1627 = vunpack.c.0.s8 %v1626
        %v1628 = vlaneseq
        %v1629 = vshrl.u32 %v1628, 7
        %v1630 = vsub.s32 %v1627, %v1629
        %v1631 = vrot.slane %v1617, %v1630
        %v1632 = vcombine.high %v1609, 0.0
        %v1633 = vcombine.high %v1616, 0.0
        %v1634 = vcombine.high %v1624, 0.0
        %v1635 = vcombine.high %v1631, 0.0
        %v1636 = vcombine.high %v884, 0.0
        %v1638 = vunpack.c.l.s4 1983009808
        %v1639 = vunpack.c.0.s8 %v1638
        %v1640 = vlaneseq
        %v1641 = vshrl.u32 %v1640, 7
        %v1642 = vsub.s32 %v1639, %v1641
        %v1643 = vrot.slane %v884, %v1642
        %v1645 = vunpack.c.l.s4 1983009808
        %v1646 = vunpack.c.0.s8 %v1645
        %v1647 = vlaneseq
        %v1648 = vshrl.u32 %v1647, 7
        %v1649 = vsub.s32 %v1646, %v1648
        %v1650 = vrot.slane %v1636, %v1649
        %v1651 = vcombine.high %v1643, 0.0
        %v1653 = vunpack.c.l.s4 1934713408
        %v1654 = vunpack.c.0.s8 %v1653
        %v1655 = vlaneseq
        %v1656 = vshrl.u32 %v1655, 7
        %v1657 = vsub.s32 %v1654, %v1656
        %v1658 = vrot.slane %v1643, %v1657
        %v1660 = vunpack.c.l.s4 1934713408
        %v1661 = vunpack.c.0.s8 %v1660
        %v1662 = vlaneseq
        %v1663 = vshrl.u32 %v1662, 7
        %v1664 = vsub.s32 %v1661, %v1663
        %v1665 = vrot.slane %v1651, %v1664
        %v1666 = vcombine.high %v1650, 0.0
        %v1668 = vunpack.c.l.s4 1934713408
        %v1669 = vunpack.c.0.s8 %v1668
        %v1670 = vlaneseq
        %v1671 = vshrl.u32 %v1670, 7
        %v1672 = vsub.s32 %v1669, %v1671
        %v1673 = vrot.slane %v1650, %v1672
        %v1675 = vunpack.c.l.s4 1934713408
        %v1676 = vunpack.c.0.s8 %v1675
        %v1677 = vlaneseq
        %v1678 = vshrl.u32 %v1677, 7
        %v1679 = vsub.s32 %v1676, %v1678
        %v1680 = vrot.slane %v1666, %v1679
        %v1681 = vcombine.high %v1658, 0.0
        %v1682 = vcombine.high %v1665, 0.0
        %v1683 = vcombine.high %v1673, 0.0
        %v1684 = vcombine.high %v1680, 0.0
        %v1685 = vcombine.high %v885, 0.0
        %v1687 = vunpack.c.l.s4 1983009808
        %v1688 = vunpack.c.0.s8 %v1687
        %v1689 = vlaneseq
        %v1690 = vshrl.u32 %v1689, 7
        %v1691 = vsub.s32 %v1688, %v1690
        %v1692 = vrot.slane %v885, %v1691
        %v1694 = vunpack.c.l.s4 1983009808
        %v1695 = vunpack.c.0.s8 %v1694
        %v1696 = vlaneseq
        %v1697 = vshrl.u32 %v1696, 7
        %v1698 = vsub.s32 %v1695, %v1697
        %v1699 = vrot.slane %v1685, %v1698
        %v1700 = vcombine.high %v1692, 0.0
        %v1702 = vunpack.c.l.s4 1934713408
        %v1703 = vunpack.c.0.s8 %v1702
        %v1704 = vlaneseq
        %v1705 = vshrl.u32 %v1704, 7
        %v1706 = vsub.s32 %v1703, %v1705
        %v1707 = vrot.slane %v1692, %v1706
        %v1709 = vunpack.c.l.s4 1934713408
        %v1710 = vunpack.c.0.s8 %v1709
        %v1711 = vlaneseq
        %v1712 = vshrl.u32 %v1711, 7
        %v1713 = vsub.s32 %v1710, %v1712
        %v1714 = vrot.slane %v1700, %v1713
        %v1715 = vcombine.high %v1699, 0.0
        %v1717 = vunpack.c.l.s4 1934713408
        %v1718 = vunpack.c.0.s8 %v1717
        %v1719 = vlaneseq
        %v1720 = vshrl.u32 %v1719, 7
        %v1721 = vsub.s32 %v1718, %v1720
        %v1722 = vrot.slane %v1699, %v1721
        %v1724 = vunpack.c.l.s4 1934713408
        %v1725 = vunpack.c.0.s8 %v1724
        %v1726 = vlaneseq
        %v1727 = vshrl.u32 %v1726, 7
        %v1728 = vsub.s32 %v1725, %v1727
        %v1729 = vrot.slane %v1715, %v1728
        %v1730 = vcombine.high %v1707, 0.0
        %v1731 = vcombine.high %v1714, 0.0
        %v1732 = vcombine.high %v1722, 0.0
        %v1733 = vcombine.high %v1729, 0.0
        %v1734 = vcombine.high %v886, 0.0
        %v1736 = vunpack.c.l.s4 1983009808
        %v1737 = vunpack.c.0.s8 %v1736
        %v1738 = vlaneseq
        %v1739 = vshrl.u32 %v1738, 7
        %v1740 = vsub.s32 %v1737, %v1739
        %v1741 = vrot.slane %v886, %v1740
        %v1743 = vunpack.c.l.s4 1983009808
        %v1744 = vunpack.c.0.s8 %v1743
        %v1745 = vlaneseq
        %v1746 = vshrl.u32 %v1745, 7
        %v1747 = vsub.s32 %v1744, %v1746
        %v1748 = vrot.slane %v1734, %v1747
        %v1749 = vcombine.high %v1741, 0.0
        %v1751 = vunpack.c.l.s4 1934713408
        %v1752 = vunpack.c.0.s8 %v1751
        %v1753 = vlaneseq
        %v1754 = vshrl.u32 %v1753, 7
        %v1755 = vsub.s32 %v1752, %v1754
        %v1756 = vrot.slane %v1741, %v1755
        %v1758 = vunpack.c.l.s4 1934713408
        %v1759 = vunpack.c.0.s8 %v1758
        %v1760 = vlaneseq
        %v1761 = vshrl.u32 %v1760, 7
        %v1762 = vsub.s32 %v1759, %v1761
        %v1763 = vrot.slane %v1749, %v1762
        %v1764 = vcombine.high %v1748, 0.0
        %v1766 = vunpack.c.l.s4 1934713408
        %v1767 = vunpack.c.0.s8 %v1766
        %v1768 = vlaneseq
        %v1769 = vshrl.u32 %v1768, 7
        %v1770 = vsub.s32 %v1767, %v1769
        %v1771 = vrot.slane %v1748, %v1770
        %v1773 = vunpack.c.l.s4 1934713408
        %v1774 = vunpack.c.0.s8 %v1773
        %v1775 = vlaneseq
        %v1776 = vshrl.u32 %v1775, 7
        %v1777 = vsub.s32 %v1774, %v1776
        %v1778 = vrot.slane %v1764, %v1777
        %v1779 = vcombine.high %v1756, 0.0
        %v1780 = vcombine.high %v1763, 0.0
        %v1781 = vcombine.high %v1771, 0.0
        %v1782 = vcombine.high %v1778, 0.0
        %v1783 = vcombine.high %v887, 0.0
        %v1785 = vunpack.c.l.s4 1983009808
        %v1786 = vunpack.c.0.s8 %v1785
        %v1787 = vlaneseq
        %v1788 = vshrl.u32 %v1787, 7
        %v1789 = vsub.s32 %v1786, %v1788
        %v1790 = vrot.slane %v887, %v1789
        %v1792 = vunpack.c.l.s4 1983009808
        %v1793 = vunpack.c.0.s8 %v1792
        %v1794 = vlaneseq
        %v1795 = vshrl.u32 %v1794, 7
        %v1796 = vsub.s32 %v1793, %v1795
        %v1797 = vrot.slane %v1783, %v1796
        %v1798 = vcombine.high %v1790, 0.0
        %v1800 = vunpack.c.l.s4 1934713408
        %v1801 = vunpack.c.0.s8 %v1800
        %v1802 = vlaneseq
        %v1803 = vshrl.u32 %v1802, 7
        %v1804 = vsub.s32 %v1801, %v1803
        %v1805 = vrot.slane %v1790, %v1804
        %v1807 = vunpack.c.l.s4 1934713408
        %v1808 = vunpack.c.0.s8 %v1807
        %v1809 = vlaneseq
        %v1810 = vshrl.u32 %v1809, 7
        %v1811 = vsub.s32 %v1808, %v1810
        %v1812 = vrot.slane %v1798, %v1811
        %v1813 = vcombine.high %v1797, 0.0
        %v1815 = vunpack.c.l.s4 1934713408
        %v1816 = vunpack.c.0.s8 %v1815
        %v1817 = vlaneseq
        %v1818 = vshrl.u32 %v1817, 7
        %v1819 = vsub.s32 %v1816, %v1818
        %v1820 = vrot.slane %v1797, %v1819
        %v1822 = vunpack.c.l.s4 1934713408
        %v1823 = vunpack.c.0.s8 %v1822
        %v1824 = vlaneseq
        %v1825 = vshrl.u32 %v1824, 7
        %v1826 = vsub.s32 %v1823, %v1825
        %v1827 = vrot.slane %v1813, %v1826
        %v1828 = vcombine.high %v1805, 0.0
        %v1829 = vcombine.high %v1812, 0.0
        %v1830 = vcombine.high %v1820, 0.0
        %v1831 = vcombine.high %v1827, 0.0
        %v1832 = vcombine.high %v888, 0.0
        %v1834 = vunpack.c.l.s4 1983009808
        %v1835 = vunpack.c.0.s8 %v1834
        %v1836 = vlaneseq
        %v1837 = vshrl.u32 %v1836, 7
        %v1838 = vsub.s32 %v1835, %v1837
        %v1839 = vrot.slane %v888, %v1838
        %v1841 = vunpack.c.l.s4 1983009808
        %v1842 = vunpack.c.0.s8 %v1841
        %v1843 = vlaneseq
        %v1844 = vshrl.u32 %v1843, 7
        %v1845 = vsub.s32 %v1842, %v1844
        %v1846 = vrot.slane %v1832, %v1845
        %v1847 = vcombine.high %v1839, 0.0
        %v1849 = vunpack.c.l.s4 1934713408
        %v1850 = vunpack.c.0.s8 %v1849
        %v1851 = vlaneseq
        %v1852 = vshrl.u32 %v1851, 7
        %v1853 = vsub.s32 %v1850, %v1852
        %v1854 = vrot.slane %v1839, %v1853
        %v1856 = vunpack.c.l.s4 1934713408
        %v1857 = vunpack.c.0.s8 %v1856
        %v1858 = vlaneseq
        %v1859 = vshrl.u32 %v1858, 7
        %v1860 = vsub.s32 %v1857, %v1859
        %v1861 = vrot.slane %v1847, %v1860
        %v1862 = vcombine.high %v1846, 0.0
        %v1864 = vunpack.c.l.s4 1934713408
        %v1865 = vunpack.c.0.s8 %v1864
        %v1866 = vlaneseq
        %v1867 = vshrl.u32 %v1866, 7
        %v1868 = vsub.s32 %v1865, %v1867
        %v1869 = vrot.slane %v1846, %v1868
        %v1871 = vunpack.c.l.s4 1934713408
        %v1872 = vunpack.c.0.s8 %v1871
        %v1873 = vlaneseq
        %v1874 = vshrl.u32 %v1873, 7
        %v1875 = vsub.s32 %v1872, %v1874
        %v1876 = vrot.slane %v1862, %v1875
        %v1877 = vcombine.high %v1854, 0.0
        %v1878 = vcombine.high %v1861, 0.0
        %v1879 = vcombine.high %v1869, 0.0
        %v1880 = vcombine.high %v1876, 0.0
        %v1881 = vcombine.high %v889, 0.0
        %v1883 = vunpack.c.l.s4 1983009808
        %v1884 = vunpack.c.0.s8 %v1883
        %v1885 = vlaneseq
        %v1886 = vshrl.u32 %v1885, 7
        %v1887 = vsub.s32 %v1884, %v1886
        %v1888 = vrot.slane %v889, %v1887
        %v1890 = vunpack.c.l.s4 1983009808
        %v1891 = vunpack.c.0.s8 %v1890
        %v1892 = vlaneseq
        %v1893 = vshrl.u32 %v1892, 7
        %v1894 = vsub.s32 %v1891, %v1893
        %v1895 = vrot.slane %v1881, %v1894
        %v1896 = vcombine.high %v1888, 0.0
        %v1898 = vunpack.c.l.s4 1934713408
        %v1899 = vunpack.c.0.s8 %v1898
        %v1900 = vlaneseq
        %v1901 = vshrl.u32 %v1900, 7
        %v1902 = vsub.s32 %v1899, %v1901
        %v1903 = vrot.slane %v1888, %v1902
        %v1905 = vunpack.c.l.s4 1934713408
        %v1906 = vunpack.c.0.s8 %v1905
        %v1907 = vlaneseq
        %v1908 = vshrl.u32 %v1907, 7
        %v1909 = vsub.s32 %v1906, %v1908
        %v1910 = vrot.slane %v1896, %v1909
        %v1911 = vcombine.high %v1895, 0.0
        %v1913 = vunpack.c.l.s4 1934713408
        %v1914 = vunpack.c.0.s8 %v1913
        %v1915 = vlaneseq
        %v1916 = vshrl.u32 %v1915, 7
        %v1917 = vsub.s32 %v1914, %v1916
        %v1918 = vrot.slane %v1895, %v1917
        %v1920 = vunpack.c.l.s4 1934713408
        %v1921 = vunpack.c.0.s8 %v1920
        %v1922 = vlaneseq
        %v1923 = vshrl.u32 %v1922, 7
        %v1924 = vsub.s32 %v1921, %v1923
        %v1925 = vrot.slane %v1911, %v1924
        %v1926 = vcombine.high %v1903, 0.0
        %v1927 = vcombine.high %v1910, 0.0
        %v1928 = vcombine.high %v1918, 0.0
        %v1929 = vcombine.high %v1925, 0.0
        %v1930 = vcombine.high %v890, 0.0
        %v1932 = vunpack.c.l.s4 1983009808
        %v1933 = vunpack.c.0.s8 %v1932
        %v1934 = vlaneseq
        %v1935 = vshrl.u32 %v1934, 7
        %v1936 = vsub.s32 %v1933, %v1935
        %v1937 = vrot.slane %v890, %v1936
        %v1939 = vunpack.c.l.s4 1983009808
        %v1940 = vunpack.c.0.s8 %v1939
        %v1941 = vlaneseq
        %v1942 = vshrl.u32 %v1941, 7
        %v1943 = vsub.s32 %v1940, %v1942
        %v1944 = vrot.slane %v1930, %v1943
        %v1945 = vcombine.high %v1937, 0.0
        %v1947 = vunpack.c.l.s4 1934713408
        %v1948 = vunpack.c.0.s8 %v1947
        %v1949 = vlaneseq
        %v1950 = vshrl.u32 %v1949, 7
        %v1951 = vsub.s32 %v1948, %v1950
        %v1952 = vrot.slane %v1937, %v1951
        %v1954 = vunpack.c.l.s4 1934713408
        %v1955 = vunpack.c.0.s8 %v1954
        %v1956 = vlaneseq
        %v1957 = vshrl.u32 %v1956, 7
        %v1958 = vsub.s32 %v1955, %v1957
        %v1959 = vrot.slane %v1945, %v1958
        %v1960 = vcombine.high %v1944, 0.0
        %v1962 = vunpack.c.l.s4 1934713408
        %v1963 = vunpack.c.0.s8 %v1962
        %v1964 = vlaneseq
        %v1965 = vshrl.u32 %v1964, 7
        %v1966 = vsub.s32 %v1963, %v1965
        %v1967 = vrot.slane %v1944, %v1966
        %v1969 = vunpack.c.l.s4 1934713408
        %v1970 = vunpack.c.0.s8 %v1969
        %v1971 = vlaneseq
        %v1972 = vshrl.u32 %v1971, 7
        %v1973 = vsub.s32 %v1970, %v1972
        %v1974 = vrot.slane %v1960, %v1973
        %v1975 = vcombine.high %v1952, 0.0
        %v1976 = vcombine.high %v1959, 0.0
        %v1977 = vcombine.high %v1967, 0.0
        %v1978 = vcombine.high %v1974, 0.0
        %v1979 = vcombine.high %v891, 0.0
        %v1981 = vunpack.c.l.s4 1983009808
        %v1982 = vunpack.c.0.s8 %v1981
        %v1983 = vlaneseq
        %v1984 = vshrl.u32 %v1983, 7
        %v1985 = vsub.s32 %v1982, %v1984
        %v1986 = vrot.slane %v891, %v1985
        %v1988 = vunpack.c.l.s4 1983009808
        %v1989 = vunpack.c.0.s8 %v1988
        %v1990 = vlaneseq
        %v1991 = vshrl.u32 %v1990, 7
        %v1992 = vsub.s32 %v1989, %v1991
        %v1993 = vrot.slane %v1979, %v1992
        %v1994 = vcombine.high %v1986, 0.0
        %v1996 = vunpack.c.l.s4 1934713408
        %v1997 = vunpack.c.0.s8 %v1996
        %v1998 = vlaneseq
        %v1999 = vshrl.u32 %v1998, 7
        %v2000 = vsub.s32 %v1997, %v1999
        %v2001 = vrot.slane %v1986, %v2000
        %v2003 = vunpack.c.l.s4 1934713408
        %v2004 = vunpack.c.0.s8 %v2003
        %v2005 = vlaneseq
        %v2006 = vshrl.u32 %v2005, 7
        %v2007 = vsub.s32 %v2004, %v2006
        %v2008 = vrot.slane %v1994, %v2007
        %v2009 = vcombine.high %v1993, 0.0
        %v2011 = vunpack.c.l.s4 1934713408
        %v2012 = vunpack.c.0.s8 %v2011
        %v2013 = vlaneseq
        %v2014 = vshrl.u32 %v2013, 7
        %v2015 = vsub.s32 %v2012, %v2014
        %v2016 = vrot.slane %v1993, %v2015
        %v2018 = vunpack.c.l.s4 1934713408
        %v2019 = vunpack.c.0.s8 %v2018
        %v2020 = vlaneseq
        %v2021 = vshrl.u32 %v2020, 7
        %v2022 = vsub.s32 %v2019, %v2021
        %v2023 = vrot.slane %v2009, %v2022
        %v2024 = vcombine.high %v2001, 0.0
        %v2025 = vcombine.high %v2008, 0.0
        %v2026 = vcombine.high %v2016, 0.0
        %v2027 = vcombine.high %v2023, 0.0
        %v2028 = vcombine.high %v892, 0.0
        %v2030 = vunpack.c.l.s4 1983009808
        %v2031 = vunpack.c.0.s8 %v2030
        %v2032 = vlaneseq
        %v2033 = vshrl.u32 %v2032, 7
        %v2034 = vsub.s32 %v2031, %v2033
        %v2035 = vrot.slane %v892, %v2034
        %v2037 = vunpack.c.l.s4 1983009808
        %v2038 = vunpack.c.0.s8 %v2037
        %v2039 = vlaneseq
        %v2040 = vshrl.u32 %v2039, 7
        %v2041 = vsub.s32 %v2038, %v2040
        %v2042 = vrot.slane %v2028, %v2041
        %v2043 = vcombine.high %v2035, 0.0
        %v2045 = vunpack.c.l.s4 1934713408
        %v2046 = vunpack.c.0.s8 %v2045
        %v2047 = vlaneseq
        %v2048 = vshrl.u32 %v2047, 7
        %v2049 = vsub.s32 %v2046, %v2048
        %v2050 = vrot.slane %v2035, %v2049
        %v2052 = vunpack.c.l.s4 1934713408
        %v2053 = vunpack.c.0.s8 %v2052
        %v2054 = vlaneseq
        %v2055 = vshrl.u32 %v2054, 7
        %v2056 = vsub.s32 %v2053, %v2055
        %v2057 = vrot.slane %v2043, %v2056
        %v2058 = vcombine.high %v2042, 0.0
        %v2060 = vunpack.c.l.s4 1934713408
        %v2061 = vunpack.c.0.s8 %v2060
        %v2062 = vlaneseq
        %v2063 = vshrl.u32 %v2062, 7
        %v2064 = vsub.s32 %v2061, %v2063
        %v2065 = vrot.slane %v2042, %v2064
        %v2067 = vunpack.c.l.s4 1934713408
        %v2068 = vunpack.c.0.s8 %v2067
        %v2069 = vlaneseq
        %v2070 = vshrl.u32 %v2069, 7
        %v2071 = vsub.s32 %v2068, %v2070
        %v2072 = vrot.slane %v2058, %v2071
        %v2073 = vcombine.high %v2050, 0.0
        %v2074 = vcombine.high %v2057, 0.0
        %v2075 = vcombine.high %v2065, 0.0
        %v2076 = vcombine.high %v2072, 0.0
        %v2077 = vcombine.high %v893, 0.0
        %v2079 = vunpack.c.l.s4 1983009808
        %v2080 = vunpack.c.0.s8 %v2079
        %v2081 = vlaneseq
        %v2082 = vshrl.u32 %v2081, 7
        %v2083 = vsub.s32 %v2080, %v2082
        %v2084 = vrot.slane %v893, %v2083
        %v2086 = vunpack.c.l.s4 1983009808
        %v2087 = vunpack.c.0.s8 %v2086
        %v2088 = vlaneseq
        %v2089 = vshrl.u32 %v2088, 7
        %v2090 = vsub.s32 %v2087, %v2089
        %v2091 = vrot.slane %v2077, %v2090
        %v2092 = vcombine.high %v2084, 0.0
        %v2094 = vunpack.c.l.s4 1934713408
        %v2095 = vunpack.c.0.s8 %v2094
        %v2096 = vlaneseq
        %v2097 = vshrl.u32 %v2096, 7
        %v2098 = vsub.s32 %v2095, %v2097
        %v2099 = vrot.slane %v2084, %v2098
        %v2101 = vunpack.c.l.s4 1934713408
        %v2102 = vunpack.c.0.s8 %v2101
        %v2103 = vlaneseq
        %v2104 = vshrl.u32 %v2103, 7
        %v2105 = vsub.s32 %v2102, %v2104
        %v2106 = vrot.slane %v2092, %v2105
        %v2107 = vcombine.high %v2091, 0.0
        %v2109 = vunpack.c.l.s4 1934713408
        %v2110 = vunpack.c.0.s8 %v2109
        %v2111 = vlaneseq
        %v2112 = vshrl.u32 %v2111, 7
        %v2113 = vsub.s32 %v2110, %v2112
        %v2114 = vrot.slane %v2091, %v2113
        %v2116 = vunpack.c.l.s4 1934713408
        %v2117 = vunpack.c.0.s8 %v2116
        %v2118 = vlaneseq
        %v2119 = vshrl.u32 %v2118, 7
        %v2120 = vsub.s32 %v2117, %v2119
        %v2121 = vrot.slane %v2107, %v2120
        %v2122 = vcombine.high %v2099, 0.0
        %v2123 = vcombine.high %v2106, 0.0
        %v2124 = vcombine.high %v2114, 0.0
        %v2125 = vcombine.high %v2121, 0.0
        %v2126 = vcombine.high %v894, 0.0
        %v2128 = vunpack.c.l.s4 1983009808
        %v2129 = vunpack.c.0.s8 %v2128
        %v2130 = vlaneseq
        %v2131 = vshrl.u32 %v2130, 7
        %v2132 = vsub.s32 %v2129, %v2131
        %v2133 = vrot.slane %v894, %v2132
        %v2135 = vunpack.c.l.s4 1983009808
        %v2136 = vunpack.c.0.s8 %v2135
        %v2137 = vlaneseq
        %v2138 = vshrl.u32 %v2137, 7
        %v2139 = vsub.s32 %v2136, %v2138
        %v2140 = vrot.slane %v2126, %v2139
        %v2141 = vcombine.high %v2133, 0.0
        %v2143 = vunpack.c.l.s4 1934713408
        %v2144 = vunpack.c.0.s8 %v2143
        %v2145 = vlaneseq
        %v2146 = vshrl.u32 %v2145, 7
        %v2147 = vsub.s32 %v2144, %v2146
        %v2148 = vrot.slane %v2133, %v2147
        %v2150 = vunpack.c.l.s4 1934713408
        %v2151 = vunpack.c.0.s8 %v2150
        %v2152 = vlaneseq
        %v2153 = vshrl.u32 %v2152, 7
        %v2154 = vsub.s32 %v2151, %v2153
        %v2155 = vrot.slane %v2141, %v2154
        %v2156 = vcombine.high %v2140, 0.0
        %v2158 = vunpack.c.l.s4 1934713408
        %v2159 = vunpack.c.0.s8 %v2158
        %v2160 = vlaneseq
        %v2161 = vshrl.u32 %v2160, 7
        %v2162 = vsub.s32 %v2159, %v2161
        %v2163 = vrot.slane %v2140, %v2162
        %v2165 = vunpack.c.l.s4 1934713408
        %v2166 = vunpack.c.0.s8 %v2165
        %v2167 = vlaneseq
        %v2168 = vshrl.u32 %v2167, 7
        %v2169 = vsub.s32 %v2166, %v2168
        %v2170 = vrot.slane %v2156, %v2169
        %v2171 = vcombine.high %v2148, 0.0
        %v2172 = vcombine.high %v2155, 0.0
        %v2173 = vcombine.high %v2163, 0.0
        %v2174 = vcombine.high %v2170, 0.0
        %v2175 = vcombine.high %v895, 0.0
        %v2177 = vunpack.c.l.s4 1983009808
        %v2178 = vunpack.c.0.s8 %v2177
        %v2179 = vlaneseq
        %v2180 = vshrl.u32 %v2179, 7
        %v2181 = vsub.s32 %v2178, %v2180
        %v2182 = vrot.slane %v895, %v2181
        %v2184 = vunpack.c.l.s4 1983009808
        %v2185 = vunpack.c.0.s8 %v2184
        %v2186 = vlaneseq
        %v2187 = vshrl.u32 %v2186, 7
        %v2188 = vsub.s32 %v2185, %v2187
        %v2189 = vrot.slane %v2175, %v2188
        %v2190 = vcombine.high %v2182, 0.0
        %v2192 = vunpack.c.l.s4 1934713408
        %v2193 = vunpack.c.0.s8 %v2192
        %v2194 = vlaneseq
        %v2195 = vshrl.u32 %v2194, 7
        %v2196 = vsub.s32 %v2193, %v2195
        %v2197 = vrot.slane %v2182, %v2196
        %v2199 = vunpack.c.l.s4 1934713408
        %v2200 = vunpack.c.0.s8 %v2199
        %v2201 = vlaneseq
        %v2202 = vshrl.u32 %v2201, 7
        %v2203 = vsub.s32 %v2200, %v2202
        %v2204 = vrot.slane %v2190, %v2203
        %v2205 = vcombine.high %v2189, 0.0
        %v2207 = vunpack.c.l.s4 1934713408
        %v2208 = vunpack.c.0.s8 %v2207
        %v2209 = vlaneseq
        %v2210 = vshrl.u32 %v2209, 7
        %v2211 = vsub.s32 %v2208, %v2210
        %v2212 = vrot.slane %v2189, %v2211
        %v2214 = vunpack.c.l.s4 1934713408
        %v2215 = vunpack.c.0.s8 %v2214
        %v2216 = vlaneseq
        %v2217 = vshrl.u32 %v2216, 7
        %v2218 = vsub.s32 %v2215, %v2217
        %v2219 = vrot.slane %v2205, %v2218
        %v2220 = vcombine.high %v2197, 0.0
        %v2221 = vcombine.high %v2204, 0.0
        %v2222 = vcombine.high %v2212, 0.0
        %v2223 = vcombine.high %v2219, 0.0
        %v2224 = vcombine.high %v896, 0.0
        %v2226 = vunpack.c.l.s4 1983009808
        %v2227 = vunpack.c.0.s8 %v2226
        %v2228 = vlaneseq
        %v2229 = vshrl.u32 %v2228, 7
        %v2230 = vsub.s32 %v2227, %v2229
        %v2231 = vrot.slane %v896, %v2230
        %v2233 = vunpack.c.l.s4 1983009808
        %v2234 = vunpack.c.0.s8 %v2233
        %v2235 = vlaneseq
        %v2236 = vshrl.u32 %v2235, 7
        %v2237 = vsub.s32 %v2234, %v2236
        %v2238 = vrot.slane %v2224, %v2237
        %v2239 = vcombine.high %v2231, 0.0
        %v2241 = vunpack.c.l.s4 1934713408
        %v2242 = vunpack.c.0.s8 %v2241
        %v2243 = vlaneseq
        %v2244 = vshrl.u32 %v2243, 7
        %v2245 = vsub.s32 %v2242, %v2244
        %v2246 = vrot.slane %v2231, %v2245
        %v2248 = vunpack.c.l.s4 1934713408
        %v2249 = vunpack.c.0.s8 %v2248
        %v2250 = vlaneseq
        %v2251 = vshrl.u32 %v2250, 7
        %v2252 = vsub.s32 %v2249, %v2251
        %v2253 = vrot.slane %v2239, %v2252
        %v2254 = vcombine.high %v2238, 0.0
        %v2256 = vunpack.c.l.s4 1934713408
        %v2257 = vunpack.c.0.s8 %v2256
        %v2258 = vlaneseq
        %v2259 = vshrl.u32 %v2258, 7
        %v2260 = vsub.s32 %v2257, %v2259
        %v2261 = vrot.slane %v2238, %v2260
        %v2263 = vunpack.c.l.s4 1934713408
        %v2264 = vunpack.c.0.s8 %v2263
        %v2265 = vlaneseq
        %v2266 = vshrl.u32 %v2265, 7
        %v2267 = vsub.s32 %v2264, %v2266
        %v2268 = vrot.slane %v2254, %v2267
        %v2269 = vcombine.high %v2246, 0.0
        %v2270 = vcombine.high %v2253, 0.0
        %v2271 = vcombine.high %v2261, 0.0
        %v2272 = vcombine.high %v2268, 0.0
        %v2273 = vcombine.high %v897, 0.0
        %v2275 = vunpack.c.l.s4 1983009808
        %v2276 = vunpack.c.0.s8 %v2275
        %v2277 = vlaneseq
        %v2278 = vshrl.u32 %v2277, 7
        %v2279 = vsub.s32 %v2276, %v2278
        %v2280 = vrot.slane %v897, %v2279
        %v2282 = vunpack.c.l.s4 1983009808
        %v2283 = vunpack.c.0.s8 %v2282
        %v2284 = vlaneseq
        %v2285 = vshrl.u32 %v2284, 7
        %v2286 = vsub.s32 %v2283, %v2285
        %v2287 = vrot.slane %v2273, %v2286
        %v2288 = vcombine.high %v2280, 0.0
        %v2290 = vunpack.c.l.s4 1934713408
        %v2291 = vunpack.c.0.s8 %v2290
        %v2292 = vlaneseq
        %v2293 = vshrl.u32 %v2292, 7
        %v2294 = vsub.s32 %v2291, %v2293
        %v2295 = vrot.slane %v2280, %v2294
        %v2297 = vunpack.c.l.s4 1934713408
        %v2298 = vunpack.c.0.s8 %v2297
        %v2299 = vlaneseq
        %v2300 = vshrl.u32 %v2299, 7
        %v2301 = vsub.s32 %v2298, %v2300
        %v2302 = vrot.slane %v2288, %v2301
        %v2303 = vcombine.high %v2287, 0.0
        %v2305 = vunpack.c.l.s4 1934713408
        %v2306 = vunpack.c.0.s8 %v2305
        %v2307 = vlaneseq
        %v2308 = vshrl.u32 %v2307, 7
        %v2309 = vsub.s32 %v2306, %v2308
        %v2310 = vrot.slane %v2287, %v2309
        %v2312 = vunpack.c.l.s4 1934713408
        %v2313 = vunpack.c.0.s8 %v2312
        %v2314 = vlaneseq
        %v2315 = vshrl.u32 %v2314, 7
        %v2316 = vsub.s32 %v2313, %v2315
        %v2317 = vrot.slane %v2303, %v2316
        %v2318 = vcombine.high %v2295, 0.0
        %v2319 = vcombine.high %v2302, 0.0
        %v2320 = vcombine.high %v2310, 0.0
        %v2321 = vcombine.high %v2317, 0.0
        %v2322 = vcombine.high %v898, 0.0
        %v2324 = vunpack.c.l.s4 1983009808
        %v2325 = vunpack.c.0.s8 %v2324
        %v2326 = vlaneseq
        %v2327 = vshrl.u32 %v2326, 7
        %v2328 = vsub.s32 %v2325, %v2327
        %v2329 = vrot.slane %v898, %v2328
        %v2331 = vunpack.c.l.s4 1983009808
        %v2332 = vunpack.c.0.s8 %v2331
        %v2333 = vlaneseq
        %v2334 = vshrl.u32 %v2333, 7
        %v2335 = vsub.s32 %v2332, %v2334
        %v2336 = vrot.slane %v2322, %v2335
        %v2337 = vcombine.high %v2329, 0.0
        %v2339 = vunpack.c.l.s4 1934713408
        %v2340 = vunpack.c.0.s8 %v2339
        %v2341 = vlaneseq
        %v2342 = vshrl.u32 %v2341, 7
        %v2343 = vsub.s32 %v2340, %v2342
        %v2344 = vrot.slane %v2329, %v2343
        %v2346 = vunpack.c.l.s4 1934713408
        %v2347 = vunpack.c.0.s8 %v2346
        %v2348 = vlaneseq
        %v2349 = vshrl.u32 %v2348, 7
        %v2350 = vsub.s32 %v2347, %v2349
        %v2351 = vrot.slane %v2337, %v2350
        %v2352 = vcombine.high %v2336, 0.0
        %v2354 = vunpack.c.l.s4 1934713408
        %v2355 = vunpack.c.0.s8 %v2354
        %v2356 = vlaneseq
        %v2357 = vshrl.u32 %v2356, 7
        %v2358 = vsub.s32 %v2355, %v2357
        %v2359 = vrot.slane %v2336, %v2358
        %v2361 = vunpack.c.l.s4 1934713408
        %v2362 = vunpack.c.0.s8 %v2361
        %v2363 = vlaneseq
        %v2364 = vshrl.u32 %v2363, 7
        %v2365 = vsub.s32 %v2362, %v2364
        %v2366 = vrot.slane %v2352, %v2365
        %v2367 = vcombine.high %v2344, 0.0
        %v2368 = vcombine.high %v2351, 0.0
        %v2369 = vcombine.high %v2359, 0.0
        %v2370 = vcombine.high %v2366, 0.0
        %v2371 = vcombine.high %v899, 0.0
        %v2373 = vunpack.c.l.s4 1983009808
        %v2374 = vunpack.c.0.s8 %v2373
        %v2375 = vlaneseq
        %v2376 = vshrl.u32 %v2375, 7
        %v2377 = vsub.s32 %v2374, %v2376
        %v2378 = vrot.slane %v899, %v2377
        %v2380 = vunpack.c.l.s4 1983009808
        %v2381 = vunpack.c.0.s8 %v2380
        %v2382 = vlaneseq
        %v2383 = vshrl.u32 %v2382, 7
        %v2384 = vsub.s32 %v2381, %v2383
        %v2385 = vrot.slane %v2371, %v2384
        %v2386 = vcombine.high %v2378, 0.0
        %v2388 = vunpack.c.l.s4 1934713408
        %v2389 = vunpack.c.0.s8 %v2388
        %v2390 = vlaneseq
        %v2391 = vshrl.u32 %v2390, 7
        %v2392 = vsub.s32 %v2389, %v2391
        %v2393 = vrot.slane %v2378, %v2392
        %v2395 = vunpack.c.l.s4 1934713408
        %v2396 = vunpack.c.0.s8 %v2395
        %v2397 = vlaneseq
        %v2398 = vshrl.u32 %v2397, 7
        %v2399 = vsub.s32 %v2396, %v2398
        %v2400 = vrot.slane %v2386, %v2399
        %v2401 = vcombine.high %v2385, 0.0
        %v2403 = vunpack.c.l.s4 1934713408
        %v2404 = vunpack.c.0.s8 %v2403
        %v2405 = vlaneseq
        %v2406 = vshrl.u32 %v2405, 7
        %v2407 = vsub.s32 %v2404, %v2406
        %v2408 = vrot.slane %v2385, %v2407
        %v2410 = vunpack.c.l.s4 1934713408
        %v2411 = vunpack.c.0.s8 %v2410
        %v2412 = vlaneseq
        %v2413 = vshrl.u32 %v2412, 7
        %v2414 = vsub.s32 %v2411, %v2413
        %v2415 = vrot.slane %v2401, %v2414
        %v2416 = vcombine.high %v2393, 0.0
        %v2417 = vcombine.high %v2400, 0.0
        %v2418 = vcombine.high %v2408, 0.0
        %v2419 = vcombine.high %v2415, 0.0
        %v2420 = vcombine.high %v900, 0.0
        %v2422 = vunpack.c.l.s4 1983009808
        %v2423 = vunpack.c.0.s8 %v2422
        %v2424 = vlaneseq
        %v2425 = vshrl.u32 %v2424, 7
        %v2426 = vsub.s32 %v2423, %v2425
        %v2427 = vrot.slane %v900, %v2426
        %v2429 = vunpack.c.l.s4 1983009808
        %v2430 = vunpack.c.0.s8 %v2429
        %v2431 = vlaneseq
        %v2432 = vshrl.u32 %v2431, 7
        %v2433 = vsub.s32 %v2430, %v2432
        %v2434 = vrot.slane %v2420, %v2433
        %v2435 = vcombine.high %v2427, 0.0
        %v2437 = vunpack.c.l.s4 1934713408
        %v2438 = vunpack.c.0.s8 %v2437
        %v2439 = vlaneseq
        %v2440 = vshrl.u32 %v2439, 7
        %v2441 = vsub.s32 %v2438, %v2440
        %v2442 = vrot.slane %v2427, %v2441
        %v2444 = vunpack.c.l.s4 1934713408
        %v2445 = vunpack.c.0.s8 %v2444
        %v2446 = vlaneseq
        %v2447 = vshrl.u32 %v2446, 7
        %v2448 = vsub.s32 %v2445, %v2447
        %v2449 = vrot.slane %v2435, %v2448
        %v2450 = vcombine.high %v2434, 0.0
        %v2452 = vunpack.c.l.s4 1934713408
        %v2453 = vunpack.c.0.s8 %v2452
        %v2454 = vlaneseq
        %v2455 = vshrl.u32 %v2454, 7
        %v2456 = vsub.s32 %v2453, %v2455
        %v2457 = vrot.slane %v2434, %v2456
        %v2459 = vunpack.c.l.s4 1934713408
        %v2460 = vunpack.c.0.s8 %v2459
        %v2461 = vlaneseq
        %v2462 = vshrl.u32 %v2461, 7
        %v2463 = vsub.s32 %v2460, %v2462
        %v2464 = vrot.slane %v2450, %v2463
        %v2465 = vcombine.high %v2442, 0.0
        %v2466 = vcombine.high %v2449, 0.0
        %v2467 = vcombine.high %v2457, 0.0
        %v2468 = vcombine.high %v2464, 0.0
        %v2469 = vcombine.high %v901, 0.0
        %v2471 = vunpack.c.l.s4 1983009808
        %v2472 = vunpack.c.0.s8 %v2471
        %v2473 = vlaneseq
        %v2474 = vshrl.u32 %v2473, 7
        %v2475 = vsub.s32 %v2472, %v2474
        %v2476 = vrot.slane %v901, %v2475
        %v2478 = vunpack.c.l.s4 1983009808
        %v2479 = vunpack.c.0.s8 %v2478
        %v2480 = vlaneseq
        %v2481 = vshrl.u32 %v2480, 7
        %v2482 = vsub.s32 %v2479, %v2481
        %v2483 = vrot.slane %v2469, %v2482
        %v2484 = vcombine.high %v2476, 0.0
        %v2486 = vunpack.c.l.s4 1934713408
        %v2487 = vunpack.c.0.s8 %v2486
        %v2488 = vlaneseq
        %v2489 = vshrl.u32 %v2488, 7
        %v2490 = vsub.s32 %v2487, %v2489
        %v2491 = vrot.slane %v2476, %v2490
        %v2493 = vunpack.c.l.s4 1934713408
        %v2494 = vunpack.c.0.s8 %v2493
        %v2495 = vlaneseq
        %v2496 = vshrl.u32 %v2495, 7
        %v2497 = vsub.s32 %v2494, %v2496
        %v2498 = vrot.slane %v2484, %v2497
        %v2499 = vcombine.high %v2483, 0.0
        %v2501 = vunpack.c.l.s4 1934713408
        %v2502 = vunpack.c.0.s8 %v2501
        %v2503 = vlaneseq
        %v2504 = vshrl.u32 %v2503, 7
        %v2505 = vsub.s32 %v2502, %v2504
        %v2506 = vrot.slane %v2483, %v2505
        %v2508 = vunpack.c.l.s4 1934713408
        %v2509 = vunpack.c.0.s8 %v2508
        %v2510 = vlaneseq
        %v2511 = vshrl.u32 %v2510, 7
        %v2512 = vsub.s32 %v2509, %v2511
        %v2513 = vrot.slane %v2499, %v2512
        %v2514 = vcombine.high %v2491, 0.0
        %v2515 = vcombine.high %v2498, 0.0
        %v2516 = vcombine.high %v2506, 0.0
        %v2517 = vcombine.high %v2513, 0.0
        %v2518 = vcombine.high %v902, 0.0
        %v2520 = vunpack.c.l.s4 1983009808
        %v2521 = vunpack.c.0.s8 %v2520
        %v2522 = vlaneseq
        %v2523 = vshrl.u32 %v2522, 7
        %v2524 = vsub.s32 %v2521, %v2523
        %v2525 = vrot.slane %v902, %v2524
        %v2527 = vunpack.c.l.s4 1983009808
        %v2528 = vunpack.c.0.s8 %v2527
        %v2529 = vlaneseq
        %v2530 = vshrl.u32 %v2529, 7
        %v2531 = vsub.s32 %v2528, %v2530
        %v2532 = vrot.slane %v2518, %v2531
        %v2533 = vcombine.high %v2525, 0.0
        %v2535 = vunpack.c.l.s4 1934713408
        %v2536 = vunpack.c.0.s8 %v2535
        %v2537 = vlaneseq
        %v2538 = vshrl.u32 %v2537, 7
        %v2539 = vsub.s32 %v2536, %v2538
        %v2540 = vrot.slane %v2525, %v2539
        %v2542 = vunpack.c.l.s4 1934713408
        %v2543 = vunpack.c.0.s8 %v2542
        %v2544 = vlaneseq
        %v2545 = vshrl.u32 %v2544, 7
        %v2546 = vsub.s32 %v2543, %v2545
        %v2547 = vrot.slane %v2533, %v2546
        %v2548 = vcombine.high %v2532, 0.0
        %v2550 = vunpack.c.l.s4 1934713408
        %v2551 = vunpack.c.0.s8 %v2550
        %v2552 = vlaneseq
        %v2553 = vshrl.u32 %v2552, 7
        %v2554 = vsub.s32 %v2551, %v2553
        %v2555 = vrot.slane %v2532, %v2554
        %v2557 = vunpack.c.l.s4 1934713408
        %v2558 = vunpack.c.0.s8 %v2557
        %v2559 = vlaneseq
        %v2560 = vshrl.u32 %v2559, 7
        %v2561 = vsub.s32 %v2558, %v2560
        %v2562 = vrot.slane %v2548, %v2561
        %v2563 = vcombine.high %v2540, 0.0
        %v2564 = vcombine.high %v2547, 0.0
        %v2565 = vcombine.high %v2555, 0.0
        %v2566 = vcombine.high %v2562, 0.0
        %v2567 = vcombine.high %v903, 0.0
        %v2569 = vunpack.c.l.s4 1983009808
        %v2570 = vunpack.c.0.s8 %v2569
        %v2571 = vlaneseq
        %v2572 = vshrl.u32 %v2571, 7
        %v2573 = vsub.s32 %v2570, %v2572
        %v2574 = vrot.slane %v903, %v2573
        %v2576 = vunpack.c.l.s4 1983009808
        %v2577 = vunpack.c.0.s8 %v2576
        %v2578 = vlaneseq
        %v2579 = vshrl.u32 %v2578, 7
        %v2580 = vsub.s32 %v2577, %v2579
        %v2581 = vrot.slane %v2567, %v2580
        %v2582 = vcombine.high %v2574, 0.0
        %v2584 = vunpack.c.l.s4 1934713408
        %v2585 = vunpack.c.0.s8 %v2584
        %v2586 = vlaneseq
        %v2587 = vshrl.u32 %v2586, 7
        %v2588 = vsub.s32 %v2585, %v2587
        %v2589 = vrot.slane %v2574, %v2588
        %v2591 = vunpack.c.l.s4 1934713408
        %v2592 = vunpack.c.0.s8 %v2591
        %v2593 = vlaneseq
        %v2594 = vshrl.u32 %v2593, 7
        %v2595 = vsub.s32 %v2592, %v2594
        %v2596 = vrot.slane %v2582, %v2595
        %v2597 = vcombine.high %v2581, 0.0
        %v2599 = vunpack.c.l.s4 1934713408
        %v2600 = vunpack.c.0.s8 %v2599
        %v2601 = vlaneseq
        %v2602 = vshrl.u32 %v2601, 7
        %v2603 = vsub.s32 %v2600, %v2602
        %v2604 = vrot.slane %v2581, %v2603
        %v2606 = vunpack.c.l.s4 1934713408
        %v2607 = vunpack.c.0.s8 %v2606
        %v2608 = vlaneseq
        %v2609 = vshrl.u32 %v2608, 7
        %v2610 = vsub.s32 %v2607, %v2609
        %v2611 = vrot.slane %v2597, %v2610
        %v2612 = vcombine.high %v2589, 0.0
        %v2613 = vcombine.high %v2596, 0.0
        %v2614 = vcombine.high %v2604, 0.0
        %v2615 = vcombine.high %v2611, 0.0
        %v2616 = vcombine.high %v904, 0.0
        %v2618 = vunpack.c.l.s4 1983009808
        %v2619 = vunpack.c.0.s8 %v2618
        %v2620 = vlaneseq
        %v2621 = vshrl.u32 %v2620, 7
        %v2622 = vsub.s32 %v2619, %v2621
        %v2623 = vrot.slane %v904, %v2622
        %v2625 = vunpack.c.l.s4 1983009808
        %v2626 = vunpack.c.0.s8 %v2625
        %v2627 = vlaneseq
        %v2628 = vshrl.u32 %v2627, 7
        %v2629 = vsub.s32 %v2626, %v2628
        %v2630 = vrot.slane %v2616, %v2629
        %v2631 = vcombine.high %v2623, 0.0
        %v2633 = vunpack.c.l.s4 1934713408
        %v2634 = vunpack.c.0.s8 %v2633
        %v2635 = vlaneseq
        %v2636 = vshrl.u32 %v2635, 7
        %v2637 = vsub.s32 %v2634, %v2636
        %v2638 = vrot.slane %v2623, %v2637
        %v2640 = vunpack.c.l.s4 1934713408
        %v2641 = vunpack.c.0.s8 %v2640
        %v2642 = vlaneseq
        %v2643 = vshrl.u32 %v2642, 7
        %v2644 = vsub.s32 %v2641, %v2643
        %v2645 = vrot.slane %v2631, %v2644
        %v2646 = vcombine.high %v2630, 0.0
        %v2648 = vunpack.c.l.s4 1934713408
        %v2649 = vunpack.c.0.s8 %v2648
        %v2650 = vlaneseq
        %v2651 = vshrl.u32 %v2650, 7
        %v2652 = vsub.s32 %v2649, %v2651
        %v2653 = vrot.slane %v2630, %v2652
        %v2655 = vunpack.c.l.s4 1934713408
        %v2656 = vunpack.c.0.s8 %v2655
        %v2657 = vlaneseq
        %v2658 = vshrl.u32 %v2657, 7
        %v2659 = vsub.s32 %v2656, %v2658
        %v2660 = vrot.slane %v2646, %v2659
        %v2661 = vcombine.high %v2638, 0.0
        %v2662 = vcombine.high %v2645, 0.0
        %v2663 = vcombine.high %v2653, 0.0
        %v2664 = vcombine.high %v2660, 0.0
        %v2665 = vcombine.high %v905, 0.0
        %v2667 = vunpack.c.l.s4 1983009808
        %v2668 = vunpack.c.0.s8 %v2667
        %v2669 = vlaneseq
        %v2670 = vshrl.u32 %v2669, 7
        %v2671 = vsub.s32 %v2668, %v2670
        %v2672 = vrot.slane %v905, %v2671
        %v2674 = vunpack.c.l.s4 1983009808
        %v2675 = vunpack.c.0.s8 %v2674
        %v2676 = vlaneseq
        %v2677 = vshrl.u32 %v2676, 7
        %v2678 = vsub.s32 %v2675, %v2677
        %v2679 = vrot.slane %v2665, %v2678
        %v2680 = vcombine.high %v2672, 0.0
        %v2682 = vunpack.c.l.s4 1934713408
        %v2683 = vunpack.c.0.s8 %v2682
        %v2684 = vlaneseq
        %v2685 = vshrl.u32 %v2684, 7
        %v2686 = vsub.s32 %v2683, %v2685
        %v2687 = vrot.slane %v2672, %v2686
        %v2689 = vunpack.c.l.s4 1934713408
        %v2690 = vunpack.c.0.s8 %v2689
        %v2691 = vlaneseq
        %v2692 = vshrl.u32 %v2691, 7
        %v2693 = vsub.s32 %v2690, %v2692
        %v2694 = vrot.slane %v2680, %v2693
        %v2695 = vcombine.high %v2679, 0.0
        %v2697 = vunpack.c.l.s4 1934713408
        %v2698 = vunpack.c.0.s8 %v2697
        %v2699 = vlaneseq
        %v2700 = vshrl.u32 %v2699, 7
        %v2701 = vsub.s32 %v2698, %v2700
        %v2702 = vrot.slane %v2679, %v2701
        %v2704 = vunpack.c.l.s4 1934713408
        %v2705 = vunpack.c.0.s8 %v2704
        %v2706 = vlaneseq
        %v2707 = vshrl.u32 %v2706, 7
        %v2708 = vsub.s32 %v2705, %v2707
        %v2709 = vrot.slane %v2695, %v2708
        %v2710 = vcombine.high %v2687, 0.0
        %v2711 = vcombine.high %v2694, 0.0
        %v2712 = vcombine.high %v2702, 0.0
        %v2713 = vcombine.high %v2709, 0.0
        %v2714 = vcombine.high %v906, 0.0
        %v2716 = vunpack.c.l.s4 1983009808
        %v2717 = vunpack.c.0.s8 %v2716
        %v2718 = vlaneseq
        %v2719 = vshrl.u32 %v2718, 7
        %v2720 = vsub.s32 %v2717, %v2719
        %v2721 = vrot.slane %v906, %v2720
        %v2723 = vunpack.c.l.s4 1983009808
        %v2724 = vunpack.c.0.s8 %v2723
        %v2725 = vlaneseq
        %v2726 = vshrl.u32 %v2725, 7
        %v2727 = vsub.s32 %v2724, %v2726
        %v2728 = vrot.slane %v2714, %v2727
        %v2729 = vcombine.high %v2721, 0.0
        %v2731 = vunpack.c.l.s4 1934713408
        %v2732 = vunpack.c.0.s8 %v2731
        %v2733 = vlaneseq
        %v2734 = vshrl.u32 %v2733, 7
        %v2735 = vsub.s32 %v2732, %v2734
        %v2736 = vrot.slane %v2721, %v2735
        %v2738 = vunpack.c.l.s4 1934713408
        %v2739 = vunpack.c.0.s8 %v2738
        %v2740 = vlaneseq
        %v2741 = vshrl.u32 %v2740, 7
        %v2742 = vsub.s32 %v2739, %v2741
        %v2743 = vrot.slane %v2729, %v2742
        %v2744 = vcombine.high %v2728, 0.0
        %v2746 = vunpack.c.l.s4 1934713408
        %v2747 = vunpack.c.0.s8 %v2746
        %v2748 = vlaneseq
        %v2749 = vshrl.u32 %v2748, 7
        %v2750 = vsub.s32 %v2747, %v2749
        %v2751 = vrot.slane %v2728, %v2750
        %v2753 = vunpack.c.l.s4 1934713408
        %v2754 = vunpack.c.0.s8 %v2753
        %v2755 = vlaneseq
        %v2756 = vshrl.u32 %v2755, 7
        %v2757 = vsub.s32 %v2754, %v2756
        %v2758 = vrot.slane %v2744, %v2757
        %v2759 = vcombine.high %v2736, 0.0
        %v2760 = vcombine.high %v2743, 0.0
        %v2761 = vcombine.high %v2751, 0.0
        %v2762 = vcombine.high %v2758, 0.0
        %v2763 = vcombine.high %v907, 0.0
        %v2765 = vunpack.c.l.s4 1983009808
        %v2766 = vunpack.c.0.s8 %v2765
        %v2767 = vlaneseq
        %v2768 = vshrl.u32 %v2767, 7
        %v2769 = vsub.s32 %v2766, %v2768
        %v2770 = vrot.slane %v907, %v2769
        %v2772 = vunpack.c.l.s4 1983009808
        %v2773 = vunpack.c.0.s8 %v2772
        %v2774 = vlaneseq
        %v2775 = vshrl.u32 %v2774, 7
        %v2776 = vsub.s32 %v2773, %v2775
        %v2777 = vrot.slane %v2763, %v2776
        %v2778 = vcombine.high %v2770, 0.0
        %v2780 = vunpack.c.l.s4 1934713408
        %v2781 = vunpack.c.0.s8 %v2780
        %v2782 = vlaneseq
        %v2783 = vshrl.u32 %v2782, 7
        %v2784 = vsub.s32 %v2781, %v2783
        %v2785 = vrot.slane %v2770, %v2784
        %v2787 = vunpack.c.l.s4 1934713408
        %v2788 = vunpack.c.0.s8 %v2787
        %v2789 = vlaneseq
        %v2790 = vshrl.u32 %v2789, 7
        %v2791 = vsub.s32 %v2788, %v2790
        %v2792 = vrot.slane %v2778, %v2791
        %v2793 = vcombine.high %v2777, 0.0
        %v2795 = vunpack.c.l.s4 1934713408
        %v2796 = vunpack.c.0.s8 %v2795
        %v2797 = vlaneseq
        %v2798 = vshrl.u32 %v2797, 7
        %v2799 = vsub.s32 %v2796, %v2798
        %v2800 = vrot.slane %v2777, %v2799
        %v2802 = vunpack.c.l.s4 1934713408
        %v2803 = vunpack.c.0.s8 %v2802
        %v2804 = vlaneseq
        %v2805 = vshrl.u32 %v2804, 7
        %v2806 = vsub.s32 %v2803, %v2805
        %v2807 = vrot.slane %v2793, %v2806
        %v2808 = vcombine.high %v2785, 0.0
        %v2809 = vcombine.high %v2792, 0.0
        %v2810 = vcombine.high %v2800, 0.0
        %v2811 = vcombine.high %v2807, 0.0
        %v2812 = vcombine.high %v908, 0.0
        %v2814 = vunpack.c.l.s4 1983009808
        %v2815 = vunpack.c.0.s8 %v2814
        %v2816 = vlaneseq
        %v2817 = vshrl.u32 %v2816, 7
        %v2818 = vsub.s32 %v2815, %v2817
        %v2819 = vrot.slane %v908, %v2818
        %v2821 = vunpack.c.l.s4 1983009808
        %v2822 = vunpack.c.0.s8 %v2821
        %v2823 = vlaneseq
        %v2824 = vshrl.u32 %v2823, 7
        %v2825 = vsub.s32 %v2822, %v2824
        %v2826 = vrot.slane %v2812, %v2825
        %v2827 = vcombine.high %v2819, 0.0
        %v2829 = vunpack.c.l.s4 1934713408
        %v2830 = vunpack.c.0.s8 %v2829
        %v2831 = vlaneseq
        %v2832 = vshrl.u32 %v2831, 7
        %v2833 = vsub.s32 %v2830, %v2832
        %v2834 = vrot.slane %v2819, %v2833
        %v2836 = vunpack.c.l.s4 1934713408
        %v2837 = vunpack.c.0.s8 %v2836
        %v2838 = vlaneseq
        %v2839 = vshrl.u32 %v2838, 7
        %v2840 = vsub.s32 %v2837, %v2839
        %v2841 = vrot.slane %v2827, %v2840
        %v2842 = vcombine.high %v2826, 0.0
        %v2844 = vunpack.c.l.s4 1934713408
        %v2845 = vunpack.c.0.s8 %v2844
        %v2846 = vlaneseq
        %v2847 = vshrl.u32 %v2846, 7
        %v2848 = vsub.s32 %v2845, %v2847
        %v2849 = vrot.slane %v2826, %v2848
        %v2851 = vunpack.c.l.s4 1934713408
        %v2852 = vunpack.c.0.s8 %v2851
        %v2853 = vlaneseq
        %v2854 = vshrl.u32 %v2853, 7
        %v2855 = vsub.s32 %v2852, %v2854
        %v2856 = vrot.slane %v2842, %v2855
        %v2857 = vcombine.high %v2834, 0.0
        %v2858 = vcombine.high %v2841, 0.0
        %v2859 = vcombine.high %v2849, 0.0
        %v2860 = vcombine.high %v2856, 0.0
        %v2861 = vcombine.high %v909, 0.0
        %v2863 = vunpack.c.l.s4 1983009808
        %v2864 = vunpack.c.0.s8 %v2863
        %v2865 = vlaneseq
        %v2866 = vshrl.u32 %v2865, 7
        %v2867 = vsub.s32 %v2864, %v2866
        %v2868 = vrot.slane %v909, %v2867
        %v2870 = vunpack.c.l.s4 1983009808
        %v2871 = vunpack.c.0.s8 %v2870
        %v2872 = vlaneseq
        %v2873 = vshrl.u32 %v2872, 7
        %v2874 = vsub.s32 %v2871, %v2873
        %v2875 = vrot.slane %v2861, %v2874
        %v2876 = vcombine.high %v2868, 0.0
        %v2878 = vunpack.c.l.s4 1934713408
        %v2879 = vunpack.c.0.s8 %v2878
        %v2880 = vlaneseq
        %v2881 = vshrl.u32 %v2880, 7
        %v2882 = vsub.s32 %v2879, %v2881
        %v2883 = vrot.slane %v2868, %v2882
        %v2885 = vunpack.c.l.s4 1934713408
        %v2886 = vunpack.c.0.s8 %v2885
        %v2887 = vlaneseq
        %v2888 = vshrl.u32 %v2887, 7
        %v2889 = vsub.s32 %v2886, %v2888
        %v2890 = vrot.slane %v2876, %v2889
        %v2891 = vcombine.high %v2875, 0.0
        %v2893 = vunpack.c.l.s4 1934713408
        %v2894 = vunpack.c.0.s8 %v2893
        %v2895 = vlaneseq
        %v2896 = vshrl.u32 %v2895, 7
        %v2897 = vsub.s32 %v2894, %v2896
        %v2898 = vrot.slane %v2875, %v2897
        %v2900 = vunpack.c.l.s4 1934713408
        %v2901 = vunpack.c.0.s8 %v2900
        %v2902 = vlaneseq
        %v2903 = vshrl.u32 %v2902, 7
        %v2904 = vsub.s32 %v2901, %v2903
        %v2905 = vrot.slane %v2891, %v2904
        %v2906 = vcombine.high %v2883, 0.0
        %v2907 = vcombine.high %v2890, 0.0
        %v2908 = vcombine.high %v2898, 0.0
        %v2909 = vcombine.high %v2905, 0.0
        %v2910 = vcombine.high %v910, 0.0
        %v2912 = vunpack.c.l.s4 1983009808
        %v2913 = vunpack.c.0.s8 %v2912
        %v2914 = vlaneseq
        %v2915 = vshrl.u32 %v2914, 7
        %v2916 = vsub.s32 %v2913, %v2915
        %v2917 = vrot.slane %v910, %v2916
        %v2919 = vunpack.c.l.s4 1983009808
        %v2920 = vunpack.c.0.s8 %v2919
        %v2921 = vlaneseq
        %v2922 = vshrl.u32 %v2921, 7
        %v2923 = vsub.s32 %v2920, %v2922
        %v2924 = vrot.slane %v2910, %v2923
        %v2925 = vcombine.high %v2917, 0.0
        %v2927 = vunpack.c.l.s4 1934713408
        %v2928 = vunpack.c.0.s8 %v2927
        %v2929 = vlaneseq
        %v2930 = vshrl.u32 %v2929, 7
        %v2931 = vsub.s32 %v2928, %v2930
        %v2932 = vrot.slane %v2917, %v2931
        %v2934 = vunpack.c.l.s4 1934713408
        %v2935 = vunpack.c.0.s8 %v2934
        %v2936 = vlaneseq
        %v2937 = vshrl.u32 %v2936, 7
        %v2938 = vsub.s32 %v2935, %v2937
        %v2939 = vrot.slane %v2925, %v2938
        %v2940 = vcombine.high %v2924, 0.0
        %v2942 = vunpack.c.l.s4 1934713408
        %v2943 = vunpack.c.0.s8 %v2942
        %v2944 = vlaneseq
        %v2945 = vshrl.u32 %v2944, 7
        %v2946 = vsub.s32 %v2943, %v2945
        %v2947 = vrot.slane %v2924, %v2946
        %v2949 = vunpack.c.l.s4 1934713408
        %v2950 = vunpack.c.0.s8 %v2949
        %v2951 = vlaneseq
        %v2952 = vshrl.u32 %v2951, 7
        %v2953 = vsub.s32 %v2950, %v2952
        %v2954 = vrot.slane %v2940, %v2953
        %v2955 = vcombine.high %v2932, 0.0
        %v2956 = vcombine.high %v2939, 0.0
        %v2957 = vcombine.high %v2947, 0.0
        %v2958 = vcombine.high %v2954, 0.0
        %v2959 = vcombine.high %v911, 0.0
        %v2961 = vunpack.c.l.s4 1983009808
        %v2962 = vunpack.c.0.s8 %v2961
        %v2963 = vlaneseq
        %v2964 = vshrl.u32 %v2963, 7
        %v2965 = vsub.s32 %v2962, %v2964
        %v2966 = vrot.slane %v911, %v2965
        %v2968 = vunpack.c.l.s4 1983009808
        %v2969 = vunpack.c.0.s8 %v2968
        %v2970 = vlaneseq
        %v2971 = vshrl.u32 %v2970, 7
        %v2972 = vsub.s32 %v2969, %v2971
        %v2973 = vrot.slane %v2959, %v2972
        %v2974 = vcombine.high %v2966, 0.0
        %v2976 = vunpack.c.l.s4 1934713408
        %v2977 = vunpack.c.0.s8 %v2976
        %v2978 = vlaneseq
        %v2979 = vshrl.u32 %v2978, 7
        %v2980 = vsub.s32 %v2977, %v2979
        %v2981 = vrot.slane %v2966, %v2980
        %v2983 = vunpack.c.l.s4 1934713408
        %v2984 = vunpack.c.0.s8 %v2983
        %v2985 = vlaneseq
        %v2986 = vshrl.u32 %v2985, 7
        %v2987 = vsub.s32 %v2984, %v2986
        %v2988 = vrot.slane %v2974, %v2987
        %v2989 = vcombine.high %v2973, 0.0
        %v2991 = vunpack.c.l.s4 1934713408
        %v2992 = vunpack.c.0.s8 %v2991
        %v2993 = vlaneseq
        %v2994 = vshrl.u32 %v2993, 7
        %v2995 = vsub.s32 %v2992, %v2994
        %v2996 = vrot.slane %v2973, %v2995
        %v2998 = vunpack.c.l.s4 1934713408
        %v2999 = vunpack.c.0.s8 %v2998
        %v3000 = vlaneseq
        %v3001 = vshrl.u32 %v3000, 7
        %v3002 = vsub.s32 %v2999, %v3001
        %v3003 = vrot.slane %v2989, %v3002
        %v3004 = vcombine.high %v2981, 0.0
        %v3005 = vcombine.high %v2988, 0.0
        %v3006 = vcombine.high %v2996, 0.0
        %v3007 = vcombine.high %v3003, 0.0
        %v3008 = vcombine.high %v912, 0.0
        %v3010 = vunpack.c.l.s4 1983009808
        %v3011 = vunpack.c.0.s8 %v3010
        %v3012 = vlaneseq
        %v3013 = vshrl.u32 %v3012, 7
        %v3014 = vsub.s32 %v3011, %v3013
        %v3015 = vrot.slane %v912, %v3014
        %v3017 = vunpack.c.l.s4 1983009808
        %v3018 = vunpack.c.0.s8 %v3017
        %v3019 = vlaneseq
        %v3020 = vshrl.u32 %v3019, 7
        %v3021 = vsub.s32 %v3018, %v3020
        %v3022 = vrot.slane %v3008, %v3021
        %v3023 = vcombine.high %v3015, 0.0
        %v3025 = vunpack.c.l.s4 1934713408
        %v3026 = vunpack.c.0.s8 %v3025
        %v3027 = vlaneseq
        %v3028 = vshrl.u32 %v3027, 7
        %v3029 = vsub.s32 %v3026, %v3028
        %v3030 = vrot.slane %v3015, %v3029
        %v3032 = vunpack.c.l.s4 1934713408
        %v3033 = vunpack.c.0.s8 %v3032
        %v3034 = vlaneseq
        %v3035 = vshrl.u32 %v3034, 7
        %v3036 = vsub.s32 %v3033, %v3035
        %v3037 = vrot.slane %v3023, %v3036
        %v3038 = vcombine.high %v3022, 0.0
        %v3040 = vunpack.c.l.s4 1934713408
        %v3041 = vunpack.c.0.s8 %v3040
        %v3042 = vlaneseq
        %v3043 = vshrl.u32 %v3042, 7
        %v3044 = vsub.s32 %v3041, %v3043
        %v3045 = vrot.slane %v3022, %v3044
        %v3047 = vunpack.c.l.s4 1934713408
        %v3048 = vunpack.c.0.s8 %v3047
        %v3049 = vlaneseq
        %v3050 = vshrl.u32 %v3049, 7
        %v3051 = vsub.s32 %v3048, %v3050
        %v3052 = vrot.slane %v3038, %v3051
        %v3053 = vcombine.high %v3030, 0.0
        %v3054 = vcombine.high %v3037, 0.0
        %v3055 = vcombine.high %v3045, 0.0
        %v3056 = vcombine.high %v3052, 0.0
        %v3057 = vcombine.high %v913, 0.0
        %v3059 = vunpack.c.l.s4 1983009808
        %v3060 = vunpack.c.0.s8 %v3059
        %v3061 = vlaneseq
        %v3062 = vshrl.u32 %v3061, 7
        %v3063 = vsub.s32 %v3060, %v3062
        %v3064 = vrot.slane %v913, %v3063
        %v3066 = vunpack.c.l.s4 1983009808
        %v3067 = vunpack.c.0.s8 %v3066
        %v3068 = vlaneseq
        %v3069 = vshrl.u32 %v3068, 7
        %v3070 = vsub.s32 %v3067, %v3069
        %v3071 = vrot.slane %v3057, %v3070
        %v3072 = vcombine.high %v3064, 0.0
        %v3074 = vunpack.c.l.s4 1934713408
        %v3075 = vunpack.c.0.s8 %v3074
        %v3076 = vlaneseq
        %v3077 = vshrl.u32 %v3076, 7
        %v3078 = vsub.s32 %v3075, %v3077
        %v3079 = vrot.slane %v3064, %v3078
        %v3081 = vunpack.c.l.s4 1934713408
        %v3082 = vunpack.c.0.s8 %v3081
        %v3083 = vlaneseq
        %v3084 = vshrl.u32 %v3083, 7
        %v3085 = vsub.s32 %v3082, %v3084
        %v3086 = vrot.slane %v3072, %v3085
        %v3087 = vcombine.high %v3071, 0.0
        %v3089 = vunpack.c.l.s4 1934713408
        %v3090 = vunpack.c.0.s8 %v3089
        %v3091 = vlaneseq
        %v3092 = vshrl.u32 %v3091, 7
        %v3093 = vsub.s32 %v3090, %v3092
        %v3094 = vrot.slane %v3071, %v3093
        %v3096 = vunpack.c.l.s4 1934713408
        %v3097 = vunpack.c.0.s8 %v3096
        %v3098 = vlaneseq
        %v3099 = vshrl.u32 %v3098, 7
        %v3100 = vsub.s32 %v3097, %v3099
        %v3101 = vrot.slane %v3087, %v3100
        %v3102 = vcombine.high %v3079, 0.0
        %v3103 = vcombine.high %v3086, 0.0
        %v3104 = vcombine.high %v3094, 0.0
        %v3105 = vcombine.high %v3101, 0.0
        %v3106 = vcombine.high %v914, 0.0
        %v3108 = vunpack.c.l.s4 1983009808
        %v3109 = vunpack.c.0.s8 %v3108
        %v3110 = vlaneseq
        %v3111 = vshrl.u32 %v3110, 7
        %v3112 = vsub.s32 %v3109, %v3111
        %v3113 = vrot.slane %v914, %v3112
        %v3115 = vunpack.c.l.s4 1983009808
        %v3116 = vunpack.c.0.s8 %v3115
        %v3117 = vlaneseq
        %v3118 = vshrl.u32 %v3117, 7
        %v3119 = vsub.s32 %v3116, %v3118
        %v3120 = vrot.slane %v3106, %v3119
        %v3121 = vcombine.high %v3113, 0.0
        %v3123 = vunpack.c.l.s4 1934713408
        %v3124 = vunpack.c.0.s8 %v3123
        %v3125 = vlaneseq
        %v3126 = vshrl.u32 %v3125, 7
        %v3127 = vsub.s32 %v3124, %v3126
        %v3128 = vrot.slane %v3113, %v3127
        %v3130 = vunpack.c.l.s4 1934713408
        %v3131 = vunpack.c.0.s8 %v3130
        %v3132 = vlaneseq
        %v3133 = vshrl.u32 %v3132, 7
        %v3134 = vsub.s32 %v3131, %v3133
        %v3135 = vrot.slane %v3121, %v3134
        %v3136 = vcombine.high %v3120, 0.0
        %v3138 = vunpack.c.l.s4 1934713408
        %v3139 = vunpack.c.0.s8 %v3138
        %v3140 = vlaneseq
        %v3141 = vshrl.u32 %v3140, 7
        %v3142 = vsub.s32 %v3139, %v3141
        %v3143 = vrot.slane %v3120, %v3142
        %v3145 = vunpack.c.l.s4 1934713408
        %v3146 = vunpack.c.0.s8 %v3145
        %v3147 = vlaneseq
        %v3148 = vshrl.u32 %v3147, 7
        %v3149 = vsub.s32 %v3146, %v3148
        %v3150 = vrot.slane %v3136, %v3149
        %v3151 = vcombine.high %v3128, 0.0
        %v3152 = vcombine.high %v3135, 0.0
        %v3153 = vcombine.high %v3143, 0.0
        %v3154 = vcombine.high %v3150, 0.0
        %v3155 = vcombine.high %v915, 0.0
        %v3157 = vunpack.c.l.s4 1983009808
        %v3158 = vunpack.c.0.s8 %v3157
        %v3159 = vlaneseq
        %v3160 = vshrl.u32 %v3159, 7
        %v3161 = vsub.s32 %v3158, %v3160
        %v3162 = vrot.slane %v915, %v3161
        %v3164 = vunpack.c.l.s4 1983009808
        %v3165 = vunpack.c.0.s8 %v3164
        %v3166 = vlaneseq
        %v3167 = vshrl.u32 %v3166, 7
        %v3168 = vsub.s32 %v3165, %v3167
        %v3169 = vrot.slane %v3155, %v3168
        %v3170 = vcombine.high %v3162, 0.0
        %v3172 = vunpack.c.l.s4 1934713408
        %v3173 = vunpack.c.0.s8 %v3172
        %v3174 = vlaneseq
        %v3175 = vshrl.u32 %v3174, 7
        %v3176 = vsub.s32 %v3173, %v3175
        %v3177 = vrot.slane %v3162, %v3176
        %v3179 = vunpack.c.l.s4 1934713408
        %v3180 = vunpack.c.0.s8 %v3179
        %v3181 = vlaneseq
        %v3182 = vshrl.u32 %v3181, 7
        %v3183 = vsub.s32 %v3180, %v3182
        %v3184 = vrot.slane %v3170, %v3183
        %v3185 = vcombine.high %v3169, 0.0
        %v3187 = vunpack.c.l.s4 1934713408
        %v3188 = vunpack.c.0.s8 %v3187
        %v3189 = vlaneseq
        %v3190 = vshrl.u32 %v3189, 7
        %v3191 = vsub.s32 %v3188, %v3190
        %v3192 = vrot.slane %v3169, %v3191
        %v3194 = vunpack.c.l.s4 1934713408
        %v3195 = vunpack.c.0.s8 %v3194
        %v3196 = vlaneseq
        %v3197 = vshrl.u32 %v3196, 7
        %v3198 = vsub.s32 %v3195, %v3197
        %v3199 = vrot.slane %v3185, %v3198
        %v3200 = vcombine.high %v3177, 0.0
        %v3201 = vcombine.high %v3184, 0.0
        %v3202 = vcombine.high %v3192, 0.0
        %v3203 = vcombine.high %v3199, 0.0
        %v3204 = vcombine.high %v916, 0.0
        %v3206 = vunpack.c.l.s4 1983009808
        %v3207 = vunpack.c.0.s8 %v3206
        %v3208 = vlaneseq
        %v3209 = vshrl.u32 %v3208, 7
        %v3210 = vsub.s32 %v3207, %v3209
        %v3211 = vrot.slane %v916, %v3210
        %v3213 = vunpack.c.l.s4 1983009808
        %v3214 = vunpack.c.0.s8 %v3213
        %v3215 = vlaneseq
        %v3216 = vshrl.u32 %v3215, 7
        %v3217 = vsub.s32 %v3214, %v3216
        %v3218 = vrot.slane %v3204, %v3217
        %v3219 = vcombine.high %v3211, 0.0
        %v3221 = vunpack.c.l.s4 1934713408
        %v3222 = vunpack.c.0.s8 %v3221
        %v3223 = vlaneseq
        %v3224 = vshrl.u32 %v3223, 7
        %v3225 = vsub.s32 %v3222, %v3224
        %v3226 = vrot.slane %v3211, %v3225
        %v3228 = vunpack.c.l.s4 1934713408
        %v3229 = vunpack.c.0.s8 %v3228
        %v3230 = vlaneseq
        %v3231 = vshrl.u32 %v3230, 7
        %v3232 = vsub.s32 %v3229, %v3231
        %v3233 = vrot.slane %v3219, %v3232
        %v3234 = vcombine.high %v3218, 0.0
        %v3236 = vunpack.c.l.s4 1934713408
        %v3237 = vunpack.c.0.s8 %v3236
        %v3238 = vlaneseq
        %v3239 = vshrl.u32 %v3238, 7
        %v3240 = vsub.s32 %v3237, %v3239
        %v3241 = vrot.slane %v3218, %v3240
        %v3243 = vunpack.c.l.s4 1934713408
        %v3244 = vunpack.c.0.s8 %v3243
        %v3245 = vlaneseq
        %v3246 = vshrl.u32 %v3245, 7
        %v3247 = vsub.s32 %v3244, %v3246
        %v3248 = vrot.slane %v3234, %v3247
        %v3249 = vcombine.high %v3226, 0.0
        %v3250 = vcombine.high %v3233, 0.0
        %v3251 = vcombine.high %v3241, 0.0
        %v3252 = vcombine.high %v3248, 0.0
        %v3253 = vcombine.high %v917, 0.0
        %v3255 = vunpack.c.l.s4 1983009808
        %v3256 = vunpack.c.0.s8 %v3255
        %v3257 = vlaneseq
        %v3258 = vshrl.u32 %v3257, 7
        %v3259 = vsub.s32 %v3256, %v3258
        %v3260 = vrot.slane %v917, %v3259
        %v3262 = vunpack.c.l.s4 1983009808
        %v3263 = vunpack.c.0.s8 %v3262
        %v3264 = vlaneseq
        %v3265 = vshrl.u32 %v3264, 7
        %v3266 = vsub.s32 %v3263, %v3265
        %v3267 = vrot.slane %v3253, %v3266
        %v3268 = vcombine.high %v3260, 0.0
        %v3270 = vunpack.c.l.s4 1934713408
        %v3271 = vunpack.c.0.s8 %v3270
        %v3272 = vlaneseq
        %v3273 = vshrl.u32 %v3272, 7
        %v3274 = vsub.s32 %v3271, %v3273
        %v3275 = vrot.slane %v3260, %v3274
        %v3277 = vunpack.c.l.s4 1934713408
        %v3278 = vunpack.c.0.s8 %v3277
        %v3279 = vlaneseq
        %v3280 = vshrl.u32 %v3279, 7
        %v3281 = vsub.s32 %v3278, %v3280
        %v3282 = vrot.slane %v3268, %v3281
        %v3283 = vcombine.high %v3267, 0.0
        %v3285 = vunpack.c.l.s4 1934713408
        %v3286 = vunpack.c.0.s8 %v3285
        %v3287 = vlaneseq
        %v3288 = vshrl.u32 %v3287, 7
        %v3289 = vsub.s32 %v3286, %v3288
        %v3290 = vrot.slane %v3267, %v3289
        %v3292 = vunpack.c.l.s4 1934713408
        %v3293 = vunpack.c.0.s8 %v3292
        %v3294 = vlaneseq
        %v3295 = vshrl.u32 %v3294, 7
        %v3296 = vsub.s32 %v3293, %v3295
        %v3297 = vrot.slane %v3283, %v3296
        %v3298 = vcombine.high %v3275, 0.0
        %v3299 = vcombine.high %v3282, 0.0
        %v3300 = vcombine.high %v3290, 0.0
        %v3301 = vcombine.high %v3297, 0.0
        %v3302 = vcombine.high %v918, 0.0
        %v3304 = vunpack.c.l.s4 1983009808
        %v3305 = vunpack.c.0.s8 %v3304
        %v3306 = vlaneseq
        %v3307 = vshrl.u32 %v3306, 7
        %v3308 = vsub.s32 %v3305, %v3307
        %v3309 = vrot.slane %v918, %v3308
        %v3311 = vunpack.c.l.s4 1983009808
        %v3312 = vunpack.c.0.s8 %v3311
        %v3313 = vlaneseq
        %v3314 = vshrl.u32 %v3313, 7
        %v3315 = vsub.s32 %v3312, %v3314
        %v3316 = vrot.slane %v3302, %v3315
        %v3317 = vcombine.high %v3309, 0.0
        %v3319 = vunpack.c.l.s4 1934713408
        %v3320 = vunpack.c.0.s8 %v3319
        %v3321 = vlaneseq
        %v3322 = vshrl.u32 %v3321, 7
        %v3323 = vsub.s32 %v3320, %v3322
        %v3324 = vrot.slane %v3309, %v3323
        %v3326 = vunpack.c.l.s4 1934713408
        %v3327 = vunpack.c.0.s8 %v3326
        %v3328 = vlaneseq
        %v3329 = vshrl.u32 %v3328, 7
        %v3330 = vsub.s32 %v3327, %v3329
        %v3331 = vrot.slane %v3317, %v3330
        %v3332 = vcombine.high %v3316, 0.0
        %v3334 = vunpack.c.l.s4 1934713408
        %v3335 = vunpack.c.0.s8 %v3334
        %v3336 = vlaneseq
        %v3337 = vshrl.u32 %v3336, 7
        %v3338 = vsub.s32 %v3335, %v3337
        %v3339 = vrot.slane %v3316, %v3338
        %v3341 = vunpack.c.l.s4 1934713408
        %v3342 = vunpack.c.0.s8 %v3341
        %v3343 = vlaneseq
        %v3344 = vshrl.u32 %v3343, 7
        %v3345 = vsub.s32 %v3342, %v3344
        %v3346 = vrot.slane %v3332, %v3345
        %v3347 = vcombine.high %v3324, 0.0
        %v3348 = vcombine.high %v3331, 0.0
        %v3349 = vcombine.high %v3339, 0.0
        %v3350 = vcombine.high %v3346, 0.0
        %v3351 = vcombine.high %v919, 0.0
        %v3353 = vunpack.c.l.s4 1983009808
        %v3354 = vunpack.c.0.s8 %v3353
        %v3355 = vlaneseq
        %v3356 = vshrl.u32 %v3355, 7
        %v3357 = vsub.s32 %v3354, %v3356
        %v3358 = vrot.slane %v919, %v3357
        %v3360 = vunpack.c.l.s4 1983009808
        %v3361 = vunpack.c.0.s8 %v3360
        %v3362 = vlaneseq
        %v3363 = vshrl.u32 %v3362, 7
        %v3364 = vsub.s32 %v3361, %v3363
        %v3365 = vrot.slane %v3351, %v3364
        %v3366 = vcombine.high %v3358, 0.0
        %v3368 = vunpack.c.l.s4 1934713408
        %v3369 = vunpack.c.0.s8 %v3368
        %v3370 = vlaneseq
        %v3371 = vshrl.u32 %v3370, 7
        %v3372 = vsub.s32 %v3369, %v3371
        %v3373 = vrot.slane %v3358, %v3372
        %v3375 = vunpack.c.l.s4 1934713408
        %v3376 = vunpack.c.0.s8 %v3375
        %v3377 = vlaneseq
        %v3378 = vshrl.u32 %v3377, 7
        %v3379 = vsub.s32 %v3376, %v3378
        %v3380 = vrot.slane %v3366, %v3379
        %v3381 = vcombine.high %v3365, 0.0
        %v3383 = vunpack.c.l.s4 1934713408
        %v3384 = vunpack.c.0.s8 %v3383
        %v3385 = vlaneseq
        %v3386 = vshrl.u32 %v3385, 7
        %v3387 = vsub.s32 %v3384, %v3386
        %v3388 = vrot.slane %v3365, %v3387
        %v3390 = vunpack.c.l.s4 1934713408
        %v3391 = vunpack.c.0.s8 %v3390
        %v3392 = vlaneseq
        %v3393 = vshrl.u32 %v3392, 7
        %v3394 = vsub.s32 %v3391, %v3393
        %v3395 = vrot.slane %v3381, %v3394
        %v3396 = vcombine.high %v3373, 0.0
        %v3397 = vcombine.high %v3380, 0.0
        %v3398 = vcombine.high %v3388, 0.0
        %v3399 = vcombine.high %v3395, 0.0
        %v3400 = vcombine.high %v920, 0.0
        %v3402 = vunpack.c.l.s4 1983009808
        %v3403 = vunpack.c.0.s8 %v3402
        %v3404 = vlaneseq
        %v3405 = vshrl.u32 %v3404, 7
        %v3406 = vsub.s32 %v3403, %v3405
        %v3407 = vrot.slane %v920, %v3406
        %v3409 = vunpack.c.l.s4 1983009808
        %v3410 = vunpack.c.0.s8 %v3409
        %v3411 = vlaneseq
        %v3412 = vshrl.u32 %v3411, 7
        %v3413 = vsub.s32 %v3410, %v3412
        %v3414 = vrot.slane %v3400, %v3413
        %v3415 = vcombine.high %v3407, 0.0
        %v3417 = vunpack.c.l.s4 1934713408
        %v3418 = vunpack.c.0.s8 %v3417
        %v3419 = vlaneseq
        %v3420 = vshrl.u32 %v3419, 7
        %v3421 = vsub.s32 %v3418, %v3420
        %v3422 = vrot.slane %v3407, %v3421
        %v3424 = vunpack.c.l.s4 1934713408
        %v3425 = vunpack.c.0.s8 %v3424
        %v3426 = vlaneseq
        %v3427 = vshrl.u32 %v3426, 7
        %v3428 = vsub.s32 %v3425, %v3427
        %v3429 = vrot.slane %v3415, %v3428
        %v3430 = vcombine.high %v3414, 0.0
        %v3432 = vunpack.c.l.s4 1934713408
        %v3433 = vunpack.c.0.s8 %v3432
        %v3434 = vlaneseq
        %v3435 = vshrl.u32 %v3434, 7
        %v3436 = vsub.s32 %v3433, %v3435
        %v3437 = vrot.slane %v3414, %v3436
        %v3439 = vunpack.c.l.s4 1934713408
        %v3440 = vunpack.c.0.s8 %v3439
        %v3441 = vlaneseq
        %v3442 = vshrl.u32 %v3441, 7
        %v3443 = vsub.s32 %v3440, %v3442
        %v3444 = vrot.slane %v3430, %v3443
        %v3445 = vcombine.high %v3422, 0.0
        %v3446 = vcombine.high %v3429, 0.0
        %v3447 = vcombine.high %v3437, 0.0
        %v3448 = vcombine.high %v3444, 0.0
        %v3449 = vcombine.high %v921, 0.0
        %v3451 = vunpack.c.l.s4 1983009808
        %v3452 = vunpack.c.0.s8 %v3451
        %v3453 = vlaneseq
        %v3454 = vshrl.u32 %v3453, 7
        %v3455 = vsub.s32 %v3452, %v3454
        %v3456 = vrot.slane %v921, %v3455
        %v3458 = vunpack.c.l.s4 1983009808
        %v3459 = vunpack.c.0.s8 %v3458
        %v3460 = vlaneseq
        %v3461 = vshrl.u32 %v3460, 7
        %v3462 = vsub.s32 %v3459, %v3461
        %v3463 = vrot.slane %v3449, %v3462
        %v3464 = vcombine.high %v3456, 0.0
        %v3466 = vunpack.c.l.s4 1934713408
        %v3467 = vunpack.c.0.s8 %v3466
        %v3468 = vlaneseq
        %v3469 = vshrl.u32 %v3468, 7
        %v3470 = vsub.s32 %v3467, %v3469
        %v3471 = vrot.slane %v3456, %v3470
        %v3473 = vunpack.c.l.s4 1934713408
        %v3474 = vunpack.c.0.s8 %v3473
        %v3475 = vlaneseq
        %v3476 = vshrl.u32 %v3475, 7
        %v3477 = vsub.s32 %v3474, %v3476
        %v3478 = vrot.slane %v3464, %v3477
        %v3479 = vcombine.high %v3463, 0.0
        %v3481 = vunpack.c.l.s4 1934713408
        %v3482 = vunpack.c.0.s8 %v3481
        %v3483 = vlaneseq
        %v3484 = vshrl.u32 %v3483, 7
        %v3485 = vsub.s32 %v3482, %v3484
        %v3486 = vrot.slane %v3463, %v3485
        %v3488 = vunpack.c.l.s4 1934713408
        %v3489 = vunpack.c.0.s8 %v3488
        %v3490 = vlaneseq
        %v3491 = vshrl.u32 %v3490, 7
        %v3492 = vsub.s32 %v3489, %v3491
        %v3493 = vrot.slane %v3479, %v3492
        %v3494 = vcombine.high %v3471, 0.0
        %v3495 = vcombine.high %v3478, 0.0
        %v3496 = vcombine.high %v3486, 0.0
        %v3497 = vcombine.high %v3493, 0.0
        %v3498 = vcombine.high %v922, 0.0
        %v3500 = vunpack.c.l.s4 1983009808
        %v3501 = vunpack.c.0.s8 %v3500
        %v3502 = vlaneseq
        %v3503 = vshrl.u32 %v3502, 7
        %v3504 = vsub.s32 %v3501, %v3503
        %v3505 = vrot.slane %v922, %v3504
        %v3507 = vunpack.c.l.s4 1983009808
        %v3508 = vunpack.c.0.s8 %v3507
        %v3509 = vlaneseq
        %v3510 = vshrl.u32 %v3509, 7
        %v3511 = vsub.s32 %v3508, %v3510
        %v3512 = vrot.slane %v3498, %v3511
        %v3513 = vcombine.high %v3505, 0.0
        %v3515 = vunpack.c.l.s4 1934713408
        %v3516 = vunpack.c.0.s8 %v3515
        %v3517 = vlaneseq
        %v3518 = vshrl.u32 %v3517, 7
        %v3519 = vsub.s32 %v3516, %v3518
        %v3520 = vrot.slane %v3505, %v3519
        %v3522 = vunpack.c.l.s4 1934713408
        %v3523 = vunpack.c.0.s8 %v3522
        %v3524 = vlaneseq
        %v3525 = vshrl.u32 %v3524, 7
        %v3526 = vsub.s32 %v3523, %v3525
        %v3527 = vrot.slane %v3513, %v3526
        %v3528 = vcombine.high %v3512, 0.0
        %v3530 = vunpack.c.l.s4 1934713408
        %v3531 = vunpack.c.0.s8 %v3530
        %v3532 = vlaneseq
        %v3533 = vshrl.u32 %v3532, 7
        %v3534 = vsub.s32 %v3531, %v3533
        %v3535 = vrot.slane %v3512, %v3534
        %v3537 = vunpack.c.l.s4 1934713408
        %v3538 = vunpack.c.0.s8 %v3537
        %v3539 = vlaneseq
        %v3540 = vshrl.u32 %v3539, 7
        %v3541 = vsub.s32 %v3538, %v3540
        %v3542 = vrot.slane %v3528, %v3541
        %v3543 = vcombine.high %v3520, 0.0
        %v3544 = vcombine.high %v3527, 0.0
        %v3545 = vcombine.high %v3535, 0.0
        %v3546 = vcombine.high %v3542, 0.0
        %v3547 = vcombine.high %v923, 0.0
        %v3549 = vunpack.c.l.s4 1983009808
        %v3550 = vunpack.c.0.s8 %v3549
        %v3551 = vlaneseq
        %v3552 = vshrl.u32 %v3551, 7
        %v3553 = vsub.s32 %v3550, %v3552
        %v3554 = vrot.slane %v923, %v3553
        %v3556 = vunpack.c.l.s4 1983009808
        %v3557 = vunpack.c.0.s8 %v3556
        %v3558 = vlaneseq
        %v3559 = vshrl.u32 %v3558, 7
        %v3560 = vsub.s32 %v3557, %v3559
        %v3561 = vrot.slane %v3547, %v3560
        %v3562 = vcombine.high %v3554, 0.0
        %v3564 = vunpack.c.l.s4 1934713408
        %v3565 = vunpack.c.0.s8 %v3564
        %v3566 = vlaneseq
        %v3567 = vshrl.u32 %v3566, 7
        %v3568 = vsub.s32 %v3565, %v3567
        %v3569 = vrot.slane %v3554, %v3568
        %v3571 = vunpack.c.l.s4 1934713408
        %v3572 = vunpack.c.0.s8 %v3571
        %v3573 = vlaneseq
        %v3574 = vshrl.u32 %v3573, 7
        %v3575 = vsub.s32 %v3572, %v3574
        %v3576 = vrot.slane %v3562, %v3575
        %v3577 = vcombine.high %v3561, 0.0
        %v3579 = vunpack.c.l.s4 1934713408
        %v3580 = vunpack.c.0.s8 %v3579
        %v3581 = vlaneseq
        %v3582 = vshrl.u32 %v3581, 7
        %v3583 = vsub.s32 %v3580, %v3582
        %v3584 = vrot.slane %v3561, %v3583
        %v3586 = vunpack.c.l.s4 1934713408
        %v3587 = vunpack.c.0.s8 %v3586
        %v3588 = vlaneseq
        %v3589 = vshrl.u32 %v3588, 7
        %v3590 = vsub.s32 %v3587, %v3589
        %v3591 = vrot.slane %v3577, %v3590
        %v3592 = vcombine.high %v3569, 0.0
        %v3593 = vcombine.high %v3576, 0.0
        %v3594 = vcombine.high %v3584, 0.0
        %v3595 = vcombine.high %v3591, 0.0
        %v3596 = vcombine.high %v924, 0.0
        %v3598 = vunpack.c.l.s4 1983009808
        %v3599 = vunpack.c.0.s8 %v3598
        %v3600 = vlaneseq
        %v3601 = vshrl.u32 %v3600, 7
        %v3602 = vsub.s32 %v3599, %v3601
        %v3603 = vrot.slane %v924, %v3602
        %v3605 = vunpack.c.l.s4 1983009808
        %v3606 = vunpack.c.0.s8 %v3605
        %v3607 = vlaneseq
        %v3608 = vshrl.u32 %v3607, 7
        %v3609 = vsub.s32 %v3606, %v3608
        %v3610 = vrot.slane %v3596, %v3609
        %v3611 = vcombine.high %v3603, 0.0
        %v3613 = vunpack.c.l.s4 1934713408
        %v3614 = vunpack.c.0.s8 %v3613
        %v3615 = vlaneseq
        %v3616 = vshrl.u32 %v3615, 7
        %v3617 = vsub.s32 %v3614, %v3616
        %v3618 = vrot.slane %v3603, %v3617
        %v3620 = vunpack.c.l.s4 1934713408
        %v3621 = vunpack.c.0.s8 %v3620
        %v3622 = vlaneseq
        %v3623 = vshrl.u32 %v3622, 7
        %v3624 = vsub.s32 %v3621, %v3623
        %v3625 = vrot.slane %v3611, %v3624
        %v3626 = vcombine.high %v3610, 0.0
        %v3628 = vunpack.c.l.s4 1934713408
        %v3629 = vunpack.c.0.s8 %v3628
        %v3630 = vlaneseq
        %v3631 = vshrl.u32 %v3630, 7
        %v3632 = vsub.s32 %v3629, %v3631
        %v3633 = vrot.slane %v3610, %v3632
        %v3635 = vunpack.c.l.s4 1934713408
        %v3636 = vunpack.c.0.s8 %v3635
        %v3637 = vlaneseq
        %v3638 = vshrl.u32 %v3637, 7
        %v3639 = vsub.s32 %v3636, %v3638
        %v3640 = vrot.slane %v3626, %v3639
        %v3641 = vcombine.high %v3618, 0.0
        %v3642 = vcombine.high %v3625, 0.0
        %v3643 = vcombine.high %v3633, 0.0
        %v3644 = vcombine.high %v3640, 0.0
        %v3645 = vcombine.high %v925, 0.0
        %v3647 = vunpack.c.l.s4 1983009808
        %v3648 = vunpack.c.0.s8 %v3647
        %v3649 = vlaneseq
        %v3650 = vshrl.u32 %v3649, 7
        %v3651 = vsub.s32 %v3648, %v3650
        %v3652 = vrot.slane %v925, %v3651
        %v3654 = vunpack.c.l.s4 1983009808
        %v3655 = vunpack.c.0.s8 %v3654
        %v3656 = vlaneseq
        %v3657 = vshrl.u32 %v3656, 7
        %v3658 = vsub.s32 %v3655, %v3657
        %v3659 = vrot.slane %v3645, %v3658
        %v3660 = vcombine.high %v3652, 0.0
        %v3662 = vunpack.c.l.s4 1934713408
        %v3663 = vunpack.c.0.s8 %v3662
        %v3664 = vlaneseq
        %v3665 = vshrl.u32 %v3664, 7
        %v3666 = vsub.s32 %v3663, %v3665
        %v3667 = vrot.slane %v3652, %v3666
        %v3669 = vunpack.c.l.s4 1934713408
        %v3670 = vunpack.c.0.s8 %v3669
        %v3671 = vlaneseq
        %v3672 = vshrl.u32 %v3671, 7
        %v3673 = vsub.s32 %v3670, %v3672
        %v3674 = vrot.slane %v3660, %v3673
        %v3675 = vcombine.high %v3659, 0.0
        %v3677 = vunpack.c.l.s4 1934713408
        %v3678 = vunpack.c.0.s8 %v3677
        %v3679 = vlaneseq
        %v3680 = vshrl.u32 %v3679, 7
        %v3681 = vsub.s32 %v3678, %v3680
        %v3682 = vrot.slane %v3659, %v3681
        %v3684 = vunpack.c.l.s4 1934713408
        %v3685 = vunpack.c.0.s8 %v3684
        %v3686 = vlaneseq
        %v3687 = vshrl.u32 %v3686, 7
        %v3688 = vsub.s32 %v3685, %v3687
        %v3689 = vrot.slane %v3675, %v3688
        %v3690 = vcombine.high %v3667, 0.0
        %v3691 = vcombine.high %v3674, 0.0
        %v3692 = vcombine.high %v3682, 0.0
        %v3693 = vcombine.high %v3689, 0.0
        %v3694 = vcombine.high %v926, 0.0
        %v3696 = vunpack.c.l.s4 1983009808
        %v3697 = vunpack.c.0.s8 %v3696
        %v3698 = vlaneseq
        %v3699 = vshrl.u32 %v3698, 7
        %v3700 = vsub.s32 %v3697, %v3699
        %v3701 = vrot.slane %v926, %v3700
        %v3703 = vunpack.c.l.s4 1983009808
        %v3704 = vunpack.c.0.s8 %v3703
        %v3705 = vlaneseq
        %v3706 = vshrl.u32 %v3705, 7
        %v3707 = vsub.s32 %v3704, %v3706
        %v3708 = vrot.slane %v3694, %v3707
        %v3709 = vcombine.high %v3701, 0.0
        %v3711 = vunpack.c.l.s4 1934713408
        %v3712 = vunpack.c.0.s8 %v3711
        %v3713 = vlaneseq
        %v3714 = vshrl.u32 %v3713, 7
        %v3715 = vsub.s32 %v3712, %v3714
        %v3716 = vrot.slane %v3701, %v3715
        %v3718 = vunpack.c.l.s4 1934713408
        %v3719 = vunpack.c.0.s8 %v3718
        %v3720 = vlaneseq
        %v3721 = vshrl.u32 %v3720, 7
        %v3722 = vsub.s32 %v3719, %v3721
        %v3723 = vrot.slane %v3709, %v3722
        %v3724 = vcombine.high %v3708, 0.0
        %v3726 = vunpack.c.l.s4 1934713408
        %v3727 = vunpack.c.0.s8 %v3726
        %v3728 = vlaneseq
        %v3729 = vshrl.u32 %v3728, 7
        %v3730 = vsub.s32 %v3727, %v3729
        %v3731 = vrot.slane %v3708, %v3730
        %v3733 = vunpack.c.l.s4 1934713408
        %v3734 = vunpack.c.0.s8 %v3733
        %v3735 = vlaneseq
        %v3736 = vshrl.u32 %v3735, 7
        %v3737 = vsub.s32 %v3734, %v3736
        %v3738 = vrot.slane %v3724, %v3737
        %v3739 = vcombine.high %v3716, 0.0
        %v3740 = vcombine.high %v3723, 0.0
        %v3741 = vcombine.high %v3731, 0.0
        %v3742 = vcombine.high %v3738, 0.0
        %v3743 = vcombine.high %v927, 0.0
        %v3745 = vunpack.c.l.s4 1983009808
        %v3746 = vunpack.c.0.s8 %v3745
        %v3747 = vlaneseq
        %v3748 = vshrl.u32 %v3747, 7
        %v3749 = vsub.s32 %v3746, %v3748
        %v3750 = vrot.slane %v927, %v3749
        %v3752 = vunpack.c.l.s4 1983009808
        %v3753 = vunpack.c.0.s8 %v3752
        %v3754 = vlaneseq
        %v3755 = vshrl.u32 %v3754, 7
        %v3756 = vsub.s32 %v3753, %v3755
        %v3757 = vrot.slane %v3743, %v3756
        %v3758 = vcombine.high %v3750, 0.0
        %v3760 = vunpack.c.l.s4 1934713408
        %v3761 = vunpack.c.0.s8 %v3760
        %v3762 = vlaneseq
        %v3763 = vshrl.u32 %v3762, 7
        %v3764 = vsub.s32 %v3761, %v3763
        %v3765 = vrot.slane %v3750, %v3764
        %v3767 = vunpack.c.l.s4 1934713408
        %v3768 = vunpack.c.0.s8 %v3767
        %v3769 = vlaneseq
        %v3770 = vshrl.u32 %v3769, 7
        %v3771 = vsub.s32 %v3768, %v3770
        %v3772 = vrot.slane %v3758, %v3771
        %v3773 = vcombine.high %v3757, 0.0
        %v3775 = vunpack.c.l.s4 1934713408
        %v3776 = vunpack.c.0.s8 %v3775
        %v3777 = vlaneseq
        %v3778 = vshrl.u32 %v3777, 7
        %v3779 = vsub.s32 %v3776, %v3778
        %v3780 = vrot.slane %v3757, %v3779
        %v3782 = vunpack.c.l.s4 1934713408
        %v3783 = vunpack.c.0.s8 %v3782
        %v3784 = vlaneseq
        %v3785 = vshrl.u32 %v3784, 7
        %v3786 = vsub.s32 %v3783, %v3785
        %v3787 = vrot.slane %v3773, %v3786
        %v3788 = vcombine.high %v3765, 0.0
        %v3789 = vcombine.high %v3772, 0.0
        %v3790 = vcombine.high %v3780, 0.0
        %v3791 = vcombine.high %v3787, 0.0
        %v3792 = vcombine.high %v928, 0.0
        %v3794 = vunpack.c.l.s4 1983009808
        %v3795 = vunpack.c.0.s8 %v3794
        %v3796 = vlaneseq
        %v3797 = vshrl.u32 %v3796, 7
        %v3798 = vsub.s32 %v3795, %v3797
        %v3799 = vrot.slane %v928, %v3798
        %v3801 = vunpack.c.l.s4 1983009808
        %v3802 = vunpack.c.0.s8 %v3801
        %v3803 = vlaneseq
        %v3804 = vshrl.u32 %v3803, 7
        %v3805 = vsub.s32 %v3802, %v3804
        %v3806 = vrot.slane %v3792, %v3805
        %v3807 = vcombine.high %v3799, 0.0
        %v3809 = vunpack.c.l.s4 1934713408
        %v3810 = vunpack.c.0.s8 %v3809
        %v3811 = vlaneseq
        %v3812 = vshrl.u32 %v3811, 7
        %v3813 = vsub.s32 %v3810, %v3812
        %v3814 = vrot.slane %v3799, %v3813
        %v3816 = vunpack.c.l.s4 1934713408
        %v3817 = vunpack.c.0.s8 %v3816
        %v3818 = vlaneseq
        %v3819 = vshrl.u32 %v3818, 7
        %v3820 = vsub.s32 %v3817, %v3819
        %v3821 = vrot.slane %v3807, %v3820
        %v3822 = vcombine.high %v3806, 0.0
        %v3824 = vunpack.c.l.s4 1934713408
        %v3825 = vunpack.c.0.s8 %v3824
        %v3826 = vlaneseq
        %v3827 = vshrl.u32 %v3826, 7
        %v3828 = vsub.s32 %v3825, %v3827
        %v3829 = vrot.slane %v3806, %v3828
        %v3831 = vunpack.c.l.s4 1934713408
        %v3832 = vunpack.c.0.s8 %v3831
        %v3833 = vlaneseq
        %v3834 = vshrl.u32 %v3833, 7
        %v3835 = vsub.s32 %v3832, %v3834
        %v3836 = vrot.slane %v3822, %v3835
        %v3837 = vcombine.high %v3814, 0.0
        %v3838 = vcombine.high %v3821, 0.0
        %v3839 = vcombine.high %v3829, 0.0
        %v3840 = vcombine.high %v3836, 0.0
        %v3841 = vcombine.high %v929, 0.0
        %v3843 = vunpack.c.l.s4 1983009808
        %v3844 = vunpack.c.0.s8 %v3843
        %v3845 = vlaneseq
        %v3846 = vshrl.u32 %v3845, 7
        %v3847 = vsub.s32 %v3844, %v3846
        %v3848 = vrot.slane %v929, %v3847
        %v3850 = vunpack.c.l.s4 1983009808
        %v3851 = vunpack.c.0.s8 %v3850
        %v3852 = vlaneseq
        %v3853 = vshrl.u32 %v3852, 7
        %v3854 = vsub.s32 %v3851, %v3853
        %v3855 = vrot.slane %v3841, %v3854
        %v3856 = vcombine.high %v3848, 0.0
        %v3858 = vunpack.c.l.s4 1934713408
        %v3859 = vunpack.c.0.s8 %v3858
        %v3860 = vlaneseq
        %v3861 = vshrl.u32 %v3860, 7
        %v3862 = vsub.s32 %v3859, %v3861
        %v3863 = vrot.slane %v3848, %v3862
        %v3865 = vunpack.c.l.s4 1934713408
        %v3866 = vunpack.c.0.s8 %v3865
        %v3867 = vlaneseq
        %v3868 = vshrl.u32 %v3867, 7
        %v3869 = vsub.s32 %v3866, %v3868
        %v3870 = vrot.slane %v3856, %v3869
        %v3871 = vcombine.high %v3855, 0.0
        %v3873 = vunpack.c.l.s4 1934713408
        %v3874 = vunpack.c.0.s8 %v3873
        %v3875 = vlaneseq
        %v3876 = vshrl.u32 %v3875, 7
        %v3877 = vsub.s32 %v3874, %v3876
        %v3878 = vrot.slane %v3855, %v3877
        %v3880 = vunpack.c.l.s4 1934713408
        %v3881 = vunpack.c.0.s8 %v3880
        %v3882 = vlaneseq
        %v3883 = vshrl.u32 %v3882, 7
        %v3884 = vsub.s32 %v3881, %v3883
        %v3885 = vrot.slane %v3871, %v3884
        %v3886 = vcombine.high %v3863, 0.0
        %v3887 = vcombine.high %v3870, 0.0
        %v3888 = vcombine.high %v3878, 0.0
        %v3889 = vcombine.high %v3885, 0.0
        %v3890 = vcombine.high %v930, 0.0
        %v3892 = vunpack.c.l.s4 1983009808
        %v3893 = vunpack.c.0.s8 %v3892
        %v3894 = vlaneseq
        %v3895 = vshrl.u32 %v3894, 7
        %v3896 = vsub.s32 %v3893, %v3895
        %v3897 = vrot.slane %v930, %v3896
        %v3899 = vunpack.c.l.s4 1983009808
        %v3900 = vunpack.c.0.s8 %v3899
        %v3901 = vlaneseq
        %v3902 = vshrl.u32 %v3901, 7
        %v3903 = vsub.s32 %v3900, %v3902
        %v3904 = vrot.slane %v3890, %v3903
        %v3905 = vcombine.high %v3897, 0.0
        %v3907 = vunpack.c.l.s4 1934713408
        %v3908 = vunpack.c.0.s8 %v3907
        %v3909 = vlaneseq
        %v3910 = vshrl.u32 %v3909, 7
        %v3911 = vsub.s32 %v3908, %v3910
        %v3912 = vrot.slane %v3897, %v3911
        %v3914 = vunpack.c.l.s4 1934713408
        %v3915 = vunpack.c.0.s8 %v3914
        %v3916 = vlaneseq
        %v3917 = vshrl.u32 %v3916, 7
        %v3918 = vsub.s32 %v3915, %v3917
        %v3919 = vrot.slane %v3905, %v3918
        %v3920 = vcombine.high %v3904, 0.0
        %v3922 = vunpack.c.l.s4 1934713408
        %v3923 = vunpack.c.0.s8 %v3922
        %v3924 = vlaneseq
        %v3925 = vshrl.u32 %v3924, 7
        %v3926 = vsub.s32 %v3923, %v3925
        %v3927 = vrot.slane %v3904, %v3926
        %v3929 = vunpack.c.l.s4 1934713408
        %v3930 = vunpack.c.0.s8 %v3929
        %v3931 = vlaneseq
        %v3932 = vshrl.u32 %v3931, 7
        %v3933 = vsub.s32 %v3930, %v3932
        %v3934 = vrot.slane %v3920, %v3933
        %v3935 = vcombine.high %v3912, 0.0
        %v3936 = vcombine.high %v3919, 0.0
        %v3937 = vcombine.high %v3927, 0.0
        %v3938 = vcombine.high %v3934, 0.0
        %v3939 = vcombine.high %v931, 0.0
        %v3941 = vunpack.c.l.s4 1983009808
        %v3942 = vunpack.c.0.s8 %v3941
        %v3943 = vlaneseq
        %v3944 = vshrl.u32 %v3943, 7
        %v3945 = vsub.s32 %v3942, %v3944
        %v3946 = vrot.slane %v931, %v3945
        %v3948 = vunpack.c.l.s4 1983009808
        %v3949 = vunpack.c.0.s8 %v3948
        %v3950 = vlaneseq
        %v3951 = vshrl.u32 %v3950, 7
        %v3952 = vsub.s32 %v3949, %v3951
        %v3953 = vrot.slane %v3939, %v3952
        %v3954 = vcombine.high %v3946, 0.0
        %v3956 = vunpack.c.l.s4 1934713408
        %v3957 = vunpack.c.0.s8 %v3956
        %v3958 = vlaneseq
        %v3959 = vshrl.u32 %v3958, 7
        %v3960 = vsub.s32 %v3957, %v3959
        %v3961 = vrot.slane %v3946, %v3960
        %v3963 = vunpack.c.l.s4 1934713408
        %v3964 = vunpack.c.0.s8 %v3963
        %v3965 = vlaneseq
        %v3966 = vshrl.u32 %v3965, 7
        %v3967 = vsub.s32 %v3964, %v3966
        %v3968 = vrot.slane %v3954, %v3967
        %v3969 = vcombine.high %v3953, 0.0
        %v3971 = vunpack.c.l.s4 1934713408
        %v3972 = vunpack.c.0.s8 %v3971
        %v3973 = vlaneseq
        %v3974 = vshrl.u32 %v3973, 7
        %v3975 = vsub.s32 %v3972, %v3974
        %v3976 = vrot.slane %v3953, %v3975
        %v3978 = vunpack.c.l.s4 1934713408
        %v3979 = vunpack.c.0.s8 %v3978
        %v3980 = vlaneseq
        %v3981 = vshrl.u32 %v3980, 7
        %v3982 = vsub.s32 %v3979, %v3981
        %v3983 = vrot.slane %v3969, %v3982
        %v3984 = vcombine.high %v3961, 0.0
        %v3985 = vcombine.high %v3968, 0.0
        %v3986 = vcombine.high %v3976, 0.0
        %v3987 = vcombine.high %v3983, 0.0
        %v3988 = vcombine.high %v932, 0.0
        %v3990 = vunpack.c.l.s4 1983009808
        %v3991 = vunpack.c.0.s8 %v3990
        %v3992 = vlaneseq
        %v3993 = vshrl.u32 %v3992, 7
        %v3994 = vsub.s32 %v3991, %v3993
        %v3995 = vrot.slane %v932, %v3994
        %v3997 = vunpack.c.l.s4 1983009808
        %v3998 = vunpack.c.0.s8 %v3997
        %v3999 = vlaneseq
        %v4000 = vshrl.u32 %v3999, 7
        %v4001 = vsub.s32 %v3998, %v4000
        %v4002 = vrot.slane %v3988, %v4001
        %v4003 = vcombine.high %v3995, 0.0
        %v4005 = vunpack.c.l.s4 1934713408
        %v4006 = vunpack.c.0.s8 %v4005
        %v4007 = vlaneseq
        %v4008 = vshrl.u32 %v4007, 7
        %v4009 = vsub.s32 %v4006, %v4008
        %v4010 = vrot.slane %v3995, %v4009
        %v4012 = vunpack.c.l.s4 1934713408
        %v4013 = vunpack.c.0.s8 %v4012
        %v4014 = vlaneseq
        %v4015 = vshrl.u32 %v4014, 7
        %v4016 = vsub.s32 %v4013, %v4015
        %v4017 = vrot.slane %v4003, %v4016
        %v4018 = vcombine.high %v4002, 0.0
        %v4020 = vunpack.c.l.s4 1934713408
        %v4021 = vunpack.c.0.s8 %v4020
        %v4022 = vlaneseq
        %v4023 = vshrl.u32 %v4022, 7
        %v4024 = vsub.s32 %v4021, %v4023
        %v4025 = vrot.slane %v4002, %v4024
        %v4027 = vunpack.c.l.s4 1934713408
        %v4028 = vunpack.c.0.s8 %v4027
        %v4029 = vlaneseq
        %v4030 = vshrl.u32 %v4029, 7
        %v4031 = vsub.s32 %v4028, %v4030
        %v4032 = vrot.slane %v4018, %v4031
        %v4033 = vcombine.high %v4010, 0.0
        %v4034 = vcombine.high %v4017, 0.0
        %v4035 = vcombine.high %v4025, 0.0
        %v4036 = vcombine.high %v4032, 0.0
        %v4037 = vcombine.high %v933, 0.0
        %v4039 = vunpack.c.l.s4 1983009808
        %v4040 = vunpack.c.0.s8 %v4039
        %v4041 = vlaneseq
        %v4042 = vshrl.u32 %v4041, 7
        %v4043 = vsub.s32 %v4040, %v4042
        %v4044 = vrot.slane %v933, %v4043
        %v4046 = vunpack.c.l.s4 1983009808
        %v4047 = vunpack.c.0.s8 %v4046
        %v4048 = vlaneseq
        %v4049 = vshrl.u32 %v4048, 7
        %v4050 = vsub.s32 %v4047, %v4049
        %v4051 = vrot.slane %v4037, %v4050
        %v4052 = vcombine.high %v4044, 0.0
        %v4054 = vunpack.c.l.s4 1934713408
        %v4055 = vunpack.c.0.s8 %v4054
        %v4056 = vlaneseq
        %v4057 = vshrl.u32 %v4056, 7
        %v4058 = vsub.s32 %v4055, %v4057
        %v4059 = vrot.slane %v4044, %v4058
        %v4061 = vunpack.c.l.s4 1934713408
        %v4062 = vunpack.c.0.s8 %v4061
        %v4063 = vlaneseq
        %v4064 = vshrl.u32 %v4063, 7
        %v4065 = vsub.s32 %v4062, %v4064
        %v4066 = vrot.slane %v4052, %v4065
        %v4067 = vcombine.high %v4051, 0.0
        %v4069 = vunpack.c.l.s4 1934713408
        %v4070 = vunpack.c.0.s8 %v4069
        %v4071 = vlaneseq
        %v4072 = vshrl.u32 %v4071, 7
        %v4073 = vsub.s32 %v4070, %v4072
        %v4074 = vrot.slane %v4051, %v4073
        %v4076 = vunpack.c.l.s4 1934713408
        %v4077 = vunpack.c.0.s8 %v4076
        %v4078 = vlaneseq
        %v4079 = vshrl.u32 %v4078, 7
        %v4080 = vsub.s32 %v4077, %v4079
        %v4081 = vrot.slane %v4067, %v4080
        %v4082 = vcombine.high %v4059, 0.0
        %v4083 = vcombine.high %v4066, 0.0
        %v4084 = vcombine.high %v4074, 0.0
        %v4085 = vcombine.high %v4081, 0.0
        %v4086 = vcombine.high %v934, 0.0
        %v4088 = vunpack.c.l.s4 1983009808
        %v4089 = vunpack.c.0.s8 %v4088
        %v4090 = vlaneseq
        %v4091 = vshrl.u32 %v4090, 7
        %v4092 = vsub.s32 %v4089, %v4091
        %v4093 = vrot.slane %v934, %v4092
        %v4095 = vunpack.c.l.s4 1983009808
        %v4096 = vunpack.c.0.s8 %v4095
        %v4097 = vlaneseq
        %v4098 = vshrl.u32 %v4097, 7
        %v4099 = vsub.s32 %v4096, %v4098
        %v4100 = vrot.slane %v4086, %v4099
        %v4101 = vcombine.high %v4093, 0.0
        %v4103 = vunpack.c.l.s4 1934713408
        %v4104 = vunpack.c.0.s8 %v4103
        %v4105 = vlaneseq
        %v4106 = vshrl.u32 %v4105, 7
        %v4107 = vsub.s32 %v4104, %v4106
        %v4108 = vrot.slane %v4093, %v4107
        %v4110 = vunpack.c.l.s4 1934713408
        %v4111 = vunpack.c.0.s8 %v4110
        %v4112 = vlaneseq
        %v4113 = vshrl.u32 %v4112, 7
        %v4114 = vsub.s32 %v4111, %v4113
        %v4115 = vrot.slane %v4101, %v4114
        %v4116 = vcombine.high %v4100, 0.0
        %v4118 = vunpack.c.l.s4 1934713408
        %v4119 = vunpack.c.0.s8 %v4118
        %v4120 = vlaneseq
        %v4121 = vshrl.u32 %v4120, 7
        %v4122 = vsub.s32 %v4119, %v4121
        %v4123 = vrot.slane %v4100, %v4122
        %v4125 = vunpack.c.l.s4 1934713408
        %v4126 = vunpack.c.0.s8 %v4125
        %v4127 = vlaneseq
        %v4128 = vshrl.u32 %v4127, 7
        %v4129 = vsub.s32 %v4126, %v4128
        %v4130 = vrot.slane %v4116, %v4129
        %v4131 = vcombine.high %v4108, 0.0
        %v4132 = vcombine.high %v4115, 0.0
        %v4133 = vcombine.high %v4123, 0.0
        %v4134 = vcombine.high %v4130, 0.0
        %v4135 = vcombine.high %v935, 0.0
        %v4137 = vunpack.c.l.s4 1983009808
        %v4138 = vunpack.c.0.s8 %v4137
        %v4139 = vlaneseq
        %v4140 = vshrl.u32 %v4139, 7
        %v4141 = vsub.s32 %v4138, %v4140
        %v4142 = vrot.slane %v935, %v4141
        %v4144 = vunpack.c.l.s4 1983009808
        %v4145 = vunpack.c.0.s8 %v4144
        %v4146 = vlaneseq
        %v4147 = vshrl.u32 %v4146, 7
        %v4148 = vsub.s32 %v4145, %v4147
        %v4149 = vrot.slane %v4135, %v4148
        %v4150 = vcombine.high %v4142, 0.0
        %v4152 = vunpack.c.l.s4 1934713408
        %v4153 = vunpack.c.0.s8 %v4152
        %v4154 = vlaneseq
        %v4155 = vshrl.u32 %v4154, 7
        %v4156 = vsub.s32 %v4153, %v4155
        %v4157 = vrot.slane %v4142, %v4156
        %v4159 = vunpack.c.l.s4 1934713408
        %v4160 = vunpack.c.0.s8 %v4159
        %v4161 = vlaneseq
        %v4162 = vshrl.u32 %v4161, 7
        %v4163 = vsub.s32 %v4160, %v4162
        %v4164 = vrot.slane %v4150, %v4163
        %v4165 = vcombine.high %v4149, 0.0
        %v4167 = vunpack.c.l.s4 1934713408
        %v4168 = vunpack.c.0.s8 %v4167
        %v4169 = vlaneseq
        %v4170 = vshrl.u32 %v4169, 7
        %v4171 = vsub.s32 %v4168, %v4170
        %v4172 = vrot.slane %v4149, %v4171
        %v4174 = vunpack.c.l.s4 1934713408
        %v4175 = vunpack.c.0.s8 %v4174
        %v4176 = vlaneseq
        %v4177 = vshrl.u32 %v4176, 7
        %v4178 = vsub.s32 %v4175, %v4177
        %v4179 = vrot.slane %v4165, %v4178
        %v4180 = vcombine.high %v4157, 0.0
        %v4181 = vcombine.high %v4164, 0.0
        %v4182 = vcombine.high %v4172, 0.0
        %v4183 = vcombine.high %v4179, 0.0
        %v4184 = vcombine.high %v936, 0.0
        %v4186 = vunpack.c.l.s4 1983009808
        %v4187 = vunpack.c.0.s8 %v4186
        %v4188 = vlaneseq
        %v4189 = vshrl.u32 %v4188, 7
        %v4190 = vsub.s32 %v4187, %v4189
        %v4191 = vrot.slane %v936, %v4190
        %v4193 = vunpack.c.l.s4 1983009808
        %v4194 = vunpack.c.0.s8 %v4193
        %v4195 = vlaneseq
        %v4196 = vshrl.u32 %v4195, 7
        %v4197 = vsub.s32 %v4194, %v4196
        %v4198 = vrot.slane %v4184, %v4197
        %v4199 = vcombine.high %v4191, 0.0
        %v4201 = vunpack.c.l.s4 1934713408
        %v4202 = vunpack.c.0.s8 %v4201
        %v4203 = vlaneseq
        %v4204 = vshrl.u32 %v4203, 7
        %v4205 = vsub.s32 %v4202, %v4204
        %v4206 = vrot.slane %v4191, %v4205
        %v4208 = vunpack.c.l.s4 1934713408
        %v4209 = vunpack.c.0.s8 %v4208
        %v4210 = vlaneseq
        %v4211 = vshrl.u32 %v4210, 7
        %v4212 = vsub.s32 %v4209, %v4211
        %v4213 = vrot.slane %v4199, %v4212
        %v4214 = vcombine.high %v4198, 0.0
        %v4216 = vunpack.c.l.s4 1934713408
        %v4217 = vunpack.c.0.s8 %v4216
        %v4218 = vlaneseq
        %v4219 = vshrl.u32 %v4218, 7
        %v4220 = vsub.s32 %v4217, %v4219
        %v4221 = vrot.slane %v4198, %v4220
        %v4223 = vunpack.c.l.s4 1934713408
        %v4224 = vunpack.c.0.s8 %v4223
        %v4225 = vlaneseq
        %v4226 = vshrl.u32 %v4225, 7
        %v4227 = vsub.s32 %v4224, %v4226
        %v4228 = vrot.slane %v4214, %v4227
        %v4229 = vcombine.high %v4206, 0.0
        %v4230 = vcombine.high %v4213, 0.0
        %v4231 = vcombine.high %v4221, 0.0
        %v4232 = vcombine.high %v4228, 0.0
        %v4233 = vcombine.high %v937, 0.0
        %v4235 = vunpack.c.l.s4 1983009808
        %v4236 = vunpack.c.0.s8 %v4235
        %v4237 = vlaneseq
        %v4238 = vshrl.u32 %v4237, 7
        %v4239 = vsub.s32 %v4236, %v4238
        %v4240 = vrot.slane %v937, %v4239
        %v4242 = vunpack.c.l.s4 1983009808
        %v4243 = vunpack.c.0.s8 %v4242
        %v4244 = vlaneseq
        %v4245 = vshrl.u32 %v4244, 7
        %v4246 = vsub.s32 %v4243, %v4245
        %v4247 = vrot.slane %v4233, %v4246
        %v4248 = vcombine.high %v4240, 0.0
        %v4250 = vunpack.c.l.s4 1934713408
        %v4251 = vunpack.c.0.s8 %v4250
        %v4252 = vlaneseq
        %v4253 = vshrl.u32 %v4252, 7
        %v4254 = vsub.s32 %v4251, %v4253
        %v4255 = vrot.slane %v4240, %v4254
        %v4257 = vunpack.c.l.s4 1934713408
        %v4258 = vunpack.c.0.s8 %v4257
        %v4259 = vlaneseq
        %v4260 = vshrl.u32 %v4259, 7
        %v4261 = vsub.s32 %v4258, %v4260
        %v4262 = vrot.slane %v4248, %v4261
        %v4263 = vcombine.high %v4247, 0.0
        %v4265 = vunpack.c.l.s4 1934713408
        %v4266 = vunpack.c.0.s8 %v4265
        %v4267 = vlaneseq
        %v4268 = vshrl.u32 %v4267, 7
        %v4269 = vsub.s32 %v4266, %v4268
        %v4270 = vrot.slane %v4247, %v4269
        %v4272 = vunpack.c.l.s4 1934713408
        %v4273 = vunpack.c.0.s8 %v4272
        %v4274 = vlaneseq
        %v4275 = vshrl.u32 %v4274, 7
        %v4276 = vsub.s32 %v4273, %v4275
        %v4277 = vrot.slane %v4263, %v4276
        %v4278 = vcombine.high %v4255, 0.0
        %v4279 = vcombine.high %v4262, 0.0
        %v4280 = vcombine.high %v4270, 0.0
        %v4281 = vcombine.high %v4277, 0.0
        %v4282 = vcombine.high %v938, 0.0
        %v4284 = vunpack.c.l.s4 1983009808
        %v4285 = vunpack.c.0.s8 %v4284
        %v4286 = vlaneseq
        %v4287 = vshrl.u32 %v4286, 7
        %v4288 = vsub.s32 %v4285, %v4287
        %v4289 = vrot.slane %v938, %v4288
        %v4291 = vunpack.c.l.s4 1983009808
        %v4292 = vunpack.c.0.s8 %v4291
        %v4293 = vlaneseq
        %v4294 = vshrl.u32 %v4293, 7
        %v4295 = vsub.s32 %v4292, %v4294
        %v4296 = vrot.slane %v4282, %v4295
        %v4297 = vcombine.high %v4289, 0.0
        %v4299 = vunpack.c.l.s4 1934713408
        %v4300 = vunpack.c.0.s8 %v4299
        %v4301 = vlaneseq
        %v4302 = vshrl.u32 %v4301, 7
        %v4303 = vsub.s32 %v4300, %v4302
        %v4304 = vrot.slane %v4289, %v4303
        %v4306 = vunpack.c.l.s4 1934713408
        %v4307 = vunpack.c.0.s8 %v4306
        %v4308 = vlaneseq
        %v4309 = vshrl.u32 %v4308, 7
        %v4310 = vsub.s32 %v4307, %v4309
        %v4311 = vrot.slane %v4297, %v4310
        %v4312 = vcombine.high %v4296, 0.0
        %v4314 = vunpack.c.l.s4 1934713408
        %v4315 = vunpack.c.0.s8 %v4314
        %v4316 = vlaneseq
        %v4317 = vshrl.u32 %v4316, 7
        %v4318 = vsub.s32 %v4315, %v4317
        %v4319 = vrot.slane %v4296, %v4318
        %v4321 = vunpack.c.l.s4 1934713408
        %v4322 = vunpack.c.0.s8 %v4321
        %v4323 = vlaneseq
        %v4324 = vshrl.u32 %v4323, 7
        %v4325 = vsub.s32 %v4322, %v4324
        %v4326 = vrot.slane %v4312, %v4325
        %v4327 = vcombine.high %v4304, 0.0
        %v4328 = vcombine.high %v4311, 0.0
        %v4329 = vcombine.high %v4319, 0.0
        %v4330 = vcombine.high %v4326, 0.0
        %v4331 = vcombine.high %v939, 0.0
        %v4333 = vunpack.c.l.s4 1983009808
        %v4334 = vunpack.c.0.s8 %v4333
        %v4335 = vlaneseq
        %v4336 = vshrl.u32 %v4335, 7
        %v4337 = vsub.s32 %v4334, %v4336
        %v4338 = vrot.slane %v939, %v4337
        %v4340 = vunpack.c.l.s4 1983009808
        %v4341 = vunpack.c.0.s8 %v4340
        %v4342 = vlaneseq
        %v4343 = vshrl.u32 %v4342, 7
        %v4344 = vsub.s32 %v4341, %v4343
        %v4345 = vrot.slane %v4331, %v4344
        %v4346 = vcombine.high %v4338, 0.0
        %v4348 = vunpack.c.l.s4 1934713408
        %v4349 = vunpack.c.0.s8 %v4348
        %v4350 = vlaneseq
        %v4351 = vshrl.u32 %v4350, 7
        %v4352 = vsub.s32 %v4349, %v4351
        %v4353 = vrot.slane %v4338, %v4352
        %v4355 = vunpack.c.l.s4 1934713408
        %v4356 = vunpack.c.0.s8 %v4355
        %v4357 = vlaneseq
        %v4358 = vshrl.u32 %v4357, 7
        %v4359 = vsub.s32 %v4356, %v4358
        %v4360 = vrot.slane %v4346, %v4359
        %v4361 = vcombine.high %v4345, 0.0
        %v4363 = vunpack.c.l.s4 1934713408
        %v4364 = vunpack.c.0.s8 %v4363
        %v4365 = vlaneseq
        %v4366 = vshrl.u32 %v4365, 7
        %v4367 = vsub.s32 %v4364, %v4366
        %v4368 = vrot.slane %v4345, %v4367
        %v4370 = vunpack.c.l.s4 1934713408
        %v4371 = vunpack.c.0.s8 %v4370
        %v4372 = vlaneseq
        %v4373 = vshrl.u32 %v4372, 7
        %v4374 = vsub.s32 %v4371, %v4373
        %v4375 = vrot.slane %v4361, %v4374
        %v4376 = vcombine.high %v4353, 0.0
        %v4377 = vcombine.high %v4360, 0.0
        %v4378 = vcombine.high %v4368, 0.0
        %v4379 = vcombine.high %v4375, 0.0
        %v4380 = vcombine.high %v940, 0.0
        %v4382 = vunpack.c.l.s4 1983009808
        %v4383 = vunpack.c.0.s8 %v4382
        %v4384 = vlaneseq
        %v4385 = vshrl.u32 %v4384, 7
        %v4386 = vsub.s32 %v4383, %v4385
        %v4387 = vrot.slane %v940, %v4386
        %v4389 = vunpack.c.l.s4 1983009808
        %v4390 = vunpack.c.0.s8 %v4389
        %v4391 = vlaneseq
        %v4392 = vshrl.u32 %v4391, 7
        %v4393 = vsub.s32 %v4390, %v4392
        %v4394 = vrot.slane %v4380, %v4393
        %v4395 = vcombine.high %v4387, 0.0
        %v4397 = vunpack.c.l.s4 1934713408
        %v4398 = vunpack.c.0.s8 %v4397
        %v4399 = vlaneseq
        %v4400 = vshrl.u32 %v4399, 7
        %v4401 = vsub.s32 %v4398, %v4400
        %v4402 = vrot.slane %v4387, %v4401
        %v4404 = vunpack.c.l.s4 1934713408
        %v4405 = vunpack.c.0.s8 %v4404
        %v4406 = vlaneseq
        %v4407 = vshrl.u32 %v4406, 7
        %v4408 = vsub.s32 %v4405, %v4407
        %v4409 = vrot.slane %v4395, %v4408
        %v4410 = vcombine.high %v4394, 0.0
        %v4412 = vunpack.c.l.s4 1934713408
        %v4413 = vunpack.c.0.s8 %v4412
        %v4414 = vlaneseq
        %v4415 = vshrl.u32 %v4414, 7
        %v4416 = vsub.s32 %v4413, %v4415
        %v4417 = vrot.slane %v4394, %v4416
        %v4419 = vunpack.c.l.s4 1934713408
        %v4420 = vunpack.c.0.s8 %v4419
        %v4421 = vlaneseq
        %v4422 = vshrl.u32 %v4421, 7
        %v4423 = vsub.s32 %v4420, %v4422
        %v4424 = vrot.slane %v4410, %v4423
        %v4425 = vcombine.high %v4402, 0.0
        %v4426 = vcombine.high %v4409, 0.0
        %v4427 = vcombine.high %v4417, 0.0
        %v4428 = vcombine.high %v4424, 0.0
        %v4429 = vcombine.high %v941, 0.0
        %v4431 = vunpack.c.l.s4 1983009808
        %v4432 = vunpack.c.0.s8 %v4431
        %v4433 = vlaneseq
        %v4434 = vshrl.u32 %v4433, 7
        %v4435 = vsub.s32 %v4432, %v4434
        %v4436 = vrot.slane %v941, %v4435
        %v4438 = vunpack.c.l.s4 1983009808
        %v4439 = vunpack.c.0.s8 %v4438
        %v4440 = vlaneseq
        %v4441 = vshrl.u32 %v4440, 7
        %v4442 = vsub.s32 %v4439, %v4441
        %v4443 = vrot.slane %v4429, %v4442
        %v4444 = vcombine.high %v4436, 0.0
        %v4446 = vunpack.c.l.s4 1934713408
        %v4447 = vunpack.c.0.s8 %v4446
        %v4448 = vlaneseq
        %v4449 = vshrl.u32 %v4448, 7
        %v4450 = vsub.s32 %v4447, %v4449
        %v4451 = vrot.slane %v4436, %v4450
        %v4453 = vunpack.c.l.s4 1934713408
        %v4454 = vunpack.c.0.s8 %v4453
        %v4455 = vlaneseq
        %v4456 = vshrl.u32 %v4455, 7
        %v4457 = vsub.s32 %v4454, %v4456
        %v4458 = vrot.slane %v4444, %v4457
        %v4459 = vcombine.high %v4443, 0.0
        %v4461 = vunpack.c.l.s4 1934713408
        %v4462 = vunpack.c.0.s8 %v4461
        %v4463 = vlaneseq
        %v4464 = vshrl.u32 %v4463, 7
        %v4465 = vsub.s32 %v4462, %v4464
        %v4466 = vrot.slane %v4443, %v4465
        %v4468 = vunpack.c.l.s4 1934713408
        %v4469 = vunpack.c.0.s8 %v4468
        %v4470 = vlaneseq
        %v4471 = vshrl.u32 %v4470, 7
        %v4472 = vsub.s32 %v4469, %v4471
        %v4473 = vrot.slane %v4459, %v4472
        %v4474 = vcombine.high %v4451, 0.0
        %v4475 = vcombine.high %v4458, 0.0
        %v4476 = vcombine.high %v4466, 0.0
        %v4477 = vcombine.high %v4473, 0.0
        %v4478 = vcombine.high %v942, 0.0
        %v4480 = vunpack.c.l.s4 1983009808
        %v4481 = vunpack.c.0.s8 %v4480
        %v4482 = vlaneseq
        %v4483 = vshrl.u32 %v4482, 7
        %v4484 = vsub.s32 %v4481, %v4483
        %v4485 = vrot.slane %v942, %v4484
        %v4487 = vunpack.c.l.s4 1983009808
        %v4488 = vunpack.c.0.s8 %v4487
        %v4489 = vlaneseq
        %v4490 = vshrl.u32 %v4489, 7
        %v4491 = vsub.s32 %v4488, %v4490
        %v4492 = vrot.slane %v4478, %v4491
        %v4493 = vcombine.high %v4485, 0.0
        %v4495 = vunpack.c.l.s4 1934713408
        %v4496 = vunpack.c.0.s8 %v4495
        %v4497 = vlaneseq
        %v4498 = vshrl.u32 %v4497, 7
        %v4499 = vsub.s32 %v4496, %v4498
        %v4500 = vrot.slane %v4485, %v4499
        %v4502 = vunpack.c.l.s4 1934713408
        %v4503 = vunpack.c.0.s8 %v4502
        %v4504 = vlaneseq
        %v4505 = vshrl.u32 %v4504, 7
        %v4506 = vsub.s32 %v4503, %v4505
        %v4507 = vrot.slane %v4493, %v4506
        %v4508 = vcombine.high %v4492, 0.0
        %v4510 = vunpack.c.l.s4 1934713408
        %v4511 = vunpack.c.0.s8 %v4510
        %v4512 = vlaneseq
        %v4513 = vshrl.u32 %v4512, 7
        %v4514 = vsub.s32 %v4511, %v4513
        %v4515 = vrot.slane %v4492, %v4514
        %v4517 = vunpack.c.l.s4 1934713408
        %v4518 = vunpack.c.0.s8 %v4517
        %v4519 = vlaneseq
        %v4520 = vshrl.u32 %v4519, 7
        %v4521 = vsub.s32 %v4518, %v4520
        %v4522 = vrot.slane %v4508, %v4521
        %v4523 = vcombine.high %v4500, 0.0
        %v4524 = vcombine.high %v4507, 0.0
        %v4525 = vcombine.high %v4515, 0.0
        %v4526 = vcombine.high %v4522, 0.0
        %v4527 = vcombine.high %v943, 0.0
        %v4529 = vunpack.c.l.s4 1983009808
        %v4530 = vunpack.c.0.s8 %v4529
        %v4531 = vlaneseq
        %v4532 = vshrl.u32 %v4531, 7
        %v4533 = vsub.s32 %v4530, %v4532
        %v4534 = vrot.slane %v943, %v4533
        %v4536 = vunpack.c.l.s4 1983009808
        %v4537 = vunpack.c.0.s8 %v4536
        %v4538 = vlaneseq
        %v4539 = vshrl.u32 %v4538, 7
        %v4540 = vsub.s32 %v4537, %v4539
        %v4541 = vrot.slane %v4527, %v4540
        %v4542 = vcombine.high %v4534, 0.0
        %v4544 = vunpack.c.l.s4 1934713408
        %v4545 = vunpack.c.0.s8 %v4544
        %v4546 = vlaneseq
        %v4547 = vshrl.u32 %v4546, 7
        %v4548 = vsub.s32 %v4545, %v4547
        %v4549 = vrot.slane %v4534, %v4548
        %v4551 = vunpack.c.l.s4 1934713408
        %v4552 = vunpack.c.0.s8 %v4551
        %v4553 = vlaneseq
        %v4554 = vshrl.u32 %v4553, 7
        %v4555 = vsub.s32 %v4552, %v4554
        %v4556 = vrot.slane %v4542, %v4555
        %v4557 = vcombine.high %v4541, 0.0
        %v4559 = vunpack.c.l.s4 1934713408
        %v4560 = vunpack.c.0.s8 %v4559
        %v4561 = vlaneseq
        %v4562 = vshrl.u32 %v4561, 7
        %v4563 = vsub.s32 %v4560, %v4562
        %v4564 = vrot.slane %v4541, %v4563
        %v4566 = vunpack.c.l.s4 1934713408
        %v4567 = vunpack.c.0.s8 %v4566
        %v4568 = vlaneseq
        %v4569 = vshrl.u32 %v4568, 7
        %v4570 = vsub.s32 %v4567, %v4569
        %v4571 = vrot.slane %v4557, %v4570
        %v4572 = vcombine.high %v4549, 0.0
        %v4573 = vcombine.high %v4556, 0.0
        %v4574 = vcombine.high %v4564, 0.0
        %v4575 = vcombine.high %v4571, 0.0
        %v4576 = vcombine.high %v944, 0.0
        %v4578 = vunpack.c.l.s4 1983009808
        %v4579 = vunpack.c.0.s8 %v4578
        %v4580 = vlaneseq
        %v4581 = vshrl.u32 %v4580, 7
        %v4582 = vsub.s32 %v4579, %v4581
        %v4583 = vrot.slane %v944, %v4582
        %v4585 = vunpack.c.l.s4 1983009808
        %v4586 = vunpack.c.0.s8 %v4585
        %v4587 = vlaneseq
        %v4588 = vshrl.u32 %v4587, 7
        %v4589 = vsub.s32 %v4586, %v4588
        %v4590 = vrot.slane %v4576, %v4589
        %v4591 = vcombine.high %v4583, 0.0
        %v4593 = vunpack.c.l.s4 1934713408
        %v4594 = vunpack.c.0.s8 %v4593
        %v4595 = vlaneseq
        %v4596 = vshrl.u32 %v4595, 7
        %v4597 = vsub.s32 %v4594, %v4596
        %v4598 = vrot.slane %v4583, %v4597
        %v4600 = vunpack.c.l.s4 1934713408
        %v4601 = vunpack.c.0.s8 %v4600
        %v4602 = vlaneseq
        %v4603 = vshrl.u32 %v4602, 7
        %v4604 = vsub.s32 %v4601, %v4603
        %v4605 = vrot.slane %v4591, %v4604
        %v4606 = vcombine.high %v4590, 0.0
        %v4608 = vunpack.c.l.s4 1934713408
        %v4609 = vunpack.c.0.s8 %v4608
        %v4610 = vlaneseq
        %v4611 = vshrl.u32 %v4610, 7
        %v4612 = vsub.s32 %v4609, %v4611
        %v4613 = vrot.slane %v4590, %v4612
        %v4615 = vunpack.c.l.s4 1934713408
        %v4616 = vunpack.c.0.s8 %v4615
        %v4617 = vlaneseq
        %v4618 = vshrl.u32 %v4617, 7
        %v4619 = vsub.s32 %v4616, %v4618
        %v4620 = vrot.slane %v4606, %v4619
        %v4621 = vcombine.high %v4598, 0.0
        %v4622 = vcombine.high %v4605, 0.0
        %v4623 = vcombine.high %v4613, 0.0
        %v4624 = vcombine.high %v4620, 0.0
        %v4625 = vcombine.high %v945, 0.0
        %v4627 = vunpack.c.l.s4 1983009808
        %v4628 = vunpack.c.0.s8 %v4627
        %v4629 = vlaneseq
        %v4630 = vshrl.u32 %v4629, 7
        %v4631 = vsub.s32 %v4628, %v4630
        %v4632 = vrot.slane %v945, %v4631
        %v4634 = vunpack.c.l.s4 1983009808
        %v4635 = vunpack.c.0.s8 %v4634
        %v4636 = vlaneseq
        %v4637 = vshrl.u32 %v4636, 7
        %v4638 = vsub.s32 %v4635, %v4637
        %v4639 = vrot.slane %v4625, %v4638
        %v4640 = vcombine.high %v4632, 0.0
        %v4642 = vunpack.c.l.s4 1934713408
        %v4643 = vunpack.c.0.s8 %v4642
        %v4644 = vlaneseq
        %v4645 = vshrl.u32 %v4644, 7
        %v4646 = vsub.s32 %v4643, %v4645
        %v4647 = vrot.slane %v4632, %v4646
        %v4649 = vunpack.c.l.s4 1934713408
        %v4650 = vunpack.c.0.s8 %v4649
        %v4651 = vlaneseq
        %v4652 = vshrl.u32 %v4651, 7
        %v4653 = vsub.s32 %v4650, %v4652
        %v4654 = vrot.slane %v4640, %v4653
        %v4655 = vcombine.high %v4639, 0.0
        %v4657 = vunpack.c.l.s4 1934713408
        %v4658 = vunpack.c.0.s8 %v4657
        %v4659 = vlaneseq
        %v4660 = vshrl.u32 %v4659, 7
        %v4661 = vsub.s32 %v4658, %v4660
        %v4662 = vrot.slane %v4639, %v4661
        %v4664 = vunpack.c.l.s4 1934713408
        %v4665 = vunpack.c.0.s8 %v4664
        %v4666 = vlaneseq
        %v4667 = vshrl.u32 %v4666, 7
        %v4668 = vsub.s32 %v4665, %v4667
        %v4669 = vrot.slane %v4655, %v4668
        %v4670 = vcombine.high %v4647, 0.0
        %v4671 = vcombine.high %v4654, 0.0
        %v4672 = vcombine.high %v4662, 0.0
        %v4673 = vcombine.high %v4669, 0.0
        %v4674 = vcombine.high %v946, 0.0
        %v4676 = vunpack.c.l.s4 1983009808
        %v4677 = vunpack.c.0.s8 %v4676
        %v4678 = vlaneseq
        %v4679 = vshrl.u32 %v4678, 7
        %v4680 = vsub.s32 %v4677, %v4679
        %v4681 = vrot.slane %v946, %v4680
        %v4683 = vunpack.c.l.s4 1983009808
        %v4684 = vunpack.c.0.s8 %v4683
        %v4685 = vlaneseq
        %v4686 = vshrl.u32 %v4685, 7
        %v4687 = vsub.s32 %v4684, %v4686
        %v4688 = vrot.slane %v4674, %v4687
        %v4689 = vcombine.high %v4681, 0.0
        %v4691 = vunpack.c.l.s4 1934713408
        %v4692 = vunpack.c.0.s8 %v4691
        %v4693 = vlaneseq
        %v4694 = vshrl.u32 %v4693, 7
        %v4695 = vsub.s32 %v4692, %v4694
        %v4696 = vrot.slane %v4681, %v4695
        %v4698 = vunpack.c.l.s4 1934713408
        %v4699 = vunpack.c.0.s8 %v4698
        %v4700 = vlaneseq
        %v4701 = vshrl.u32 %v4700, 7
        %v4702 = vsub.s32 %v4699, %v4701
        %v4703 = vrot.slane %v4689, %v4702
        %v4704 = vcombine.high %v4688, 0.0
        %v4706 = vunpack.c.l.s4 1934713408
        %v4707 = vunpack.c.0.s8 %v4706
        %v4708 = vlaneseq
        %v4709 = vshrl.u32 %v4708, 7
        %v4710 = vsub.s32 %v4707, %v4709
        %v4711 = vrot.slane %v4688, %v4710
        %v4713 = vunpack.c.l.s4 1934713408
        %v4714 = vunpack.c.0.s8 %v4713
        %v4715 = vlaneseq
        %v4716 = vshrl.u32 %v4715, 7
        %v4717 = vsub.s32 %v4714, %v4716
        %v4718 = vrot.slane %v4704, %v4717
        %v4719 = vcombine.high %v4696, 0.0
        %v4720 = vcombine.high %v4703, 0.0
        %v4721 = vcombine.high %v4711, 0.0
        %v4722 = vcombine.high %v4718, 0.0
        %v4723 = vcombine.high %v947, 0.0
        %v4725 = vunpack.c.l.s4 1983009808
        %v4726 = vunpack.c.0.s8 %v4725
        %v4727 = vlaneseq
        %v4728 = vshrl.u32 %v4727, 7
        %v4729 = vsub.s32 %v4726, %v4728
        %v4730 = vrot.slane %v947, %v4729
        %v4732 = vunpack.c.l.s4 1983009808
        %v4733 = vunpack.c.0.s8 %v4732
        %v4734 = vlaneseq
        %v4735 = vshrl.u32 %v4734, 7
        %v4736 = vsub.s32 %v4733, %v4735
        %v4737 = vrot.slane %v4723, %v4736
        %v4738 = vcombine.high %v4730, 0.0
        %v4740 = vunpack.c.l.s4 1934713408
        %v4741 = vunpack.c.0.s8 %v4740
        %v4742 = vlaneseq
        %v4743 = vshrl.u32 %v4742, 7
        %v4744 = vsub.s32 %v4741, %v4743
        %v4745 = vrot.slane %v4730, %v4744
        %v4747 = vunpack.c.l.s4 1934713408
        %v4748 = vunpack.c.0.s8 %v4747
        %v4749 = vlaneseq
        %v4750 = vshrl.u32 %v4749, 7
        %v4751 = vsub.s32 %v4748, %v4750
        %v4752 = vrot.slane %v4738, %v4751
        %v4753 = vcombine.high %v4737, 0.0
        %v4755 = vunpack.c.l.s4 1934713408
        %v4756 = vunpack.c.0.s8 %v4755
        %v4757 = vlaneseq
        %v4758 = vshrl.u32 %v4757, 7
        %v4759 = vsub.s32 %v4756, %v4758
        %v4760 = vrot.slane %v4737, %v4759
        %v4762 = vunpack.c.l.s4 1934713408
        %v4763 = vunpack.c.0.s8 %v4762
        %v4764 = vlaneseq
        %v4765 = vshrl.u32 %v4764, 7
        %v4766 = vsub.s32 %v4763, %v4765
        %v4767 = vrot.slane %v4753, %v4766
        %v4768 = vcombine.high %v4745, 0.0
        %v4769 = vcombine.high %v4752, 0.0
        %v4770 = vcombine.high %v4760, 0.0
        %v4771 = vcombine.high %v4767, 0.0
        %v4772 = vcombine.high %v948, 0.0
        %v4774 = vunpack.c.l.s4 1983009808
        %v4775 = vunpack.c.0.s8 %v4774
        %v4776 = vlaneseq
        %v4777 = vshrl.u32 %v4776, 7
        %v4778 = vsub.s32 %v4775, %v4777
        %v4779 = vrot.slane %v948, %v4778
        %v4781 = vunpack.c.l.s4 1983009808
        %v4782 = vunpack.c.0.s8 %v4781
        %v4783 = vlaneseq
        %v4784 = vshrl.u32 %v4783, 7
        %v4785 = vsub.s32 %v4782, %v4784
        %v4786 = vrot.slane %v4772, %v4785
        %v4787 = vcombine.high %v4779, 0.0
        %v4789 = vunpack.c.l.s4 1934713408
        %v4790 = vunpack.c.0.s8 %v4789
        %v4791 = vlaneseq
        %v4792 = vshrl.u32 %v4791, 7
        %v4793 = vsub.s32 %v4790, %v4792
        %v4794 = vrot.slane %v4779, %v4793
        %v4796 = vunpack.c.l.s4 1934713408
        %v4797 = vunpack.c.0.s8 %v4796
        %v4798 = vlaneseq
        %v4799 = vshrl.u32 %v4798, 7
        %v4800 = vsub.s32 %v4797, %v4799
        %v4801 = vrot.slane %v4787, %v4800
        %v4802 = vcombine.high %v4786, 0.0
        %v4804 = vunpack.c.l.s4 1934713408
        %v4805 = vunpack.c.0.s8 %v4804
        %v4806 = vlaneseq
        %v4807 = vshrl.u32 %v4806, 7
        %v4808 = vsub.s32 %v4805, %v4807
        %v4809 = vrot.slane %v4786, %v4808
        %v4811 = vunpack.c.l.s4 1934713408
        %v4812 = vunpack.c.0.s8 %v4811
        %v4813 = vlaneseq
        %v4814 = vshrl.u32 %v4813, 7
        %v4815 = vsub.s32 %v4812, %v4814
        %v4816 = vrot.slane %v4802, %v4815
        %v4817 = vcombine.high %v4794, 0.0
        %v4818 = vcombine.high %v4801, 0.0
        %v4819 = vcombine.high %v4809, 0.0
        %v4820 = vcombine.high %v4816, 0.0
        %v4821 = vcombine.high %v949, 0.0
        %v4823 = vunpack.c.l.s4 1983009808
        %v4824 = vunpack.c.0.s8 %v4823
        %v4825 = vlaneseq
        %v4826 = vshrl.u32 %v4825, 7
        %v4827 = vsub.s32 %v4824, %v4826
        %v4828 = vrot.slane %v949, %v4827
        %v4830 = vunpack.c.l.s4 1983009808
        %v4831 = vunpack.c.0.s8 %v4830
        %v4832 = vlaneseq
        %v4833 = vshrl.u32 %v4832, 7
        %v4834 = vsub.s32 %v4831, %v4833
        %v4835 = vrot.slane %v4821, %v4834
        %v4836 = vcombine.high %v4828, 0.0
        %v4838 = vunpack.c.l.s4 1934713408
        %v4839 = vunpack.c.0.s8 %v4838
        %v4840 = vlaneseq
        %v4841 = vshrl.u32 %v4840, 7
        %v4842 = vsub.s32 %v4839, %v4841
        %v4843 = vrot.slane %v4828, %v4842
        %v4845 = vunpack.c.l.s4 1934713408
        %v4846 = vunpack.c.0.s8 %v4845
        %v4847 = vlaneseq
        %v4848 = vshrl.u32 %v4847, 7
        %v4849 = vsub.s32 %v4846, %v4848
        %v4850 = vrot.slane %v4836, %v4849
        %v4851 = vcombine.high %v4835, 0.0
        %v4853 = vunpack.c.l.s4 1934713408
        %v4854 = vunpack.c.0.s8 %v4853
        %v4855 = vlaneseq
        %v4856 = vshrl.u32 %v4855, 7
        %v4857 = vsub.s32 %v4854, %v4856
        %v4858 = vrot.slane %v4835, %v4857
        %v4860 = vunpack.c.l.s4 1934713408
        %v4861 = vunpack.c.0.s8 %v4860
        %v4862 = vlaneseq
        %v4863 = vshrl.u32 %v4862, 7
        %v4864 = vsub.s32 %v4861, %v4863
        %v4865 = vrot.slane %v4851, %v4864
        %v4866 = vcombine.high %v4843, 0.0
        %v4867 = vcombine.high %v4850, 0.0
        %v4868 = vcombine.high %v4858, 0.0
        %v4869 = vcombine.high %v4865, 0.0
        %v4870 = vcombine.high %v950, 0.0
        %v4872 = vunpack.c.l.s4 1983009808
        %v4873 = vunpack.c.0.s8 %v4872
        %v4874 = vlaneseq
        %v4875 = vshrl.u32 %v4874, 7
        %v4876 = vsub.s32 %v4873, %v4875
        %v4877 = vrot.slane %v950, %v4876
        %v4879 = vunpack.c.l.s4 1983009808
        %v4880 = vunpack.c.0.s8 %v4879
        %v4881 = vlaneseq
        %v4882 = vshrl.u32 %v4881, 7
        %v4883 = vsub.s32 %v4880, %v4882
        %v4884 = vrot.slane %v4870, %v4883
        %v4885 = vcombine.high %v4877, 0.0
        %v4887 = vunpack.c.l.s4 1934713408
        %v4888 = vunpack.c.0.s8 %v4887
        %v4889 = vlaneseq
        %v4890 = vshrl.u32 %v4889, 7
        %v4891 = vsub.s32 %v4888, %v4890
        %v4892 = vrot.slane %v4877, %v4891
        %v4894 = vunpack.c.l.s4 1934713408
        %v4895 = vunpack.c.0.s8 %v4894
        %v4896 = vlaneseq
        %v4897 = vshrl.u32 %v4896, 7
        %v4898 = vsub.s32 %v4895, %v4897
        %v4899 = vrot.slane %v4885, %v4898
        %v4900 = vcombine.high %v4884, 0.0
        %v4902 = vunpack.c.l.s4 1934713408
        %v4903 = vunpack.c.0.s8 %v4902
        %v4904 = vlaneseq
        %v4905 = vshrl.u32 %v4904, 7
        %v4906 = vsub.s32 %v4903, %v4905
        %v4907 = vrot.slane %v4884, %v4906
        %v4909 = vunpack.c.l.s4 1934713408
        %v4910 = vunpack.c.0.s8 %v4909
        %v4911 = vlaneseq
        %v4912 = vshrl.u32 %v4911, 7
        %v4913 = vsub.s32 %v4910, %v4912
        %v4914 = vrot.slane %v4900, %v4913
        %v4915 = vcombine.high %v4892, 0.0
        %v4916 = vcombine.high %v4899, 0.0
        %v4917 = vcombine.high %v4907, 0.0
        %v4918 = vcombine.high %v4914, 0.0
        %v4919 = vcombine.high %v951, 0.0
        %v4921 = vunpack.c.l.s4 1983009808
        %v4922 = vunpack.c.0.s8 %v4921
        %v4923 = vlaneseq
        %v4924 = vshrl.u32 %v4923, 7
        %v4925 = vsub.s32 %v4922, %v4924
        %v4926 = vrot.slane %v951, %v4925
        %v4928 = vunpack.c.l.s4 1983009808
        %v4929 = vunpack.c.0.s8 %v4928
        %v4930 = vlaneseq
        %v4931 = vshrl.u32 %v4930, 7
        %v4932 = vsub.s32 %v4929, %v4931
        %v4933 = vrot.slane %v4919, %v4932
        %v4934 = vcombine.high %v4926, 0.0
        %v4936 = vunpack.c.l.s4 1934713408
        %v4937 = vunpack.c.0.s8 %v4936
        %v4938 = vlaneseq
        %v4939 = vshrl.u32 %v4938, 7
        %v4940 = vsub.s32 %v4937, %v4939
        %v4941 = vrot.slane %v4926, %v4940
        %v4943 = vunpack.c.l.s4 1934713408
        %v4944 = vunpack.c.0.s8 %v4943
        %v4945 = vlaneseq
        %v4946 = vshrl.u32 %v4945, 7
        %v4947 = vsub.s32 %v4944, %v4946
        %v4948 = vrot.slane %v4934, %v4947
        %v4949 = vcombine.high %v4933, 0.0
        %v4951 = vunpack.c.l.s4 1934713408
        %v4952 = vunpack.c.0.s8 %v4951
        %v4953 = vlaneseq
        %v4954 = vshrl.u32 %v4953, 7
        %v4955 = vsub.s32 %v4952, %v4954
        %v4956 = vrot.slane %v4933, %v4955
        %v4958 = vunpack.c.l.s4 1934713408
        %v4959 = vunpack.c.0.s8 %v4958
        %v4960 = vlaneseq
        %v4961 = vshrl.u32 %v4960, 7
        %v4962 = vsub.s32 %v4959, %v4961
        %v4963 = vrot.slane %v4949, %v4962
        %v4964 = vcombine.high %v4941, 0.0
        %v4965 = vcombine.high %v4948, 0.0
        %v4966 = vcombine.high %v4956, 0.0
        %v4967 = vcombine.high %v4963, 0.0
        %v4968 = vcombine.high %v952, 0.0
        %v4970 = vunpack.c.l.s4 1983009808
        %v4971 = vunpack.c.0.s8 %v4970
        %v4972 = vlaneseq
        %v4973 = vshrl.u32 %v4972, 7
        %v4974 = vsub.s32 %v4971, %v4973
        %v4975 = vrot.slane %v952, %v4974
        %v4977 = vunpack.c.l.s4 1983009808
        %v4978 = vunpack.c.0.s8 %v4977
        %v4979 = vlaneseq
        %v4980 = vshrl.u32 %v4979, 7
        %v4981 = vsub.s32 %v4978, %v4980
        %v4982 = vrot.slane %v4968, %v4981
        %v4983 = vcombine.high %v4975, 0.0
        %v4985 = vunpack.c.l.s4 1934713408
        %v4986 = vunpack.c.0.s8 %v4985
        %v4987 = vlaneseq
        %v4988 = vshrl.u32 %v4987, 7
        %v4989 = vsub.s32 %v4986, %v4988
        %v4990 = vrot.slane %v4975, %v4989
        %v4992 = vunpack.c.l.s4 1934713408
        %v4993 = vunpack.c.0.s8 %v4992
        %v4994 = vlaneseq
        %v4995 = vshrl.u32 %v4994, 7
        %v4996 = vsub.s32 %v4993, %v4995
        %v4997 = vrot.slane %v4983, %v4996
        %v4998 = vcombine.high %v4982, 0.0
        %v5000 = vunpack.c.l.s4 1934713408
        %v5001 = vunpack.c.0.s8 %v5000
        %v5002 = vlaneseq
        %v5003 = vshrl.u32 %v5002, 7
        %v5004 = vsub.s32 %v5001, %v5003
        %v5005 = vrot.slane %v4982, %v5004
        %v5007 = vunpack.c.l.s4 1934713408
        %v5008 = vunpack.c.0.s8 %v5007
        %v5009 = vlaneseq
        %v5010 = vshrl.u32 %v5009, 7
        %v5011 = vsub.s32 %v5008, %v5010
        %v5012 = vrot.slane %v4998, %v5011
        %v5013 = vcombine.high %v4990, 0.0
        %v5014 = vcombine.high %v4997, 0.0
        %v5015 = vcombine.high %v5005, 0.0
        %v5016 = vcombine.high %v5012, 0.0
        %v5017 = vcombine.high %v953, 0.0
        %v5019 = vunpack.c.l.s4 1983009808
        %v5020 = vunpack.c.0.s8 %v5019
        %v5021 = vlaneseq
        %v5022 = vshrl.u32 %v5021, 7
        %v5023 = vsub.s32 %v5020, %v5022
        %v5024 = vrot.slane %v953, %v5023
        %v5026 = vunpack.c.l.s4 1983009808
        %v5027 = vunpack.c.0.s8 %v5026
        %v5028 = vlaneseq
        %v5029 = vshrl.u32 %v5028, 7
        %v5030 = vsub.s32 %v5027, %v5029
        %v5031 = vrot.slane %v5017, %v5030
        %v5032 = vcombine.high %v5024, 0.0
        %v5034 = vunpack.c.l.s4 1934713408
        %v5035 = vunpack.c.0.s8 %v5034
        %v5036 = vlaneseq
        %v5037 = vshrl.u32 %v5036, 7
        %v5038 = vsub.s32 %v5035, %v5037
        %v5039 = vrot.slane %v5024, %v5038
        %v5041 = vunpack.c.l.s4 1934713408
        %v5042 = vunpack.c.0.s8 %v5041
        %v5043 = vlaneseq
        %v5044 = vshrl.u32 %v5043, 7
        %v5045 = vsub.s32 %v5042, %v5044
        %v5046 = vrot.slane %v5032, %v5045
        %v5047 = vcombine.high %v5031, 0.0
        %v5049 = vunpack.c.l.s4 1934713408
        %v5050 = vunpack.c.0.s8 %v5049
        %v5051 = vlaneseq
        %v5052 = vshrl.u32 %v5051, 7
        %v5053 = vsub.s32 %v5050, %v5052
        %v5054 = vrot.slane %v5031, %v5053
        %v5056 = vunpack.c.l.s4 1934713408
        %v5057 = vunpack.c.0.s8 %v5056
        %v5058 = vlaneseq
        %v5059 = vshrl.u32 %v5058, 7
        %v5060 = vsub.s32 %v5057, %v5059
        %v5061 = vrot.slane %v5047, %v5060
        %v5062 = vcombine.high %v5039, 0.0
        %v5063 = vcombine.high %v5046, 0.0
        %v5064 = vcombine.high %v5054, 0.0
        %v5065 = vcombine.high %v5061, 0.0
        %v5066 = vcombine.high %v954, 0.0
        %v5068 = vunpack.c.l.s4 1983009808
        %v5069 = vunpack.c.0.s8 %v5068
        %v5070 = vlaneseq
        %v5071 = vshrl.u32 %v5070, 7
        %v5072 = vsub.s32 %v5069, %v5071
        %v5073 = vrot.slane %v954, %v5072
        %v5075 = vunpack.c.l.s4 1983009808
        %v5076 = vunpack.c.0.s8 %v5075
        %v5077 = vlaneseq
        %v5078 = vshrl.u32 %v5077, 7
        %v5079 = vsub.s32 %v5076, %v5078
        %v5080 = vrot.slane %v5066, %v5079
        %v5081 = vcombine.high %v5073, 0.0
        %v5083 = vunpack.c.l.s4 1934713408
        %v5084 = vunpack.c.0.s8 %v5083
        %v5085 = vlaneseq
        %v5086 = vshrl.u32 %v5085, 7
        %v5087 = vsub.s32 %v5084, %v5086
        %v5088 = vrot.slane %v5073, %v5087
        %v5090 = vunpack.c.l.s4 1934713408
        %v5091 = vunpack.c.0.s8 %v5090
        %v5092 = vlaneseq
        %v5093 = vshrl.u32 %v5092, 7
        %v5094 = vsub.s32 %v5091, %v5093
        %v5095 = vrot.slane %v5081, %v5094
        %v5096 = vcombine.high %v5080, 0.0
        %v5098 = vunpack.c.l.s4 1934713408
        %v5099 = vunpack.c.0.s8 %v5098
        %v5100 = vlaneseq
        %v5101 = vshrl.u32 %v5100, 7
        %v5102 = vsub.s32 %v5099, %v5101
        %v5103 = vrot.slane %v5080, %v5102
        %v5105 = vunpack.c.l.s4 1934713408
        %v5106 = vunpack.c.0.s8 %v5105
        %v5107 = vlaneseq
        %v5108 = vshrl.u32 %v5107, 7
        %v5109 = vsub.s32 %v5106, %v5108
        %v5110 = vrot.slane %v5096, %v5109
        %v5111 = vcombine.high %v5088, 0.0
        %v5112 = vcombine.high %v5095, 0.0
        %v5113 = vcombine.high %v5103, 0.0
        %v5114 = vcombine.high %v5110, 0.0
        %v5115 = vcombine.high %v955, 0.0
        %v5117 = vunpack.c.l.s4 1983009808
        %v5118 = vunpack.c.0.s8 %v5117
        %v5119 = vlaneseq
        %v5120 = vshrl.u32 %v5119, 7
        %v5121 = vsub.s32 %v5118, %v5120
        %v5122 = vrot.slane %v955, %v5121
        %v5124 = vunpack.c.l.s4 1983009808
        %v5125 = vunpack.c.0.s8 %v5124
        %v5126 = vlaneseq
        %v5127 = vshrl.u32 %v5126, 7
        %v5128 = vsub.s32 %v5125, %v5127
        %v5129 = vrot.slane %v5115, %v5128
        %v5130 = vcombine.high %v5122, 0.0
        %v5132 = vunpack.c.l.s4 1934713408
        %v5133 = vunpack.c.0.s8 %v5132
        %v5134 = vlaneseq
        %v5135 = vshrl.u32 %v5134, 7
        %v5136 = vsub.s32 %v5133, %v5135
        %v5137 = vrot.slane %v5122, %v5136
        %v5139 = vunpack.c.l.s4 1934713408
        %v5140 = vunpack.c.0.s8 %v5139
        %v5141 = vlaneseq
        %v5142 = vshrl.u32 %v5141, 7
        %v5143 = vsub.s32 %v5140, %v5142
        %v5144 = vrot.slane %v5130, %v5143
        %v5145 = vcombine.high %v5129, 0.0
        %v5147 = vunpack.c.l.s4 1934713408
        %v5148 = vunpack.c.0.s8 %v5147
        %v5149 = vlaneseq
        %v5150 = vshrl.u32 %v5149, 7
        %v5151 = vsub.s32 %v5148, %v5150
        %v5152 = vrot.slane %v5129, %v5151
        %v5154 = vunpack.c.l.s4 1934713408
        %v5155 = vunpack.c.0.s8 %v5154
        %v5156 = vlaneseq
        %v5157 = vshrl.u32 %v5156, 7
        %v5158 = vsub.s32 %v5155, %v5157
        %v5159 = vrot.slane %v5145, %v5158
        %v5160 = vcombine.high %v5137, 0.0
        %v5161 = vcombine.high %v5144, 0.0
        %v5162 = vcombine.high %v5152, 0.0
        %v5163 = vcombine.high %v5159, 0.0
        %v5164 = vcombine.high %v956, 0.0
        %v5166 = vunpack.c.l.s4 1983009808
        %v5167 = vunpack.c.0.s8 %v5166
        %v5168 = vlaneseq
        %v5169 = vshrl.u32 %v5168, 7
        %v5170 = vsub.s32 %v5167, %v5169
        %v5171 = vrot.slane %v956, %v5170
        %v5173 = vunpack.c.l.s4 1983009808
        %v5174 = vunpack.c.0.s8 %v5173
        %v5175 = vlaneseq
        %v5176 = vshrl.u32 %v5175, 7
        %v5177 = vsub.s32 %v5174, %v5176
        %v5178 = vrot.slane %v5164, %v5177
        %v5179 = vcombine.high %v5171, 0.0
        %v5181 = vunpack.c.l.s4 1934713408
        %v5182 = vunpack.c.0.s8 %v5181
        %v5183 = vlaneseq
        %v5184 = vshrl.u32 %v5183, 7
        %v5185 = vsub.s32 %v5182, %v5184
        %v5186 = vrot.slane %v5171, %v5185
        %v5188 = vunpack.c.l.s4 1934713408
        %v5189 = vunpack.c.0.s8 %v5188
        %v5190 = vlaneseq
        %v5191 = vshrl.u32 %v5190, 7
        %v5192 = vsub.s32 %v5189, %v5191
        %v5193 = vrot.slane %v5179, %v5192
        %v5194 = vcombine.high %v5178, 0.0
        %v5196 = vunpack.c.l.s4 1934713408
        %v5197 = vunpack.c.0.s8 %v5196
        %v5198 = vlaneseq
        %v5199 = vshrl.u32 %v5198, 7
        %v5200 = vsub.s32 %v5197, %v5199
        %v5201 = vrot.slane %v5178, %v5200
        %v5203 = vunpack.c.l.s4 1934713408
        %v5204 = vunpack.c.0.s8 %v5203
        %v5205 = vlaneseq
        %v5206 = vshrl.u32 %v5205, 7
        %v5207 = vsub.s32 %v5204, %v5206
        %v5208 = vrot.slane %v5194, %v5207
        %v5209 = vcombine.high %v5186, 0.0
        %v5210 = vcombine.high %v5193, 0.0
        %v5211 = vcombine.high %v5201, 0.0
        %v5212 = vcombine.high %v5208, 0.0
        %v5213 = vcombine.high %v957, 0.0
        %v5215 = vunpack.c.l.s4 1983009808
        %v5216 = vunpack.c.0.s8 %v5215
        %v5217 = vlaneseq
        %v5218 = vshrl.u32 %v5217, 7
        %v5219 = vsub.s32 %v5216, %v5218
        %v5220 = vrot.slane %v957, %v5219
        %v5222 = vunpack.c.l.s4 1983009808
        %v5223 = vunpack.c.0.s8 %v5222
        %v5224 = vlaneseq
        %v5225 = vshrl.u32 %v5224, 7
        %v5226 = vsub.s32 %v5223, %v5225
        %v5227 = vrot.slane %v5213, %v5226
        %v5228 = vcombine.high %v5220, 0.0
        %v5230 = vunpack.c.l.s4 1934713408
        %v5231 = vunpack.c.0.s8 %v5230
        %v5232 = vlaneseq
        %v5233 = vshrl.u32 %v5232, 7
        %v5234 = vsub.s32 %v5231, %v5233
        %v5235 = vrot.slane %v5220, %v5234
        %v5237 = vunpack.c.l.s4 1934713408
        %v5238 = vunpack.c.0.s8 %v5237
        %v5239 = vlaneseq
        %v5240 = vshrl.u32 %v5239, 7
        %v5241 = vsub.s32 %v5238, %v5240
        %v5242 = vrot.slane %v5228, %v5241
        %v5243 = vcombine.high %v5227, 0.0
        %v5245 = vunpack.c.l.s4 1934713408
        %v5246 = vunpack.c.0.s8 %v5245
        %v5247 = vlaneseq
        %v5248 = vshrl.u32 %v5247, 7
        %v5249 = vsub.s32 %v5246, %v5248
        %v5250 = vrot.slane %v5227, %v5249
        %v5252 = vunpack.c.l.s4 1934713408
        %v5253 = vunpack.c.0.s8 %v5252
        %v5254 = vlaneseq
        %v5255 = vshrl.u32 %v5254, 7
        %v5256 = vsub.s32 %v5253, %v5255
        %v5257 = vrot.slane %v5243, %v5256
        %v5258 = vcombine.high %v5235, 0.0
        %v5259 = vcombine.high %v5242, 0.0
        %v5260 = vcombine.high %v5250, 0.0
        %v5261 = vcombine.high %v5257, 0.0
        %v5262 = vcombine.high %v958, 0.0
        %v5264 = vunpack.c.l.s4 1983009808
        %v5265 = vunpack.c.0.s8 %v5264
        %v5266 = vlaneseq
        %v5267 = vshrl.u32 %v5266, 7
        %v5268 = vsub.s32 %v5265, %v5267
        %v5269 = vrot.slane %v958, %v5268
        %v5271 = vunpack.c.l.s4 1983009808
        %v5272 = vunpack.c.0.s8 %v5271
        %v5273 = vlaneseq
        %v5274 = vshrl.u32 %v5273, 7
        %v5275 = vsub.s32 %v5272, %v5274
        %v5276 = vrot.slane %v5262, %v5275
        %v5277 = vcombine.high %v5269, 0.0
        %v5279 = vunpack.c.l.s4 1934713408
        %v5280 = vunpack.c.0.s8 %v5279
        %v5281 = vlaneseq
        %v5282 = vshrl.u32 %v5281, 7
        %v5283 = vsub.s32 %v5280, %v5282
        %v5284 = vrot.slane %v5269, %v5283
        %v5286 = vunpack.c.l.s4 1934713408
        %v5287 = vunpack.c.0.s8 %v5286
        %v5288 = vlaneseq
        %v5289 = vshrl.u32 %v5288, 7
        %v5290 = vsub.s32 %v5287, %v5289
        %v5291 = vrot.slane %v5277, %v5290
        %v5292 = vcombine.high %v5276, 0.0
        %v5294 = vunpack.c.l.s4 1934713408
        %v5295 = vunpack.c.0.s8 %v5294
        %v5296 = vlaneseq
        %v5297 = vshrl.u32 %v5296, 7
        %v5298 = vsub.s32 %v5295, %v5297
        %v5299 = vrot.slane %v5276, %v5298
        %v5301 = vunpack.c.l.s4 1934713408
        %v5302 = vunpack.c.0.s8 %v5301
        %v5303 = vlaneseq
        %v5304 = vshrl.u32 %v5303, 7
        %v5305 = vsub.s32 %v5302, %v5304
        %v5306 = vrot.slane %v5292, %v5305
        %v5307 = vcombine.high %v5284, 0.0
        %v5308 = vcombine.high %v5291, 0.0
        %v5309 = vcombine.high %v5299, 0.0
        %v5310 = vcombine.high %v5306, 0.0
        %v5311 = vcombine.high %v959, 0.0
        %v5313 = vunpack.c.l.s4 1983009808
        %v5314 = vunpack.c.0.s8 %v5313
        %v5315 = vlaneseq
        %v5316 = vshrl.u32 %v5315, 7
        %v5317 = vsub.s32 %v5314, %v5316
        %v5318 = vrot.slane %v959, %v5317
        %v5320 = vunpack.c.l.s4 1983009808
        %v5321 = vunpack.c.0.s8 %v5320
        %v5322 = vlaneseq
        %v5323 = vshrl.u32 %v5322, 7
        %v5324 = vsub.s32 %v5321, %v5323
        %v5325 = vrot.slane %v5311, %v5324
        %v5326 = vcombine.high %v5318, 0.0
        %v5328 = vunpack.c.l.s4 1934713408
        %v5329 = vunpack.c.0.s8 %v5328
        %v5330 = vlaneseq
        %v5331 = vshrl.u32 %v5330, 7
        %v5332 = vsub.s32 %v5329, %v5331
        %v5333 = vrot.slane %v5318, %v5332
        %v5335 = vunpack.c.l.s4 1934713408
        %v5336 = vunpack.c.0.s8 %v5335
        %v5337 = vlaneseq
        %v5338 = vshrl.u32 %v5337, 7
        %v5339 = vsub.s32 %v5336, %v5338
        %v5340 = vrot.slane %v5326, %v5339
        %v5341 = vcombine.high %v5325, 0.0
        %v5343 = vunpack.c.l.s4 1934713408
        %v5344 = vunpack.c.0.s8 %v5343
        %v5345 = vlaneseq
        %v5346 = vshrl.u32 %v5345, 7
        %v5347 = vsub.s32 %v5344, %v5346
        %v5348 = vrot.slane %v5325, %v5347
        %v5350 = vunpack.c.l.s4 1934713408
        %v5351 = vunpack.c.0.s8 %v5350
        %v5352 = vlaneseq
        %v5353 = vshrl.u32 %v5352, 7
        %v5354 = vsub.s32 %v5351, %v5353
        %v5355 = vrot.slane %v5341, %v5354
        %v5356 = vcombine.high %v5333, 0.0
        %v5357 = vcombine.high %v5340, 0.0
        %v5358 = vcombine.high %v5348, 0.0
        %v5359 = vcombine.high %v5355, 0.0
        %v5360 = vcombine.high %v960, 0.0
        %v5362 = vunpack.c.l.s4 1983009808
        %v5363 = vunpack.c.0.s8 %v5362
        %v5364 = vlaneseq
        %v5365 = vshrl.u32 %v5364, 7
        %v5366 = vsub.s32 %v5363, %v5365
        %v5367 = vrot.slane %v960, %v5366
        %v5369 = vunpack.c.l.s4 1983009808
        %v5370 = vunpack.c.0.s8 %v5369
        %v5371 = vlaneseq
        %v5372 = vshrl.u32 %v5371, 7
        %v5373 = vsub.s32 %v5370, %v5372
        %v5374 = vrot.slane %v5360, %v5373
        %v5375 = vcombine.high %v5367, 0.0
        %v5377 = vunpack.c.l.s4 1934713408
        %v5378 = vunpack.c.0.s8 %v5377
        %v5379 = vlaneseq
        %v5380 = vshrl.u32 %v5379, 7
        %v5381 = vsub.s32 %v5378, %v5380
        %v5382 = vrot.slane %v5367, %v5381
        %v5384 = vunpack.c.l.s4 1934713408
        %v5385 = vunpack.c.0.s8 %v5384
        %v5386 = vlaneseq
        %v5387 = vshrl.u32 %v5386, 7
        %v5388 = vsub.s32 %v5385, %v5387
        %v5389 = vrot.slane %v5375, %v5388
        %v5390 = vcombine.high %v5374, 0.0
        %v5392 = vunpack.c.l.s4 1934713408
        %v5393 = vunpack.c.0.s8 %v5392
        %v5394 = vlaneseq
        %v5395 = vshrl.u32 %v5394, 7
        %v5396 = vsub.s32 %v5393, %v5395
        %v5397 = vrot.slane %v5374, %v5396
        %v5399 = vunpack.c.l.s4 1934713408
        %v5400 = vunpack.c.0.s8 %v5399
        %v5401 = vlaneseq
        %v5402 = vshrl.u32 %v5401, 7
        %v5403 = vsub.s32 %v5400, %v5402
        %v5404 = vrot.slane %v5390, %v5403
        %v5405 = vcombine.high %v5382, 0.0
        %v5406 = vcombine.high %v5389, 0.0
        %v5407 = vcombine.high %v5397, 0.0
        %v5408 = vcombine.high %v5404, 0.0
        %v5409 = vcombine.high %v961, 0.0
        %v5411 = vunpack.c.l.s4 1983009808
        %v5412 = vunpack.c.0.s8 %v5411
        %v5413 = vlaneseq
        %v5414 = vshrl.u32 %v5413, 7
        %v5415 = vsub.s32 %v5412, %v5414
        %v5416 = vrot.slane %v961, %v5415
        %v5418 = vunpack.c.l.s4 1983009808
        %v5419 = vunpack.c.0.s8 %v5418
        %v5420 = vlaneseq
        %v5421 = vshrl.u32 %v5420, 7
        %v5422 = vsub.s32 %v5419, %v5421
        %v5423 = vrot.slane %v5409, %v5422
        %v5424 = vcombine.high %v5416, 0.0
        %v5426 = vunpack.c.l.s4 1934713408
        %v5427 = vunpack.c.0.s8 %v5426
        %v5428 = vlaneseq
        %v5429 = vshrl.u32 %v5428, 7
        %v5430 = vsub.s32 %v5427, %v5429
        %v5431 = vrot.slane %v5416, %v5430
        %v5433 = vunpack.c.l.s4 1934713408
        %v5434 = vunpack.c.0.s8 %v5433
        %v5435 = vlaneseq
        %v5436 = vshrl.u32 %v5435, 7
        %v5437 = vsub.s32 %v5434, %v5436
        %v5438 = vrot.slane %v5424, %v5437
        %v5439 = vcombine.high %v5423, 0.0
        %v5441 = vunpack.c.l.s4 1934713408
        %v5442 = vunpack.c.0.s8 %v5441
        %v5443 = vlaneseq
        %v5444 = vshrl.u32 %v5443, 7
        %v5445 = vsub.s32 %v5442, %v5444
        %v5446 = vrot.slane %v5423, %v5445
        %v5448 = vunpack.c.l.s4 1934713408
        %v5449 = vunpack.c.0.s8 %v5448
        %v5450 = vlaneseq
        %v5451 = vshrl.u32 %v5450, 7
        %v5452 = vsub.s32 %v5449, %v5451
        %v5453 = vrot.slane %v5439, %v5452
        %v5454 = vcombine.high %v5431, 0.0
        %v5455 = vcombine.high %v5438, 0.0
        %v5456 = vcombine.high %v5446, 0.0
        %v5457 = vcombine.high %v5453, 0.0
        %v5458 = vcombine.high %v962, 0.0
        %v5460 = vunpack.c.l.s4 1983009808
        %v5461 = vunpack.c.0.s8 %v5460
        %v5462 = vlaneseq
        %v5463 = vshrl.u32 %v5462, 7
        %v5464 = vsub.s32 %v5461, %v5463
        %v5465 = vrot.slane %v962, %v5464
        %v5467 = vunpack.c.l.s4 1983009808
        %v5468 = vunpack.c.0.s8 %v5467
        %v5469 = vlaneseq
        %v5470 = vshrl.u32 %v5469, 7
        %v5471 = vsub.s32 %v5468, %v5470
        %v5472 = vrot.slane %v5458, %v5471
        %v5473 = vcombine.high %v5465, 0.0
        %v5475 = vunpack.c.l.s4 1934713408
        %v5476 = vunpack.c.0.s8 %v5475
        %v5477 = vlaneseq
        %v5478 = vshrl.u32 %v5477, 7
        %v5479 = vsub.s32 %v5476, %v5478
        %v5480 = vrot.slane %v5465, %v5479
        %v5482 = vunpack.c.l.s4 1934713408
        %v5483 = vunpack.c.0.s8 %v5482
        %v5484 = vlaneseq
        %v5485 = vshrl.u32 %v5484, 7
        %v5486 = vsub.s32 %v5483, %v5485
        %v5487 = vrot.slane %v5473, %v5486
        %v5488 = vcombine.high %v5472, 0.0
        %v5490 = vunpack.c.l.s4 1934713408
        %v5491 = vunpack.c.0.s8 %v5490
        %v5492 = vlaneseq
        %v5493 = vshrl.u32 %v5492, 7
        %v5494 = vsub.s32 %v5491, %v5493
        %v5495 = vrot.slane %v5472, %v5494
        %v5497 = vunpack.c.l.s4 1934713408
        %v5498 = vunpack.c.0.s8 %v5497
        %v5499 = vlaneseq
        %v5500 = vshrl.u32 %v5499, 7
        %v5501 = vsub.s32 %v5498, %v5500
        %v5502 = vrot.slane %v5488, %v5501
        %v5503 = vcombine.high %v5480, 0.0
        %v5504 = vcombine.high %v5487, 0.0
        %v5505 = vcombine.high %v5495, 0.0
        %v5506 = vcombine.high %v5502, 0.0
        %v5507 = vcombine.high %v963, 0.0
        %v5509 = vunpack.c.l.s4 1983009808
        %v5510 = vunpack.c.0.s8 %v5509
        %v5511 = vlaneseq
        %v5512 = vshrl.u32 %v5511, 7
        %v5513 = vsub.s32 %v5510, %v5512
        %v5514 = vrot.slane %v963, %v5513
        %v5516 = vunpack.c.l.s4 1983009808
        %v5517 = vunpack.c.0.s8 %v5516
        %v5518 = vlaneseq
        %v5519 = vshrl.u32 %v5518, 7
        %v5520 = vsub.s32 %v5517, %v5519
        %v5521 = vrot.slane %v5507, %v5520
        %v5522 = vcombine.high %v5514, 0.0
        %v5524 = vunpack.c.l.s4 1934713408
        %v5525 = vunpack.c.0.s8 %v5524
        %v5526 = vlaneseq
        %v5527 = vshrl.u32 %v5526, 7
        %v5528 = vsub.s32 %v5525, %v5527
        %v5529 = vrot.slane %v5514, %v5528
        %v5531 = vunpack.c.l.s4 1934713408
        %v5532 = vunpack.c.0.s8 %v5531
        %v5533 = vlaneseq
        %v5534 = vshrl.u32 %v5533, 7
        %v5535 = vsub.s32 %v5532, %v5534
        %v5536 = vrot.slane %v5522, %v5535
        %v5537 = vcombine.high %v5521, 0.0
        %v5539 = vunpack.c.l.s4 1934713408
        %v5540 = vunpack.c.0.s8 %v5539
        %v5541 = vlaneseq
        %v5542 = vshrl.u32 %v5541, 7
        %v5543 = vsub.s32 %v5540, %v5542
        %v5544 = vrot.slane %v5521, %v5543
        %v5546 = vunpack.c.l.s4 1934713408
        %v5547 = vunpack.c.0.s8 %v5546
        %v5548 = vlaneseq
        %v5549 = vshrl.u32 %v5548, 7
        %v5550 = vsub.s32 %v5547, %v5549
        %v5551 = vrot.slane %v5537, %v5550
        %v5552 = vcombine.high %v5529, 0.0
        %v5553 = vcombine.high %v5536, 0.0
        %v5554 = vcombine.high %v5544, 0.0
        %v5555 = vcombine.high %v5551, 0.0
        %v5556 = vcombine.high %v964, 0.0
        %v5558 = vunpack.c.l.s4 1983009808
        %v5559 = vunpack.c.0.s8 %v5558
        %v5560 = vlaneseq
        %v5561 = vshrl.u32 %v5560, 7
        %v5562 = vsub.s32 %v5559, %v5561
        %v5563 = vrot.slane %v964, %v5562
        %v5565 = vunpack.c.l.s4 1983009808
        %v5566 = vunpack.c.0.s8 %v5565
        %v5567 = vlaneseq
        %v5568 = vshrl.u32 %v5567, 7
        %v5569 = vsub.s32 %v5566, %v5568
        %v5570 = vrot.slane %v5556, %v5569
        %v5571 = vcombine.high %v5563, 0.0
        %v5573 = vunpack.c.l.s4 1934713408
        %v5574 = vunpack.c.0.s8 %v5573
        %v5575 = vlaneseq
        %v5576 = vshrl.u32 %v5575, 7
        %v5577 = vsub.s32 %v5574, %v5576
        %v5578 = vrot.slane %v5563, %v5577
        %v5580 = vunpack.c.l.s4 1934713408
        %v5581 = vunpack.c.0.s8 %v5580
        %v5582 = vlaneseq
        %v5583 = vshrl.u32 %v5582, 7
        %v5584 = vsub.s32 %v5581, %v5583
        %v5585 = vrot.slane %v5571, %v5584
        %v5586 = vcombine.high %v5570, 0.0
        %v5588 = vunpack.c.l.s4 1934713408
        %v5589 = vunpack.c.0.s8 %v5588
        %v5590 = vlaneseq
        %v5591 = vshrl.u32 %v5590, 7
        %v5592 = vsub.s32 %v5589, %v5591
        %v5593 = vrot.slane %v5570, %v5592
        %v5595 = vunpack.c.l.s4 1934713408
        %v5596 = vunpack.c.0.s8 %v5595
        %v5597 = vlaneseq
        %v5598 = vshrl.u32 %v5597, 7
        %v5599 = vsub.s32 %v5596, %v5598
        %v5600 = vrot.slane %v5586, %v5599
        %v5601 = vcombine.high %v5578, 0.0
        %v5602 = vcombine.high %v5585, 0.0
        %v5603 = vcombine.high %v5593, 0.0
        %v5604 = vcombine.high %v5600, 0.0
        %v5605 = vcombine.high %v965, 0.0
        %v5607 = vunpack.c.l.s4 1983009808
        %v5608 = vunpack.c.0.s8 %v5607
        %v5609 = vlaneseq
        %v5610 = vshrl.u32 %v5609, 7
        %v5611 = vsub.s32 %v5608, %v5610
        %v5612 = vrot.slane %v965, %v5611
        %v5614 = vunpack.c.l.s4 1983009808
        %v5615 = vunpack.c.0.s8 %v5614
        %v5616 = vlaneseq
        %v5617 = vshrl.u32 %v5616, 7
        %v5618 = vsub.s32 %v5615, %v5617
        %v5619 = vrot.slane %v5605, %v5618
        %v5620 = vcombine.high %v5612, 0.0
        %v5622 = vunpack.c.l.s4 1934713408
        %v5623 = vunpack.c.0.s8 %v5622
        %v5624 = vlaneseq
        %v5625 = vshrl.u32 %v5624, 7
        %v5626 = vsub.s32 %v5623, %v5625
        %v5627 = vrot.slane %v5612, %v5626
        %v5629 = vunpack.c.l.s4 1934713408
        %v5630 = vunpack.c.0.s8 %v5629
        %v5631 = vlaneseq
        %v5632 = vshrl.u32 %v5631, 7
        %v5633 = vsub.s32 %v5630, %v5632
        %v5634 = vrot.slane %v5620, %v5633
        %v5635 = vcombine.high %v5619, 0.0
        %v5637 = vunpack.c.l.s4 1934713408
        %v5638 = vunpack.c.0.s8 %v5637
        %v5639 = vlaneseq
        %v5640 = vshrl.u32 %v5639, 7
        %v5641 = vsub.s32 %v5638, %v5640
        %v5642 = vrot.slane %v5619, %v5641
        %v5644 = vunpack.c.l.s4 1934713408
        %v5645 = vunpack.c.0.s8 %v5644
        %v5646 = vlaneseq
        %v5647 = vshrl.u32 %v5646, 7
        %v5648 = vsub.s32 %v5645, %v5647
        %v5649 = vrot.slane %v5635, %v5648
        %v5650 = vcombine.high %v5627, 0.0
        %v5651 = vcombine.high %v5634, 0.0
        %v5652 = vcombine.high %v5642, 0.0
        %v5653 = vcombine.high %v5649, 0.0
        %v5654 = vcombine.high %v966, 0.0
        %v5656 = vunpack.c.l.s4 1983009808
        %v5657 = vunpack.c.0.s8 %v5656
        %v5658 = vlaneseq
        %v5659 = vshrl.u32 %v5658, 7
        %v5660 = vsub.s32 %v5657, %v5659
        %v5661 = vrot.slane %v966, %v5660
        %v5663 = vunpack.c.l.s4 1983009808
        %v5664 = vunpack.c.0.s8 %v5663
        %v5665 = vlaneseq
        %v5666 = vshrl.u32 %v5665, 7
        %v5667 = vsub.s32 %v5664, %v5666
        %v5668 = vrot.slane %v5654, %v5667
        %v5669 = vcombine.high %v5661, 0.0
        %v5671 = vunpack.c.l.s4 1934713408
        %v5672 = vunpack.c.0.s8 %v5671
        %v5673 = vlaneseq
        %v5674 = vshrl.u32 %v5673, 7
        %v5675 = vsub.s32 %v5672, %v5674
        %v5676 = vrot.slane %v5661, %v5675
        %v5678 = vunpack.c.l.s4 1934713408
        %v5679 = vunpack.c.0.s8 %v5678
        %v5680 = vlaneseq
        %v5681 = vshrl.u32 %v5680, 7
        %v5682 = vsub.s32 %v5679, %v5681
        %v5683 = vrot.slane %v5669, %v5682
        %v5684 = vcombine.high %v5668, 0.0
        %v5686 = vunpack.c.l.s4 1934713408
        %v5687 = vunpack.c.0.s8 %v5686
        %v5688 = vlaneseq
        %v5689 = vshrl.u32 %v5688, 7
        %v5690 = vsub.s32 %v5687, %v5689
        %v5691 = vrot.slane %v5668, %v5690
        %v5693 = vunpack.c.l.s4 1934713408
        %v5694 = vunpack.c.0.s8 %v5693
        %v5695 = vlaneseq
        %v5696 = vshrl.u32 %v5695, 7
        %v5697 = vsub.s32 %v5694, %v5696
        %v5698 = vrot.slane %v5684, %v5697
        %v5699 = vcombine.high %v5676, 0.0
        %v5700 = vcombine.high %v5683, 0.0
        %v5701 = vcombine.high %v5691, 0.0
        %v5702 = vcombine.high %v5698, 0.0
        %v5703 = vcombine.high %v967, 0.0
        %v5705 = vunpack.c.l.s4 1983009808
        %v5706 = vunpack.c.0.s8 %v5705
        %v5707 = vlaneseq
        %v5708 = vshrl.u32 %v5707, 7
        %v5709 = vsub.s32 %v5706, %v5708
        %v5710 = vrot.slane %v967, %v5709
        %v5712 = vunpack.c.l.s4 1983009808
        %v5713 = vunpack.c.0.s8 %v5712
        %v5714 = vlaneseq
        %v5715 = vshrl.u32 %v5714, 7
        %v5716 = vsub.s32 %v5713, %v5715
        %v5717 = vrot.slane %v5703, %v5716
        %v5718 = vcombine.high %v5710, 0.0
        %v5720 = vunpack.c.l.s4 1934713408
        %v5721 = vunpack.c.0.s8 %v5720
        %v5722 = vlaneseq
        %v5723 = vshrl.u32 %v5722, 7
        %v5724 = vsub.s32 %v5721, %v5723
        %v5725 = vrot.slane %v5710, %v5724
        %v5727 = vunpack.c.l.s4 1934713408
        %v5728 = vunpack.c.0.s8 %v5727
        %v5729 = vlaneseq
        %v5730 = vshrl.u32 %v5729, 7
        %v5731 = vsub.s32 %v5728, %v5730
        %v5732 = vrot.slane %v5718, %v5731
        %v5733 = vcombine.high %v5717, 0.0
        %v5735 = vunpack.c.l.s4 1934713408
        %v5736 = vunpack.c.0.s8 %v5735
        %v5737 = vlaneseq
        %v5738 = vshrl.u32 %v5737, 7
        %v5739 = vsub.s32 %v5736, %v5738
        %v5740 = vrot.slane %v5717, %v5739
        %v5742 = vunpack.c.l.s4 1934713408
        %v5743 = vunpack.c.0.s8 %v5742
        %v5744 = vlaneseq
        %v5745 = vshrl.u32 %v5744, 7
        %v5746 = vsub.s32 %v5743, %v5745
        %v5747 = vrot.slane %v5733, %v5746
        %v5748 = vcombine.high %v5725, 0.0
        %v5749 = vcombine.high %v5732, 0.0
        %v5750 = vcombine.high %v5740, 0.0
        %v5751 = vcombine.high %v5747, 0.0
        %v5752 = vcombine.high %v968, 0.0
        %v5754 = vunpack.c.l.s4 1983009808
        %v5755 = vunpack.c.0.s8 %v5754
        %v5756 = vlaneseq
        %v5757 = vshrl.u32 %v5756, 7
        %v5758 = vsub.s32 %v5755, %v5757
        %v5759 = vrot.slane %v968, %v5758
        %v5761 = vunpack.c.l.s4 1983009808
        %v5762 = vunpack.c.0.s8 %v5761
        %v5763 = vlaneseq
        %v5764 = vshrl.u32 %v5763, 7
        %v5765 = vsub.s32 %v5762, %v5764
        %v5766 = vrot.slane %v5752, %v5765
        %v5767 = vcombine.high %v5759, 0.0
        %v5769 = vunpack.c.l.s4 1934713408
        %v5770 = vunpack.c.0.s8 %v5769
        %v5771 = vlaneseq
        %v5772 = vshrl.u32 %v5771, 7
        %v5773 = vsub.s32 %v5770, %v5772
        %v5774 = vrot.slane %v5759, %v5773
        %v5776 = vunpack.c.l.s4 1934713408
        %v5777 = vunpack.c.0.s8 %v5776
        %v5778 = vlaneseq
        %v5779 = vshrl.u32 %v5778, 7
        %v5780 = vsub.s32 %v5777, %v5779
        %v5781 = vrot.slane %v5767, %v5780
        %v5782 = vcombine.high %v5766, 0.0
        %v5784 = vunpack.c.l.s4 1934713408
        %v5785 = vunpack.c.0.s8 %v5784
        %v5786 = vlaneseq
        %v5787 = vshrl.u32 %v5786, 7
        %v5788 = vsub.s32 %v5785, %v5787
        %v5789 = vrot.slane %v5766, %v5788
        %v5791 = vunpack.c.l.s4 1934713408
        %v5792 = vunpack.c.0.s8 %v5791
        %v5793 = vlaneseq
        %v5794 = vshrl.u32 %v5793, 7
        %v5795 = vsub.s32 %v5792, %v5794
        %v5796 = vrot.slane %v5782, %v5795
        %v5797 = vcombine.high %v5774, 0.0
        %v5798 = vcombine.high %v5781, 0.0
        %v5799 = vcombine.high %v5789, 0.0
        %v5800 = vcombine.high %v5796, 0.0
        %v5801 = vcombine.high %v969, 0.0
        %v5803 = vunpack.c.l.s4 1983009808
        %v5804 = vunpack.c.0.s8 %v5803
        %v5805 = vlaneseq
        %v5806 = vshrl.u32 %v5805, 7
        %v5807 = vsub.s32 %v5804, %v5806
        %v5808 = vrot.slane %v969, %v5807
        %v5810 = vunpack.c.l.s4 1983009808
        %v5811 = vunpack.c.0.s8 %v5810
        %v5812 = vlaneseq
        %v5813 = vshrl.u32 %v5812, 7
        %v5814 = vsub.s32 %v5811, %v5813
        %v5815 = vrot.slane %v5801, %v5814
        %v5816 = vcombine.high %v5808, 0.0
        %v5818 = vunpack.c.l.s4 1934713408
        %v5819 = vunpack.c.0.s8 %v5818
        %v5820 = vlaneseq
        %v5821 = vshrl.u32 %v5820, 7
        %v5822 = vsub.s32 %v5819, %v5821
        %v5823 = vrot.slane %v5808, %v5822
        %v5825 = vunpack.c.l.s4 1934713408
        %v5826 = vunpack.c.0.s8 %v5825
        %v5827 = vlaneseq
        %v5828 = vshrl.u32 %v5827, 7
        %v5829 = vsub.s32 %v5826, %v5828
        %v5830 = vrot.slane %v5816, %v5829
        %v5831 = vcombine.high %v5815, 0.0
        %v5833 = vunpack.c.l.s4 1934713408
        %v5834 = vunpack.c.0.s8 %v5833
        %v5835 = vlaneseq
        %v5836 = vshrl.u32 %v5835, 7
        %v5837 = vsub.s32 %v5834, %v5836
        %v5838 = vrot.slane %v5815, %v5837
        %v5840 = vunpack.c.l.s4 1934713408
        %v5841 = vunpack.c.0.s8 %v5840
        %v5842 = vlaneseq
        %v5843 = vshrl.u32 %v5842, 7
        %v5844 = vsub.s32 %v5841, %v5843
        %v5845 = vrot.slane %v5831, %v5844
        %v5846 = vcombine.high %v5823, 0.0
        %v5847 = vcombine.high %v5830, 0.0
        %v5848 = vcombine.high %v5838, 0.0
        %v5849 = vcombine.high %v5845, 0.0
        %v5850 = vcombine.high %v970, 0.0
        %v5852 = vunpack.c.l.s4 1983009808
        %v5853 = vunpack.c.0.s8 %v5852
        %v5854 = vlaneseq
        %v5855 = vshrl.u32 %v5854, 7
        %v5856 = vsub.s32 %v5853, %v5855
        %v5857 = vrot.slane %v970, %v5856
        %v5859 = vunpack.c.l.s4 1983009808
        %v5860 = vunpack.c.0.s8 %v5859
        %v5861 = vlaneseq
        %v5862 = vshrl.u32 %v5861, 7
        %v5863 = vsub.s32 %v5860, %v5862
        %v5864 = vrot.slane %v5850, %v5863
        %v5865 = vcombine.high %v5857, 0.0
        %v5867 = vunpack.c.l.s4 1934713408
        %v5868 = vunpack.c.0.s8 %v5867
        %v5869 = vlaneseq
        %v5870 = vshrl.u32 %v5869, 7
        %v5871 = vsub.s32 %v5868, %v5870
        %v5872 = vrot.slane %v5857, %v5871
        %v5874 = vunpack.c.l.s4 1934713408
        %v5875 = vunpack.c.0.s8 %v5874
        %v5876 = vlaneseq
        %v5877 = vshrl.u32 %v5876, 7
        %v5878 = vsub.s32 %v5875, %v5877
        %v5879 = vrot.slane %v5865, %v5878
        %v5880 = vcombine.high %v5864, 0.0
        %v5882 = vunpack.c.l.s4 1934713408
        %v5883 = vunpack.c.0.s8 %v5882
        %v5884 = vlaneseq
        %v5885 = vshrl.u32 %v5884, 7
        %v5886 = vsub.s32 %v5883, %v5885
        %v5887 = vrot.slane %v5864, %v5886
        %v5889 = vunpack.c.l.s4 1934713408
        %v5890 = vunpack.c.0.s8 %v5889
        %v5891 = vlaneseq
        %v5892 = vshrl.u32 %v5891, 7
        %v5893 = vsub.s32 %v5890, %v5892
        %v5894 = vrot.slane %v5880, %v5893
        %v5895 = vcombine.high %v5872, 0.0
        %v5896 = vcombine.high %v5879, 0.0
        %v5897 = vcombine.high %v5887, 0.0
        %v5898 = vcombine.high %v5894, 0.0
        %v5899 = vcombine.high %v971, 0.0
        %v5901 = vunpack.c.l.s4 1983009808
        %v5902 = vunpack.c.0.s8 %v5901
        %v5903 = vlaneseq
        %v5904 = vshrl.u32 %v5903, 7
        %v5905 = vsub.s32 %v5902, %v5904
        %v5906 = vrot.slane %v971, %v5905
        %v5908 = vunpack.c.l.s4 1983009808
        %v5909 = vunpack.c.0.s8 %v5908
        %v5910 = vlaneseq
        %v5911 = vshrl.u32 %v5910, 7
        %v5912 = vsub.s32 %v5909, %v5911
        %v5913 = vrot.slane %v5899, %v5912
        %v5914 = vcombine.high %v5906, 0.0
        %v5916 = vunpack.c.l.s4 1934713408
        %v5917 = vunpack.c.0.s8 %v5916
        %v5918 = vlaneseq
        %v5919 = vshrl.u32 %v5918, 7
        %v5920 = vsub.s32 %v5917, %v5919
        %v5921 = vrot.slane %v5906, %v5920
        %v5923 = vunpack.c.l.s4 1934713408
        %v5924 = vunpack.c.0.s8 %v5923
        %v5925 = vlaneseq
        %v5926 = vshrl.u32 %v5925, 7
        %v5927 = vsub.s32 %v5924, %v5926
        %v5928 = vrot.slane %v5914, %v5927
        %v5929 = vcombine.high %v5913, 0.0
        %v5931 = vunpack.c.l.s4 1934713408
        %v5932 = vunpack.c.0.s8 %v5931
        %v5933 = vlaneseq
        %v5934 = vshrl.u32 %v5933, 7
        %v5935 = vsub.s32 %v5932, %v5934
        %v5936 = vrot.slane %v5913, %v5935
        %v5938 = vunpack.c.l.s4 1934713408
        %v5939 = vunpack.c.0.s8 %v5938
        %v5940 = vlaneseq
        %v5941 = vshrl.u32 %v5940, 7
        %v5942 = vsub.s32 %v5939, %v5941
        %v5943 = vrot.slane %v5929, %v5942
        %v5944 = vcombine.high %v5921, 0.0
        %v5945 = vcombine.high %v5928, 0.0
        %v5946 = vcombine.high %v5936, 0.0
        %v5947 = vcombine.high %v5943, 0.0
        %v5948 = vcombine.high %v972, 0.0
        %v5950 = vunpack.c.l.s4 1983009808
        %v5951 = vunpack.c.0.s8 %v5950
        %v5952 = vlaneseq
        %v5953 = vshrl.u32 %v5952, 7
        %v5954 = vsub.s32 %v5951, %v5953
        %v5955 = vrot.slane %v972, %v5954
        %v5957 = vunpack.c.l.s4 1983009808
        %v5958 = vunpack.c.0.s8 %v5957
        %v5959 = vlaneseq
        %v5960 = vshrl.u32 %v5959, 7
        %v5961 = vsub.s32 %v5958, %v5960
        %v5962 = vrot.slane %v5948, %v5961
        %v5963 = vcombine.high %v5955, 0.0
        %v5965 = vunpack.c.l.s4 1934713408
        %v5966 = vunpack.c.0.s8 %v5965
        %v5967 = vlaneseq
        %v5968 = vshrl.u32 %v5967, 7
        %v5969 = vsub.s32 %v5966, %v5968
        %v5970 = vrot.slane %v5955, %v5969
        %v5972 = vunpack.c.l.s4 1934713408
        %v5973 = vunpack.c.0.s8 %v5972
        %v5974 = vlaneseq
        %v5975 = vshrl.u32 %v5974, 7
        %v5976 = vsub.s32 %v5973, %v5975
        %v5977 = vrot.slane %v5963, %v5976
        %v5978 = vcombine.high %v5962, 0.0
        %v5980 = vunpack.c.l.s4 1934713408
        %v5981 = vunpack.c.0.s8 %v5980
        %v5982 = vlaneseq
        %v5983 = vshrl.u32 %v5982, 7
        %v5984 = vsub.s32 %v5981, %v5983
        %v5985 = vrot.slane %v5962, %v5984
        %v5987 = vunpack.c.l.s4 1934713408
        %v5988 = vunpack.c.0.s8 %v5987
        %v5989 = vlaneseq
        %v5990 = vshrl.u32 %v5989, 7
        %v5991 = vsub.s32 %v5988, %v5990
        %v5992 = vrot.slane %v5978, %v5991
        %v5993 = vcombine.high %v5970, 0.0
        %v5994 = vcombine.high %v5977, 0.0
        %v5995 = vcombine.high %v5985, 0.0
        %v5996 = vcombine.high %v5992, 0.0
        %v5997 = vcombine.high %v973, 0.0
        %v5999 = vunpack.c.l.s4 1983009808
        %v6000 = vunpack.c.0.s8 %v5999
        %v6001 = vlaneseq
        %v6002 = vshrl.u32 %v6001, 7
        %v6003 = vsub.s32 %v6000, %v6002
        %v6004 = vrot.slane %v973, %v6003
        %v6006 = vunpack.c.l.s4 1983009808
        %v6007 = vunpack.c.0.s8 %v6006
        %v6008 = vlaneseq
        %v6009 = vshrl.u32 %v6008, 7
        %v6010 = vsub.s32 %v6007, %v6009
        %v6011 = vrot.slane %v5997, %v6010
        %v6012 = vcombine.high %v6004, 0.0
        %v6014 = vunpack.c.l.s4 1934713408
        %v6015 = vunpack.c.0.s8 %v6014
        %v6016 = vlaneseq
        %v6017 = vshrl.u32 %v6016, 7
        %v6018 = vsub.s32 %v6015, %v6017
        %v6019 = vrot.slane %v6004, %v6018
        %v6021 = vunpack.c.l.s4 1934713408
        %v6022 = vunpack.c.0.s8 %v6021
        %v6023 = vlaneseq
        %v6024 = vshrl.u32 %v6023, 7
        %v6025 = vsub.s32 %v6022, %v6024
        %v6026 = vrot.slane %v6012, %v6025
        %v6027 = vcombine.high %v6011, 0.0
        %v6029 = vunpack.c.l.s4 1934713408
        %v6030 = vunpack.c.0.s8 %v6029
        %v6031 = vlaneseq
        %v6032 = vshrl.u32 %v6031, 7
        %v6033 = vsub.s32 %v6030, %v6032
        %v6034 = vrot.slane %v6011, %v6033
        %v6036 = vunpack.c.l.s4 1934713408
        %v6037 = vunpack.c.0.s8 %v6036
        %v6038 = vlaneseq
        %v6039 = vshrl.u32 %v6038, 7
        %v6040 = vsub.s32 %v6037, %v6039
        %v6041 = vrot.slane %v6027, %v6040
        %v6042 = vcombine.high %v6019, 0.0
        %v6043 = vcombine.high %v6026, 0.0
        %v6044 = vcombine.high %v6034, 0.0
        %v6045 = vcombine.high %v6041, 0.0
        %v6046 = vcombine.high %v974, 0.0
        %v6048 = vunpack.c.l.s4 1983009808
        %v6049 = vunpack.c.0.s8 %v6048
        %v6050 = vlaneseq
        %v6051 = vshrl.u32 %v6050, 7
        %v6052 = vsub.s32 %v6049, %v6051
        %v6053 = vrot.slane %v974, %v6052
        %v6055 = vunpack.c.l.s4 1983009808
        %v6056 = vunpack.c.0.s8 %v6055
        %v6057 = vlaneseq
        %v6058 = vshrl.u32 %v6057, 7
        %v6059 = vsub.s32 %v6056, %v6058
        %v6060 = vrot.slane %v6046, %v6059
        %v6061 = vcombine.high %v6053, 0.0
        %v6063 = vunpack.c.l.s4 1934713408
        %v6064 = vunpack.c.0.s8 %v6063
        %v6065 = vlaneseq
        %v6066 = vshrl.u32 %v6065, 7
        %v6067 = vsub.s32 %v6064, %v6066
        %v6068 = vrot.slane %v6053, %v6067
        %v6070 = vunpack.c.l.s4 1934713408
        %v6071 = vunpack.c.0.s8 %v6070
        %v6072 = vlaneseq
        %v6073 = vshrl.u32 %v6072, 7
        %v6074 = vsub.s32 %v6071, %v6073
        %v6075 = vrot.slane %v6061, %v6074
        %v6076 = vcombine.high %v6060, 0.0
        %v6078 = vunpack.c.l.s4 1934713408
        %v6079 = vunpack.c.0.s8 %v6078
        %v6080 = vlaneseq
        %v6081 = vshrl.u32 %v6080, 7
        %v6082 = vsub.s32 %v6079, %v6081
        %v6083 = vrot.slane %v6060, %v6082
        %v6085 = vunpack.c.l.s4 1934713408
        %v6086 = vunpack.c.0.s8 %v6085
        %v6087 = vlaneseq
        %v6088 = vshrl.u32 %v6087, 7
        %v6089 = vsub.s32 %v6086, %v6088
        %v6090 = vrot.slane %v6076, %v6089
        %v6091 = vcombine.high %v6068, 0.0
        %v6092 = vcombine.high %v6075, 0.0
        %v6093 = vcombine.high %v6083, 0.0
        %v6094 = vcombine.high %v6090, 0.0
        %v6095 = vcombine.high %v975, 0.0
        %v6097 = vunpack.c.l.s4 1983009808
        %v6098 = vunpack.c.0.s8 %v6097
        %v6099 = vlaneseq
        %v6100 = vshrl.u32 %v6099, 7
        %v6101 = vsub.s32 %v6098, %v6100
        %v6102 = vrot.slane %v975, %v6101
        %v6104 = vunpack.c.l.s4 1983009808
        %v6105 = vunpack.c.0.s8 %v6104
        %v6106 = vlaneseq
        %v6107 = vshrl.u32 %v6106, 7
        %v6108 = vsub.s32 %v6105, %v6107
        %v6109 = vrot.slane %v6095, %v6108
        %v6110 = vcombine.high %v6102, 0.0
        %v6112 = vunpack.c.l.s4 1934713408
        %v6113 = vunpack.c.0.s8 %v6112
        %v6114 = vlaneseq
        %v6115 = vshrl.u32 %v6114, 7
        %v6116 = vsub.s32 %v6113, %v6115
        %v6117 = vrot.slane %v6102, %v6116
        %v6119 = vunpack.c.l.s4 1934713408
        %v6120 = vunpack.c.0.s8 %v6119
        %v6121 = vlaneseq
        %v6122 = vshrl.u32 %v6121, 7
        %v6123 = vsub.s32 %v6120, %v6122
        %v6124 = vrot.slane %v6110, %v6123
        %v6125 = vcombine.high %v6109, 0.0
        %v6127 = vunpack.c.l.s4 1934713408
        %v6128 = vunpack.c.0.s8 %v6127
        %v6129 = vlaneseq
        %v6130 = vshrl.u32 %v6129, 7
        %v6131 = vsub.s32 %v6128, %v6130
        %v6132 = vrot.slane %v6109, %v6131
        %v6134 = vunpack.c.l.s4 1934713408
        %v6135 = vunpack.c.0.s8 %v6134
        %v6136 = vlaneseq
        %v6137 = vshrl.u32 %v6136, 7
        %v6138 = vsub.s32 %v6135, %v6137
        %v6139 = vrot.slane %v6125, %v6138
        %v6140 = vcombine.high %v6117, 0.0
        %v6141 = vcombine.high %v6124, 0.0
        %v6142 = vcombine.high %v6132, 0.0
        %v6143 = vcombine.high %v6139, 0.0
        %v6144 = vcombine.high %v976, 0.0
        %v6146 = vunpack.c.l.s4 1983009808
        %v6147 = vunpack.c.0.s8 %v6146
        %v6148 = vlaneseq
        %v6149 = vshrl.u32 %v6148, 7
        %v6150 = vsub.s32 %v6147, %v6149
        %v6151 = vrot.slane %v976, %v6150
        %v6153 = vunpack.c.l.s4 1983009808
        %v6154 = vunpack.c.0.s8 %v6153
        %v6155 = vlaneseq
        %v6156 = vshrl.u32 %v6155, 7
        %v6157 = vsub.s32 %v6154, %v6156
        %v6158 = vrot.slane %v6144, %v6157
        %v6159 = vcombine.high %v6151, 0.0
        %v6161 = vunpack.c.l.s4 1934713408
        %v6162 = vunpack.c.0.s8 %v6161
        %v6163 = vlaneseq
        %v6164 = vshrl.u32 %v6163, 7
        %v6165 = vsub.s32 %v6162, %v6164
        %v6166 = vrot.slane %v6151, %v6165
        %v6168 = vunpack.c.l.s4 1934713408
        %v6169 = vunpack.c.0.s8 %v6168
        %v6170 = vlaneseq
        %v6171 = vshrl.u32 %v6170, 7
        %v6172 = vsub.s32 %v6169, %v6171
        %v6173 = vrot.slane %v6159, %v6172
        %v6174 = vcombine.high %v6158, 0.0
        %v6176 = vunpack.c.l.s4 1934713408
        %v6177 = vunpack.c.0.s8 %v6176
        %v6178 = vlaneseq
        %v6179 = vshrl.u32 %v6178, 7
        %v6180 = vsub.s32 %v6177, %v6179
        %v6181 = vrot.slane %v6158, %v6180
        %v6183 = vunpack.c.l.s4 1934713408
        %v6184 = vunpack.c.0.s8 %v6183
        %v6185 = vlaneseq
        %v6186 = vshrl.u32 %v6185, 7
        %v6187 = vsub.s32 %v6184, %v6186
        %v6188 = vrot.slane %v6174, %v6187
        %v6189 = vcombine.high %v6166, 0.0
        %v6190 = vcombine.high %v6173, 0.0
        %v6191 = vcombine.high %v6181, 0.0
        %v6192 = vcombine.high %v6188, 0.0
        %v6193 = vcombine.high %v977, 0.0
        %v6195 = vunpack.c.l.s4 1983009808
        %v6196 = vunpack.c.0.s8 %v6195
        %v6197 = vlaneseq
        %v6198 = vshrl.u32 %v6197, 7
        %v6199 = vsub.s32 %v6196, %v6198
        %v6200 = vrot.slane %v977, %v6199
        %v6202 = vunpack.c.l.s4 1983009808
        %v6203 = vunpack.c.0.s8 %v6202
        %v6204 = vlaneseq
        %v6205 = vshrl.u32 %v6204, 7
        %v6206 = vsub.s32 %v6203, %v6205
        %v6207 = vrot.slane %v6193, %v6206
        %v6208 = vcombine.high %v6200, 0.0
        %v6210 = vunpack.c.l.s4 1934713408
        %v6211 = vunpack.c.0.s8 %v6210
        %v6212 = vlaneseq
        %v6213 = vshrl.u32 %v6212, 7
        %v6214 = vsub.s32 %v6211, %v6213
        %v6215 = vrot.slane %v6200, %v6214
        %v6217 = vunpack.c.l.s4 1934713408
        %v6218 = vunpack.c.0.s8 %v6217
        %v6219 = vlaneseq
        %v6220 = vshrl.u32 %v6219, 7
        %v6221 = vsub.s32 %v6218, %v6220
        %v6222 = vrot.slane %v6208, %v6221
        %v6223 = vcombine.high %v6207, 0.0
        %v6225 = vunpack.c.l.s4 1934713408
        %v6226 = vunpack.c.0.s8 %v6225
        %v6227 = vlaneseq
        %v6228 = vshrl.u32 %v6227, 7
        %v6229 = vsub.s32 %v6226, %v6228
        %v6230 = vrot.slane %v6207, %v6229
        %v6232 = vunpack.c.l.s4 1934713408
        %v6233 = vunpack.c.0.s8 %v6232
        %v6234 = vlaneseq
        %v6235 = vshrl.u32 %v6234, 7
        %v6236 = vsub.s32 %v6233, %v6235
        %v6237 = vrot.slane %v6223, %v6236
        %v6238 = vcombine.high %v6215, 0.0
        %v6239 = vcombine.high %v6222, 0.0
        %v6240 = vcombine.high %v6230, 0.0
        %v6241 = vcombine.high %v6237, 0.0
        %v6242 = vcombine.high %v978, 0.0
        %v6244 = vunpack.c.l.s4 1983009808
        %v6245 = vunpack.c.0.s8 %v6244
        %v6246 = vlaneseq
        %v6247 = vshrl.u32 %v6246, 7
        %v6248 = vsub.s32 %v6245, %v6247
        %v6249 = vrot.slane %v978, %v6248
        %v6251 = vunpack.c.l.s4 1983009808
        %v6252 = vunpack.c.0.s8 %v6251
        %v6253 = vlaneseq
        %v6254 = vshrl.u32 %v6253, 7
        %v6255 = vsub.s32 %v6252, %v6254
        %v6256 = vrot.slane %v6242, %v6255
        %v6257 = vcombine.high %v6249, 0.0
        %v6259 = vunpack.c.l.s4 1934713408
        %v6260 = vunpack.c.0.s8 %v6259
        %v6261 = vlaneseq
        %v6262 = vshrl.u32 %v6261, 7
        %v6263 = vsub.s32 %v6260, %v6262
        %v6264 = vrot.slane %v6249, %v6263
        %v6266 = vunpack.c.l.s4 1934713408
        %v6267 = vunpack.c.0.s8 %v6266
        %v6268 = vlaneseq
        %v6269 = vshrl.u32 %v6268, 7
        %v6270 = vsub.s32 %v6267, %v6269
        %v6271 = vrot.slane %v6257, %v6270
        %v6272 = vcombine.high %v6256, 0.0
        %v6274 = vunpack.c.l.s4 1934713408
        %v6275 = vunpack.c.0.s8 %v6274
        %v6276 = vlaneseq
        %v6277 = vshrl.u32 %v6276, 7
        %v6278 = vsub.s32 %v6275, %v6277
        %v6279 = vrot.slane %v6256, %v6278
        %v6281 = vunpack.c.l.s4 1934713408
        %v6282 = vunpack.c.0.s8 %v6281
        %v6283 = vlaneseq
        %v6284 = vshrl.u32 %v6283, 7
        %v6285 = vsub.s32 %v6282, %v6284
        %v6286 = vrot.slane %v6272, %v6285
        %v6287 = vcombine.high %v6264, 0.0
        %v6288 = vcombine.high %v6271, 0.0
        %v6289 = vcombine.high %v6279, 0.0
        %v6290 = vcombine.high %v6286, 0.0
        %v6291 = vcombine.high %v979, 0.0
        %v6293 = vunpack.c.l.s4 1983009808
        %v6294 = vunpack.c.0.s8 %v6293
        %v6295 = vlaneseq
        %v6296 = vshrl.u32 %v6295, 7
        %v6297 = vsub.s32 %v6294, %v6296
        %v6298 = vrot.slane %v979, %v6297
        %v6300 = vunpack.c.l.s4 1983009808
        %v6301 = vunpack.c.0.s8 %v6300
        %v6302 = vlaneseq
        %v6303 = vshrl.u32 %v6302, 7
        %v6304 = vsub.s32 %v6301, %v6303
        %v6305 = vrot.slane %v6291, %v6304
        %v6306 = vcombine.high %v6298, 0.0
        %v6308 = vunpack.c.l.s4 1934713408
        %v6309 = vunpack.c.0.s8 %v6308
        %v6310 = vlaneseq
        %v6311 = vshrl.u32 %v6310, 7
        %v6312 = vsub.s32 %v6309, %v6311
        %v6313 = vrot.slane %v6298, %v6312
        %v6315 = vunpack.c.l.s4 1934713408
        %v6316 = vunpack.c.0.s8 %v6315
        %v6317 = vlaneseq
        %v6318 = vshrl.u32 %v6317, 7
        %v6319 = vsub.s32 %v6316, %v6318
        %v6320 = vrot.slane %v6306, %v6319
        %v6321 = vcombine.high %v6305, 0.0
        %v6323 = vunpack.c.l.s4 1934713408
        %v6324 = vunpack.c.0.s8 %v6323
        %v6325 = vlaneseq
        %v6326 = vshrl.u32 %v6325, 7
        %v6327 = vsub.s32 %v6324, %v6326
        %v6328 = vrot.slane %v6305, %v6327
        %v6330 = vunpack.c.l.s4 1934713408
        %v6331 = vunpack.c.0.s8 %v6330
        %v6332 = vlaneseq
        %v6333 = vshrl.u32 %v6332, 7
        %v6334 = vsub.s32 %v6331, %v6333
        %v6335 = vrot.slane %v6321, %v6334
        %v6336 = vcombine.high %v6313, 0.0
        %v6337 = vcombine.high %v6320, 0.0
        %v6338 = vcombine.high %v6328, 0.0
        %v6339 = vcombine.high %v6335, 0.0
        %v6340 = vcombine.high %v980, 0.0
        %v6342 = vunpack.c.l.s4 1983009808
        %v6343 = vunpack.c.0.s8 %v6342
        %v6344 = vlaneseq
        %v6345 = vshrl.u32 %v6344, 7
        %v6346 = vsub.s32 %v6343, %v6345
        %v6347 = vrot.slane %v980, %v6346
        %v6349 = vunpack.c.l.s4 1983009808
        %v6350 = vunpack.c.0.s8 %v6349
        %v6351 = vlaneseq
        %v6352 = vshrl.u32 %v6351, 7
        %v6353 = vsub.s32 %v6350, %v6352
        %v6354 = vrot.slane %v6340, %v6353
        %v6355 = vcombine.high %v6347, 0.0
        %v6357 = vunpack.c.l.s4 1934713408
        %v6358 = vunpack.c.0.s8 %v6357
        %v6359 = vlaneseq
        %v6360 = vshrl.u32 %v6359, 7
        %v6361 = vsub.s32 %v6358, %v6360
        %v6362 = vrot.slane %v6347, %v6361
        %v6364 = vunpack.c.l.s4 1934713408
        %v6365 = vunpack.c.0.s8 %v6364
        %v6366 = vlaneseq
        %v6367 = vshrl.u32 %v6366, 7
        %v6368 = vsub.s32 %v6365, %v6367
        %v6369 = vrot.slane %v6355, %v6368
        %v6370 = vcombine.high %v6354, 0.0
        %v6372 = vunpack.c.l.s4 1934713408
        %v6373 = vunpack.c.0.s8 %v6372
        %v6374 = vlaneseq
        %v6375 = vshrl.u32 %v6374, 7
        %v6376 = vsub.s32 %v6373, %v6375
        %v6377 = vrot.slane %v6354, %v6376
        %v6379 = vunpack.c.l.s4 1934713408
        %v6380 = vunpack.c.0.s8 %v6379
        %v6381 = vlaneseq
        %v6382 = vshrl.u32 %v6381, 7
        %v6383 = vsub.s32 %v6380, %v6382
        %v6384 = vrot.slane %v6370, %v6383
        %v6385 = vcombine.high %v6362, 0.0
        %v6386 = vcombine.high %v6369, 0.0
        %v6387 = vcombine.high %v6377, 0.0
        %v6388 = vcombine.high %v6384, 0.0
        %v6389 = vcombine.high %v981, 0.0
        %v6391 = vunpack.c.l.s4 1983009808
        %v6392 = vunpack.c.0.s8 %v6391
        %v6393 = vlaneseq
        %v6394 = vshrl.u32 %v6393, 7
        %v6395 = vsub.s32 %v6392, %v6394
        %v6396 = vrot.slane %v981, %v6395
        %v6398 = vunpack.c.l.s4 1983009808
        %v6399 = vunpack.c.0.s8 %v6398
        %v6400 = vlaneseq
        %v6401 = vshrl.u32 %v6400, 7
        %v6402 = vsub.s32 %v6399, %v6401
        %v6403 = vrot.slane %v6389, %v6402
        %v6404 = vcombine.high %v6396, 0.0
        %v6406 = vunpack.c.l.s4 1934713408
        %v6407 = vunpack.c.0.s8 %v6406
        %v6408 = vlaneseq
        %v6409 = vshrl.u32 %v6408, 7
        %v6410 = vsub.s32 %v6407, %v6409
        %v6411 = vrot.slane %v6396, %v6410
        %v6413 = vunpack.c.l.s4 1934713408
        %v6414 = vunpack.c.0.s8 %v6413
        %v6415 = vlaneseq
        %v6416 = vshrl.u32 %v6415, 7
        %v6417 = vsub.s32 %v6414, %v6416
        %v6418 = vrot.slane %v6404, %v6417
        %v6419 = vcombine.high %v6403, 0.0
        %v6421 = vunpack.c.l.s4 1934713408
        %v6422 = vunpack.c.0.s8 %v6421
        %v6423 = vlaneseq
        %v6424 = vshrl.u32 %v6423, 7
        %v6425 = vsub.s32 %v6422, %v6424
        %v6426 = vrot.slane %v6403, %v6425
        %v6428 = vunpack.c.l.s4 1934713408
        %v6429 = vunpack.c.0.s8 %v6428
        %v6430 = vlaneseq
        %v6431 = vshrl.u32 %v6430, 7
        %v6432 = vsub.s32 %v6429, %v6431
        %v6433 = vrot.slane %v6419, %v6432
        %v6434 = vcombine.high %v6411, 0.0
        %v6435 = vcombine.high %v6418, 0.0
        %v6436 = vcombine.high %v6426, 0.0
        %v6437 = vcombine.high %v6433, 0.0
        %v6438 = vcombine.high %v982, 0.0
        %v6440 = vunpack.c.l.s4 1983009808
        %v6441 = vunpack.c.0.s8 %v6440
        %v6442 = vlaneseq
        %v6443 = vshrl.u32 %v6442, 7
        %v6444 = vsub.s32 %v6441, %v6443
        %v6445 = vrot.slane %v982, %v6444
        %v6447 = vunpack.c.l.s4 1983009808
        %v6448 = vunpack.c.0.s8 %v6447
        %v6449 = vlaneseq
        %v6450 = vshrl.u32 %v6449, 7
        %v6451 = vsub.s32 %v6448, %v6450
        %v6452 = vrot.slane %v6438, %v6451
        %v6453 = vcombine.high %v6445, 0.0
        %v6455 = vunpack.c.l.s4 1934713408
        %v6456 = vunpack.c.0.s8 %v6455
        %v6457 = vlaneseq
        %v6458 = vshrl.u32 %v6457, 7
        %v6459 = vsub.s32 %v6456, %v6458
        %v6460 = vrot.slane %v6445, %v6459
        %v6462 = vunpack.c.l.s4 1934713408
        %v6463 = vunpack.c.0.s8 %v6462
        %v6464 = vlaneseq
        %v6465 = vshrl.u32 %v6464, 7
        %v6466 = vsub.s32 %v6463, %v6465
        %v6467 = vrot.slane %v6453, %v6466
        %v6468 = vcombine.high %v6452, 0.0
        %v6470 = vunpack.c.l.s4 1934713408
        %v6471 = vunpack.c.0.s8 %v6470
        %v6472 = vlaneseq
        %v6473 = vshrl.u32 %v6472, 7
        %v6474 = vsub.s32 %v6471, %v6473
        %v6475 = vrot.slane %v6452, %v6474
        %v6477 = vunpack.c.l.s4 1934713408
        %v6478 = vunpack.c.0.s8 %v6477
        %v6479 = vlaneseq
        %v6480 = vshrl.u32 %v6479, 7
        %v6481 = vsub.s32 %v6478, %v6480
        %v6482 = vrot.slane %v6468, %v6481
        %v6483 = vcombine.high %v6460, 0.0
        %v6484 = vcombine.high %v6467, 0.0
        %v6485 = vcombine.high %v6475, 0.0
        %v6486 = vcombine.high %v6482, 0.0
        %v6487 = vcombine.high %v983, 0.0
        %v6489 = vunpack.c.l.s4 1983009808
        %v6490 = vunpack.c.0.s8 %v6489
        %v6491 = vlaneseq
        %v6492 = vshrl.u32 %v6491, 7
        %v6493 = vsub.s32 %v6490, %v6492
        %v6494 = vrot.slane %v983, %v6493
        %v6496 = vunpack.c.l.s4 1983009808
        %v6497 = vunpack.c.0.s8 %v6496
        %v6498 = vlaneseq
        %v6499 = vshrl.u32 %v6498, 7
        %v6500 = vsub.s32 %v6497, %v6499
        %v6501 = vrot.slane %v6487, %v6500
        %v6502 = vcombine.high %v6494, 0.0
        %v6504 = vunpack.c.l.s4 1934713408
        %v6505 = vunpack.c.0.s8 %v6504
        %v6506 = vlaneseq
        %v6507 = vshrl.u32 %v6506, 7
        %v6508 = vsub.s32 %v6505, %v6507
        %v6509 = vrot.slane %v6494, %v6508
        %v6511 = vunpack.c.l.s4 1934713408
        %v6512 = vunpack.c.0.s8 %v6511
        %v6513 = vlaneseq
        %v6514 = vshrl.u32 %v6513, 7
        %v6515 = vsub.s32 %v6512, %v6514
        %v6516 = vrot.slane %v6502, %v6515
        %v6517 = vcombine.high %v6501, 0.0
        %v6519 = vunpack.c.l.s4 1934713408
        %v6520 = vunpack.c.0.s8 %v6519
        %v6521 = vlaneseq
        %v6522 = vshrl.u32 %v6521, 7
        %v6523 = vsub.s32 %v6520, %v6522
        %v6524 = vrot.slane %v6501, %v6523
        %v6526 = vunpack.c.l.s4 1934713408
        %v6527 = vunpack.c.0.s8 %v6526
        %v6528 = vlaneseq
        %v6529 = vshrl.u32 %v6528, 7
        %v6530 = vsub.s32 %v6527, %v6529
        %v6531 = vrot.slane %v6517, %v6530
        %v6532 = vcombine.high %v6509, 0.0
        %v6533 = vcombine.high %v6516, 0.0
        %v6534 = vcombine.high %v6524, 0.0
        %v6535 = vcombine.high %v6531, 0.0
        %v6536 = vcombine.high %v984, 0.0
        %v6538 = vunpack.c.l.s4 1983009808
        %v6539 = vunpack.c.0.s8 %v6538
        %v6540 = vlaneseq
        %v6541 = vshrl.u32 %v6540, 7
        %v6542 = vsub.s32 %v6539, %v6541
        %v6543 = vrot.slane %v984, %v6542
        %v6545 = vunpack.c.l.s4 1983009808
        %v6546 = vunpack.c.0.s8 %v6545
        %v6547 = vlaneseq
        %v6548 = vshrl.u32 %v6547, 7
        %v6549 = vsub.s32 %v6546, %v6548
        %v6550 = vrot.slane %v6536, %v6549
        %v6551 = vcombine.high %v6543, 0.0
        %v6553 = vunpack.c.l.s4 1934713408
        %v6554 = vunpack.c.0.s8 %v6553
        %v6555 = vlaneseq
        %v6556 = vshrl.u32 %v6555, 7
        %v6557 = vsub.s32 %v6554, %v6556
        %v6558 = vrot.slane %v6543, %v6557
        %v6560 = vunpack.c.l.s4 1934713408
        %v6561 = vunpack.c.0.s8 %v6560
        %v6562 = vlaneseq
        %v6563 = vshrl.u32 %v6562, 7
        %v6564 = vsub.s32 %v6561, %v6563
        %v6565 = vrot.slane %v6551, %v6564
        %v6566 = vcombine.high %v6550, 0.0
        %v6568 = vunpack.c.l.s4 1934713408
        %v6569 = vunpack.c.0.s8 %v6568
        %v6570 = vlaneseq
        %v6571 = vshrl.u32 %v6570, 7
        %v6572 = vsub.s32 %v6569, %v6571
        %v6573 = vrot.slane %v6550, %v6572
        %v6575 = vunpack.c.l.s4 1934713408
        %v6576 = vunpack.c.0.s8 %v6575
        %v6577 = vlaneseq
        %v6578 = vshrl.u32 %v6577, 7
        %v6579 = vsub.s32 %v6576, %v6578
        %v6580 = vrot.slane %v6566, %v6579
        %v6581 = vcombine.high %v6558, 0.0
        %v6582 = vcombine.high %v6565, 0.0
        %v6583 = vcombine.high %v6573, 0.0
        %v6584 = vcombine.high %v6580, 0.0
        %v6585 = vcombine.high %v985, 0.0
        %v6587 = vunpack.c.l.s4 1983009808
        %v6588 = vunpack.c.0.s8 %v6587
        %v6589 = vlaneseq
        %v6590 = vshrl.u32 %v6589, 7
        %v6591 = vsub.s32 %v6588, %v6590
        %v6592 = vrot.slane %v985, %v6591
        %v6594 = vunpack.c.l.s4 1983009808
        %v6595 = vunpack.c.0.s8 %v6594
        %v6596 = vlaneseq
        %v6597 = vshrl.u32 %v6596, 7
        %v6598 = vsub.s32 %v6595, %v6597
        %v6599 = vrot.slane %v6585, %v6598
        %v6600 = vcombine.high %v6592, 0.0
        %v6602 = vunpack.c.l.s4 1934713408
        %v6603 = vunpack.c.0.s8 %v6602
        %v6604 = vlaneseq
        %v6605 = vshrl.u32 %v6604, 7
        %v6606 = vsub.s32 %v6603, %v6605
        %v6607 = vrot.slane %v6592, %v6606
        %v6609 = vunpack.c.l.s4 1934713408
        %v6610 = vunpack.c.0.s8 %v6609
        %v6611 = vlaneseq
        %v6612 = vshrl.u32 %v6611, 7
        %v6613 = vsub.s32 %v6610, %v6612
        %v6614 = vrot.slane %v6600, %v6613
        %v6615 = vcombine.high %v6599, 0.0
        %v6617 = vunpack.c.l.s4 1934713408
        %v6618 = vunpack.c.0.s8 %v6617
        %v6619 = vlaneseq
        %v6620 = vshrl.u32 %v6619, 7
        %v6621 = vsub.s32 %v6618, %v6620
        %v6622 = vrot.slane %v6599, %v6621
        %v6624 = vunpack.c.l.s4 1934713408
        %v6625 = vunpack.c.0.s8 %v6624
        %v6626 = vlaneseq
        %v6627 = vshrl.u32 %v6626, 7
        %v6628 = vsub.s32 %v6625, %v6627
        %v6629 = vrot.slane %v6615, %v6628
        %v6630 = vcombine.high %v6607, 0.0
        %v6631 = vcombine.high %v6614, 0.0
        %v6632 = vcombine.high %v6622, 0.0
        %v6633 = vcombine.high %v6629, 0.0
        %v6634 = vcombine.high %v986, 0.0
        %v6636 = vunpack.c.l.s4 1983009808
        %v6637 = vunpack.c.0.s8 %v6636
        %v6638 = vlaneseq
        %v6639 = vshrl.u32 %v6638, 7
        %v6640 = vsub.s32 %v6637, %v6639
        %v6641 = vrot.slane %v986, %v6640
        %v6643 = vunpack.c.l.s4 1983009808
        %v6644 = vunpack.c.0.s8 %v6643
        %v6645 = vlaneseq
        %v6646 = vshrl.u32 %v6645, 7
        %v6647 = vsub.s32 %v6644, %v6646
        %v6648 = vrot.slane %v6634, %v6647
        %v6649 = vcombine.high %v6641, 0.0
        %v6651 = vunpack.c.l.s4 1934713408
        %v6652 = vunpack.c.0.s8 %v6651
        %v6653 = vlaneseq
        %v6654 = vshrl.u32 %v6653, 7
        %v6655 = vsub.s32 %v6652, %v6654
        %v6656 = vrot.slane %v6641, %v6655
        %v6658 = vunpack.c.l.s4 1934713408
        %v6659 = vunpack.c.0.s8 %v6658
        %v6660 = vlaneseq
        %v6661 = vshrl.u32 %v6660, 7
        %v6662 = vsub.s32 %v6659, %v6661
        %v6663 = vrot.slane %v6649, %v6662
        %v6664 = vcombine.high %v6648, 0.0
        %v6666 = vunpack.c.l.s4 1934713408
        %v6667 = vunpack.c.0.s8 %v6666
        %v6668 = vlaneseq
        %v6669 = vshrl.u32 %v6668, 7
        %v6670 = vsub.s32 %v6667, %v6669
        %v6671 = vrot.slane %v6648, %v6670
        %v6673 = vunpack.c.l.s4 1934713408
        %v6674 = vunpack.c.0.s8 %v6673
        %v6675 = vlaneseq
        %v6676 = vshrl.u32 %v6675, 7
        %v6677 = vsub.s32 %v6674, %v6676
        %v6678 = vrot.slane %v6664, %v6677
        %v6679 = vcombine.high %v6656, 0.0
        %v6680 = vcombine.high %v6663, 0.0
        %v6681 = vcombine.high %v6671, 0.0
        %v6682 = vcombine.high %v6678, 0.0
        %v6683 = vcombine.high %v987, 0.0
        %v6685 = vunpack.c.l.s4 1983009808
        %v6686 = vunpack.c.0.s8 %v6685
        %v6687 = vlaneseq
        %v6688 = vshrl.u32 %v6687, 7
        %v6689 = vsub.s32 %v6686, %v6688
        %v6690 = vrot.slane %v987, %v6689
        %v6692 = vunpack.c.l.s4 1983009808
        %v6693 = vunpack.c.0.s8 %v6692
        %v6694 = vlaneseq
        %v6695 = vshrl.u32 %v6694, 7
        %v6696 = vsub.s32 %v6693, %v6695
        %v6697 = vrot.slane %v6683, %v6696
        %v6698 = vcombine.high %v6690, 0.0
        %v6700 = vunpack.c.l.s4 1934713408
        %v6701 = vunpack.c.0.s8 %v6700
        %v6702 = vlaneseq
        %v6703 = vshrl.u32 %v6702, 7
        %v6704 = vsub.s32 %v6701, %v6703
        %v6705 = vrot.slane %v6690, %v6704
        %v6707 = vunpack.c.l.s4 1934713408
        %v6708 = vunpack.c.0.s8 %v6707
        %v6709 = vlaneseq
        %v6710 = vshrl.u32 %v6709, 7
        %v6711 = vsub.s32 %v6708, %v6710
        %v6712 = vrot.slane %v6698, %v6711
        %v6713 = vcombine.high %v6697, 0.0
        %v6715 = vunpack.c.l.s4 1934713408
        %v6716 = vunpack.c.0.s8 %v6715
        %v6717 = vlaneseq
        %v6718 = vshrl.u32 %v6717, 7
        %v6719 = vsub.s32 %v6716, %v6718
        %v6720 = vrot.slane %v6697, %v6719
        %v6722 = vunpack.c.l.s4 1934713408
        %v6723 = vunpack.c.0.s8 %v6722
        %v6724 = vlaneseq
        %v6725 = vshrl.u32 %v6724, 7
        %v6726 = vsub.s32 %v6723, %v6725
        %v6727 = vrot.slane %v6713, %v6726
        %v6728 = vcombine.high %v6705, 0.0
        %v6729 = vcombine.high %v6712, 0.0
        %v6730 = vcombine.high %v6720, 0.0
        %v6731 = vcombine.high %v6727, 0.0
        %v6732 = vcombine.high %v988, 0.0
        %v6734 = vunpack.c.l.s4 1983009808
        %v6735 = vunpack.c.0.s8 %v6734
        %v6736 = vlaneseq
        %v6737 = vshrl.u32 %v6736, 7
        %v6738 = vsub.s32 %v6735, %v6737
        %v6739 = vrot.slane %v988, %v6738
        %v6741 = vunpack.c.l.s4 1983009808
        %v6742 = vunpack.c.0.s8 %v6741
        %v6743 = vlaneseq
        %v6744 = vshrl.u32 %v6743, 7
        %v6745 = vsub.s32 %v6742, %v6744
        %v6746 = vrot.slane %v6732, %v6745
        %v6747 = vcombine.high %v6739, 0.0
        %v6749 = vunpack.c.l.s4 1934713408
        %v6750 = vunpack.c.0.s8 %v6749
        %v6751 = vlaneseq
        %v6752 = vshrl.u32 %v6751, 7
        %v6753 = vsub.s32 %v6750, %v6752
        %v6754 = vrot.slane %v6739, %v6753
        %v6756 = vunpack.c.l.s4 1934713408
        %v6757 = vunpack.c.0.s8 %v6756
        %v6758 = vlaneseq
        %v6759 = vshrl.u32 %v6758, 7
        %v6760 = vsub.s32 %v6757, %v6759
        %v6761 = vrot.slane %v6747, %v6760
        %v6762 = vcombine.high %v6746, 0.0
        %v6764 = vunpack.c.l.s4 1934713408
        %v6765 = vunpack.c.0.s8 %v6764
        %v6766 = vlaneseq
        %v6767 = vshrl.u32 %v6766, 7
        %v6768 = vsub.s32 %v6765, %v6767
        %v6769 = vrot.slane %v6746, %v6768
        %v6771 = vunpack.c.l.s4 1934713408
        %v6772 = vunpack.c.0.s8 %v6771
        %v6773 = vlaneseq
        %v6774 = vshrl.u32 %v6773, 7
        %v6775 = vsub.s32 %v6772, %v6774
        %v6776 = vrot.slane %v6762, %v6775
        %v6777 = vcombine.high %v6754, 0.0
        %v6778 = vcombine.high %v6761, 0.0
        %v6779 = vcombine.high %v6769, 0.0
        %v6780 = vcombine.high %v6776, 0.0
        %v6781 = vcombine.high %v989, 0.0
        %v6783 = vunpack.c.l.s4 1983009808
        %v6784 = vunpack.c.0.s8 %v6783
        %v6785 = vlaneseq
        %v6786 = vshrl.u32 %v6785, 7
        %v6787 = vsub.s32 %v6784, %v6786
        %v6788 = vrot.slane %v989, %v6787
        %v6790 = vunpack.c.l.s4 1983009808
        %v6791 = vunpack.c.0.s8 %v6790
        %v6792 = vlaneseq
        %v6793 = vshrl.u32 %v6792, 7
        %v6794 = vsub.s32 %v6791, %v6793
        %v6795 = vrot.slane %v6781, %v6794
        %v6796 = vcombine.high %v6788, 0.0
        %v6798 = vunpack.c.l.s4 1934713408
        %v6799 = vunpack.c.0.s8 %v6798
        %v6800 = vlaneseq
        %v6801 = vshrl.u32 %v6800, 7
        %v6802 = vsub.s32 %v6799, %v6801
        %v6803 = vrot.slane %v6788, %v6802
        %v6805 = vunpack.c.l.s4 1934713408
        %v6806 = vunpack.c.0.s8 %v6805
        %v6807 = vlaneseq
        %v6808 = vshrl.u32 %v6807, 7
        %v6809 = vsub.s32 %v6806, %v6808
        %v6810 = vrot.slane %v6796, %v6809
        %v6811 = vcombine.high %v6795, 0.0
        %v6813 = vunpack.c.l.s4 1934713408
        %v6814 = vunpack.c.0.s8 %v6813
        %v6815 = vlaneseq
        %v6816 = vshrl.u32 %v6815, 7
        %v6817 = vsub.s32 %v6814, %v6816
        %v6818 = vrot.slane %v6795, %v6817
        %v6820 = vunpack.c.l.s4 1934713408
        %v6821 = vunpack.c.0.s8 %v6820
        %v6822 = vlaneseq
        %v6823 = vshrl.u32 %v6822, 7
        %v6824 = vsub.s32 %v6821, %v6823
        %v6825 = vrot.slane %v6811, %v6824
        %v6826 = vcombine.high %v6803, 0.0
        %v6827 = vcombine.high %v6810, 0.0
        %v6828 = vcombine.high %v6818, 0.0
        %v6829 = vcombine.high %v6825, 0.0
        %v6830 = vcombine.high %v990, 0.0
        %v6832 = vunpack.c.l.s4 1983009808
        %v6833 = vunpack.c.0.s8 %v6832
        %v6834 = vlaneseq
        %v6835 = vshrl.u32 %v6834, 7
        %v6836 = vsub.s32 %v6833, %v6835
        %v6837 = vrot.slane %v990, %v6836
        %v6839 = vunpack.c.l.s4 1983009808
        %v6840 = vunpack.c.0.s8 %v6839
        %v6841 = vlaneseq
        %v6842 = vshrl.u32 %v6841, 7
        %v6843 = vsub.s32 %v6840, %v6842
        %v6844 = vrot.slane %v6830, %v6843
        %v6845 = vcombine.high %v6837, 0.0
        %v6847 = vunpack.c.l.s4 1934713408
        %v6848 = vunpack.c.0.s8 %v6847
        %v6849 = vlaneseq
        %v6850 = vshrl.u32 %v6849, 7
        %v6851 = vsub.s32 %v6848, %v6850
        %v6852 = vrot.slane %v6837, %v6851
        %v6854 = vunpack.c.l.s4 1934713408
        %v6855 = vunpack.c.0.s8 %v6854
        %v6856 = vlaneseq
        %v6857 = vshrl.u32 %v6856, 7
        %v6858 = vsub.s32 %v6855, %v6857
        %v6859 = vrot.slane %v6845, %v6858
        %v6860 = vcombine.high %v6844, 0.0
        %v6862 = vunpack.c.l.s4 1934713408
        %v6863 = vunpack.c.0.s8 %v6862
        %v6864 = vlaneseq
        %v6865 = vshrl.u32 %v6864, 7
        %v6866 = vsub.s32 %v6863, %v6865
        %v6867 = vrot.slane %v6844, %v6866
        %v6869 = vunpack.c.l.s4 1934713408
        %v6870 = vunpack.c.0.s8 %v6869
        %v6871 = vlaneseq
        %v6872 = vshrl.u32 %v6871, 7
        %v6873 = vsub.s32 %v6870, %v6872
        %v6874 = vrot.slane %v6860, %v6873
        %v6875 = vcombine.high %v6852, 0.0
        %v6876 = vcombine.high %v6859, 0.0
        %v6877 = vcombine.high %v6867, 0.0
        %v6878 = vcombine.high %v6874, 0.0
        %v6879 = vcombine.high %v991, 0.0
        %v6881 = vunpack.c.l.s4 1983009808
        %v6882 = vunpack.c.0.s8 %v6881
        %v6883 = vlaneseq
        %v6884 = vshrl.u32 %v6883, 7
        %v6885 = vsub.s32 %v6882, %v6884
        %v6886 = vrot.slane %v991, %v6885
        %v6888 = vunpack.c.l.s4 1983009808
        %v6889 = vunpack.c.0.s8 %v6888
        %v6890 = vlaneseq
        %v6891 = vshrl.u32 %v6890, 7
        %v6892 = vsub.s32 %v6889, %v6891
        %v6893 = vrot.slane %v6879, %v6892
        %v6894 = vcombine.high %v6886, 0.0
        %v6896 = vunpack.c.l.s4 1934713408
        %v6897 = vunpack.c.0.s8 %v6896
        %v6898 = vlaneseq
        %v6899 = vshrl.u32 %v6898, 7
        %v6900 = vsub.s32 %v6897, %v6899
        %v6901 = vrot.slane %v6886, %v6900
        %v6903 = vunpack.c.l.s4 1934713408
        %v6904 = vunpack.c.0.s8 %v6903
        %v6905 = vlaneseq
        %v6906 = vshrl.u32 %v6905, 7
        %v6907 = vsub.s32 %v6904, %v6906
        %v6908 = vrot.slane %v6894, %v6907
        %v6909 = vcombine.high %v6893, 0.0
        %v6911 = vunpack.c.l.s4 1934713408
        %v6912 = vunpack.c.0.s8 %v6911
        %v6913 = vlaneseq
        %v6914 = vshrl.u32 %v6913, 7
        %v6915 = vsub.s32 %v6912, %v6914
        %v6916 = vrot.slane %v6893, %v6915
        %v6918 = vunpack.c.l.s4 1934713408
        %v6919 = vunpack.c.0.s8 %v6918
        %v6920 = vlaneseq
        %v6921 = vshrl.u32 %v6920, 7
        %v6922 = vsub.s32 %v6919, %v6921
        %v6923 = vrot.slane %v6909, %v6922
        %v6924 = vcombine.high %v6901, 0.0
        %v6925 = vcombine.high %v6908, 0.0
        %v6926 = vcombine.high %v6916, 0.0
        %v6927 = vcombine.high %v6923, 0.0
        %v6928 = vcombine.high %v992, 0.0
        %v6930 = vunpack.c.l.s4 1983009808
        %v6931 = vunpack.c.0.s8 %v6930
        %v6932 = vlaneseq
        %v6933 = vshrl.u32 %v6932, 7
        %v6934 = vsub.s32 %v6931, %v6933
        %v6935 = vrot.slane %v992, %v6934
        %v6937 = vunpack.c.l.s4 1983009808
        %v6938 = vunpack.c.0.s8 %v6937
        %v6939 = vlaneseq
        %v6940 = vshrl.u32 %v6939, 7
        %v6941 = vsub.s32 %v6938, %v6940
        %v6942 = vrot.slane %v6928, %v6941
        %v6943 = vcombine.high %v6935, 0.0
        %v6945 = vunpack.c.l.s4 1934713408
        %v6946 = vunpack.c.0.s8 %v6945
        %v6947 = vlaneseq
        %v6948 = vshrl.u32 %v6947, 7
        %v6949 = vsub.s32 %v6946, %v6948
        %v6950 = vrot.slane %v6935, %v6949
        %v6952 = vunpack.c.l.s4 1934713408
        %v6953 = vunpack.c.0.s8 %v6952
        %v6954 = vlaneseq
        %v6955 = vshrl.u32 %v6954, 7
        %v6956 = vsub.s32 %v6953, %v6955
        %v6957 = vrot.slane %v6943, %v6956
        %v6958 = vcombine.high %v6942, 0.0
        %v6960 = vunpack.c.l.s4 1934713408
        %v6961 = vunpack.c.0.s8 %v6960
        %v6962 = vlaneseq
        %v6963 = vshrl.u32 %v6962, 7
        %v6964 = vsub.s32 %v6961, %v6963
        %v6965 = vrot.slane %v6942, %v6964
        %v6967 = vunpack.c.l.s4 1934713408
        %v6968 = vunpack.c.0.s8 %v6967
        %v6969 = vlaneseq
        %v6970 = vshrl.u32 %v6969, 7
        %v6971 = vsub.s32 %v6968, %v6970
        %v6972 = vrot.slane %v6958, %v6971
        %v6973 = vcombine.high %v6950, 0.0
        %v6974 = vcombine.high %v6957, 0.0
        %v6975 = vcombine.high %v6965, 0.0
        %v6976 = vcombine.high %v6972, 0.0
        %v6977 = vcombine.high %v993, 0.0
        %v6979 = vunpack.c.l.s4 1983009808
        %v6980 = vunpack.c.0.s8 %v6979
        %v6981 = vlaneseq
        %v6982 = vshrl.u32 %v6981, 7
        %v6983 = vsub.s32 %v6980, %v6982
        %v6984 = vrot.slane %v993, %v6983
        %v6986 = vunpack.c.l.s4 1983009808
        %v6987 = vunpack.c.0.s8 %v6986
        %v6988 = vlaneseq
        %v6989 = vshrl.u32 %v6988, 7
        %v6990 = vsub.s32 %v6987, %v6989
        %v6991 = vrot.slane %v6977, %v6990
        %v6992 = vcombine.high %v6984, 0.0
        %v6994 = vunpack.c.l.s4 1934713408
        %v6995 = vunpack.c.0.s8 %v6994
        %v6996 = vlaneseq
        %v6997 = vshrl.u32 %v6996, 7
        %v6998 = vsub.s32 %v6995, %v6997
        %v6999 = vrot.slane %v6984, %v6998
        %v7001 = vunpack.c.l.s4 1934713408
        %v7002 = vunpack.c.0.s8 %v7001
        %v7003 = vlaneseq
        %v7004 = vshrl.u32 %v7003, 7
        %v7005 = vsub.s32 %v7002, %v7004
        %v7006 = vrot.slane %v6992, %v7005
        %v7007 = vcombine.high %v6991, 0.0
        %v7009 = vunpack.c.l.s4 1934713408
        %v7010 = vunpack.c.0.s8 %v7009
        %v7011 = vlaneseq
        %v7012 = vshrl.u32 %v7011, 7
        %v7013 = vsub.s32 %v7010, %v7012
        %v7014 = vrot.slane %v6991, %v7013
        %v7016 = vunpack.c.l.s4 1934713408
        %v7017 = vunpack.c.0.s8 %v7016
        %v7018 = vlaneseq
        %v7019 = vshrl.u32 %v7018, 7
        %v7020 = vsub.s32 %v7017, %v7019
        %v7021 = vrot.slane %v7007, %v7020
        %v7022 = vcombine.high %v6999, 0.0
        %v7023 = vcombine.high %v7006, 0.0
        %v7024 = vcombine.high %v7014, 0.0
        %v7025 = vcombine.high %v7021, 0.0
        %v7026 = vcombine.high %v994, 0.0
        %v7028 = vunpack.c.l.s4 1983009808
        %v7029 = vunpack.c.0.s8 %v7028
        %v7030 = vlaneseq
        %v7031 = vshrl.u32 %v7030, 7
        %v7032 = vsub.s32 %v7029, %v7031
        %v7033 = vrot.slane %v994, %v7032
        %v7035 = vunpack.c.l.s4 1983009808
        %v7036 = vunpack.c.0.s8 %v7035
        %v7037 = vlaneseq
        %v7038 = vshrl.u32 %v7037, 7
        %v7039 = vsub.s32 %v7036, %v7038
        %v7040 = vrot.slane %v7026, %v7039
        %v7041 = vcombine.high %v7033, 0.0
        %v7043 = vunpack.c.l.s4 1934713408
        %v7044 = vunpack.c.0.s8 %v7043
        %v7045 = vlaneseq
        %v7046 = vshrl.u32 %v7045, 7
        %v7047 = vsub.s32 %v7044, %v7046
        %v7048 = vrot.slane %v7033, %v7047
        %v7050 = vunpack.c.l.s4 1934713408
        %v7051 = vunpack.c.0.s8 %v7050
        %v7052 = vlaneseq
        %v7053 = vshrl.u32 %v7052, 7
        %v7054 = vsub.s32 %v7051, %v7053
        %v7055 = vrot.slane %v7041, %v7054
        %v7056 = vcombine.high %v7040, 0.0
        %v7058 = vunpack.c.l.s4 1934713408
        %v7059 = vunpack.c.0.s8 %v7058
        %v7060 = vlaneseq
        %v7061 = vshrl.u32 %v7060, 7
        %v7062 = vsub.s32 %v7059, %v7061
        %v7063 = vrot.slane %v7040, %v7062
        %v7065 = vunpack.c.l.s4 1934713408
        %v7066 = vunpack.c.0.s8 %v7065
        %v7067 = vlaneseq
        %v7068 = vshrl.u32 %v7067, 7
        %v7069 = vsub.s32 %v7066, %v7068
        %v7070 = vrot.slane %v7056, %v7069
        %v7071 = vcombine.high %v7048, 0.0
        %v7072 = vcombine.high %v7055, 0.0
        %v7073 = vcombine.high %v7063, 0.0
        %v7074 = vcombine.high %v7070, 0.0
        %v7075 = vcombine.high %v995, 0.0
        %v7077 = vunpack.c.l.s4 1983009808
        %v7078 = vunpack.c.0.s8 %v7077
        %v7079 = vlaneseq
        %v7080 = vshrl.u32 %v7079, 7
        %v7081 = vsub.s32 %v7078, %v7080
        %v7082 = vrot.slane %v995, %v7081
        %v7084 = vunpack.c.l.s4 1983009808
        %v7085 = vunpack.c.0.s8 %v7084
        %v7086 = vlaneseq
        %v7087 = vshrl.u32 %v7086, 7
        %v7088 = vsub.s32 %v7085, %v7087
        %v7089 = vrot.slane %v7075, %v7088
        %v7090 = vcombine.high %v7082, 0.0
        %v7092 = vunpack.c.l.s4 1934713408
        %v7093 = vunpack.c.0.s8 %v7092
        %v7094 = vlaneseq
        %v7095 = vshrl.u32 %v7094, 7
        %v7096 = vsub.s32 %v7093, %v7095
        %v7097 = vrot.slane %v7082, %v7096
        %v7099 = vunpack.c.l.s4 1934713408
        %v7100 = vunpack.c.0.s8 %v7099
        %v7101 = vlaneseq
        %v7102 = vshrl.u32 %v7101, 7
        %v7103 = vsub.s32 %v7100, %v7102
        %v7104 = vrot.slane %v7090, %v7103
        %v7105 = vcombine.high %v7089, 0.0
        %v7107 = vunpack.c.l.s4 1934713408
        %v7108 = vunpack.c.0.s8 %v7107
        %v7109 = vlaneseq
        %v7110 = vshrl.u32 %v7109, 7
        %v7111 = vsub.s32 %v7108, %v7110
        %v7112 = vrot.slane %v7089, %v7111
        %v7114 = vunpack.c.l.s4 1934713408
        %v7115 = vunpack.c.0.s8 %v7114
        %v7116 = vlaneseq
        %v7117 = vshrl.u32 %v7116, 7
        %v7118 = vsub.s32 %v7115, %v7117
        %v7119 = vrot.slane %v7105, %v7118
        %v7120 = vcombine.high %v7097, 0.0
        %v7121 = vcombine.high %v7104, 0.0
        %v7122 = vcombine.high %v7112, 0.0
        %v7123 = vcombine.high %v7119, 0.0
        %v7124 = vcombine.high %v996, 0.0
        %v7126 = vunpack.c.l.s4 1983009808
        %v7127 = vunpack.c.0.s8 %v7126
        %v7128 = vlaneseq
        %v7129 = vshrl.u32 %v7128, 7
        %v7130 = vsub.s32 %v7127, %v7129
        %v7131 = vrot.slane %v996, %v7130
        %v7133 = vunpack.c.l.s4 1983009808
        %v7134 = vunpack.c.0.s8 %v7133
        %v7135 = vlaneseq
        %v7136 = vshrl.u32 %v7135, 7
        %v7137 = vsub.s32 %v7134, %v7136
        %v7138 = vrot.slane %v7124, %v7137
        %v7139 = vcombine.high %v7131, 0.0
        %v7141 = vunpack.c.l.s4 1934713408
        %v7142 = vunpack.c.0.s8 %v7141
        %v7143 = vlaneseq
        %v7144 = vshrl.u32 %v7143, 7
        %v7145 = vsub.s32 %v7142, %v7144
        %v7146 = vrot.slane %v7131, %v7145
        %v7148 = vunpack.c.l.s4 1934713408
        %v7149 = vunpack.c.0.s8 %v7148
        %v7150 = vlaneseq
        %v7151 = vshrl.u32 %v7150, 7
        %v7152 = vsub.s32 %v7149, %v7151
        %v7153 = vrot.slane %v7139, %v7152
        %v7154 = vcombine.high %v7138, 0.0
        %v7156 = vunpack.c.l.s4 1934713408
        %v7157 = vunpack.c.0.s8 %v7156
        %v7158 = vlaneseq
        %v7159 = vshrl.u32 %v7158, 7
        %v7160 = vsub.s32 %v7157, %v7159
        %v7161 = vrot.slane %v7138, %v7160
        %v7163 = vunpack.c.l.s4 1934713408
        %v7164 = vunpack.c.0.s8 %v7163
        %v7165 = vlaneseq
        %v7166 = vshrl.u32 %v7165, 7
        %v7167 = vsub.s32 %v7164, %v7166
        %v7168 = vrot.slane %v7154, %v7167
        %v7169 = vcombine.high %v7146, 0.0
        %v7170 = vcombine.high %v7153, 0.0
        %v7171 = vcombine.high %v7161, 0.0
        %v7172 = vcombine.high %v7168, 0.0
        %v7173 = vcombine.high %v997, 0.0
        %v7175 = vunpack.c.l.s4 1983009808
        %v7176 = vunpack.c.0.s8 %v7175
        %v7177 = vlaneseq
        %v7178 = vshrl.u32 %v7177, 7
        %v7179 = vsub.s32 %v7176, %v7178
        %v7180 = vrot.slane %v997, %v7179
        %v7182 = vunpack.c.l.s4 1983009808
        %v7183 = vunpack.c.0.s8 %v7182
        %v7184 = vlaneseq
        %v7185 = vshrl.u32 %v7184, 7
        %v7186 = vsub.s32 %v7183, %v7185
        %v7187 = vrot.slane %v7173, %v7186
        %v7188 = vcombine.high %v7180, 0.0
        %v7190 = vunpack.c.l.s4 1934713408
        %v7191 = vunpack.c.0.s8 %v7190
        %v7192 = vlaneseq
        %v7193 = vshrl.u32 %v7192, 7
        %v7194 = vsub.s32 %v7191, %v7193
        %v7195 = vrot.slane %v7180, %v7194
        %v7197 = vunpack.c.l.s4 1934713408
        %v7198 = vunpack.c.0.s8 %v7197
        %v7199 = vlaneseq
        %v7200 = vshrl.u32 %v7199, 7
        %v7201 = vsub.s32 %v7198, %v7200
        %v7202 = vrot.slane %v7188, %v7201
        %v7203 = vcombine.high %v7187, 0.0
        %v7205 = vunpack.c.l.s4 1934713408
        %v7206 = vunpack.c.0.s8 %v7205
        %v7207 = vlaneseq
        %v7208 = vshrl.u32 %v7207, 7
        %v7209 = vsub.s32 %v7206, %v7208
        %v7210 = vrot.slane %v7187, %v7209
        %v7212 = vunpack.c.l.s4 1934713408
        %v7213 = vunpack.c.0.s8 %v7212
        %v7214 = vlaneseq
        %v7215 = vshrl.u32 %v7214, 7
        %v7216 = vsub.s32 %v7213, %v7215
        %v7217 = vrot.slane %v7203, %v7216
        %v7218 = vcombine.high %v7195, 0.0
        %v7219 = vcombine.high %v7202, 0.0
        %v7220 = vcombine.high %v7210, 0.0
        %v7221 = vcombine.high %v7217, 0.0
        %v7222 = vcombine.high %v998, 0.0
        %v7224 = vunpack.c.l.s4 1983009808
        %v7225 = vunpack.c.0.s8 %v7224
        %v7226 = vlaneseq
        %v7227 = vshrl.u32 %v7226, 7
        %v7228 = vsub.s32 %v7225, %v7227
        %v7229 = vrot.slane %v998, %v7228
        %v7231 = vunpack.c.l.s4 1983009808
        %v7232 = vunpack.c.0.s8 %v7231
        %v7233 = vlaneseq
        %v7234 = vshrl.u32 %v7233, 7
        %v7235 = vsub.s32 %v7232, %v7234
        %v7236 = vrot.slane %v7222, %v7235
        %v7237 = vcombine.high %v7229, 0.0
        %v7239 = vunpack.c.l.s4 1934713408
        %v7240 = vunpack.c.0.s8 %v7239
        %v7241 = vlaneseq
        %v7242 = vshrl.u32 %v7241, 7
        %v7243 = vsub.s32 %v7240, %v7242
        %v7244 = vrot.slane %v7229, %v7243
        %v7246 = vunpack.c.l.s4 1934713408
        %v7247 = vunpack.c.0.s8 %v7246
        %v7248 = vlaneseq
        %v7249 = vshrl.u32 %v7248, 7
        %v7250 = vsub.s32 %v7247, %v7249
        %v7251 = vrot.slane %v7237, %v7250
        %v7252 = vcombine.high %v7236, 0.0
        %v7254 = vunpack.c.l.s4 1934713408
        %v7255 = vunpack.c.0.s8 %v7254
        %v7256 = vlaneseq
        %v7257 = vshrl.u32 %v7256, 7
        %v7258 = vsub.s32 %v7255, %v7257
        %v7259 = vrot.slane %v7236, %v7258
        %v7261 = vunpack.c.l.s4 1934713408
        %v7262 = vunpack.c.0.s8 %v7261
        %v7263 = vlaneseq
        %v7264 = vshrl.u32 %v7263, 7
        %v7265 = vsub.s32 %v7262, %v7264
        %v7266 = vrot.slane %v7252, %v7265
        %v7267 = vcombine.high %v7244, 0.0
        %v7268 = vcombine.high %v7251, 0.0
        %v7269 = vcombine.high %v7259, 0.0
        %v7270 = vcombine.high %v7266, 0.0
        %7335 = vrot.lane.b32.xlu0 %v1044, 2
        %v7336 = vpop.permute.xlu0 %7335
        %7337 = vrot.lane.b32.xlu0 %v1142, 2
        %v7338 = vpop.permute.xlu0 %7337
        %7339 = vrot.lane.b32.xlu0 %v1240, 2
        %v7340 = vpop.permute.xlu0 %7339
        %7341 = vrot.lane.b32.xlu0 %v1338, 2
        %v7342 = vpop.permute.xlu0 %7341
        %7343 = vrot.lane.b32.xlu0 %v1436, 2
        %v7344 = vpop.permute.xlu0 %7343
        %7345 = vrot.lane.b32.xlu0 %v1534, 2
        %v7346 = vpop.permute.xlu0 %7345
        %7347 = vrot.lane.b32.xlu0 %v1632, 2
        %v7348 = vpop.permute.xlu0 %7347
        %7349 = vrot.lane.b32.xlu0 %v1730, 2
        %v7350 = vpop.permute.xlu0 %7349
        %7351 = vrot.lane.b32.xlu0 %v1828, 2
        %v7352 = vpop.permute.xlu0 %7351
        %7353 = vrot.lane.b32.xlu0 %v1926, 2
        %v7354 = vpop.permute.xlu0 %7353
        %7355 = vrot.lane.b32.xlu0 %v2024, 2
        %v7356 = vpop.permute.xlu0 %7355
        %7357 = vrot.lane.b32.xlu0 %v2122, 2
        %v7358 = vpop.permute.xlu0 %7357
        %7359 = vrot.lane.b32.xlu0 %v2220, 2
        %v7360 = vpop.permute.xlu0 %7359
        %7361 = vrot.lane.b32.xlu0 %v2318, 2
        %v7362 = vpop.permute.xlu0 %7361
        %7363 = vrot.lane.b32.xlu0 %v2416, 2
        %v7364 = vpop.permute.xlu0 %7363
        %7365 = vrot.lane.b32.xlu0 %v2514, 2
        %v7366 = vpop.permute.xlu0 %7365
        %7367 = vrot.lane.b32.xlu0 %v2612, 2
        %v7368 = vpop.permute.xlu0 %7367
        %7369 = vrot.lane.b32.xlu0 %v2710, 2
        %v7370 = vpop.permute.xlu0 %7369
        %7371 = vrot.lane.b32.xlu0 %v2808, 2
        %v7372 = vpop.permute.xlu0 %7371
        %7373 = vrot.lane.b32.xlu0 %v2906, 2
        %v7374 = vpop.permute.xlu0 %7373
        %7375 = vrot.lane.b32.xlu0 %v3004, 2
        %v7376 = vpop.permute.xlu0 %7375
        %7377 = vrot.lane.b32.xlu0 %v3102, 2
        %v7378 = vpop.permute.xlu0 %7377
        %7379 = vrot.lane.b32.xlu0 %v3200, 2
        %v7380 = vpop.permute.xlu0 %7379
        %7381 = vrot.lane.b32.xlu0 %v3298, 2
        %v7382 = vpop.permute.xlu0 %7381
        %7383 = vrot.lane.b32.xlu0 %v3396, 2
        %v7384 = vpop.permute.xlu0 %7383
        %7385 = vrot.lane.b32.xlu0 %v3494, 2
        %v7386 = vpop.permute.xlu0 %7385
        %7387 = vrot.lane.b32.xlu0 %v3592, 2
        %v7388 = vpop.permute.xlu0 %7387
        %7389 = vrot.lane.b32.xlu0 %v3690, 2
        %v7390 = vpop.permute.xlu0 %7389
        %7391 = vrot.lane.b32.xlu0 %v3788, 2
        %v7392 = vpop.permute.xlu0 %7391
        %7393 = vrot.lane.b32.xlu0 %v3886, 2
        %v7394 = vpop.permute.xlu0 %7393
        %7395 = vrot.lane.b32.xlu0 %v3984, 2
        %v7396 = vpop.permute.xlu0 %7395
        %7397 = vrot.lane.b32.xlu0 %v4082, 2
        %v7398 = vpop.permute.xlu0 %7397
        %7399 = vrot.lane.b32.xlu0 %v4180, 2
        %v7400 = vpop.permute.xlu0 %7399
        %7401 = vrot.lane.b32.xlu0 %v4278, 2
        %v7402 = vpop.permute.xlu0 %7401
        %7403 = vrot.lane.b32.xlu0 %v4376, 2
        %v7404 = vpop.permute.xlu0 %7403
        %7405 = vrot.lane.b32.xlu0 %v4474, 2
        %v7406 = vpop.permute.xlu0 %7405
        %7407 = vrot.lane.b32.xlu0 %v4572, 2
        %v7408 = vpop.permute.xlu0 %7407
        %7409 = vrot.lane.b32.xlu0 %v4670, 2
        %v7410 = vpop.permute.xlu0 %7409
        %7411 = vrot.lane.b32.xlu0 %v4768, 2
        %v7412 = vpop.permute.xlu0 %7411
        %7413 = vrot.lane.b32.xlu0 %v4866, 2
        %v7414 = vpop.permute.xlu0 %7413
        %7415 = vrot.lane.b32.xlu0 %v4964, 2
        %v7416 = vpop.permute.xlu0 %7415
        %7417 = vrot.lane.b32.xlu0 %v5062, 2
        %v7418 = vpop.permute.xlu0 %7417
        %7419 = vrot.lane.b32.xlu0 %v5160, 2
        %v7420 = vpop.permute.xlu0 %7419
        %7421 = vrot.lane.b32.xlu0 %v5258, 2
        %v7422 = vpop.permute.xlu0 %7421
        %7423 = vrot.lane.b32.xlu0 %v5356, 2
        %v7424 = vpop.permute.xlu0 %7423
        %7425 = vrot.lane.b32.xlu0 %v5454, 2
        %v7426 = vpop.permute.xlu0 %7425
        %7427 = vrot.lane.b32.xlu0 %v5552, 2
        %v7428 = vpop.permute.xlu0 %7427
        %7429 = vrot.lane.b32.xlu0 %v5650, 2
        %v7430 = vpop.permute.xlu0 %7429
        %7431 = vrot.lane.b32.xlu0 %v5748, 2
        %v7432 = vpop.permute.xlu0 %7431
        %7433 = vrot.lane.b32.xlu0 %v5846, 2
        %v7434 = vpop.permute.xlu0 %7433
        %7435 = vrot.lane.b32.xlu0 %v5944, 2
        %v7436 = vpop.permute.xlu0 %7435
        %7437 = vrot.lane.b32.xlu0 %v6042, 2
        %v7438 = vpop.permute.xlu0 %7437
        %7439 = vrot.lane.b32.xlu0 %v6140, 2
        %v7440 = vpop.permute.xlu0 %7439
        %7441 = vrot.lane.b32.xlu0 %v6238, 2
        %v7442 = vpop.permute.xlu0 %7441
        %7443 = vrot.lane.b32.xlu0 %v6336, 2
        %v7444 = vpop.permute.xlu0 %7443
        %7445 = vrot.lane.b32.xlu0 %v6434, 2
        %v7446 = vpop.permute.xlu0 %7445
        %7447 = vrot.lane.b32.xlu0 %v6532, 2
        %v7448 = vpop.permute.xlu0 %7447
        %7449 = vrot.lane.b32.xlu0 %v6630, 2
        %v7450 = vpop.permute.xlu0 %7449
        %7451 = vrot.lane.b32.xlu0 %v6728, 2
        %v7452 = vpop.permute.xlu0 %7451
        %7453 = vrot.lane.b32.xlu0 %v6826, 2
        %v7454 = vpop.permute.xlu0 %7453
        %7455 = vrot.lane.b32.xlu0 %v6924, 2
        %v7456 = vpop.permute.xlu0 %7455
        %7457 = vrot.lane.b32.xlu0 %v7022, 2
        %v7458 = vpop.permute.xlu0 %7457
        %7459 = vrot.lane.b32.xlu0 %v7120, 2
        %v7460 = vpop.permute.xlu0 %7459
        %7461 = vrot.lane.b32.xlu0 %v7218, 2
        %v7462 = vpop.permute.xlu0 %7461
        %7591 = vrot.lane.b32.xlu0 %v1028, 4
        %v7592 = vpop.permute.xlu0 %7591
        %7593 = vrot.lane.b32.xlu0 %v1126, 4
        %v7594 = vpop.permute.xlu0 %7593
        %7595 = vrot.lane.b32.xlu0 %v1224, 4
        %v7596 = vpop.permute.xlu0 %7595
        %7597 = vrot.lane.b32.xlu0 %v1322, 4
        %v7598 = vpop.permute.xlu0 %7597
        %7599 = vrot.lane.b32.xlu0 %v1420, 4
        %v7600 = vpop.permute.xlu0 %7599
        %7601 = vrot.lane.b32.xlu0 %v1518, 4
        %v7602 = vpop.permute.xlu0 %7601
        %7603 = vrot.lane.b32.xlu0 %v1616, 4
        %v7604 = vpop.permute.xlu0 %7603
        %7605 = vrot.lane.b32.xlu0 %v1714, 4
        %v7606 = vpop.permute.xlu0 %7605
        %7607 = vrot.lane.b32.xlu0 %v1812, 4
        %v7608 = vpop.permute.xlu0 %7607
        %7609 = vrot.lane.b32.xlu0 %v1910, 4
        %v7610 = vpop.permute.xlu0 %7609
        %7611 = vrot.lane.b32.xlu0 %v2008, 4
        %v7612 = vpop.permute.xlu0 %7611
        %7613 = vrot.lane.b32.xlu0 %v2106, 4
        %v7614 = vpop.permute.xlu0 %7613
        %7615 = vrot.lane.b32.xlu0 %v2204, 4
        %v7616 = vpop.permute.xlu0 %7615
        %7617 = vrot.lane.b32.xlu0 %v2302, 4
        %v7618 = vpop.permute.xlu0 %7617
        %7619 = vrot.lane.b32.xlu0 %v2400, 4
        %v7620 = vpop.permute.xlu0 %7619
        %7621 = vrot.lane.b32.xlu0 %v2498, 4
        %v7622 = vpop.permute.xlu0 %7621
        %7623 = vrot.lane.b32.xlu0 %v2596, 4
        %v7624 = vpop.permute.xlu0 %7623
        %7625 = vrot.lane.b32.xlu0 %v2694, 4
        %v7626 = vpop.permute.xlu0 %7625
        %7627 = vrot.lane.b32.xlu0 %v2792, 4
        %v7628 = vpop.permute.xlu0 %7627
        %7629 = vrot.lane.b32.xlu0 %v2890, 4
        %v7630 = vpop.permute.xlu0 %7629
        %7631 = vrot.lane.b32.xlu0 %v2988, 4
        %v7632 = vpop.permute.xlu0 %7631
        %7633 = vrot.lane.b32.xlu0 %v3086, 4
        %v7634 = vpop.permute.xlu0 %7633
        %7635 = vrot.lane.b32.xlu0 %v3184, 4
        %v7636 = vpop.permute.xlu0 %7635
        %7637 = vrot.lane.b32.xlu0 %v3282, 4
        %v7638 = vpop.permute.xlu0 %7637
        %7639 = vrot.lane.b32.xlu0 %v3380, 4
        %v7640 = vpop.permute.xlu0 %7639
        %7641 = vrot.lane.b32.xlu0 %v3478, 4
        %v7642 = vpop.permute.xlu0 %7641
        %7643 = vrot.lane.b32.xlu0 %v3576, 4
        %v7644 = vpop.permute.xlu0 %7643
        %7645 = vrot.lane.b32.xlu0 %v3674, 4
        %v7646 = vpop.permute.xlu0 %7645
        %7647 = vrot.lane.b32.xlu0 %v3772, 4
        %v7648 = vpop.permute.xlu0 %7647
        %7649 = vrot.lane.b32.xlu0 %v3870, 4
        %v7650 = vpop.permute.xlu0 %7649
        %7651 = vrot.lane.b32.xlu0 %v3968, 4
        %v7652 = vpop.permute.xlu0 %7651
        %7653 = vrot.lane.b32.xlu0 %v4066, 4
        %v7654 = vpop.permute.xlu0 %7653
        %7655 = vrot.lane.b32.xlu0 %v4164, 4
        %v7656 = vpop.permute.xlu0 %7655
        %7657 = vrot.lane.b32.xlu0 %v4262, 4
        %v7658 = vpop.permute.xlu0 %7657
        %7659 = vrot.lane.b32.xlu0 %v4360, 4
        %v7660 = vpop.permute.xlu0 %7659
        %7661 = vrot.lane.b32.xlu0 %v4458, 4
        %v7662 = vpop.permute.xlu0 %7661
        %7663 = vrot.lane.b32.xlu0 %v4556, 4
        %v7664 = vpop.permute.xlu0 %7663
        %7665 = vrot.lane.b32.xlu0 %v4654, 4
        %v7666 = vpop.permute.xlu0 %7665
        %7667 = vrot.lane.b32.xlu0 %v4752, 4
        %v7668 = vpop.permute.xlu0 %7667
        %7669 = vrot.lane.b32.xlu0 %v4850, 4
        %v7670 = vpop.permute.xlu0 %7669
        %7671 = vrot.lane.b32.xlu0 %v4948, 4
        %v7672 = vpop.permute.xlu0 %7671
        %7673 = vrot.lane.b32.xlu0 %v5046, 4
        %v7674 = vpop.permute.xlu0 %7673
        %7675 = vrot.lane.b32.xlu0 %v5144, 4
        %v7676 = vpop.permute.xlu0 %7675
        %7677 = vrot.lane.b32.xlu0 %v5242, 4
        %v7678 = vpop.permute.xlu0 %7677
        %7679 = vrot.lane.b32.xlu0 %v5340, 4
        %v7680 = vpop.permute.xlu0 %7679
        %7681 = vrot.lane.b32.xlu0 %v5438, 4
        %v7682 = vpop.permute.xlu0 %7681
        %7683 = vrot.lane.b32.xlu0 %v5536, 4
        %v7684 = vpop.permute.xlu0 %7683
        %7685 = vrot.lane.b32.xlu0 %v5634, 4
        %v7686 = vpop.permute.xlu0 %7685
        %7687 = vrot.lane.b32.xlu0 %v5732, 4
        %v7688 = vpop.permute.xlu0 %7687
        %7689 = vrot.lane.b32.xlu0 %v5830, 4
        %v7690 = vpop.permute.xlu0 %7689
        %7691 = vrot.lane.b32.xlu0 %v5928, 4
        %v7692 = vpop.permute.xlu0 %7691
        %7693 = vrot.lane.b32.xlu0 %v6026, 4
        %v7694 = vpop.permute.xlu0 %7693
        %7695 = vrot.lane.b32.xlu0 %v6124, 4
        %v7696 = vpop.permute.xlu0 %7695
        %7697 = vrot.lane.b32.xlu0 %v6222, 4
        %v7698 = vpop.permute.xlu0 %7697
        %7699 = vrot.lane.b32.xlu0 %v6320, 4
        %v7700 = vpop.permute.xlu0 %7699
        %7701 = vrot.lane.b32.xlu0 %v6418, 4
        %v7702 = vpop.permute.xlu0 %7701
        %7703 = vrot.lane.b32.xlu0 %v6516, 4
        %v7704 = vpop.permute.xlu0 %7703
        %7705 = vrot.lane.b32.xlu0 %v6614, 4
        %v7706 = vpop.permute.xlu0 %7705
        %7707 = vrot.lane.b32.xlu0 %v6712, 4
        %v7708 = vpop.permute.xlu0 %7707
        %7709 = vrot.lane.b32.xlu0 %v6810, 4
        %v7710 = vpop.permute.xlu0 %7709
        %7711 = vrot.lane.b32.xlu0 %v6908, 4
        %v7712 = vpop.permute.xlu0 %7711
        %7713 = vrot.lane.b32.xlu0 %v7006, 4
        %v7714 = vpop.permute.xlu0 %7713
        %7715 = vrot.lane.b32.xlu0 %v7104, 4
        %v7716 = vpop.permute.xlu0 %7715
        %7717 = vrot.lane.b32.xlu0 %v7202, 4
        %v7718 = vpop.permute.xlu0 %7717
        %7847 = vrot.lane.b32.xlu0 %v1045, 6
        %v7848 = vpop.permute.xlu0 %7847
        %7849 = vrot.lane.b32.xlu0 %v1143, 6
        %v7850 = vpop.permute.xlu0 %7849
        %7851 = vrot.lane.b32.xlu0 %v1241, 6
        %v7852 = vpop.permute.xlu0 %7851
        %7853 = vrot.lane.b32.xlu0 %v1339, 6
        %v7854 = vpop.permute.xlu0 %7853
        %7855 = vrot.lane.b32.xlu0 %v1437, 6
        %v7856 = vpop.permute.xlu0 %7855
        %7857 = vrot.lane.b32.xlu0 %v1535, 6
        %v7858 = vpop.permute.xlu0 %7857
        %7859 = vrot.lane.b32.xlu0 %v1633, 6
        %v7860 = vpop.permute.xlu0 %7859
        %7861 = vrot.lane.b32.xlu0 %v1731, 6
        %v7862 = vpop.permute.xlu0 %7861
        %7863 = vrot.lane.b32.xlu0 %v1829, 6
        %v7864 = vpop.permute.xlu0 %7863
        %7865 = vrot.lane.b32.xlu0 %v1927, 6
        %v7866 = vpop.permute.xlu0 %7865
        %7867 = vrot.lane.b32.xlu0 %v2025, 6
        %v7868 = vpop.permute.xlu0 %7867
        %7869 = vrot.lane.b32.xlu0 %v2123, 6
        %v7870 = vpop.permute.xlu0 %7869
        %7871 = vrot.lane.b32.xlu0 %v2221, 6
        %v7872 = vpop.permute.xlu0 %7871
        %7873 = vrot.lane.b32.xlu0 %v2319, 6
        %v7874 = vpop.permute.xlu0 %7873
        %7875 = vrot.lane.b32.xlu0 %v2417, 6
        %v7876 = vpop.permute.xlu0 %7875
        %7877 = vrot.lane.b32.xlu0 %v2515, 6
        %v7878 = vpop.permute.xlu0 %7877
        %7879 = vrot.lane.b32.xlu0 %v2613, 6
        %v7880 = vpop.permute.xlu0 %7879
        %7881 = vrot.lane.b32.xlu0 %v2711, 6
        %v7882 = vpop.permute.xlu0 %7881
        %7883 = vrot.lane.b32.xlu0 %v2809, 6
        %v7884 = vpop.permute.xlu0 %7883
        %7885 = vrot.lane.b32.xlu0 %v2907, 6
        %v7886 = vpop.permute.xlu0 %7885
        %7887 = vrot.lane.b32.xlu0 %v3005, 6
        %v7888 = vpop.permute.xlu0 %7887
        %7889 = vrot.lane.b32.xlu0 %v3103, 6
        %v7890 = vpop.permute.xlu0 %7889
        %7891 = vrot.lane.b32.xlu0 %v3201, 6
        %v7892 = vpop.permute.xlu0 %7891
        %7893 = vrot.lane.b32.xlu0 %v3299, 6
        %v7894 = vpop.permute.xlu0 %7893
        %7895 = vrot.lane.b32.xlu0 %v3397, 6
        %v7896 = vpop.permute.xlu0 %7895
        %7897 = vrot.lane.b32.xlu0 %v3495, 6
        %v7898 = vpop.permute.xlu0 %7897
        %7899 = vrot.lane.b32.xlu0 %v3593, 6
        %v7900 = vpop.permute.xlu0 %7899
        %7901 = vrot.lane.b32.xlu0 %v3691, 6
        %v7902 = vpop.permute.xlu0 %7901
        %7903 = vrot.lane.b32.xlu0 %v3789, 6
        %v7904 = vpop.permute.xlu0 %7903
        %7905 = vrot.lane.b32.xlu0 %v3887, 6
        %v7906 = vpop.permute.xlu0 %7905
        %7907 = vrot.lane.b32.xlu0 %v3985, 6
        %v7908 = vpop.permute.xlu0 %7907
        %7909 = vrot.lane.b32.xlu0 %v4083, 6
        %v7910 = vpop.permute.xlu0 %7909
        %7911 = vrot.lane.b32.xlu0 %v4181, 6
        %v7912 = vpop.permute.xlu0 %7911
        %7913 = vrot.lane.b32.xlu0 %v4279, 6
        %v7914 = vpop.permute.xlu0 %7913
        %7915 = vrot.lane.b32.xlu0 %v4377, 6
        %v7916 = vpop.permute.xlu0 %7915
        %7917 = vrot.lane.b32.xlu0 %v4475, 6
        %v7918 = vpop.permute.xlu0 %7917
        %7919 = vrot.lane.b32.xlu0 %v4573, 6
        %v7920 = vpop.permute.xlu0 %7919
        %7921 = vrot.lane.b32.xlu0 %v4671, 6
        %v7922 = vpop.permute.xlu0 %7921
        %7923 = vrot.lane.b32.xlu0 %v4769, 6
        %v7924 = vpop.permute.xlu0 %7923
        %7925 = vrot.lane.b32.xlu0 %v4867, 6
        %v7926 = vpop.permute.xlu0 %7925
        %7927 = vrot.lane.b32.xlu0 %v4965, 6
        %v7928 = vpop.permute.xlu0 %7927
        %7929 = vrot.lane.b32.xlu0 %v5063, 6
        %v7930 = vpop.permute.xlu0 %7929
        %7931 = vrot.lane.b32.xlu0 %v5161, 6
        %v7932 = vpop.permute.xlu0 %7931
        %7933 = vrot.lane.b32.xlu0 %v5259, 6
        %v7934 = vpop.permute.xlu0 %7933
        %7935 = vrot.lane.b32.xlu0 %v5357, 6
        %v7936 = vpop.permute.xlu0 %7935
        %7937 = vrot.lane.b32.xlu0 %v5455, 6
        %v7938 = vpop.permute.xlu0 %7937
        %7939 = vrot.lane.b32.xlu0 %v5553, 6
        %v7940 = vpop.permute.xlu0 %7939
        %7941 = vrot.lane.b32.xlu0 %v5651, 6
        %v7942 = vpop.permute.xlu0 %7941
        %7943 = vrot.lane.b32.xlu0 %v5749, 6
        %v7944 = vpop.permute.xlu0 %7943
        %7945 = vrot.lane.b32.xlu0 %v5847, 6
        %v7946 = vpop.permute.xlu0 %7945
        %7947 = vrot.lane.b32.xlu0 %v5945, 6
        %v7948 = vpop.permute.xlu0 %7947
        %7949 = vrot.lane.b32.xlu0 %v6043, 6
        %v7950 = vpop.permute.xlu0 %7949
        %7951 = vrot.lane.b32.xlu0 %v6141, 6
        %v7952 = vpop.permute.xlu0 %7951
        %7953 = vrot.lane.b32.xlu0 %v6239, 6
        %v7954 = vpop.permute.xlu0 %7953
        %7955 = vrot.lane.b32.xlu0 %v6337, 6
        %v7956 = vpop.permute.xlu0 %7955
        %7957 = vrot.lane.b32.xlu0 %v6435, 6
        %v7958 = vpop.permute.xlu0 %7957
        %7959 = vrot.lane.b32.xlu0 %v6533, 6
        %v7960 = vpop.permute.xlu0 %7959
        %7961 = vrot.lane.b32.xlu0 %v6631, 6
        %v7962 = vpop.permute.xlu0 %7961
        %7963 = vrot.lane.b32.xlu0 %v6729, 6
        %v7964 = vpop.permute.xlu0 %7963
        %7965 = vrot.lane.b32.xlu0 %v6827, 6
        %v7966 = vpop.permute.xlu0 %7965
        %7967 = vrot.lane.b32.xlu0 %v6925, 6
        %v7968 = vpop.permute.xlu0 %7967
        %7969 = vrot.lane.b32.xlu0 %v7023, 6
        %v7970 = vpop.permute.xlu0 %7969
        %7971 = vrot.lane.b32.xlu0 %v7121, 6
        %v7972 = vpop.permute.xlu0 %7971
        %7973 = vrot.lane.b32.xlu0 %v7219, 6
        %v7974 = vpop.permute.xlu0 %7973
        %8103 = vrot.lane.b32.xlu0 %v1036, 8
        %v8104 = vpop.permute.xlu0 %8103
        %8105 = vrot.lane.b32.xlu0 %v1134, 8
        %v8106 = vpop.permute.xlu0 %8105
        %8107 = vrot.lane.b32.xlu0 %v1232, 8
        %v8108 = vpop.permute.xlu0 %8107
        %8109 = vrot.lane.b32.xlu0 %v1330, 8
        %v8110 = vpop.permute.xlu0 %8109
        %8111 = vrot.lane.b32.xlu0 %v1428, 8
        %v8112 = vpop.permute.xlu0 %8111
        %8113 = vrot.lane.b32.xlu0 %v1526, 8
        %v8114 = vpop.permute.xlu0 %8113
        %8115 = vrot.lane.b32.xlu0 %v1624, 8
        %v8116 = vpop.permute.xlu0 %8115
        %8117 = vrot.lane.b32.xlu0 %v1722, 8
        %v8118 = vpop.permute.xlu0 %8117
        %8119 = vrot.lane.b32.xlu0 %v1820, 8
        %v8120 = vpop.permute.xlu0 %8119
        %8121 = vrot.lane.b32.xlu0 %v1918, 8
        %v8122 = vpop.permute.xlu0 %8121
        %8123 = vrot.lane.b32.xlu0 %v2016, 8
        %v8124 = vpop.permute.xlu0 %8123
        %8125 = vrot.lane.b32.xlu0 %v2114, 8
        %v8126 = vpop.permute.xlu0 %8125
        %8127 = vrot.lane.b32.xlu0 %v2212, 8
        %v8128 = vpop.permute.xlu0 %8127
        %8129 = vrot.lane.b32.xlu0 %v2310, 8
        %v8130 = vpop.permute.xlu0 %8129
        %8131 = vrot.lane.b32.xlu0 %v2408, 8
        %v8132 = vpop.permute.xlu0 %8131
        %8133 = vrot.lane.b32.xlu0 %v2506, 8
        %v8134 = vpop.permute.xlu0 %8133
        %8135 = vrot.lane.b32.xlu0 %v2604, 8
        %v8136 = vpop.permute.xlu0 %8135
        %8137 = vrot.lane.b32.xlu0 %v2702, 8
        %v8138 = vpop.permute.xlu0 %8137
        %8139 = vrot.lane.b32.xlu0 %v2800, 8
        %v8140 = vpop.permute.xlu0 %8139
        %8141 = vrot.lane.b32.xlu0 %v2898, 8
        %v8142 = vpop.permute.xlu0 %8141
        %8143 = vrot.lane.b32.xlu0 %v2996, 8
        %v8144 = vpop.permute.xlu0 %8143
        %8145 = vrot.lane.b32.xlu0 %v3094, 8
        %v8146 = vpop.permute.xlu0 %8145
        %8147 = vrot.lane.b32.xlu0 %v3192, 8
        %v8148 = vpop.permute.xlu0 %8147
        %8149 = vrot.lane.b32.xlu0 %v3290, 8
        %v8150 = vpop.permute.xlu0 %8149
        %8151 = vrot.lane.b32.xlu0 %v3388, 8
        %v8152 = vpop.permute.xlu0 %8151
        %8153 = vrot.lane.b32.xlu0 %v3486, 8
        %v8154 = vpop.permute.xlu0 %8153
        %8155 = vrot.lane.b32.xlu0 %v3584, 8
        %v8156 = vpop.permute.xlu0 %8155
        %8157 = vrot.lane.b32.xlu0 %v3682, 8
        %v8158 = vpop.permute.xlu0 %8157
        %8159 = vrot.lane.b32.xlu0 %v3780, 8
        %v8160 = vpop.permute.xlu0 %8159
        %8161 = vrot.lane.b32.xlu0 %v3878, 8
        %v8162 = vpop.permute.xlu0 %8161
        %8163 = vrot.lane.b32.xlu0 %v3976, 8
        %v8164 = vpop.permute.xlu0 %8163
        %8165 = vrot.lane.b32.xlu0 %v4074, 8
        %v8166 = vpop.permute.xlu0 %8165
        %8167 = vrot.lane.b32.xlu0 %v4172, 8
        %v8168 = vpop.permute.xlu0 %8167
        %8169 = vrot.lane.b32.xlu0 %v4270, 8
        %v8170 = vpop.permute.xlu0 %8169
        %8171 = vrot.lane.b32.xlu0 %v4368, 8
        %v8172 = vpop.permute.xlu0 %8171
        %8173 = vrot.lane.b32.xlu0 %v4466, 8
        %v8174 = vpop.permute.xlu0 %8173
        %8175 = vrot.lane.b32.xlu0 %v4564, 8
        %v8176 = vpop.permute.xlu0 %8175
        %8177 = vrot.lane.b32.xlu0 %v4662, 8
        %v8178 = vpop.permute.xlu0 %8177
        %8179 = vrot.lane.b32.xlu0 %v4760, 8
        %v8180 = vpop.permute.xlu0 %8179
        %8181 = vrot.lane.b32.xlu0 %v4858, 8
        %v8182 = vpop.permute.xlu0 %8181
        %8183 = vrot.lane.b32.xlu0 %v4956, 8
        %v8184 = vpop.permute.xlu0 %8183
        %8185 = vrot.lane.b32.xlu0 %v5054, 8
        %v8186 = vpop.permute.xlu0 %8185
        %8187 = vrot.lane.b32.xlu0 %v5152, 8
        %v8188 = vpop.permute.xlu0 %8187
        %8189 = vrot.lane.b32.xlu0 %v5250, 8
        %v8190 = vpop.permute.xlu0 %8189
        %8191 = vrot.lane.b32.xlu0 %v5348, 8
        %v8192 = vpop.permute.xlu0 %8191
        %8193 = vrot.lane.b32.xlu0 %v5446, 8
        %v8194 = vpop.permute.xlu0 %8193
        %8195 = vrot.lane.b32.xlu0 %v5544, 8
        %v8196 = vpop.permute.xlu0 %8195
        %8197 = vrot.lane.b32.xlu0 %v5642, 8
        %v8198 = vpop.permute.xlu0 %8197
        %8199 = vrot.lane.b32.xlu0 %v5740, 8
        %v8200 = vpop.permute.xlu0 %8199
        %8201 = vrot.lane.b32.xlu0 %v5838, 8
        %v8202 = vpop.permute.xlu0 %8201
        %8203 = vrot.lane.b32.xlu0 %v5936, 8
        %v8204 = vpop.permute.xlu0 %8203
        %8205 = vrot.lane.b32.xlu0 %v6034, 8
        %v8206 = vpop.permute.xlu0 %8205
        %8207 = vrot.lane.b32.xlu0 %v6132, 8
        %v8208 = vpop.permute.xlu0 %8207
        %8209 = vrot.lane.b32.xlu0 %v6230, 8
        %v8210 = vpop.permute.xlu0 %8209
        %8211 = vrot.lane.b32.xlu0 %v6328, 8
        %v8212 = vpop.permute.xlu0 %8211
        %8213 = vrot.lane.b32.xlu0 %v6426, 8
        %v8214 = vpop.permute.xlu0 %8213
        %8215 = vrot.lane.b32.xlu0 %v6524, 8
        %v8216 = vpop.permute.xlu0 %8215
        %8217 = vrot.lane.b32.xlu0 %v6622, 8
        %v8218 = vpop.permute.xlu0 %8217
        %8219 = vrot.lane.b32.xlu0 %v6720, 8
        %v8220 = vpop.permute.xlu0 %8219
        %8221 = vrot.lane.b32.xlu0 %v6818, 8
        %v8222 = vpop.permute.xlu0 %8221
        %8223 = vrot.lane.b32.xlu0 %v6916, 8
        %v8224 = vpop.permute.xlu0 %8223
        %8225 = vrot.lane.b32.xlu0 %v7014, 8
        %v8226 = vpop.permute.xlu0 %8225
        %8227 = vrot.lane.b32.xlu0 %v7112, 8
        %v8228 = vpop.permute.xlu0 %8227
        %8229 = vrot.lane.b32.xlu0 %v7210, 8
        %v8230 = vpop.permute.xlu0 %8229
        %8359 = vrot.lane.b32.xlu0 %v1046, 10
        %v8360 = vpop.permute.xlu0 %8359
        %8361 = vrot.lane.b32.xlu0 %v1144, 10
        %v8362 = vpop.permute.xlu0 %8361
        %8363 = vrot.lane.b32.xlu0 %v1242, 10
        %v8364 = vpop.permute.xlu0 %8363
        %8365 = vrot.lane.b32.xlu0 %v1340, 10
        %v8366 = vpop.permute.xlu0 %8365
        %8367 = vrot.lane.b32.xlu0 %v1438, 10
        %v8368 = vpop.permute.xlu0 %8367
        %8369 = vrot.lane.b32.xlu0 %v1536, 10
        %v8370 = vpop.permute.xlu0 %8369
        %8371 = vrot.lane.b32.xlu0 %v1634, 10
        %v8372 = vpop.permute.xlu0 %8371
        %8373 = vrot.lane.b32.xlu0 %v1732, 10
        %v8374 = vpop.permute.xlu0 %8373
        %8375 = vrot.lane.b32.xlu0 %v1830, 10
        %v8376 = vpop.permute.xlu0 %8375
        %8377 = vrot.lane.b32.xlu0 %v1928, 10
        %v8378 = vpop.permute.xlu0 %8377
        %8379 = vrot.lane.b32.xlu0 %v2026, 10
        %v8380 = vpop.permute.xlu0 %8379
        %8381 = vrot.lane.b32.xlu0 %v2124, 10
        %v8382 = vpop.permute.xlu0 %8381
        %8383 = vrot.lane.b32.xlu0 %v2222, 10
        %v8384 = vpop.permute.xlu0 %8383
        %8385 = vrot.lane.b32.xlu0 %v2320, 10
        %v8386 = vpop.permute.xlu0 %8385
        %8387 = vrot.lane.b32.xlu0 %v2418, 10
        %v8388 = vpop.permute.xlu0 %8387
        %8389 = vrot.lane.b32.xlu0 %v2516, 10
        %v8390 = vpop.permute.xlu0 %8389
        %8391 = vrot.lane.b32.xlu0 %v2614, 10
        %v8392 = vpop.permute.xlu0 %8391
        %8393 = vrot.lane.b32.xlu0 %v2712, 10
        %v8394 = vpop.permute.xlu0 %8393
        %8395 = vrot.lane.b32.xlu0 %v2810, 10
        %v8396 = vpop.permute.xlu0 %8395
        %8397 = vrot.lane.b32.xlu0 %v2908, 10
        %v8398 = vpop.permute.xlu0 %8397
        %8399 = vrot.lane.b32.xlu0 %v3006, 10
        %v8400 = vpop.permute.xlu0 %8399
        %8401 = vrot.lane.b32.xlu0 %v3104, 10
        %v8402 = vpop.permute.xlu0 %8401
        %8403 = vrot.lane.b32.xlu0 %v3202, 10
        %v8404 = vpop.permute.xlu0 %8403
        %8405 = vrot.lane.b32.xlu0 %v3300, 10
        %v8406 = vpop.permute.xlu0 %8405
        %8407 = vrot.lane.b32.xlu0 %v3398, 10
        %v8408 = vpop.permute.xlu0 %8407
        %8409 = vrot.lane.b32.xlu0 %v3496, 10
        %v8410 = vpop.permute.xlu0 %8409
        %8411 = vrot.lane.b32.xlu0 %v3594, 10
        %v8412 = vpop.permute.xlu0 %8411
        %8413 = vrot.lane.b32.xlu0 %v3692, 10
        %v8414 = vpop.permute.xlu0 %8413
        %8415 = vrot.lane.b32.xlu0 %v3790, 10
        %v8416 = vpop.permute.xlu0 %8415
        %8417 = vrot.lane.b32.xlu0 %v3888, 10
        %v8418 = vpop.permute.xlu0 %8417
        %8419 = vrot.lane.b32.xlu0 %v3986, 10
        %v8420 = vpop.permute.xlu0 %8419
        %8421 = vrot.lane.b32.xlu0 %v4084, 10
        %v8422 = vpop.permute.xlu0 %8421
        %8423 = vrot.lane.b32.xlu0 %v4182, 10
        %v8424 = vpop.permute.xlu0 %8423
        %8425 = vrot.lane.b32.xlu0 %v4280, 10
        %v8426 = vpop.permute.xlu0 %8425
        %8427 = vrot.lane.b32.xlu0 %v4378, 10
        %v8428 = vpop.permute.xlu0 %8427
        %8429 = vrot.lane.b32.xlu0 %v4476, 10
        %v8430 = vpop.permute.xlu0 %8429
        %8431 = vrot.lane.b32.xlu0 %v4574, 10
        %v8432 = vpop.permute.xlu0 %8431
        %8433 = vrot.lane.b32.xlu0 %v4672, 10
        %v8434 = vpop.permute.xlu0 %8433
        %8435 = vrot.lane.b32.xlu0 %v4770, 10
        %v8436 = vpop.permute.xlu0 %8435
        %8437 = vrot.lane.b32.xlu0 %v4868, 10
        %v8438 = vpop.permute.xlu0 %8437
        %8439 = vrot.lane.b32.xlu0 %v4966, 10
        %v8440 = vpop.permute.xlu0 %8439
        %8441 = vrot.lane.b32.xlu0 %v5064, 10
        %v8442 = vpop.permute.xlu0 %8441
        %8443 = vrot.lane.b32.xlu0 %v5162, 10
        %v8444 = vpop.permute.xlu0 %8443
        %8445 = vrot.lane.b32.xlu0 %v5260, 10
        %v8446 = vpop.permute.xlu0 %8445
        %8447 = vrot.lane.b32.xlu0 %v5358, 10
        %v8448 = vpop.permute.xlu0 %8447
        %8449 = vrot.lane.b32.xlu0 %v5456, 10
        %v8450 = vpop.permute.xlu0 %8449
        %8451 = vrot.lane.b32.xlu0 %v5554, 10
        %v8452 = vpop.permute.xlu0 %8451
        %8453 = vrot.lane.b32.xlu0 %v5652, 10
        %v8454 = vpop.permute.xlu0 %8453
        %8455 = vrot.lane.b32.xlu0 %v5750, 10
        %v8456 = vpop.permute.xlu0 %8455
        %8457 = vrot.lane.b32.xlu0 %v5848, 10
        %v8458 = vpop.permute.xlu0 %8457
        %8459 = vrot.lane.b32.xlu0 %v5946, 10
        %v8460 = vpop.permute.xlu0 %8459
        %8461 = vrot.lane.b32.xlu0 %v6044, 10
        %v8462 = vpop.permute.xlu0 %8461
        %8463 = vrot.lane.b32.xlu0 %v6142, 10
        %v8464 = vpop.permute.xlu0 %8463
        %8465 = vrot.lane.b32.xlu0 %v6240, 10
        %v8466 = vpop.permute.xlu0 %8465
        %8467 = vrot.lane.b32.xlu0 %v6338, 10
        %v8468 = vpop.permute.xlu0 %8467
        %8469 = vrot.lane.b32.xlu0 %v6436, 10
        %v8470 = vpop.permute.xlu0 %8469
        %8471 = vrot.lane.b32.xlu0 %v6534, 10
        %v8472 = vpop.permute.xlu0 %8471
        %8473 = vrot.lane.b32.xlu0 %v6632, 10
        %v8474 = vpop.permute.xlu0 %8473
        %8475 = vrot.lane.b32.xlu0 %v6730, 10
        %v8476 = vpop.permute.xlu0 %8475
        %8477 = vrot.lane.b32.xlu0 %v6828, 10
        %v8478 = vpop.permute.xlu0 %8477
        %8479 = vrot.lane.b32.xlu0 %v6926, 10
        %v8480 = vpop.permute.xlu0 %8479
        %8481 = vrot.lane.b32.xlu0 %v7024, 10
        %v8482 = vpop.permute.xlu0 %8481
        %8483 = vrot.lane.b32.xlu0 %v7122, 10
        %v8484 = vpop.permute.xlu0 %8483
        %8485 = vrot.lane.b32.xlu0 %v7220, 10
        %v8486 = vpop.permute.xlu0 %8485
        %8615 = vrot.lane.b32.xlu0 %v1043, 12
        %v8616 = vpop.permute.xlu0 %8615
        %8617 = vrot.lane.b32.xlu0 %v1141, 12
        %v8618 = vpop.permute.xlu0 %8617
        %8619 = vrot.lane.b32.xlu0 %v1239, 12
        %v8620 = vpop.permute.xlu0 %8619
        %8621 = vrot.lane.b32.xlu0 %v1337, 12
        %v8622 = vpop.permute.xlu0 %8621
        %8623 = vrot.lane.b32.xlu0 %v1435, 12
        %v8624 = vpop.permute.xlu0 %8623
        %8625 = vrot.lane.b32.xlu0 %v1533, 12
        %v8626 = vpop.permute.xlu0 %8625
        %8627 = vrot.lane.b32.xlu0 %v1631, 12
        %v8628 = vpop.permute.xlu0 %8627
        %8629 = vrot.lane.b32.xlu0 %v1729, 12
        %v8630 = vpop.permute.xlu0 %8629
        %8631 = vrot.lane.b32.xlu0 %v1827, 12
        %v8632 = vpop.permute.xlu0 %8631
        %8633 = vrot.lane.b32.xlu0 %v1925, 12
        %v8634 = vpop.permute.xlu0 %8633
        %8635 = vrot.lane.b32.xlu0 %v2023, 12
        %v8636 = vpop.permute.xlu0 %8635
        %8637 = vrot.lane.b32.xlu0 %v2121, 12
        %v8638 = vpop.permute.xlu0 %8637
        %8639 = vrot.lane.b32.xlu0 %v2219, 12
        %v8640 = vpop.permute.xlu0 %8639
        %8641 = vrot.lane.b32.xlu0 %v2317, 12
        %v8642 = vpop.permute.xlu0 %8641
        %8643 = vrot.lane.b32.xlu0 %v2415, 12
        %v8644 = vpop.permute.xlu0 %8643
        %8645 = vrot.lane.b32.xlu0 %v2513, 12
        %v8646 = vpop.permute.xlu0 %8645
        %8647 = vrot.lane.b32.xlu0 %v2611, 12
        %v8648 = vpop.permute.xlu0 %8647
        %8649 = vrot.lane.b32.xlu0 %v2709, 12
        %v8650 = vpop.permute.xlu0 %8649
        %8651 = vrot.lane.b32.xlu0 %v2807, 12
        %v8652 = vpop.permute.xlu0 %8651
        %8653 = vrot.lane.b32.xlu0 %v2905, 12
        %v8654 = vpop.permute.xlu0 %8653
        %8655 = vrot.lane.b32.xlu0 %v3003, 12
        %v8656 = vpop.permute.xlu0 %8655
        %8657 = vrot.lane.b32.xlu0 %v3101, 12
        %v8658 = vpop.permute.xlu0 %8657
        %8659 = vrot.lane.b32.xlu0 %v3199, 12
        %v8660 = vpop.permute.xlu0 %8659
        %8661 = vrot.lane.b32.xlu0 %v3297, 12
        %v8662 = vpop.permute.xlu0 %8661
        %8663 = vrot.lane.b32.xlu0 %v3395, 12
        %v8664 = vpop.permute.xlu0 %8663
        %8665 = vrot.lane.b32.xlu0 %v3493, 12
        %v8666 = vpop.permute.xlu0 %8665
        %8667 = vrot.lane.b32.xlu0 %v3591, 12
        %v8668 = vpop.permute.xlu0 %8667
        %8669 = vrot.lane.b32.xlu0 %v3689, 12
        %v8670 = vpop.permute.xlu0 %8669
        %8671 = vrot.lane.b32.xlu0 %v3787, 12
        %v8672 = vpop.permute.xlu0 %8671
        %8673 = vrot.lane.b32.xlu0 %v3885, 12
        %v8674 = vpop.permute.xlu0 %8673
        %8675 = vrot.lane.b32.xlu0 %v3983, 12
        %v8676 = vpop.permute.xlu0 %8675
        %8677 = vrot.lane.b32.xlu0 %v4081, 12
        %v8678 = vpop.permute.xlu0 %8677
        %8679 = vrot.lane.b32.xlu0 %v4179, 12
        %v8680 = vpop.permute.xlu0 %8679
        %8681 = vrot.lane.b32.xlu0 %v4277, 12
        %v8682 = vpop.permute.xlu0 %8681
        %8683 = vrot.lane.b32.xlu0 %v4375, 12
        %v8684 = vpop.permute.xlu0 %8683
        %8685 = vrot.lane.b32.xlu0 %v4473, 12
        %v8686 = vpop.permute.xlu0 %8685
        %8687 = vrot.lane.b32.xlu0 %v4571, 12
        %v8688 = vpop.permute.xlu0 %8687
        %8689 = vrot.lane.b32.xlu0 %v4669, 12
        %v8690 = vpop.permute.xlu0 %8689
        %8691 = vrot.lane.b32.xlu0 %v4767, 12
        %v8692 = vpop.permute.xlu0 %8691
        %8693 = vrot.lane.b32.xlu0 %v4865, 12
        %v8694 = vpop.permute.xlu0 %8693
        %8695 = vrot.lane.b32.xlu0 %v4963, 12
        %v8696 = vpop.permute.xlu0 %8695
        %8697 = vrot.lane.b32.xlu0 %v5061, 12
        %v8698 = vpop.permute.xlu0 %8697
        %8699 = vrot.lane.b32.xlu0 %v5159, 12
        %v8700 = vpop.permute.xlu0 %8699
        %8701 = vrot.lane.b32.xlu0 %v5257, 12
        %v8702 = vpop.permute.xlu0 %8701
        %8703 = vrot.lane.b32.xlu0 %v5355, 12
        %v8704 = vpop.permute.xlu0 %8703
        %8705 = vrot.lane.b32.xlu0 %v5453, 12
        %v8706 = vpop.permute.xlu0 %8705
        %8707 = vrot.lane.b32.xlu0 %v5551, 12
        %v8708 = vpop.permute.xlu0 %8707
        %8709 = vrot.lane.b32.xlu0 %v5649, 12
        %v8710 = vpop.permute.xlu0 %8709
        %8711 = vrot.lane.b32.xlu0 %v5747, 12
        %v8712 = vpop.permute.xlu0 %8711
        %8713 = vrot.lane.b32.xlu0 %v5845, 12
        %v8714 = vpop.permute.xlu0 %8713
        %8715 = vrot.lane.b32.xlu0 %v5943, 12
        %v8716 = vpop.permute.xlu0 %8715
        %8717 = vrot.lane.b32.xlu0 %v6041, 12
        %v8718 = vpop.permute.xlu0 %8717
        %8719 = vrot.lane.b32.xlu0 %v6139, 12
        %v8720 = vpop.permute.xlu0 %8719
        %8721 = vrot.lane.b32.xlu0 %v6237, 12
        %v8722 = vpop.permute.xlu0 %8721
        %8723 = vrot.lane.b32.xlu0 %v6335, 12
        %v8724 = vpop.permute.xlu0 %8723
        %8725 = vrot.lane.b32.xlu0 %v6433, 12
        %v8726 = vpop.permute.xlu0 %8725
        %8727 = vrot.lane.b32.xlu0 %v6531, 12
        %v8728 = vpop.permute.xlu0 %8727
        %8729 = vrot.lane.b32.xlu0 %v6629, 12
        %v8730 = vpop.permute.xlu0 %8729
        %8731 = vrot.lane.b32.xlu0 %v6727, 12
        %v8732 = vpop.permute.xlu0 %8731
        %8733 = vrot.lane.b32.xlu0 %v6825, 12
        %v8734 = vpop.permute.xlu0 %8733
        %8735 = vrot.lane.b32.xlu0 %v6923, 12
        %v8736 = vpop.permute.xlu0 %8735
        %8737 = vrot.lane.b32.xlu0 %v7021, 12
        %v8738 = vpop.permute.xlu0 %8737
        %8739 = vrot.lane.b32.xlu0 %v7119, 12
        %v8740 = vpop.permute.xlu0 %8739
        %8741 = vrot.lane.b32.xlu0 %v7217, 12
        %v8742 = vpop.permute.xlu0 %8741
        %8871 = vrot.lane.b32.xlu0 %v1047, 14
        %v8872 = vpop.permute.xlu0 %8871
        %8873 = vrot.lane.b32.xlu0 %v1145, 14
        %v8874 = vpop.permute.xlu0 %8873
        %8875 = vrot.lane.b32.xlu0 %v1243, 14
        %v8876 = vpop.permute.xlu0 %8875
        %8877 = vrot.lane.b32.xlu0 %v1341, 14
        %v8878 = vpop.permute.xlu0 %8877
        %8879 = vrot.lane.b32.xlu0 %v1439, 14
        %v8880 = vpop.permute.xlu0 %8879
        %8881 = vrot.lane.b32.xlu0 %v1537, 14
        %v8882 = vpop.permute.xlu0 %8881
        %8883 = vrot.lane.b32.xlu0 %v1635, 14
        %v8884 = vpop.permute.xlu0 %8883
        %8885 = vrot.lane.b32.xlu0 %v1733, 14
        %v8886 = vpop.permute.xlu0 %8885
        %8887 = vrot.lane.b32.xlu0 %v1831, 14
        %v8888 = vpop.permute.xlu0 %8887
        %8889 = vrot.lane.b32.xlu0 %v1929, 14
        %v8890 = vpop.permute.xlu0 %8889
        %8891 = vrot.lane.b32.xlu0 %v2027, 14
        %v8892 = vpop.permute.xlu0 %8891
        %8893 = vrot.lane.b32.xlu0 %v2125, 14
        %v8894 = vpop.permute.xlu0 %8893
        %8895 = vrot.lane.b32.xlu0 %v2223, 14
        %v8896 = vpop.permute.xlu0 %8895
        %8897 = vrot.lane.b32.xlu0 %v2321, 14
        %v8898 = vpop.permute.xlu0 %8897
        %8899 = vrot.lane.b32.xlu0 %v2419, 14
        %v8900 = vpop.permute.xlu0 %8899
        %8901 = vrot.lane.b32.xlu0 %v2517, 14
        %v8902 = vpop.permute.xlu0 %8901
        %8903 = vrot.lane.b32.xlu0 %v2615, 14
        %v8904 = vpop.permute.xlu0 %8903
        %8905 = vrot.lane.b32.xlu0 %v2713, 14
        %v8906 = vpop.permute.xlu0 %8905
        %8907 = vrot.lane.b32.xlu0 %v2811, 14
        %v8908 = vpop.permute.xlu0 %8907
        %8909 = vrot.lane.b32.xlu0 %v2909, 14
        %v8910 = vpop.permute.xlu0 %8909
        %8911 = vrot.lane.b32.xlu0 %v3007, 14
        %v8912 = vpop.permute.xlu0 %8911
        %8913 = vrot.lane.b32.xlu0 %v3105, 14
        %v8914 = vpop.permute.xlu0 %8913
        %8915 = vrot.lane.b32.xlu0 %v3203, 14
        %v8916 = vpop.permute.xlu0 %8915
        %8917 = vrot.lane.b32.xlu0 %v3301, 14
        %v8918 = vpop.permute.xlu0 %8917
        %8919 = vrot.lane.b32.xlu0 %v3399, 14
        %v8920 = vpop.permute.xlu0 %8919
        %8921 = vrot.lane.b32.xlu0 %v3497, 14
        %v8922 = vpop.permute.xlu0 %8921
        %8923 = vrot.lane.b32.xlu0 %v3595, 14
        %v8924 = vpop.permute.xlu0 %8923
        %8925 = vrot.lane.b32.xlu0 %v3693, 14
        %v8926 = vpop.permute.xlu0 %8925
        %8927 = vrot.lane.b32.xlu0 %v3791, 14
        %v8928 = vpop.permute.xlu0 %8927
        %8929 = vrot.lane.b32.xlu0 %v3889, 14
        %v8930 = vpop.permute.xlu0 %8929
        %8931 = vrot.lane.b32.xlu0 %v3987, 14
        %v8932 = vpop.permute.xlu0 %8931
        %8933 = vrot.lane.b32.xlu0 %v4085, 14
        %v8934 = vpop.permute.xlu0 %8933
        %8935 = vrot.lane.b32.xlu0 %v4183, 14
        %v8936 = vpop.permute.xlu0 %8935
        %8937 = vrot.lane.b32.xlu0 %v4281, 14
        %v8938 = vpop.permute.xlu0 %8937
        %8939 = vrot.lane.b32.xlu0 %v4379, 14
        %v8940 = vpop.permute.xlu0 %8939
        %8941 = vrot.lane.b32.xlu0 %v4477, 14
        %v8942 = vpop.permute.xlu0 %8941
        %8943 = vrot.lane.b32.xlu0 %v4575, 14
        %v8944 = vpop.permute.xlu0 %8943
        %8945 = vrot.lane.b32.xlu0 %v4673, 14
        %v8946 = vpop.permute.xlu0 %8945
        %8947 = vrot.lane.b32.xlu0 %v4771, 14
        %v8948 = vpop.permute.xlu0 %8947
        %8949 = vrot.lane.b32.xlu0 %v4869, 14
        %v8950 = vpop.permute.xlu0 %8949
        %8951 = vrot.lane.b32.xlu0 %v4967, 14
        %v8952 = vpop.permute.xlu0 %8951
        %8953 = vrot.lane.b32.xlu0 %v5065, 14
        %v8954 = vpop.permute.xlu0 %8953
        %8955 = vrot.lane.b32.xlu0 %v5163, 14
        %v8956 = vpop.permute.xlu0 %8955
        %8957 = vrot.lane.b32.xlu0 %v5261, 14
        %v8958 = vpop.permute.xlu0 %8957
        %8959 = vrot.lane.b32.xlu0 %v5359, 14
        %v8960 = vpop.permute.xlu0 %8959
        %8961 = vrot.lane.b32.xlu0 %v5457, 14
        %v8962 = vpop.permute.xlu0 %8961
        %8963 = vrot.lane.b32.xlu0 %v5555, 14
        %v8964 = vpop.permute.xlu0 %8963
        %8965 = vrot.lane.b32.xlu0 %v5653, 14
        %v8966 = vpop.permute.xlu0 %8965
        %8967 = vrot.lane.b32.xlu0 %v5751, 14
        %v8968 = vpop.permute.xlu0 %8967
        %8969 = vrot.lane.b32.xlu0 %v5849, 14
        %v8970 = vpop.permute.xlu0 %8969
        %8971 = vrot.lane.b32.xlu0 %v5947, 14
        %v8972 = vpop.permute.xlu0 %8971
        %8973 = vrot.lane.b32.xlu0 %v6045, 14
        %v8974 = vpop.permute.xlu0 %8973
        %8975 = vrot.lane.b32.xlu0 %v6143, 14
        %v8976 = vpop.permute.xlu0 %8975
        %8977 = vrot.lane.b32.xlu0 %v6241, 14
        %v8978 = vpop.permute.xlu0 %8977
        %8979 = vrot.lane.b32.xlu0 %v6339, 14
        %v8980 = vpop.permute.xlu0 %8979
        %8981 = vrot.lane.b32.xlu0 %v6437, 14
        %v8982 = vpop.permute.xlu0 %8981
        %8983 = vrot.lane.b32.xlu0 %v6535, 14
        %v8984 = vpop.permute.xlu0 %8983
        %8985 = vrot.lane.b32.xlu0 %v6633, 14
        %v8986 = vpop.permute.xlu0 %8985
        %8987 = vrot.lane.b32.xlu0 %v6731, 14
        %v8988 = vpop.permute.xlu0 %8987
        %8989 = vrot.lane.b32.xlu0 %v6829, 14
        %v8990 = vpop.permute.xlu0 %8989
        %8991 = vrot.lane.b32.xlu0 %v6927, 14
        %v8992 = vpop.permute.xlu0 %8991
        %8993 = vrot.lane.b32.xlu0 %v7025, 14
        %v8994 = vpop.permute.xlu0 %8993
        %8995 = vrot.lane.b32.xlu0 %v7123, 14
        %v8996 = vpop.permute.xlu0 %8995
        %8997 = vrot.lane.b32.xlu0 %v7221, 14
        %v8998 = vpop.permute.xlu0 %8997
        %9127 = vrot.lane.b32.xlu0 %v1070, 16
        %v9128 = vpop.permute.xlu0 %9127
        %9129 = vrot.lane.b32.xlu0 %v1168, 16
        %v9130 = vpop.permute.xlu0 %9129
        %9131 = vrot.lane.b32.xlu0 %v1266, 16
        %v9132 = vpop.permute.xlu0 %9131
        %9133 = vrot.lane.b32.xlu0 %v1364, 16
        %v9134 = vpop.permute.xlu0 %9133
        %9135 = vrot.lane.b32.xlu0 %v1462, 16
        %v9136 = vpop.permute.xlu0 %9135
        %9137 = vrot.lane.b32.xlu0 %v1560, 16
        %v9138 = vpop.permute.xlu0 %9137
        %9139 = vrot.lane.b32.xlu0 %v1658, 16
        %v9140 = vpop.permute.xlu0 %9139
        %9141 = vrot.lane.b32.xlu0 %v1756, 16
        %v9142 = vpop.permute.xlu0 %9141
        %9143 = vrot.lane.b32.xlu0 %v1854, 16
        %v9144 = vpop.permute.xlu0 %9143
        %9145 = vrot.lane.b32.xlu0 %v1952, 16
        %v9146 = vpop.permute.xlu0 %9145
        %9147 = vrot.lane.b32.xlu0 %v2050, 16
        %v9148 = vpop.permute.xlu0 %9147
        %9149 = vrot.lane.b32.xlu0 %v2148, 16
        %v9150 = vpop.permute.xlu0 %9149
        %9151 = vrot.lane.b32.xlu0 %v2246, 16
        %v9152 = vpop.permute.xlu0 %9151
        %9153 = vrot.lane.b32.xlu0 %v2344, 16
        %v9154 = vpop.permute.xlu0 %9153
        %9155 = vrot.lane.b32.xlu0 %v2442, 16
        %v9156 = vpop.permute.xlu0 %9155
        %9157 = vrot.lane.b32.xlu0 %v2540, 16
        %v9158 = vpop.permute.xlu0 %9157
        %9159 = vrot.lane.b32.xlu0 %v2638, 16
        %v9160 = vpop.permute.xlu0 %9159
        %9161 = vrot.lane.b32.xlu0 %v2736, 16
        %v9162 = vpop.permute.xlu0 %9161
        %9163 = vrot.lane.b32.xlu0 %v2834, 16
        %v9164 = vpop.permute.xlu0 %9163
        %9165 = vrot.lane.b32.xlu0 %v2932, 16
        %v9166 = vpop.permute.xlu0 %9165
        %9167 = vrot.lane.b32.xlu0 %v3030, 16
        %v9168 = vpop.permute.xlu0 %9167
        %9169 = vrot.lane.b32.xlu0 %v3128, 16
        %v9170 = vpop.permute.xlu0 %9169
        %9171 = vrot.lane.b32.xlu0 %v3226, 16
        %v9172 = vpop.permute.xlu0 %9171
        %9173 = vrot.lane.b32.xlu0 %v3324, 16
        %v9174 = vpop.permute.xlu0 %9173
        %9175 = vrot.lane.b32.xlu0 %v3422, 16
        %v9176 = vpop.permute.xlu0 %9175
        %9177 = vrot.lane.b32.xlu0 %v3520, 16
        %v9178 = vpop.permute.xlu0 %9177
        %9179 = vrot.lane.b32.xlu0 %v3618, 16
        %v9180 = vpop.permute.xlu0 %9179
        %9181 = vrot.lane.b32.xlu0 %v3716, 16
        %v9182 = vpop.permute.xlu0 %9181
        %9183 = vrot.lane.b32.xlu0 %v3814, 16
        %v9184 = vpop.permute.xlu0 %9183
        %9185 = vrot.lane.b32.xlu0 %v3912, 16
        %v9186 = vpop.permute.xlu0 %9185
        %9187 = vrot.lane.b32.xlu0 %v4010, 16
        %v9188 = vpop.permute.xlu0 %9187
        %9189 = vrot.lane.b32.xlu0 %v4108, 16
        %v9190 = vpop.permute.xlu0 %9189
        %9191 = vrot.lane.b32.xlu0 %v4206, 16
        %v9192 = vpop.permute.xlu0 %9191
        %9193 = vrot.lane.b32.xlu0 %v4304, 16
        %v9194 = vpop.permute.xlu0 %9193
        %9195 = vrot.lane.b32.xlu0 %v4402, 16
        %v9196 = vpop.permute.xlu0 %9195
        %9197 = vrot.lane.b32.xlu0 %v4500, 16
        %v9198 = vpop.permute.xlu0 %9197
        %9199 = vrot.lane.b32.xlu0 %v4598, 16
        %v9200 = vpop.permute.xlu0 %9199
        %9201 = vrot.lane.b32.xlu0 %v4696, 16
        %v9202 = vpop.permute.xlu0 %9201
        %9203 = vrot.lane.b32.xlu0 %v4794, 16
        %v9204 = vpop.permute.xlu0 %9203
        %9205 = vrot.lane.b32.xlu0 %v4892, 16
        %v9206 = vpop.permute.xlu0 %9205
        %9207 = vrot.lane.b32.xlu0 %v4990, 16
        %v9208 = vpop.permute.xlu0 %9207
        %9209 = vrot.lane.b32.xlu0 %v5088, 16
        %v9210 = vpop.permute.xlu0 %9209
        %9211 = vrot.lane.b32.xlu0 %v5186, 16
        %v9212 = vpop.permute.xlu0 %9211
        %9213 = vrot.lane.b32.xlu0 %v5284, 16
        %v9214 = vpop.permute.xlu0 %9213
        %9215 = vrot.lane.b32.xlu0 %v5382, 16
        %v9216 = vpop.permute.xlu0 %9215
        %9217 = vrot.lane.b32.xlu0 %v5480, 16
        %v9218 = vpop.permute.xlu0 %9217
        %9219 = vrot.lane.b32.xlu0 %v5578, 16
        %v9220 = vpop.permute.xlu0 %9219
        %9221 = vrot.lane.b32.xlu0 %v5676, 16
        %v9222 = vpop.permute.xlu0 %9221
        %9223 = vrot.lane.b32.xlu0 %v5774, 16
        %v9224 = vpop.permute.xlu0 %9223
        %9225 = vrot.lane.b32.xlu0 %v5872, 16
        %v9226 = vpop.permute.xlu0 %9225
        %9227 = vrot.lane.b32.xlu0 %v5970, 16
        %v9228 = vpop.permute.xlu0 %9227
        %9229 = vrot.lane.b32.xlu0 %v6068, 16
        %v9230 = vpop.permute.xlu0 %9229
        %9231 = vrot.lane.b32.xlu0 %v6166, 16
        %v9232 = vpop.permute.xlu0 %9231
        %9233 = vrot.lane.b32.xlu0 %v6264, 16
        %v9234 = vpop.permute.xlu0 %9233
        %9235 = vrot.lane.b32.xlu0 %v6362, 16
        %v9236 = vpop.permute.xlu0 %9235
        %9237 = vrot.lane.b32.xlu0 %v6460, 16
        %v9238 = vpop.permute.xlu0 %9237
        %9239 = vrot.lane.b32.xlu0 %v6558, 16
        %v9240 = vpop.permute.xlu0 %9239
        %9241 = vrot.lane.b32.xlu0 %v6656, 16
        %v9242 = vpop.permute.xlu0 %9241
        %9243 = vrot.lane.b32.xlu0 %v6754, 16
        %v9244 = vpop.permute.xlu0 %9243
        %9245 = vrot.lane.b32.xlu0 %v6852, 16
        %v9246 = vpop.permute.xlu0 %9245
        %9247 = vrot.lane.b32.xlu0 %v6950, 16
        %v9248 = vpop.permute.xlu0 %9247
        %9249 = vrot.lane.b32.xlu0 %v7048, 16
        %v9250 = vpop.permute.xlu0 %9249
        %9251 = vrot.lane.b32.xlu0 %v7146, 16
        %v9252 = vpop.permute.xlu0 %9251
        %9253 = vrot.lane.b32.xlu0 %v7244, 16
        %v9254 = vpop.permute.xlu0 %9253
        %9383 = vrot.lane.b32.xlu0 %v1093, 18
        %v9384 = vpop.permute.xlu0 %9383
        %9385 = vrot.lane.b32.xlu0 %v1191, 18
        %v9386 = vpop.permute.xlu0 %9385
        %9387 = vrot.lane.b32.xlu0 %v1289, 18
        %v9388 = vpop.permute.xlu0 %9387
        %9389 = vrot.lane.b32.xlu0 %v1387, 18
        %v9390 = vpop.permute.xlu0 %9389
        %9391 = vrot.lane.b32.xlu0 %v1485, 18
        %v9392 = vpop.permute.xlu0 %9391
        %9393 = vrot.lane.b32.xlu0 %v1583, 18
        %v9394 = vpop.permute.xlu0 %9393
        %9395 = vrot.lane.b32.xlu0 %v1681, 18
        %v9396 = vpop.permute.xlu0 %9395
        %9397 = vrot.lane.b32.xlu0 %v1779, 18
        %v9398 = vpop.permute.xlu0 %9397
        %9399 = vrot.lane.b32.xlu0 %v1877, 18
        %v9400 = vpop.permute.xlu0 %9399
        %9401 = vrot.lane.b32.xlu0 %v1975, 18
        %v9402 = vpop.permute.xlu0 %9401
        %9403 = vrot.lane.b32.xlu0 %v2073, 18
        %v9404 = vpop.permute.xlu0 %9403
        %9405 = vrot.lane.b32.xlu0 %v2171, 18
        %v9406 = vpop.permute.xlu0 %9405
        %9407 = vrot.lane.b32.xlu0 %v2269, 18
        %v9408 = vpop.permute.xlu0 %9407
        %9409 = vrot.lane.b32.xlu0 %v2367, 18
        %v9410 = vpop.permute.xlu0 %9409
        %9411 = vrot.lane.b32.xlu0 %v2465, 18
        %v9412 = vpop.permute.xlu0 %9411
        %9413 = vrot.lane.b32.xlu0 %v2563, 18
        %v9414 = vpop.permute.xlu0 %9413
        %9415 = vrot.lane.b32.xlu0 %v2661, 18
        %v9416 = vpop.permute.xlu0 %9415
        %9417 = vrot.lane.b32.xlu0 %v2759, 18
        %v9418 = vpop.permute.xlu0 %9417
        %9419 = vrot.lane.b32.xlu0 %v2857, 18
        %v9420 = vpop.permute.xlu0 %9419
        %9421 = vrot.lane.b32.xlu0 %v2955, 18
        %v9422 = vpop.permute.xlu0 %9421
        %9423 = vrot.lane.b32.xlu0 %v3053, 18
        %v9424 = vpop.permute.xlu0 %9423
        %9425 = vrot.lane.b32.xlu0 %v3151, 18
        %v9426 = vpop.permute.xlu0 %9425
        %9427 = vrot.lane.b32.xlu0 %v3249, 18
        %v9428 = vpop.permute.xlu0 %9427
        %9429 = vrot.lane.b32.xlu0 %v3347, 18
        %v9430 = vpop.permute.xlu0 %9429
        %9431 = vrot.lane.b32.xlu0 %v3445, 18
        %v9432 = vpop.permute.xlu0 %9431
        %9433 = vrot.lane.b32.xlu0 %v3543, 18
        %v9434 = vpop.permute.xlu0 %9433
        %9435 = vrot.lane.b32.xlu0 %v3641, 18
        %v9436 = vpop.permute.xlu0 %9435
        %9437 = vrot.lane.b32.xlu0 %v3739, 18
        %v9438 = vpop.permute.xlu0 %9437
        %9439 = vrot.lane.b32.xlu0 %v3837, 18
        %v9440 = vpop.permute.xlu0 %9439
        %9441 = vrot.lane.b32.xlu0 %v3935, 18
        %v9442 = vpop.permute.xlu0 %9441
        %9443 = vrot.lane.b32.xlu0 %v4033, 18
        %v9444 = vpop.permute.xlu0 %9443
        %9445 = vrot.lane.b32.xlu0 %v4131, 18
        %v9446 = vpop.permute.xlu0 %9445
        %9447 = vrot.lane.b32.xlu0 %v4229, 18
        %v9448 = vpop.permute.xlu0 %9447
        %9449 = vrot.lane.b32.xlu0 %v4327, 18
        %v9450 = vpop.permute.xlu0 %9449
        %9451 = vrot.lane.b32.xlu0 %v4425, 18
        %v9452 = vpop.permute.xlu0 %9451
        %9453 = vrot.lane.b32.xlu0 %v4523, 18
        %v9454 = vpop.permute.xlu0 %9453
        %9455 = vrot.lane.b32.xlu0 %v4621, 18
        %v9456 = vpop.permute.xlu0 %9455
        %9457 = vrot.lane.b32.xlu0 %v4719, 18
        %v9458 = vpop.permute.xlu0 %9457
        %9459 = vrot.lane.b32.xlu0 %v4817, 18
        %v9460 = vpop.permute.xlu0 %9459
        %9461 = vrot.lane.b32.xlu0 %v4915, 18
        %v9462 = vpop.permute.xlu0 %9461
        %9463 = vrot.lane.b32.xlu0 %v5013, 18
        %v9464 = vpop.permute.xlu0 %9463
        %9465 = vrot.lane.b32.xlu0 %v5111, 18
        %v9466 = vpop.permute.xlu0 %9465
        %9467 = vrot.lane.b32.xlu0 %v5209, 18
        %v9468 = vpop.permute.xlu0 %9467
        %9469 = vrot.lane.b32.xlu0 %v5307, 18
        %v9470 = vpop.permute.xlu0 %9469
        %9471 = vrot.lane.b32.xlu0 %v5405, 18
        %v9472 = vpop.permute.xlu0 %9471
        %9473 = vrot.lane.b32.xlu0 %v5503, 18
        %v9474 = vpop.permute.xlu0 %9473
        %9475 = vrot.lane.b32.xlu0 %v5601, 18
        %v9476 = vpop.permute.xlu0 %9475
        %9477 = vrot.lane.b32.xlu0 %v5699, 18
        %v9478 = vpop.permute.xlu0 %9477
        %9479 = vrot.lane.b32.xlu0 %v5797, 18
        %v9480 = vpop.permute.xlu0 %9479
        %9481 = vrot.lane.b32.xlu0 %v5895, 18
        %v9482 = vpop.permute.xlu0 %9481
        %9483 = vrot.lane.b32.xlu0 %v5993, 18
        %v9484 = vpop.permute.xlu0 %9483
        %9485 = vrot.lane.b32.xlu0 %v6091, 18
        %v9486 = vpop.permute.xlu0 %9485
        %9487 = vrot.lane.b32.xlu0 %v6189, 18
        %v9488 = vpop.permute.xlu0 %9487
        %9489 = vrot.lane.b32.xlu0 %v6287, 18
        %v9490 = vpop.permute.xlu0 %9489
        %9491 = vrot.lane.b32.xlu0 %v6385, 18
        %v9492 = vpop.permute.xlu0 %9491
        %9493 = vrot.lane.b32.xlu0 %v6483, 18
        %v9494 = vpop.permute.xlu0 %9493
        %9495 = vrot.lane.b32.xlu0 %v6581, 18
        %v9496 = vpop.permute.xlu0 %9495
        %9497 = vrot.lane.b32.xlu0 %v6679, 18
        %v9498 = vpop.permute.xlu0 %9497
        %9499 = vrot.lane.b32.xlu0 %v6777, 18
        %v9500 = vpop.permute.xlu0 %9499
        %9501 = vrot.lane.b32.xlu0 %v6875, 18
        %v9502 = vpop.permute.xlu0 %9501
        %9503 = vrot.lane.b32.xlu0 %v6973, 18
        %v9504 = vpop.permute.xlu0 %9503
        %9505 = vrot.lane.b32.xlu0 %v7071, 18
        %v9506 = vpop.permute.xlu0 %9505
        %9507 = vrot.lane.b32.xlu0 %v7169, 18
        %v9508 = vpop.permute.xlu0 %9507
        %9509 = vrot.lane.b32.xlu0 %v7267, 18
        %v9510 = vpop.permute.xlu0 %9509
        %9639 = vrot.lane.b32.xlu0 %v1077, 20
        %v9640 = vpop.permute.xlu0 %9639
        %9641 = vrot.lane.b32.xlu0 %v1175, 20
        %v9642 = vpop.permute.xlu0 %9641
        %9643 = vrot.lane.b32.xlu0 %v1273, 20
        %v9644 = vpop.permute.xlu0 %9643
        %9645 = vrot.lane.b32.xlu0 %v1371, 20
        %v9646 = vpop.permute.xlu0 %9645
        %9647 = vrot.lane.b32.xlu0 %v1469, 20
        %v9648 = vpop.permute.xlu0 %9647
        %9649 = vrot.lane.b32.xlu0 %v1567, 20
        %v9650 = vpop.permute.xlu0 %9649
        %9651 = vrot.lane.b32.xlu0 %v1665, 20
        %v9652 = vpop.permute.xlu0 %9651
        %9653 = vrot.lane.b32.xlu0 %v1763, 20
        %v9654 = vpop.permute.xlu0 %9653
        %9655 = vrot.lane.b32.xlu0 %v1861, 20
        %v9656 = vpop.permute.xlu0 %9655
        %9657 = vrot.lane.b32.xlu0 %v1959, 20
        %v9658 = vpop.permute.xlu0 %9657
        %9659 = vrot.lane.b32.xlu0 %v2057, 20
        %v9660 = vpop.permute.xlu0 %9659
        %9661 = vrot.lane.b32.xlu0 %v2155, 20
        %v9662 = vpop.permute.xlu0 %9661
        %9663 = vrot.lane.b32.xlu0 %v2253, 20
        %v9664 = vpop.permute.xlu0 %9663
        %9665 = vrot.lane.b32.xlu0 %v2351, 20
        %v9666 = vpop.permute.xlu0 %9665
        %9667 = vrot.lane.b32.xlu0 %v2449, 20
        %v9668 = vpop.permute.xlu0 %9667
        %9669 = vrot.lane.b32.xlu0 %v2547, 20
        %v9670 = vpop.permute.xlu0 %9669
        %9671 = vrot.lane.b32.xlu0 %v2645, 20
        %v9672 = vpop.permute.xlu0 %9671
        %9673 = vrot.lane.b32.xlu0 %v2743, 20
        %v9674 = vpop.permute.xlu0 %9673
        %9675 = vrot.lane.b32.xlu0 %v2841, 20
        %v9676 = vpop.permute.xlu0 %9675
        %9677 = vrot.lane.b32.xlu0 %v2939, 20
        %v9678 = vpop.permute.xlu0 %9677
        %9679 = vrot.lane.b32.xlu0 %v3037, 20
        %v9680 = vpop.permute.xlu0 %9679
        %9681 = vrot.lane.b32.xlu0 %v3135, 20
        %v9682 = vpop.permute.xlu0 %9681
        %9683 = vrot.lane.b32.xlu0 %v3233, 20
        %v9684 = vpop.permute.xlu0 %9683
        %9685 = vrot.lane.b32.xlu0 %v3331, 20
        %v9686 = vpop.permute.xlu0 %9685
        %9687 = vrot.lane.b32.xlu0 %v3429, 20
        %v9688 = vpop.permute.xlu0 %9687
        %9689 = vrot.lane.b32.xlu0 %v3527, 20
        %v9690 = vpop.permute.xlu0 %9689
        %9691 = vrot.lane.b32.xlu0 %v3625, 20
        %v9692 = vpop.permute.xlu0 %9691
        %9693 = vrot.lane.b32.xlu0 %v3723, 20
        %v9694 = vpop.permute.xlu0 %9693
        %9695 = vrot.lane.b32.xlu0 %v3821, 20
        %v9696 = vpop.permute.xlu0 %9695
        %9697 = vrot.lane.b32.xlu0 %v3919, 20
        %v9698 = vpop.permute.xlu0 %9697
        %9699 = vrot.lane.b32.xlu0 %v4017, 20
        %v9700 = vpop.permute.xlu0 %9699
        %9701 = vrot.lane.b32.xlu0 %v4115, 20
        %v9702 = vpop.permute.xlu0 %9701
        %9703 = vrot.lane.b32.xlu0 %v4213, 20
        %v9704 = vpop.permute.xlu0 %9703
        %9705 = vrot.lane.b32.xlu0 %v4311, 20
        %v9706 = vpop.permute.xlu0 %9705
        %9707 = vrot.lane.b32.xlu0 %v4409, 20
        %v9708 = vpop.permute.xlu0 %9707
        %9709 = vrot.lane.b32.xlu0 %v4507, 20
        %v9710 = vpop.permute.xlu0 %9709
        %9711 = vrot.lane.b32.xlu0 %v4605, 20
        %v9712 = vpop.permute.xlu0 %9711
        %9713 = vrot.lane.b32.xlu0 %v4703, 20
        %v9714 = vpop.permute.xlu0 %9713
        %9715 = vrot.lane.b32.xlu0 %v4801, 20
        %v9716 = vpop.permute.xlu0 %9715
        %9717 = vrot.lane.b32.xlu0 %v4899, 20
        %v9718 = vpop.permute.xlu0 %9717
        %9719 = vrot.lane.b32.xlu0 %v4997, 20
        %v9720 = vpop.permute.xlu0 %9719
        %9721 = vrot.lane.b32.xlu0 %v5095, 20
        %v9722 = vpop.permute.xlu0 %9721
        %9723 = vrot.lane.b32.xlu0 %v5193, 20
        %v9724 = vpop.permute.xlu0 %9723
        %9725 = vrot.lane.b32.xlu0 %v5291, 20
        %v9726 = vpop.permute.xlu0 %9725
        %9727 = vrot.lane.b32.xlu0 %v5389, 20
        %v9728 = vpop.permute.xlu0 %9727
        %9729 = vrot.lane.b32.xlu0 %v5487, 20
        %v9730 = vpop.permute.xlu0 %9729
        %9731 = vrot.lane.b32.xlu0 %v5585, 20
        %v9732 = vpop.permute.xlu0 %9731
        %9733 = vrot.lane.b32.xlu0 %v5683, 20
        %v9734 = vpop.permute.xlu0 %9733
        %9735 = vrot.lane.b32.xlu0 %v5781, 20
        %v9736 = vpop.permute.xlu0 %9735
        %9737 = vrot.lane.b32.xlu0 %v5879, 20
        %v9738 = vpop.permute.xlu0 %9737
        %9739 = vrot.lane.b32.xlu0 %v5977, 20
        %v9740 = vpop.permute.xlu0 %9739
        %9741 = vrot.lane.b32.xlu0 %v6075, 20
        %v9742 = vpop.permute.xlu0 %9741
        %9743 = vrot.lane.b32.xlu0 %v6173, 20
        %v9744 = vpop.permute.xlu0 %9743
        %9745 = vrot.lane.b32.xlu0 %v6271, 20
        %v9746 = vpop.permute.xlu0 %9745
        %9747 = vrot.lane.b32.xlu0 %v6369, 20
        %v9748 = vpop.permute.xlu0 %9747
        %9749 = vrot.lane.b32.xlu0 %v6467, 20
        %v9750 = vpop.permute.xlu0 %9749
        %9751 = vrot.lane.b32.xlu0 %v6565, 20
        %v9752 = vpop.permute.xlu0 %9751
        %9753 = vrot.lane.b32.xlu0 %v6663, 20
        %v9754 = vpop.permute.xlu0 %9753
        %9755 = vrot.lane.b32.xlu0 %v6761, 20
        %v9756 = vpop.permute.xlu0 %9755
        %9757 = vrot.lane.b32.xlu0 %v6859, 20
        %v9758 = vpop.permute.xlu0 %9757
        %9759 = vrot.lane.b32.xlu0 %v6957, 20
        %v9760 = vpop.permute.xlu0 %9759
        %9761 = vrot.lane.b32.xlu0 %v7055, 20
        %v9762 = vpop.permute.xlu0 %9761
        %9763 = vrot.lane.b32.xlu0 %v7153, 20
        %v9764 = vpop.permute.xlu0 %9763
        %9765 = vrot.lane.b32.xlu0 %v7251, 20
        %v9766 = vpop.permute.xlu0 %9765
        %9895 = vrot.lane.b32.xlu0 %v1094, 22
        %v9896 = vpop.permute.xlu0 %9895
        %9897 = vrot.lane.b32.xlu0 %v1192, 22
        %v9898 = vpop.permute.xlu0 %9897
        %9899 = vrot.lane.b32.xlu0 %v1290, 22
        %v9900 = vpop.permute.xlu0 %9899
        %9901 = vrot.lane.b32.xlu0 %v1388, 22
        %v9902 = vpop.permute.xlu0 %9901
        %9903 = vrot.lane.b32.xlu0 %v1486, 22
        %v9904 = vpop.permute.xlu0 %9903
        %9905 = vrot.lane.b32.xlu0 %v1584, 22
        %v9906 = vpop.permute.xlu0 %9905
        %9907 = vrot.lane.b32.xlu0 %v1682, 22
        %v9908 = vpop.permute.xlu0 %9907
        %9909 = vrot.lane.b32.xlu0 %v1780, 22
        %v9910 = vpop.permute.xlu0 %9909
        %9911 = vrot.lane.b32.xlu0 %v1878, 22
        %v9912 = vpop.permute.xlu0 %9911
        %9913 = vrot.lane.b32.xlu0 %v1976, 22
        %v9914 = vpop.permute.xlu0 %9913
        %9915 = vrot.lane.b32.xlu0 %v2074, 22
        %v9916 = vpop.permute.xlu0 %9915
        %9917 = vrot.lane.b32.xlu0 %v2172, 22
        %v9918 = vpop.permute.xlu0 %9917
        %9919 = vrot.lane.b32.xlu0 %v2270, 22
        %v9920 = vpop.permute.xlu0 %9919
        %9921 = vrot.lane.b32.xlu0 %v2368, 22
        %v9922 = vpop.permute.xlu0 %9921
        %9923 = vrot.lane.b32.xlu0 %v2466, 22
        %v9924 = vpop.permute.xlu0 %9923
        %9925 = vrot.lane.b32.xlu0 %v2564, 22
        %v9926 = vpop.permute.xlu0 %9925
        %9927 = vrot.lane.b32.xlu0 %v2662, 22
        %v9928 = vpop.permute.xlu0 %9927
        %9929 = vrot.lane.b32.xlu0 %v2760, 22
        %v9930 = vpop.permute.xlu0 %9929
        %9931 = vrot.lane.b32.xlu0 %v2858, 22
        %v9932 = vpop.permute.xlu0 %9931
        %9933 = vrot.lane.b32.xlu0 %v2956, 22
        %v9934 = vpop.permute.xlu0 %9933
        %9935 = vrot.lane.b32.xlu0 %v3054, 22
        %v9936 = vpop.permute.xlu0 %9935
        %9937 = vrot.lane.b32.xlu0 %v3152, 22
        %v9938 = vpop.permute.xlu0 %9937
        %9939 = vrot.lane.b32.xlu0 %v3250, 22
        %v9940 = vpop.permute.xlu0 %9939
        %9941 = vrot.lane.b32.xlu0 %v3348, 22
        %v9942 = vpop.permute.xlu0 %9941
        %9943 = vrot.lane.b32.xlu0 %v3446, 22
        %v9944 = vpop.permute.xlu0 %9943
        %9945 = vrot.lane.b32.xlu0 %v3544, 22
        %v9946 = vpop.permute.xlu0 %9945
        %9947 = vrot.lane.b32.xlu0 %v3642, 22
        %v9948 = vpop.permute.xlu0 %9947
        %9949 = vrot.lane.b32.xlu0 %v3740, 22
        %v9950 = vpop.permute.xlu0 %9949
        %9951 = vrot.lane.b32.xlu0 %v3838, 22
        %v9952 = vpop.permute.xlu0 %9951
        %9953 = vrot.lane.b32.xlu0 %v3936, 22
        %v9954 = vpop.permute.xlu0 %9953
        %9955 = vrot.lane.b32.xlu0 %v4034, 22
        %v9956 = vpop.permute.xlu0 %9955
        %9957 = vrot.lane.b32.xlu0 %v4132, 22
        %v9958 = vpop.permute.xlu0 %9957
        %9959 = vrot.lane.b32.xlu0 %v4230, 22
        %v9960 = vpop.permute.xlu0 %9959
        %9961 = vrot.lane.b32.xlu0 %v4328, 22
        %v9962 = vpop.permute.xlu0 %9961
        %9963 = vrot.lane.b32.xlu0 %v4426, 22
        %v9964 = vpop.permute.xlu0 %9963
        %9965 = vrot.lane.b32.xlu0 %v4524, 22
        %v9966 = vpop.permute.xlu0 %9965
        %9967 = vrot.lane.b32.xlu0 %v4622, 22
        %v9968 = vpop.permute.xlu0 %9967
        %9969 = vrot.lane.b32.xlu0 %v4720, 22
        %v9970 = vpop.permute.xlu0 %9969
        %9971 = vrot.lane.b32.xlu0 %v4818, 22
        %v9972 = vpop.permute.xlu0 %9971
        %9973 = vrot.lane.b32.xlu0 %v4916, 22
        %v9974 = vpop.permute.xlu0 %9973
        %9975 = vrot.lane.b32.xlu0 %v5014, 22
        %v9976 = vpop.permute.xlu0 %9975
        %9977 = vrot.lane.b32.xlu0 %v5112, 22
        %v9978 = vpop.permute.xlu0 %9977
        %9979 = vrot.lane.b32.xlu0 %v5210, 22
        %v9980 = vpop.permute.xlu0 %9979
        %9981 = vrot.lane.b32.xlu0 %v5308, 22
        %v9982 = vpop.permute.xlu0 %9981
        %9983 = vrot.lane.b32.xlu0 %v5406, 22
        %v9984 = vpop.permute.xlu0 %9983
        %9985 = vrot.lane.b32.xlu0 %v5504, 22
        %v9986 = vpop.permute.xlu0 %9985
        %9987 = vrot.lane.b32.xlu0 %v5602, 22
        %v9988 = vpop.permute.xlu0 %9987
        %9989 = vrot.lane.b32.xlu0 %v5700, 22
        %v9990 = vpop.permute.xlu0 %9989
        %9991 = vrot.lane.b32.xlu0 %v5798, 22
        %v9992 = vpop.permute.xlu0 %9991
        %9993 = vrot.lane.b32.xlu0 %v5896, 22
        %v9994 = vpop.permute.xlu0 %9993
        %9995 = vrot.lane.b32.xlu0 %v5994, 22
        %v9996 = vpop.permute.xlu0 %9995
        %9997 = vrot.lane.b32.xlu0 %v6092, 22
        %v9998 = vpop.permute.xlu0 %9997
        %9999 = vrot.lane.b32.xlu0 %v6190, 22
        %v10000 = vpop.permute.xlu0 %9999
        %10001 = vrot.lane.b32.xlu0 %v6288, 22
        %v10002 = vpop.permute.xlu0 %10001
        %10003 = vrot.lane.b32.xlu0 %v6386, 22
        %v10004 = vpop.permute.xlu0 %10003
        %10005 = vrot.lane.b32.xlu0 %v6484, 22
        %v10006 = vpop.permute.xlu0 %10005
        %10007 = vrot.lane.b32.xlu0 %v6582, 22
        %v10008 = vpop.permute.xlu0 %10007
        %10009 = vrot.lane.b32.xlu0 %v6680, 22
        %v10010 = vpop.permute.xlu0 %10009
        %10011 = vrot.lane.b32.xlu0 %v6778, 22
        %v10012 = vpop.permute.xlu0 %10011
        %10013 = vrot.lane.b32.xlu0 %v6876, 22
        %v10014 = vpop.permute.xlu0 %10013
        %10015 = vrot.lane.b32.xlu0 %v6974, 22
        %v10016 = vpop.permute.xlu0 %10015
        %10017 = vrot.lane.b32.xlu0 %v7072, 22
        %v10018 = vpop.permute.xlu0 %10017
        %10019 = vrot.lane.b32.xlu0 %v7170, 22
        %v10020 = vpop.permute.xlu0 %10019
        %10021 = vrot.lane.b32.xlu0 %v7268, 22
        %v10022 = vpop.permute.xlu0 %10021
        %10151 = vrot.lane.b32.xlu0 %v1085, 24
        %v10152 = vpop.permute.xlu0 %10151
        %10153 = vrot.lane.b32.xlu0 %v1183, 24
        %v10154 = vpop.permute.xlu0 %10153
        %10155 = vrot.lane.b32.xlu0 %v1281, 24
        %v10156 = vpop.permute.xlu0 %10155
        %10157 = vrot.lane.b32.xlu0 %v1379, 24
        %v10158 = vpop.permute.xlu0 %10157
        %10159 = vrot.lane.b32.xlu0 %v1477, 24
        %v10160 = vpop.permute.xlu0 %10159
        %10161 = vrot.lane.b32.xlu0 %v1575, 24
        %v10162 = vpop.permute.xlu0 %10161
        %10163 = vrot.lane.b32.xlu0 %v1673, 24
        %v10164 = vpop.permute.xlu0 %10163
        %10165 = vrot.lane.b32.xlu0 %v1771, 24
        %v10166 = vpop.permute.xlu0 %10165
        %10167 = vrot.lane.b32.xlu0 %v1869, 24
        %v10168 = vpop.permute.xlu0 %10167
        %10169 = vrot.lane.b32.xlu0 %v1967, 24
        %v10170 = vpop.permute.xlu0 %10169
        %10171 = vrot.lane.b32.xlu0 %v2065, 24
        %v10172 = vpop.permute.xlu0 %10171
        %10173 = vrot.lane.b32.xlu0 %v2163, 24
        %v10174 = vpop.permute.xlu0 %10173
        %10175 = vrot.lane.b32.xlu0 %v2261, 24
        %v10176 = vpop.permute.xlu0 %10175
        %10177 = vrot.lane.b32.xlu0 %v2359, 24
        %v10178 = vpop.permute.xlu0 %10177
        %10179 = vrot.lane.b32.xlu0 %v2457, 24
        %v10180 = vpop.permute.xlu0 %10179
        %10181 = vrot.lane.b32.xlu0 %v2555, 24
        %v10182 = vpop.permute.xlu0 %10181
        %10183 = vrot.lane.b32.xlu0 %v2653, 24
        %v10184 = vpop.permute.xlu0 %10183
        %10185 = vrot.lane.b32.xlu0 %v2751, 24
        %v10186 = vpop.permute.xlu0 %10185
        %10187 = vrot.lane.b32.xlu0 %v2849, 24
        %v10188 = vpop.permute.xlu0 %10187
        %10189 = vrot.lane.b32.xlu0 %v2947, 24
        %v10190 = vpop.permute.xlu0 %10189
        %10191 = vrot.lane.b32.xlu0 %v3045, 24
        %v10192 = vpop.permute.xlu0 %10191
        %10193 = vrot.lane.b32.xlu0 %v3143, 24
        %v10194 = vpop.permute.xlu0 %10193
        %10195 = vrot.lane.b32.xlu0 %v3241, 24
        %v10196 = vpop.permute.xlu0 %10195
        %10197 = vrot.lane.b32.xlu0 %v3339, 24
        %v10198 = vpop.permute.xlu0 %10197
        %10199 = vrot.lane.b32.xlu0 %v3437, 24
        %v10200 = vpop.permute.xlu0 %10199
        %10201 = vrot.lane.b32.xlu0 %v3535, 24
        %v10202 = vpop.permute.xlu0 %10201
        %10203 = vrot.lane.b32.xlu0 %v3633, 24
        %v10204 = vpop.permute.xlu0 %10203
        %10205 = vrot.lane.b32.xlu0 %v3731, 24
        %v10206 = vpop.permute.xlu0 %10205
        %10207 = vrot.lane.b32.xlu0 %v3829, 24
        %v10208 = vpop.permute.xlu0 %10207
        %10209 = vrot.lane.b32.xlu0 %v3927, 24
        %v10210 = vpop.permute.xlu0 %10209
        %10211 = vrot.lane.b32.xlu0 %v4025, 24
        %v10212 = vpop.permute.xlu0 %10211
        %10213 = vrot.lane.b32.xlu0 %v4123, 24
        %v10214 = vpop.permute.xlu0 %10213
        %10215 = vrot.lane.b32.xlu0 %v4221, 24
        %v10216 = vpop.permute.xlu0 %10215
        %10217 = vrot.lane.b32.xlu0 %v4319, 24
        %v10218 = vpop.permute.xlu0 %10217
        %10219 = vrot.lane.b32.xlu0 %v4417, 24
        %v10220 = vpop.permute.xlu0 %10219
        %10221 = vrot.lane.b32.xlu0 %v4515, 24
        %v10222 = vpop.permute.xlu0 %10221
        %10223 = vrot.lane.b32.xlu0 %v4613, 24
        %v10224 = vpop.permute.xlu0 %10223
        %10225 = vrot.lane.b32.xlu0 %v4711, 24
        %v10226 = vpop.permute.xlu0 %10225
        %10227 = vrot.lane.b32.xlu0 %v4809, 24
        %v10228 = vpop.permute.xlu0 %10227
        %10229 = vrot.lane.b32.xlu0 %v4907, 24
        %v10230 = vpop.permute.xlu0 %10229
        %10231 = vrot.lane.b32.xlu0 %v5005, 24
        %v10232 = vpop.permute.xlu0 %10231
        %10233 = vrot.lane.b32.xlu0 %v5103, 24
        %v10234 = vpop.permute.xlu0 %10233
        %10235 = vrot.lane.b32.xlu0 %v5201, 24
        %v10236 = vpop.permute.xlu0 %10235
        %10237 = vrot.lane.b32.xlu0 %v5299, 24
        %v10238 = vpop.permute.xlu0 %10237
        %10239 = vrot.lane.b32.xlu0 %v5397, 24
        %v10240 = vpop.permute.xlu0 %10239
        %10241 = vrot.lane.b32.xlu0 %v5495, 24
        %v10242 = vpop.permute.xlu0 %10241
        %10243 = vrot.lane.b32.xlu0 %v5593, 24
        %v10244 = vpop.permute.xlu0 %10243
        %10245 = vrot.lane.b32.xlu0 %v5691, 24
        %v10246 = vpop.permute.xlu0 %10245
        %10247 = vrot.lane.b32.xlu0 %v5789, 24
        %v10248 = vpop.permute.xlu0 %10247
        %10249 = vrot.lane.b32.xlu0 %v5887, 24
        %v10250 = vpop.permute.xlu0 %10249
        %10251 = vrot.lane.b32.xlu0 %v5985, 24
        %v10252 = vpop.permute.xlu0 %10251
        %10253 = vrot.lane.b32.xlu0 %v6083, 24
        %v10254 = vpop.permute.xlu0 %10253
        %10255 = vrot.lane.b32.xlu0 %v6181, 24
        %v10256 = vpop.permute.xlu0 %10255
        %10257 = vrot.lane.b32.xlu0 %v6279, 24
        %v10258 = vpop.permute.xlu0 %10257
        %10259 = vrot.lane.b32.xlu0 %v6377, 24
        %v10260 = vpop.permute.xlu0 %10259
        %10261 = vrot.lane.b32.xlu0 %v6475, 24
        %v10262 = vpop.permute.xlu0 %10261
        %10263 = vrot.lane.b32.xlu0 %v6573, 24
        %v10264 = vpop.permute.xlu0 %10263
        %10265 = vrot.lane.b32.xlu0 %v6671, 24
        %v10266 = vpop.permute.xlu0 %10265
        %10267 = vrot.lane.b32.xlu0 %v6769, 24
        %v10268 = vpop.permute.xlu0 %10267
        %10269 = vrot.lane.b32.xlu0 %v6867, 24
        %v10270 = vpop.permute.xlu0 %10269
        %10271 = vrot.lane.b32.xlu0 %v6965, 24
        %v10272 = vpop.permute.xlu0 %10271
        %10273 = vrot.lane.b32.xlu0 %v7063, 24
        %v10274 = vpop.permute.xlu0 %10273
        %10275 = vrot.lane.b32.xlu0 %v7161, 24
        %v10276 = vpop.permute.xlu0 %10275
        %10277 = vrot.lane.b32.xlu0 %v7259, 24
        %v10278 = vpop.permute.xlu0 %10277
        %10407 = vrot.lane.b32.xlu0 %v1095, 26
        %v10408 = vpop.permute.xlu0 %10407
        %10409 = vrot.lane.b32.xlu0 %v1193, 26
        %v10410 = vpop.permute.xlu0 %10409
        %10411 = vrot.lane.b32.xlu0 %v1291, 26
        %v10412 = vpop.permute.xlu0 %10411
        %10413 = vrot.lane.b32.xlu0 %v1389, 26
        %v10414 = vpop.permute.xlu0 %10413
        %10415 = vrot.lane.b32.xlu0 %v1487, 26
        %v10416 = vpop.permute.xlu0 %10415
        %10417 = vrot.lane.b32.xlu0 %v1585, 26
        %v10418 = vpop.permute.xlu0 %10417
        %10419 = vrot.lane.b32.xlu0 %v1683, 26
        %v10420 = vpop.permute.xlu0 %10419
        %10421 = vrot.lane.b32.xlu0 %v1781, 26
        %v10422 = vpop.permute.xlu0 %10421
        %10423 = vrot.lane.b32.xlu0 %v1879, 26
        %v10424 = vpop.permute.xlu0 %10423
        %10425 = vrot.lane.b32.xlu0 %v1977, 26
        %v10426 = vpop.permute.xlu0 %10425
        %10427 = vrot.lane.b32.xlu0 %v2075, 26
        %v10428 = vpop.permute.xlu0 %10427
        %10429 = vrot.lane.b32.xlu0 %v2173, 26
        %v10430 = vpop.permute.xlu0 %10429
        %10431 = vrot.lane.b32.xlu0 %v2271, 26
        %v10432 = vpop.permute.xlu0 %10431
        %10433 = vrot.lane.b32.xlu0 %v2369, 26
        %v10434 = vpop.permute.xlu0 %10433
        %10435 = vrot.lane.b32.xlu0 %v2467, 26
        %v10436 = vpop.permute.xlu0 %10435
        %10437 = vrot.lane.b32.xlu0 %v2565, 26
        %v10438 = vpop.permute.xlu0 %10437
        %10439 = vrot.lane.b32.xlu0 %v2663, 26
        %v10440 = vpop.permute.xlu0 %10439
        %10441 = vrot.lane.b32.xlu0 %v2761, 26
        %v10442 = vpop.permute.xlu0 %10441
        %10443 = vrot.lane.b32.xlu0 %v2859, 26
        %v10444 = vpop.permute.xlu0 %10443
        %10445 = vrot.lane.b32.xlu0 %v2957, 26
        %v10446 = vpop.permute.xlu0 %10445
        %10447 = vrot.lane.b32.xlu0 %v3055, 26
        %v10448 = vpop.permute.xlu0 %10447
        %10449 = vrot.lane.b32.xlu0 %v3153, 26
        %v10450 = vpop.permute.xlu0 %10449
        %10451 = vrot.lane.b32.xlu0 %v3251, 26
        %v10452 = vpop.permute.xlu0 %10451
        %10453 = vrot.lane.b32.xlu0 %v3349, 26
        %v10454 = vpop.permute.xlu0 %10453
        %10455 = vrot.lane.b32.xlu0 %v3447, 26
        %v10456 = vpop.permute.xlu0 %10455
        %10457 = vrot.lane.b32.xlu0 %v3545, 26
        %v10458 = vpop.permute.xlu0 %10457
        %10459 = vrot.lane.b32.xlu0 %v3643, 26
        %v10460 = vpop.permute.xlu0 %10459
        %10461 = vrot.lane.b32.xlu0 %v3741, 26
        %v10462 = vpop.permute.xlu0 %10461
        %10463 = vrot.lane.b32.xlu0 %v3839, 26
        %v10464 = vpop.permute.xlu0 %10463
        %10465 = vrot.lane.b32.xlu0 %v3937, 26
        %v10466 = vpop.permute.xlu0 %10465
        %10467 = vrot.lane.b32.xlu0 %v4035, 26
        %v10468 = vpop.permute.xlu0 %10467
        %10469 = vrot.lane.b32.xlu0 %v4133, 26
        %v10470 = vpop.permute.xlu0 %10469
        %10471 = vrot.lane.b32.xlu0 %v4231, 26
        %v10472 = vpop.permute.xlu0 %10471
        %10473 = vrot.lane.b32.xlu0 %v4329, 26
        %v10474 = vpop.permute.xlu0 %10473
        %10475 = vrot.lane.b32.xlu0 %v4427, 26
        %v10476 = vpop.permute.xlu0 %10475
        %10477 = vrot.lane.b32.xlu0 %v4525, 26
        %v10478 = vpop.permute.xlu0 %10477
        %10479 = vrot.lane.b32.xlu0 %v4623, 26
        %v10480 = vpop.permute.xlu0 %10479
        %10481 = vrot.lane.b32.xlu0 %v4721, 26
        %v10482 = vpop.permute.xlu0 %10481
        %10483 = vrot.lane.b32.xlu0 %v4819, 26
        %v10484 = vpop.permute.xlu0 %10483
        %10485 = vrot.lane.b32.xlu0 %v4917, 26
        %v10486 = vpop.permute.xlu0 %10485
        %10487 = vrot.lane.b32.xlu0 %v5015, 26
        %v10488 = vpop.permute.xlu0 %10487
        %10489 = vrot.lane.b32.xlu0 %v5113, 26
        %v10490 = vpop.permute.xlu0 %10489
        %10491 = vrot.lane.b32.xlu0 %v5211, 26
        %v10492 = vpop.permute.xlu0 %10491
        %10493 = vrot.lane.b32.xlu0 %v5309, 26
        %v10494 = vpop.permute.xlu0 %10493
        %10495 = vrot.lane.b32.xlu0 %v5407, 26
        %v10496 = vpop.permute.xlu0 %10495
        %10497 = vrot.lane.b32.xlu0 %v5505, 26
        %v10498 = vpop.permute.xlu0 %10497
        %10499 = vrot.lane.b32.xlu0 %v5603, 26
        %v10500 = vpop.permute.xlu0 %10499
        %10501 = vrot.lane.b32.xlu0 %v5701, 26
        %v10502 = vpop.permute.xlu0 %10501
        %10503 = vrot.lane.b32.xlu0 %v5799, 26
        %v10504 = vpop.permute.xlu0 %10503
        %10505 = vrot.lane.b32.xlu0 %v5897, 26
        %v10506 = vpop.permute.xlu0 %10505
        %10507 = vrot.lane.b32.xlu0 %v5995, 26
        %v10508 = vpop.permute.xlu0 %10507
        %10509 = vrot.lane.b32.xlu0 %v6093, 26
        %v10510 = vpop.permute.xlu0 %10509
        %10511 = vrot.lane.b32.xlu0 %v6191, 26
        %v10512 = vpop.permute.xlu0 %10511
        %10513 = vrot.lane.b32.xlu0 %v6289, 26
        %v10514 = vpop.permute.xlu0 %10513
        %10515 = vrot.lane.b32.xlu0 %v6387, 26
        %v10516 = vpop.permute.xlu0 %10515
        %10517 = vrot.lane.b32.xlu0 %v6485, 26
        %v10518 = vpop.permute.xlu0 %10517
        %10519 = vrot.lane.b32.xlu0 %v6583, 26
        %v10520 = vpop.permute.xlu0 %10519
        %10521 = vrot.lane.b32.xlu0 %v6681, 26
        %v10522 = vpop.permute.xlu0 %10521
        %10523 = vrot.lane.b32.xlu0 %v6779, 26
        %v10524 = vpop.permute.xlu0 %10523
        %10525 = vrot.lane.b32.xlu0 %v6877, 26
        %v10526 = vpop.permute.xlu0 %10525
        %10527 = vrot.lane.b32.xlu0 %v6975, 26
        %v10528 = vpop.permute.xlu0 %10527
        %10529 = vrot.lane.b32.xlu0 %v7073, 26
        %v10530 = vpop.permute.xlu0 %10529
        %10531 = vrot.lane.b32.xlu0 %v7171, 26
        %v10532 = vpop.permute.xlu0 %10531
        %10533 = vrot.lane.b32.xlu0 %v7269, 26
        %v10534 = vpop.permute.xlu0 %10533
        %10663 = vrot.lane.b32.xlu0 %v1092, 28
        %v10664 = vpop.permute.xlu0 %10663
        %10665 = vrot.lane.b32.xlu0 %v1190, 28
        %v10666 = vpop.permute.xlu0 %10665
        %10667 = vrot.lane.b32.xlu0 %v1288, 28
        %v10668 = vpop.permute.xlu0 %10667
        %10669 = vrot.lane.b32.xlu0 %v1386, 28
        %v10670 = vpop.permute.xlu0 %10669
        %10671 = vrot.lane.b32.xlu0 %v1484, 28
        %v10672 = vpop.permute.xlu0 %10671
        %10673 = vrot.lane.b32.xlu0 %v1582, 28
        %v10674 = vpop.permute.xlu0 %10673
        %10675 = vrot.lane.b32.xlu0 %v1680, 28
        %v10676 = vpop.permute.xlu0 %10675
        %10677 = vrot.lane.b32.xlu0 %v1778, 28
        %v10678 = vpop.permute.xlu0 %10677
        %10679 = vrot.lane.b32.xlu0 %v1876, 28
        %v10680 = vpop.permute.xlu0 %10679
        %10681 = vrot.lane.b32.xlu0 %v1974, 28
        %v10682 = vpop.permute.xlu0 %10681
        %10683 = vrot.lane.b32.xlu0 %v2072, 28
        %v10684 = vpop.permute.xlu0 %10683
        %10685 = vrot.lane.b32.xlu0 %v2170, 28
        %v10686 = vpop.permute.xlu0 %10685
        %10687 = vrot.lane.b32.xlu0 %v2268, 28
        %v10688 = vpop.permute.xlu0 %10687
        %10689 = vrot.lane.b32.xlu0 %v2366, 28
        %v10690 = vpop.permute.xlu0 %10689
        %10691 = vrot.lane.b32.xlu0 %v2464, 28
        %v10692 = vpop.permute.xlu0 %10691
        %10693 = vrot.lane.b32.xlu0 %v2562, 28
        %v10694 = vpop.permute.xlu0 %10693
        %10695 = vrot.lane.b32.xlu0 %v2660, 28
        %v10696 = vpop.permute.xlu0 %10695
        %10697 = vrot.lane.b32.xlu0 %v2758, 28
        %v10698 = vpop.permute.xlu0 %10697
        %10699 = vrot.lane.b32.xlu0 %v2856, 28
        %v10700 = vpop.permute.xlu0 %10699
        %10701 = vrot.lane.b32.xlu0 %v2954, 28
        %v10702 = vpop.permute.xlu0 %10701
        %10703 = vrot.lane.b32.xlu0 %v3052, 28
        %v10704 = vpop.permute.xlu0 %10703
        %10705 = vrot.lane.b32.xlu0 %v3150, 28
        %v10706 = vpop.permute.xlu0 %10705
        %10707 = vrot.lane.b32.xlu0 %v3248, 28
        %v10708 = vpop.permute.xlu0 %10707
        %10709 = vrot.lane.b32.xlu0 %v3346, 28
        %v10710 = vpop.permute.xlu0 %10709
        %10711 = vrot.lane.b32.xlu0 %v3444, 28
        %v10712 = vpop.permute.xlu0 %10711
        %10713 = vrot.lane.b32.xlu0 %v3542, 28
        %v10714 = vpop.permute.xlu0 %10713
        %10715 = vrot.lane.b32.xlu0 %v3640, 28
        %v10716 = vpop.permute.xlu0 %10715
        %10717 = vrot.lane.b32.xlu0 %v3738, 28
        %v10718 = vpop.permute.xlu0 %10717
        %10719 = vrot.lane.b32.xlu0 %v3836, 28
        %v10720 = vpop.permute.xlu0 %10719
        %10721 = vrot.lane.b32.xlu0 %v3934, 28
        %v10722 = vpop.permute.xlu0 %10721
        %10723 = vrot.lane.b32.xlu0 %v4032, 28
        %v10724 = vpop.permute.xlu0 %10723
        %10725 = vrot.lane.b32.xlu0 %v4130, 28
        %v10726 = vpop.permute.xlu0 %10725
        %10727 = vrot.lane.b32.xlu0 %v4228, 28
        %v10728 = vpop.permute.xlu0 %10727
        %10729 = vrot.lane.b32.xlu0 %v4326, 28
        %v10730 = vpop.permute.xlu0 %10729
        %10731 = vrot.lane.b32.xlu0 %v4424, 28
        %v10732 = vpop.permute.xlu0 %10731
        %10733 = vrot.lane.b32.xlu0 %v4522, 28
        %v10734 = vpop.permute.xlu0 %10733
        %10735 = vrot.lane.b32.xlu0 %v4620, 28
        %v10736 = vpop.permute.xlu0 %10735
        %10737 = vrot.lane.b32.xlu0 %v4718, 28
        %v10738 = vpop.permute.xlu0 %10737
        %10739 = vrot.lane.b32.xlu0 %v4816, 28
        %v10740 = vpop.permute.xlu0 %10739
        %10741 = vrot.lane.b32.xlu0 %v4914, 28
        %v10742 = vpop.permute.xlu0 %10741
        %10743 = vrot.lane.b32.xlu0 %v5012, 28
        %v10744 = vpop.permute.xlu0 %10743
        %10745 = vrot.lane.b32.xlu0 %v5110, 28
        %v10746 = vpop.permute.xlu0 %10745
        %10747 = vrot.lane.b32.xlu0 %v5208, 28
        %v10748 = vpop.permute.xlu0 %10747
        %10749 = vrot.lane.b32.xlu0 %v5306, 28
        %v10750 = vpop.permute.xlu0 %10749
        %10751 = vrot.lane.b32.xlu0 %v5404, 28
        %v10752 = vpop.permute.xlu0 %10751
        %10753 = vrot.lane.b32.xlu0 %v5502, 28
        %v10754 = vpop.permute.xlu0 %10753
        %10755 = vrot.lane.b32.xlu0 %v5600, 28
        %v10756 = vpop.permute.xlu0 %10755
        %10757 = vrot.lane.b32.xlu0 %v5698, 28
        %v10758 = vpop.permute.xlu0 %10757
        %10759 = vrot.lane.b32.xlu0 %v5796, 28
        %v10760 = vpop.permute.xlu0 %10759
        %10761 = vrot.lane.b32.xlu0 %v5894, 28
        %v10762 = vpop.permute.xlu0 %10761
        %10763 = vrot.lane.b32.xlu0 %v5992, 28
        %v10764 = vpop.permute.xlu0 %10763
        %10765 = vrot.lane.b32.xlu0 %v6090, 28
        %v10766 = vpop.permute.xlu0 %10765
        %10767 = vrot.lane.b32.xlu0 %v6188, 28
        %v10768 = vpop.permute.xlu0 %10767
        %10769 = vrot.lane.b32.xlu0 %v6286, 28
        %v10770 = vpop.permute.xlu0 %10769
        %10771 = vrot.lane.b32.xlu0 %v6384, 28
        %v10772 = vpop.permute.xlu0 %10771
        %10773 = vrot.lane.b32.xlu0 %v6482, 28
        %v10774 = vpop.permute.xlu0 %10773
        %10775 = vrot.lane.b32.xlu0 %v6580, 28
        %v10776 = vpop.permute.xlu0 %10775
        %10777 = vrot.lane.b32.xlu0 %v6678, 28
        %v10778 = vpop.permute.xlu0 %10777
        %10779 = vrot.lane.b32.xlu0 %v6776, 28
        %v10780 = vpop.permute.xlu0 %10779
        %10781 = vrot.lane.b32.xlu0 %v6874, 28
        %v10782 = vpop.permute.xlu0 %10781
        %10783 = vrot.lane.b32.xlu0 %v6972, 28
        %v10784 = vpop.permute.xlu0 %10783
        %10785 = vrot.lane.b32.xlu0 %v7070, 28
        %v10786 = vpop.permute.xlu0 %10785
        %10787 = vrot.lane.b32.xlu0 %v7168, 28
        %v10788 = vpop.permute.xlu0 %10787
        %10789 = vrot.lane.b32.xlu0 %v7266, 28
        %v10790 = vpop.permute.xlu0 %10789
        %10919 = vrot.lane.b32.xlu0 %v1096, 30
        %v10920 = vpop.permute.xlu0 %10919
        %10921 = vrot.lane.b32.xlu0 %v1194, 30
        %v10922 = vpop.permute.xlu0 %10921
        %10923 = vrot.lane.b32.xlu0 %v1292, 30
        %v10924 = vpop.permute.xlu0 %10923
        %10925 = vrot.lane.b32.xlu0 %v1390, 30
        %v10926 = vpop.permute.xlu0 %10925
        %10927 = vrot.lane.b32.xlu0 %v1488, 30
        %v10928 = vpop.permute.xlu0 %10927
        %10929 = vrot.lane.b32.xlu0 %v1586, 30
        %v10930 = vpop.permute.xlu0 %10929
        %10931 = vrot.lane.b32.xlu0 %v1684, 30
        %v10932 = vpop.permute.xlu0 %10931
        %10933 = vrot.lane.b32.xlu0 %v1782, 30
        %v10934 = vpop.permute.xlu0 %10933
        %10935 = vrot.lane.b32.xlu0 %v1880, 30
        %v10936 = vpop.permute.xlu0 %10935
        %10937 = vrot.lane.b32.xlu0 %v1978, 30
        %v10938 = vpop.permute.xlu0 %10937
        %10939 = vrot.lane.b32.xlu0 %v2076, 30
        %v10940 = vpop.permute.xlu0 %10939
        %10941 = vrot.lane.b32.xlu0 %v2174, 30
        %v10942 = vpop.permute.xlu0 %10941
        %10943 = vrot.lane.b32.xlu0 %v2272, 30
        %v10944 = vpop.permute.xlu0 %10943
        %10945 = vrot.lane.b32.xlu0 %v2370, 30
        %v10946 = vpop.permute.xlu0 %10945
        %10947 = vrot.lane.b32.xlu0 %v2468, 30
        %v10948 = vpop.permute.xlu0 %10947
        %10949 = vrot.lane.b32.xlu0 %v2566, 30
        %v10950 = vpop.permute.xlu0 %10949
        %10951 = vrot.lane.b32.xlu0 %v2664, 30
        %v10952 = vpop.permute.xlu0 %10951
        %10953 = vrot.lane.b32.xlu0 %v2762, 30
        %v10954 = vpop.permute.xlu0 %10953
        %10955 = vrot.lane.b32.xlu0 %v2860, 30
        %v10956 = vpop.permute.xlu0 %10955
        %10957 = vrot.lane.b32.xlu0 %v2958, 30
        %v10958 = vpop.permute.xlu0 %10957
        %10959 = vrot.lane.b32.xlu0 %v3056, 30
        %v10960 = vpop.permute.xlu0 %10959
        %10961 = vrot.lane.b32.xlu0 %v3154, 30
        %v10962 = vpop.permute.xlu0 %10961
        %10963 = vrot.lane.b32.xlu0 %v3252, 30
        %v10964 = vpop.permute.xlu0 %10963
        %10965 = vrot.lane.b32.xlu0 %v3350, 30
        %v10966 = vpop.permute.xlu0 %10965
        %10967 = vrot.lane.b32.xlu0 %v3448, 30
        %v10968 = vpop.permute.xlu0 %10967
        %10969 = vrot.lane.b32.xlu0 %v3546, 30
        %v10970 = vpop.permute.xlu0 %10969
        %10971 = vrot.lane.b32.xlu0 %v3644, 30
        %v10972 = vpop.permute.xlu0 %10971
        %10973 = vrot.lane.b32.xlu0 %v3742, 30
        %v10974 = vpop.permute.xlu0 %10973
        %10975 = vrot.lane.b32.xlu0 %v3840, 30
        %v10976 = vpop.permute.xlu0 %10975
        %10977 = vrot.lane.b32.xlu0 %v3938, 30
        %v10978 = vpop.permute.xlu0 %10977
        %10979 = vrot.lane.b32.xlu0 %v4036, 30
        %v10980 = vpop.permute.xlu0 %10979
        %10981 = vrot.lane.b32.xlu0 %v4134, 30
        %v10982 = vpop.permute.xlu0 %10981
        %10983 = vrot.lane.b32.xlu0 %v4232, 30
        %v10984 = vpop.permute.xlu0 %10983
        %10985 = vrot.lane.b32.xlu0 %v4330, 30
        %v10986 = vpop.permute.xlu0 %10985
        %10987 = vrot.lane.b32.xlu0 %v4428, 30
        %v10988 = vpop.permute.xlu0 %10987
        %10989 = vrot.lane.b32.xlu0 %v4526, 30
        %v10990 = vpop.permute.xlu0 %10989
        %10991 = vrot.lane.b32.xlu0 %v4624, 30
        %v10992 = vpop.permute.xlu0 %10991
        %10993 = vrot.lane.b32.xlu0 %v4722, 30
        %v10994 = vpop.permute.xlu0 %10993
        %10995 = vrot.lane.b32.xlu0 %v4820, 30
        %v10996 = vpop.permute.xlu0 %10995
        %10997 = vrot.lane.b32.xlu0 %v4918, 30
        %v10998 = vpop.permute.xlu0 %10997
        %10999 = vrot.lane.b32.xlu0 %v5016, 30
        %v11000 = vpop.permute.xlu0 %10999
        %11001 = vrot.lane.b32.xlu0 %v5114, 30
        %v11002 = vpop.permute.xlu0 %11001
        %11003 = vrot.lane.b32.xlu0 %v5212, 30
        %v11004 = vpop.permute.xlu0 %11003
        %11005 = vrot.lane.b32.xlu0 %v5310, 30
        %v11006 = vpop.permute.xlu0 %11005
        %11007 = vrot.lane.b32.xlu0 %v5408, 30
        %v11008 = vpop.permute.xlu0 %11007
        %11009 = vrot.lane.b32.xlu0 %v5506, 30
        %v11010 = vpop.permute.xlu0 %11009
        %11011 = vrot.lane.b32.xlu0 %v5604, 30
        %v11012 = vpop.permute.xlu0 %11011
        %11013 = vrot.lane.b32.xlu0 %v5702, 30
        %v11014 = vpop.permute.xlu0 %11013
        %11015 = vrot.lane.b32.xlu0 %v5800, 30
        %v11016 = vpop.permute.xlu0 %11015
        %11017 = vrot.lane.b32.xlu0 %v5898, 30
        %v11018 = vpop.permute.xlu0 %11017
        %11019 = vrot.lane.b32.xlu0 %v5996, 30
        %v11020 = vpop.permute.xlu0 %11019
        %11021 = vrot.lane.b32.xlu0 %v6094, 30
        %v11022 = vpop.permute.xlu0 %11021
        %11023 = vrot.lane.b32.xlu0 %v6192, 30
        %v11024 = vpop.permute.xlu0 %11023
        %11025 = vrot.lane.b32.xlu0 %v6290, 30
        %v11026 = vpop.permute.xlu0 %11025
        %11027 = vrot.lane.b32.xlu0 %v6388, 30
        %v11028 = vpop.permute.xlu0 %11027
        %11029 = vrot.lane.b32.xlu0 %v6486, 30
        %v11030 = vpop.permute.xlu0 %11029
        %11031 = vrot.lane.b32.xlu0 %v6584, 30
        %v11032 = vpop.permute.xlu0 %11031
        %11033 = vrot.lane.b32.xlu0 %v6682, 30
        %v11034 = vpop.permute.xlu0 %11033
        %11035 = vrot.lane.b32.xlu0 %v6780, 30
        %v11036 = vpop.permute.xlu0 %11035
        %11037 = vrot.lane.b32.xlu0 %v6878, 30
        %v11038 = vpop.permute.xlu0 %11037
        %11039 = vrot.lane.b32.xlu0 %v6976, 30
        %v11040 = vpop.permute.xlu0 %11039
        %11041 = vrot.lane.b32.xlu0 %v7074, 30
        %v11042 = vpop.permute.xlu0 %11041
        %11043 = vrot.lane.b32.xlu0 %v7172, 30
        %v11044 = vpop.permute.xlu0 %11043
        %11045 = vrot.lane.b32.xlu0 %v7270, 30
        %v11046 = vpop.permute.xlu0 %11045
        %vm11111 = vcmask 15360
        %v11112 = vsel %vm11111, %v1021, %v7336
        %v11113 = vsel %vm11111, %v1119, %v7338
        %v11114 = vsel %vm11111, %v1217, %v7340
        %v11115 = vsel %vm11111, %v1315, %v7342
        %v11116 = vsel %vm11111, %v1413, %v7344
        %v11117 = vsel %vm11111, %v1511, %v7346
        %v11118 = vsel %vm11111, %v1609, %v7348
        %v11119 = vsel %vm11111, %v1707, %v7350
        %v11120 = vsel %vm11111, %v1805, %v7352
        %v11121 = vsel %vm11111, %v1903, %v7354
        %v11122 = vsel %vm11111, %v2001, %v7356
        %v11123 = vsel %vm11111, %v2099, %v7358
        %v11124 = vsel %vm11111, %v2197, %v7360
        %v11125 = vsel %vm11111, %v2295, %v7362
        %v11126 = vsel %vm11111, %v2393, %v7364
        %v11127 = vsel %vm11111, %v2491, %v7366
        %v11128 = vsel %vm11111, %v2589, %v7368
        %v11129 = vsel %vm11111, %v2687, %v7370
        %v11130 = vsel %vm11111, %v2785, %v7372
        %v11131 = vsel %vm11111, %v2883, %v7374
        %v11132 = vsel %vm11111, %v2981, %v7376
        %v11133 = vsel %vm11111, %v3079, %v7378
        %v11134 = vsel %vm11111, %v3177, %v7380
        %v11135 = vsel %vm11111, %v3275, %v7382
        %v11136 = vsel %vm11111, %v3373, %v7384
        %v11137 = vsel %vm11111, %v3471, %v7386
        %v11138 = vsel %vm11111, %v3569, %v7388
        %v11139 = vsel %vm11111, %v3667, %v7390
        %v11140 = vsel %vm11111, %v3765, %v7392
        %v11141 = vsel %vm11111, %v3863, %v7394
        %v11142 = vsel %vm11111, %v3961, %v7396
        %v11143 = vsel %vm11111, %v4059, %v7398
        %v11144 = vsel %vm11111, %v4157, %v7400
        %v11145 = vsel %vm11111, %v4255, %v7402
        %v11146 = vsel %vm11111, %v4353, %v7404
        %v11147 = vsel %vm11111, %v4451, %v7406
        %v11148 = vsel %vm11111, %v4549, %v7408
        %v11149 = vsel %vm11111, %v4647, %v7410
        %v11150 = vsel %vm11111, %v4745, %v7412
        %v11151 = vsel %vm11111, %v4843, %v7414
        %v11152 = vsel %vm11111, %v4941, %v7416
        %v11153 = vsel %vm11111, %v5039, %v7418
        %v11154 = vsel %vm11111, %v5137, %v7420
        %v11155 = vsel %vm11111, %v5235, %v7422
        %v11156 = vsel %vm11111, %v5333, %v7424
        %v11157 = vsel %vm11111, %v5431, %v7426
        %v11158 = vsel %vm11111, %v5529, %v7428
        %v11159 = vsel %vm11111, %v5627, %v7430
        %v11160 = vsel %vm11111, %v5725, %v7432
        %v11161 = vsel %vm11111, %v5823, %v7434
        %v11162 = vsel %vm11111, %v5921, %v7436
        %v11163 = vsel %vm11111, %v6019, %v7438
        %v11164 = vsel %vm11111, %v6117, %v7440
        %v11165 = vsel %vm11111, %v6215, %v7442
        %v11166 = vsel %vm11111, %v6313, %v7444
        %v11167 = vsel %vm11111, %v6411, %v7446
        %v11168 = vsel %vm11111, %v6509, %v7448
        %v11169 = vsel %vm11111, %v6607, %v7450
        %v11170 = vsel %vm11111, %v6705, %v7452
        %v11171 = vsel %vm11111, %v6803, %v7454
        %v11172 = vsel %vm11111, %v6901, %v7456
        %v11173 = vsel %vm11111, %v6999, %v7458
        %v11174 = vsel %vm11111, %v7097, %v7460
        %v11175 = vsel %vm11111, %v7195, %v7462
        %vm11176 = vcmask 31744
        %v11177 = vsel %vm11176, %v11112, %v7592
        %v11178 = vsel %vm11176, %v11113, %v7594
        %v11179 = vsel %vm11176, %v11114, %v7596
        %v11180 = vsel %vm11176, %v11115, %v7598
        %v11181 = vsel %vm11176, %v11116, %v7600
        %v11182 = vsel %vm11176, %v11117, %v7602
        %v11183 = vsel %vm11176, %v11118, %v7604
        %v11184 = vsel %vm11176, %v11119, %v7606
        %v11185 = vsel %vm11176, %v11120, %v7608
        %v11186 = vsel %vm11176, %v11121, %v7610
        %v11187 = vsel %vm11176, %v11122, %v7612
        %v11188 = vsel %vm11176, %v11123, %v7614
        %v11189 = vsel %vm11176, %v11124, %v7616
        %v11190 = vsel %vm11176, %v11125, %v7618
        %v11191 = vsel %vm11176, %v11126, %v7620
        %v11192 = vsel %vm11176, %v11127, %v7622
        %v11193 = vsel %vm11176, %v11128, %v7624
        %v11194 = vsel %vm11176, %v11129, %v7626
        %v11195 = vsel %vm11176, %v11130, %v7628
        %v11196 = vsel %vm11176, %v11131, %v7630
        %v11197 = vsel %vm11176, %v11132, %v7632
        %v11198 = vsel %vm11176, %v11133, %v7634
        %v11199 = vsel %vm11176, %v11134, %v7636
        %v11200 = vsel %vm11176, %v11135, %v7638
        %v11201 = vsel %vm11176, %v11136, %v7640
        %v11202 = vsel %vm11176, %v11137, %v7642
        %v11203 = vsel %vm11176, %v11138, %v7644
        %v11204 = vsel %vm11176, %v11139, %v7646
        %v11205 = vsel %vm11176, %v11140, %v7648
        %v11206 = vsel %vm11176, %v11141, %v7650
        %v11207 = vsel %vm11176, %v11142, %v7652
        %v11208 = vsel %vm11176, %v11143, %v7654
        %v11209 = vsel %vm11176, %v11144, %v7656
        %v11210 = vsel %vm11176, %v11145, %v7658
        %v11211 = vsel %vm11176, %v11146, %v7660
        %v11212 = vsel %vm11176, %v11147, %v7662
        %v11213 = vsel %vm11176, %v11148, %v7664
        %v11214 = vsel %vm11176, %v11149, %v7666
        %v11215 = vsel %vm11176, %v11150, %v7668
        %v11216 = vsel %vm11176, %v11151, %v7670
        %v11217 = vsel %vm11176, %v11152, %v7672
        %v11218 = vsel %vm11176, %v11153, %v7674
        %v11219 = vsel %vm11176, %v11154, %v7676
        %v11220 = vsel %vm11176, %v11155, %v7678
        %v11221 = vsel %vm11176, %v11156, %v7680
        %v11222 = vsel %vm11176, %v11157, %v7682
        %v11223 = vsel %vm11176, %v11158, %v7684
        %v11224 = vsel %vm11176, %v11159, %v7686
        %v11225 = vsel %vm11176, %v11160, %v7688
        %v11226 = vsel %vm11176, %v11161, %v7690
        %v11227 = vsel %vm11176, %v11162, %v7692
        %v11228 = vsel %vm11176, %v11163, %v7694
        %v11229 = vsel %vm11176, %v11164, %v7696
        %v11230 = vsel %vm11176, %v11165, %v7698
        %v11231 = vsel %vm11176, %v11166, %v7700
        %v11232 = vsel %vm11176, %v11167, %v7702
        %v11233 = vsel %vm11176, %v11168, %v7704
        %v11234 = vsel %vm11176, %v11169, %v7706
        %v11235 = vsel %vm11176, %v11170, %v7708
        %v11236 = vsel %vm11176, %v11171, %v7710
        %v11237 = vsel %vm11176, %v11172, %v7712
        %v11238 = vsel %vm11176, %v11173, %v7714
        %v11239 = vsel %vm11176, %v11174, %v7716
        %v11240 = vsel %vm11176, %v11175, %v7718
        %vm11241 = vcmask 48128
        %v11242 = vsel %vm11241, %v11177, %v7848
        %v11243 = vsel %vm11241, %v11178, %v7850
        %v11244 = vsel %vm11241, %v11179, %v7852
        %v11245 = vsel %vm11241, %v11180, %v7854
        %v11246 = vsel %vm11241, %v11181, %v7856
        %v11247 = vsel %vm11241, %v11182, %v7858
        %v11248 = vsel %vm11241, %v11183, %v7860
        %v11249 = vsel %vm11241, %v11184, %v7862
        %v11250 = vsel %vm11241, %v11185, %v7864
        %v11251 = vsel %vm11241, %v11186, %v7866
        %v11252 = vsel %vm11241, %v11187, %v7868
        %v11253 = vsel %vm11241, %v11188, %v7870
        %v11254 = vsel %vm11241, %v11189, %v7872
        %v11255 = vsel %vm11241, %v11190, %v7874
        %v11256 = vsel %vm11241, %v11191, %v7876
        %v11257 = vsel %vm11241, %v11192, %v7878
        %v11258 = vsel %vm11241, %v11193, %v7880
        %v11259 = vsel %vm11241, %v11194, %v7882
        %v11260 = vsel %vm11241, %v11195, %v7884
        %v11261 = vsel %vm11241, %v11196, %v7886
        %v11262 = vsel %vm11241, %v11197, %v7888
        %v11263 = vsel %vm11241, %v11198, %v7890
        %v11264 = vsel %vm11241, %v11199, %v7892
        %v11265 = vsel %vm11241, %v11200, %v7894
        %v11266 = vsel %vm11241, %v11201, %v7896
        %v11267 = vsel %vm11241, %v11202, %v7898
        %v11268 = vsel %vm11241, %v11203, %v7900
        %v11269 = vsel %vm11241, %v11204, %v7902
        %v11270 = vsel %vm11241, %v11205, %v7904
        %v11271 = vsel %vm11241, %v11206, %v7906
        %v11272 = vsel %vm11241, %v11207, %v7908
        %v11273 = vsel %vm11241, %v11208, %v7910
        %v11274 = vsel %vm11241, %v11209, %v7912
        %v11275 = vsel %vm11241, %v11210, %v7914
        %v11276 = vsel %vm11241, %v11211, %v7916
        %v11277 = vsel %vm11241, %v11212, %v7918
        %v11278 = vsel %vm11241, %v11213, %v7920
        %v11279 = vsel %vm11241, %v11214, %v7922
        %v11280 = vsel %vm11241, %v11215, %v7924
        %v11281 = vsel %vm11241, %v11216, %v7926
        %v11282 = vsel %vm11241, %v11217, %v7928
        %v11283 = vsel %vm11241, %v11218, %v7930
        %v11284 = vsel %vm11241, %v11219, %v7932
        %v11285 = vsel %vm11241, %v11220, %v7934
        %v11286 = vsel %vm11241, %v11221, %v7936
        %v11287 = vsel %vm11241, %v11222, %v7938
        %v11288 = vsel %vm11241, %v11223, %v7940
        %v11289 = vsel %vm11241, %v11224, %v7942
        %v11290 = vsel %vm11241, %v11225, %v7944
        %v11291 = vsel %vm11241, %v11226, %v7946
        %v11292 = vsel %vm11241, %v11227, %v7948
        %v11293 = vsel %vm11241, %v11228, %v7950
        %v11294 = vsel %vm11241, %v11229, %v7952
        %v11295 = vsel %vm11241, %v11230, %v7954
        %v11296 = vsel %vm11241, %v11231, %v7956
        %v11297 = vsel %vm11241, %v11232, %v7958
        %v11298 = vsel %vm11241, %v11233, %v7960
        %v11299 = vsel %vm11241, %v11234, %v7962
        %v11300 = vsel %vm11241, %v11235, %v7964
        %v11301 = vsel %vm11241, %v11236, %v7966
        %v11302 = vsel %vm11241, %v11237, %v7968
        %v11303 = vsel %vm11241, %v11238, %v7970
        %v11304 = vsel %vm11241, %v11239, %v7972
        %v11305 = vsel %vm11241, %v11240, %v7974
        %vm11306 = vcmask 64512
        %v11307 = vsel %vm11306, %v11242, %v8104
        %v11308 = vsel %vm11306, %v11243, %v8106
        %v11309 = vsel %vm11306, %v11244, %v8108
        %v11310 = vsel %vm11306, %v11245, %v8110
        %v11311 = vsel %vm11306, %v11246, %v8112
        %v11312 = vsel %vm11306, %v11247, %v8114
        %v11313 = vsel %vm11306, %v11248, %v8116
        %v11314 = vsel %vm11306, %v11249, %v8118
        %v11315 = vsel %vm11306, %v11250, %v8120
        %v11316 = vsel %vm11306, %v11251, %v8122
        %v11317 = vsel %vm11306, %v11252, %v8124
        %v11318 = vsel %vm11306, %v11253, %v8126
        %v11319 = vsel %vm11306, %v11254, %v8128
        %v11320 = vsel %vm11306, %v11255, %v8130
        %v11321 = vsel %vm11306, %v11256, %v8132
        %v11322 = vsel %vm11306, %v11257, %v8134
        %v11323 = vsel %vm11306, %v11258, %v8136
        %v11324 = vsel %vm11306, %v11259, %v8138
        %v11325 = vsel %vm11306, %v11260, %v8140
        %v11326 = vsel %vm11306, %v11261, %v8142
        %v11327 = vsel %vm11306, %v11262, %v8144
        %v11328 = vsel %vm11306, %v11263, %v8146
        %v11329 = vsel %vm11306, %v11264, %v8148
        %v11330 = vsel %vm11306, %v11265, %v8150
        %v11331 = vsel %vm11306, %v11266, %v8152
        %v11332 = vsel %vm11306, %v11267, %v8154
        %v11333 = vsel %vm11306, %v11268, %v8156
        %v11334 = vsel %vm11306, %v11269, %v8158
        %v11335 = vsel %vm11306, %v11270, %v8160
        %v11336 = vsel %vm11306, %v11271, %v8162
        %v11337 = vsel %vm11306, %v11272, %v8164
        %v11338 = vsel %vm11306, %v11273, %v8166
        %v11339 = vsel %vm11306, %v11274, %v8168
        %v11340 = vsel %vm11306, %v11275, %v8170
        %v11341 = vsel %vm11306, %v11276, %v8172
        %v11342 = vsel %vm11306, %v11277, %v8174
        %v11343 = vsel %vm11306, %v11278, %v8176
        %v11344 = vsel %vm11306, %v11279, %v8178
        %v11345 = vsel %vm11306, %v11280, %v8180
        %v11346 = vsel %vm11306, %v11281, %v8182
        %v11347 = vsel %vm11306, %v11282, %v8184
        %v11348 = vsel %vm11306, %v11283, %v8186
        %v11349 = vsel %vm11306, %v11284, %v8188
        %v11350 = vsel %vm11306, %v11285, %v8190
        %v11351 = vsel %vm11306, %v11286, %v8192
        %v11352 = vsel %vm11306, %v11287, %v8194
        %v11353 = vsel %vm11306, %v11288, %v8196
        %v11354 = vsel %vm11306, %v11289, %v8198
        %v11355 = vsel %vm11306, %v11290, %v8200
        %v11356 = vsel %vm11306, %v11291, %v8202
        %v11357 = vsel %vm11306, %v11292, %v8204
        %v11358 = vsel %vm11306, %v11293, %v8206
        %v11359 = vsel %vm11306, %v11294, %v8208
        %v11360 = vsel %vm11306, %v11295, %v8210
        %v11361 = vsel %vm11306, %v11296, %v8212
        %v11362 = vsel %vm11306, %v11297, %v8214
        %v11363 = vsel %vm11306, %v11298, %v8216
        %v11364 = vsel %vm11306, %v11299, %v8218
        %v11365 = vsel %vm11306, %v11300, %v8220
        %v11366 = vsel %vm11306, %v11301, %v8222
        %v11367 = vsel %vm11306, %v11302, %v8224
        %v11368 = vsel %vm11306, %v11303, %v8226
        %v11369 = vsel %vm11306, %v11304, %v8228
        %v11370 = vsel %vm11306, %v11305, %v8230
        %vm11371 = vcmask 80896
        %v11372 = vsel %vm11371, %v11307, %v8360
        %v11373 = vsel %vm11371, %v11308, %v8362
        %v11374 = vsel %vm11371, %v11309, %v8364
        %v11375 = vsel %vm11371, %v11310, %v8366
        %v11376 = vsel %vm11371, %v11311, %v8368
        %v11377 = vsel %vm11371, %v11312, %v8370
        %v11378 = vsel %vm11371, %v11313, %v8372
        %v11379 = vsel %vm11371, %v11314, %v8374
        %v11380 = vsel %vm11371, %v11315, %v8376
        %v11381 = vsel %vm11371, %v11316, %v8378
        %v11382 = vsel %vm11371, %v11317, %v8380
        %v11383 = vsel %vm11371, %v11318, %v8382
        %v11384 = vsel %vm11371, %v11319, %v8384
        %v11385 = vsel %vm11371, %v11320, %v8386
        %v11386 = vsel %vm11371, %v11321, %v8388
        %v11387 = vsel %vm11371, %v11322, %v8390
        %v11388 = vsel %vm11371, %v11323, %v8392
        %v11389 = vsel %vm11371, %v11324, %v8394
        %v11390 = vsel %vm11371, %v11325, %v8396
        %v11391 = vsel %vm11371, %v11326, %v8398
        %v11392 = vsel %vm11371, %v11327, %v8400
        %v11393 = vsel %vm11371, %v11328, %v8402
        %v11394 = vsel %vm11371, %v11329, %v8404
        %v11395 = vsel %vm11371, %v11330, %v8406
        %v11396 = vsel %vm11371, %v11331, %v8408
        %v11397 = vsel %vm11371, %v11332, %v8410
        %v11398 = vsel %vm11371, %v11333, %v8412
        %v11399 = vsel %vm11371, %v11334, %v8414
        %v11400 = vsel %vm11371, %v11335, %v8416
        %v11401 = vsel %vm11371, %v11336, %v8418
        %v11402 = vsel %vm11371, %v11337, %v8420
        %v11403 = vsel %vm11371, %v11338, %v8422
        %v11404 = vsel %vm11371, %v11339, %v8424
        %v11405 = vsel %vm11371, %v11340, %v8426
        %v11406 = vsel %vm11371, %v11341, %v8428
        %v11407 = vsel %vm11371, %v11342, %v8430
        %v11408 = vsel %vm11371, %v11343, %v8432
        %v11409 = vsel %vm11371, %v11344, %v8434
        %v11410 = vsel %vm11371, %v11345, %v8436
        %v11411 = vsel %vm11371, %v11346, %v8438
        %v11412 = vsel %vm11371, %v11347, %v8440
        %v11413 = vsel %vm11371, %v11348, %v8442
        %v11414 = vsel %vm11371, %v11349, %v8444
        %v11415 = vsel %vm11371, %v11350, %v8446
        %v11416 = vsel %vm11371, %v11351, %v8448
        %v11417 = vsel %vm11371, %v11352, %v8450
        %v11418 = vsel %vm11371, %v11353, %v8452
        %v11419 = vsel %vm11371, %v11354, %v8454
        %v11420 = vsel %vm11371, %v11355, %v8456
        %v11421 = vsel %vm11371, %v11356, %v8458
        %v11422 = vsel %vm11371, %v11357, %v8460
        %v11423 = vsel %vm11371, %v11358, %v8462
        %v11424 = vsel %vm11371, %v11359, %v8464
        %v11425 = vsel %vm11371, %v11360, %v8466
        %v11426 = vsel %vm11371, %v11361, %v8468
        %v11427 = vsel %vm11371, %v11362, %v8470
        %v11428 = vsel %vm11371, %v11363, %v8472
        %v11429 = vsel %vm11371, %v11364, %v8474
        %v11430 = vsel %vm11371, %v11365, %v8476
        %v11431 = vsel %vm11371, %v11366, %v8478
        %v11432 = vsel %vm11371, %v11367, %v8480
        %v11433 = vsel %vm11371, %v11368, %v8482
        %v11434 = vsel %vm11371, %v11369, %v8484
        %v11435 = vsel %vm11371, %v11370, %v8486
        %vm11436 = vcmask 97280
        %v11437 = vsel %vm11436, %v11372, %v8616
        %v11438 = vsel %vm11436, %v11373, %v8618
        %v11439 = vsel %vm11436, %v11374, %v8620
        %v11440 = vsel %vm11436, %v11375, %v8622
        %v11441 = vsel %vm11436, %v11376, %v8624
        %v11442 = vsel %vm11436, %v11377, %v8626
        %v11443 = vsel %vm11436, %v11378, %v8628
        %v11444 = vsel %vm11436, %v11379, %v8630
        %v11445 = vsel %vm11436, %v11380, %v8632
        %v11446 = vsel %vm11436, %v11381, %v8634
        %v11447 = vsel %vm11436, %v11382, %v8636
        %v11448 = vsel %vm11436, %v11383, %v8638
        %v11449 = vsel %vm11436, %v11384, %v8640
        %v11450 = vsel %vm11436, %v11385, %v8642
        %v11451 = vsel %vm11436, %v11386, %v8644
        %v11452 = vsel %vm11436, %v11387, %v8646
        %v11453 = vsel %vm11436, %v11388, %v8648
        %v11454 = vsel %vm11436, %v11389, %v8650
        %v11455 = vsel %vm11436, %v11390, %v8652
        %v11456 = vsel %vm11436, %v11391, %v8654
        %v11457 = vsel %vm11436, %v11392, %v8656
        %v11458 = vsel %vm11436, %v11393, %v8658
        %v11459 = vsel %vm11436, %v11394, %v8660
        %v11460 = vsel %vm11436, %v11395, %v8662
        %v11461 = vsel %vm11436, %v11396, %v8664
        %v11462 = vsel %vm11436, %v11397, %v8666
        %v11463 = vsel %vm11436, %v11398, %v8668
        %v11464 = vsel %vm11436, %v11399, %v8670
        %v11465 = vsel %vm11436, %v11400, %v8672
        %v11466 = vsel %vm11436, %v11401, %v8674
        %v11467 = vsel %vm11436, %v11402, %v8676
        %v11468 = vsel %vm11436, %v11403, %v8678
        %v11469 = vsel %vm11436, %v11404, %v8680
        %v11470 = vsel %vm11436, %v11405, %v8682
        %v11471 = vsel %vm11436, %v11406, %v8684
        %v11472 = vsel %vm11436, %v11407, %v8686
        %v11473 = vsel %vm11436, %v11408, %v8688
        %v11474 = vsel %vm11436, %v11409, %v8690
        %v11475 = vsel %vm11436, %v11410, %v8692
        %v11476 = vsel %vm11436, %v11411, %v8694
        %v11477 = vsel %vm11436, %v11412, %v8696
        %v11478 = vsel %vm11436, %v11413, %v8698
        %v11479 = vsel %vm11436, %v11414, %v8700
        %v11480 = vsel %vm11436, %v11415, %v8702
        %v11481 = vsel %vm11436, %v11416, %v8704
        %v11482 = vsel %vm11436, %v11417, %v8706
        %v11483 = vsel %vm11436, %v11418, %v8708
        %v11484 = vsel %vm11436, %v11419, %v8710
        %v11485 = vsel %vm11436, %v11420, %v8712
        %v11486 = vsel %vm11436, %v11421, %v8714
        %v11487 = vsel %vm11436, %v11422, %v8716
        %v11488 = vsel %vm11436, %v11423, %v8718
        %v11489 = vsel %vm11436, %v11424, %v8720
        %v11490 = vsel %vm11436, %v11425, %v8722
        %v11491 = vsel %vm11436, %v11426, %v8724
        %v11492 = vsel %vm11436, %v11427, %v8726
        %v11493 = vsel %vm11436, %v11428, %v8728
        %v11494 = vsel %vm11436, %v11429, %v8730
        %v11495 = vsel %vm11436, %v11430, %v8732
        %v11496 = vsel %vm11436, %v11431, %v8734
        %v11497 = vsel %vm11436, %v11432, %v8736
        %v11498 = vsel %vm11436, %v11433, %v8738
        %v11499 = vsel %vm11436, %v11434, %v8740
        %v11500 = vsel %vm11436, %v11435, %v8742
        %vm11501 = vcmask 113664
        %v11502 = vsel %vm11501, %v11437, %v8872
        %v11503 = vsel %vm11501, %v11438, %v8874
        %v11504 = vsel %vm11501, %v11439, %v8876
        %v11505 = vsel %vm11501, %v11440, %v8878
        %v11506 = vsel %vm11501, %v11441, %v8880
        %v11507 = vsel %vm11501, %v11442, %v8882
        %v11508 = vsel %vm11501, %v11443, %v8884
        %v11509 = vsel %vm11501, %v11444, %v8886
        %v11510 = vsel %vm11501, %v11445, %v8888
        %v11511 = vsel %vm11501, %v11446, %v8890
        %v11512 = vsel %vm11501, %v11447, %v8892
        %v11513 = vsel %vm11501, %v11448, %v8894
        %v11514 = vsel %vm11501, %v11449, %v8896
        %v11515 = vsel %vm11501, %v11450, %v8898
        %v11516 = vsel %vm11501, %v11451, %v8900
        %v11517 = vsel %vm11501, %v11452, %v8902
        %v11518 = vsel %vm11501, %v11453, %v8904
        %v11519 = vsel %vm11501, %v11454, %v8906
        %v11520 = vsel %vm11501, %v11455, %v8908
        %v11521 = vsel %vm11501, %v11456, %v8910
        %v11522 = vsel %vm11501, %v11457, %v8912
        %v11523 = vsel %vm11501, %v11458, %v8914
        %v11524 = vsel %vm11501, %v11459, %v8916
        %v11525 = vsel %vm11501, %v11460, %v8918
        %v11526 = vsel %vm11501, %v11461, %v8920
        %v11527 = vsel %vm11501, %v11462, %v8922
        %v11528 = vsel %vm11501, %v11463, %v8924
        %v11529 = vsel %vm11501, %v11464, %v8926
        %v11530 = vsel %vm11501, %v11465, %v8928
        %v11531 = vsel %vm11501, %v11466, %v8930
        %v11532 = vsel %vm11501, %v11467, %v8932
        %v11533 = vsel %vm11501, %v11468, %v8934
        %v11534 = vsel %vm11501, %v11469, %v8936
        %v11535 = vsel %vm11501, %v11470, %v8938
        %v11536 = vsel %vm11501, %v11471, %v8940
        %v11537 = vsel %vm11501, %v11472, %v8942
        %v11538 = vsel %vm11501, %v11473, %v8944
        %v11539 = vsel %vm11501, %v11474, %v8946
        %v11540 = vsel %vm11501, %v11475, %v8948
        %v11541 = vsel %vm11501, %v11476, %v8950
        %v11542 = vsel %vm11501, %v11477, %v8952
        %v11543 = vsel %vm11501, %v11478, %v8954
        %v11544 = vsel %vm11501, %v11479, %v8956
        %v11545 = vsel %vm11501, %v11480, %v8958
        %v11546 = vsel %vm11501, %v11481, %v8960
        %v11547 = vsel %vm11501, %v11482, %v8962
        %v11548 = vsel %vm11501, %v11483, %v8964
        %v11549 = vsel %vm11501, %v11484, %v8966
        %v11550 = vsel %vm11501, %v11485, %v8968
        %v11551 = vsel %vm11501, %v11486, %v8970
        %v11552 = vsel %vm11501, %v11487, %v8972
        %v11553 = vsel %vm11501, %v11488, %v8974
        %v11554 = vsel %vm11501, %v11489, %v8976
        %v11555 = vsel %vm11501, %v11490, %v8978
        %v11556 = vsel %vm11501, %v11491, %v8980
        %v11557 = vsel %vm11501, %v11492, %v8982
        %v11558 = vsel %vm11501, %v11493, %v8984
        %v11559 = vsel %vm11501, %v11494, %v8986
        %v11560 = vsel %vm11501, %v11495, %v8988
        %v11561 = vsel %vm11501, %v11496, %v8990
        %v11562 = vsel %vm11501, %v11497, %v8992
        %v11563 = vsel %vm11501, %v11498, %v8994
        %v11564 = vsel %vm11501, %v11499, %v8996
        %v11565 = vsel %vm11501, %v11500, %v8998
        %vm11566 = vcmask 130048
        %v11567 = vsel %vm11566, %v11502, %v9128
        %v11568 = vsel %vm11566, %v11503, %v9130
        %v11569 = vsel %vm11566, %v11504, %v9132
        %v11570 = vsel %vm11566, %v11505, %v9134
        %v11571 = vsel %vm11566, %v11506, %v9136
        %v11572 = vsel %vm11566, %v11507, %v9138
        %v11573 = vsel %vm11566, %v11508, %v9140
        %v11574 = vsel %vm11566, %v11509, %v9142
        %v11575 = vsel %vm11566, %v11510, %v9144
        %v11576 = vsel %vm11566, %v11511, %v9146
        %v11577 = vsel %vm11566, %v11512, %v9148
        %v11578 = vsel %vm11566, %v11513, %v9150
        %v11579 = vsel %vm11566, %v11514, %v9152
        %v11580 = vsel %vm11566, %v11515, %v9154
        %v11581 = vsel %vm11566, %v11516, %v9156
        %v11582 = vsel %vm11566, %v11517, %v9158
        %v11583 = vsel %vm11566, %v11518, %v9160
        %v11584 = vsel %vm11566, %v11519, %v9162
        %v11585 = vsel %vm11566, %v11520, %v9164
        %v11586 = vsel %vm11566, %v11521, %v9166
        %v11587 = vsel %vm11566, %v11522, %v9168
        %v11588 = vsel %vm11566, %v11523, %v9170
        %v11589 = vsel %vm11566, %v11524, %v9172
        %v11590 = vsel %vm11566, %v11525, %v9174
        %v11591 = vsel %vm11566, %v11526, %v9176
        %v11592 = vsel %vm11566, %v11527, %v9178
        %v11593 = vsel %vm11566, %v11528, %v9180
        %v11594 = vsel %vm11566, %v11529, %v9182
        %v11595 = vsel %vm11566, %v11530, %v9184
        %v11596 = vsel %vm11566, %v11531, %v9186
        %v11597 = vsel %vm11566, %v11532, %v9188
        %v11598 = vsel %vm11566, %v11533, %v9190
        %v11599 = vsel %vm11566, %v11534, %v9192
        %v11600 = vsel %vm11566, %v11535, %v9194
        %v11601 = vsel %vm11566, %v11536, %v9196
        %v11602 = vsel %vm11566, %v11537, %v9198
        %v11603 = vsel %vm11566, %v11538, %v9200
        %v11604 = vsel %vm11566, %v11539, %v9202
        %v11605 = vsel %vm11566, %v11540, %v9204
        %v11606 = vsel %vm11566, %v11541, %v9206
        %v11607 = vsel %vm11566, %v11542, %v9208
        %v11608 = vsel %vm11566, %v11543, %v9210
        %v11609 = vsel %vm11566, %v11544, %v9212
        %v11610 = vsel %vm11566, %v11545, %v9214
        %v11611 = vsel %vm11566, %v11546, %v9216
        %v11612 = vsel %vm11566, %v11547, %v9218
        %v11613 = vsel %vm11566, %v11548, %v9220
        %v11614 = vsel %vm11566, %v11549, %v9222
        %v11615 = vsel %vm11566, %v11550, %v9224
        %v11616 = vsel %vm11566, %v11551, %v9226
        %v11617 = vsel %vm11566, %v11552, %v9228
        %v11618 = vsel %vm11566, %v11553, %v9230
        %v11619 = vsel %vm11566, %v11554, %v9232
        %v11620 = vsel %vm11566, %v11555, %v9234
        %v11621 = vsel %vm11566, %v11556, %v9236
        %v11622 = vsel %vm11566, %v11557, %v9238
        %v11623 = vsel %vm11566, %v11558, %v9240
        %v11624 = vsel %vm11566, %v11559, %v9242
        %v11625 = vsel %vm11566, %v11560, %v9244
        %v11626 = vsel %vm11566, %v11561, %v9246
        %v11627 = vsel %vm11566, %v11562, %v9248
        %v11628 = vsel %vm11566, %v11563, %v9250
        %v11629 = vsel %vm11566, %v11564, %v9252
        %v11630 = vsel %vm11566, %v11565, %v9254
        %vm11631 = vcmask 146432
        %v11632 = vsel %vm11631, %v11567, %v9384
        %v11633 = vsel %vm11631, %v11568, %v9386
        %v11634 = vsel %vm11631, %v11569, %v9388
        %v11635 = vsel %vm11631, %v11570, %v9390
        %v11636 = vsel %vm11631, %v11571, %v9392
        %v11637 = vsel %vm11631, %v11572, %v9394
        %v11638 = vsel %vm11631, %v11573, %v9396
        %v11639 = vsel %vm11631, %v11574, %v9398
        %v11640 = vsel %vm11631, %v11575, %v9400
        %v11641 = vsel %vm11631, %v11576, %v9402
        %v11642 = vsel %vm11631, %v11577, %v9404
        %v11643 = vsel %vm11631, %v11578, %v9406
        %v11644 = vsel %vm11631, %v11579, %v9408
        %v11645 = vsel %vm11631, %v11580, %v9410
        %v11646 = vsel %vm11631, %v11581, %v9412
        %v11647 = vsel %vm11631, %v11582, %v9414
        %v11648 = vsel %vm11631, %v11583, %v9416
        %v11649 = vsel %vm11631, %v11584, %v9418
        %v11650 = vsel %vm11631, %v11585, %v9420
        %v11651 = vsel %vm11631, %v11586, %v9422
        %v11652 = vsel %vm11631, %v11587, %v9424
        %v11653 = vsel %vm11631, %v11588, %v9426
        %v11654 = vsel %vm11631, %v11589, %v9428
        %v11655 = vsel %vm11631, %v11590, %v9430
        %v11656 = vsel %vm11631, %v11591, %v9432
        %v11657 = vsel %vm11631, %v11592, %v9434
        %v11658 = vsel %vm11631, %v11593, %v9436
        %v11659 = vsel %vm11631, %v11594, %v9438
        %v11660 = vsel %vm11631, %v11595, %v9440
        %v11661 = vsel %vm11631, %v11596, %v9442
        %v11662 = vsel %vm11631, %v11597, %v9444
        %v11663 = vsel %vm11631, %v11598, %v9446
        %v11664 = vsel %vm11631, %v11599, %v9448
        %v11665 = vsel %vm11631, %v11600, %v9450
        %v11666 = vsel %vm11631, %v11601, %v9452
        %v11667 = vsel %vm11631, %v11602, %v9454
        %v11668 = vsel %vm11631, %v11603, %v9456
        %v11669 = vsel %vm11631, %v11604, %v9458
        %v11670 = vsel %vm11631, %v11605, %v9460
        %v11671 = vsel %vm11631, %v11606, %v9462
        %v11672 = vsel %vm11631, %v11607, %v9464
        %v11673 = vsel %vm11631, %v11608, %v9466
        %v11674 = vsel %vm11631, %v11609, %v9468
        %v11675 = vsel %vm11631, %v11610, %v9470
        %v11676 = vsel %vm11631, %v11611, %v9472
        %v11677 = vsel %vm11631, %v11612, %v9474
        %v11678 = vsel %vm11631, %v11613, %v9476
        %v11679 = vsel %vm11631, %v11614, %v9478
        %v11680 = vsel %vm11631, %v11615, %v9480
        %v11681 = vsel %vm11631, %v11616, %v9482
        %v11682 = vsel %vm11631, %v11617, %v9484
        %v11683 = vsel %vm11631, %v11618, %v9486
        %v11684 = vsel %vm11631, %v11619, %v9488
        %v11685 = vsel %vm11631, %v11620, %v9490
        %v11686 = vsel %vm11631, %v11621, %v9492
        %v11687 = vsel %vm11631, %v11622, %v9494
        %v11688 = vsel %vm11631, %v11623, %v9496
        %v11689 = vsel %vm11631, %v11624, %v9498
        %v11690 = vsel %vm11631, %v11625, %v9500
        %v11691 = vsel %vm11631, %v11626, %v9502
        %v11692 = vsel %vm11631, %v11627, %v9504
        %v11693 = vsel %vm11631, %v11628, %v9506
        %v11694 = vsel %vm11631, %v11629, %v9508
        %v11695 = vsel %vm11631, %v11630, %v9510
        %vm11696 = vcmask 162816
        %v11697 = vsel %vm11696, %v11632, %v9640
        %v11698 = vsel %vm11696, %v11633, %v9642
        %v11699 = vsel %vm11696, %v11634, %v9644
        %v11700 = vsel %vm11696, %v11635, %v9646
        %v11701 = vsel %vm11696, %v11636, %v9648
        %v11702 = vsel %vm11696, %v11637, %v9650
        %v11703 = vsel %vm11696, %v11638, %v9652
        %v11704 = vsel %vm11696, %v11639, %v9654
        %v11705 = vsel %vm11696, %v11640, %v9656
        %v11706 = vsel %vm11696, %v11641, %v9658
        %v11707 = vsel %vm11696, %v11642, %v9660
        %v11708 = vsel %vm11696, %v11643, %v9662
        %v11709 = vsel %vm11696, %v11644, %v9664
        %v11710 = vsel %vm11696, %v11645, %v9666
        %v11711 = vsel %vm11696, %v11646, %v9668
        %v11712 = vsel %vm11696, %v11647, %v9670
        %v11713 = vsel %vm11696, %v11648, %v9672
        %v11714 = vsel %vm11696, %v11649, %v9674
        %v11715 = vsel %vm11696, %v11650, %v9676
        %v11716 = vsel %vm11696, %v11651, %v9678
        %v11717 = vsel %vm11696, %v11652, %v9680
        %v11718 = vsel %vm11696, %v11653, %v9682
        %v11719 = vsel %vm11696, %v11654, %v9684
        %v11720 = vsel %vm11696, %v11655, %v9686
        %v11721 = vsel %vm11696, %v11656, %v9688
        %v11722 = vsel %vm11696, %v11657, %v9690
        %v11723 = vsel %vm11696, %v11658, %v9692
        %v11724 = vsel %vm11696, %v11659, %v9694
        %v11725 = vsel %vm11696, %v11660, %v9696
        %v11726 = vsel %vm11696, %v11661, %v9698
        %v11727 = vsel %vm11696, %v11662, %v9700
        %v11728 = vsel %vm11696, %v11663, %v9702
        %v11729 = vsel %vm11696, %v11664, %v9704
        %v11730 = vsel %vm11696, %v11665, %v9706
        %v11731 = vsel %vm11696, %v11666, %v9708
        %v11732 = vsel %vm11696, %v11667, %v9710
        %v11733 = vsel %vm11696, %v11668, %v9712
        %v11734 = vsel %vm11696, %v11669, %v9714
        %v11735 = vsel %vm11696, %v11670, %v9716
        %v11736 = vsel %vm11696, %v11671, %v9718
        %v11737 = vsel %vm11696, %v11672, %v9720
        %v11738 = vsel %vm11696, %v11673, %v9722
        %v11739 = vsel %vm11696, %v11674, %v9724
        %v11740 = vsel %vm11696, %v11675, %v9726
        %v11741 = vsel %vm11696, %v11676, %v9728
        %v11742 = vsel %vm11696, %v11677, %v9730
        %v11743 = vsel %vm11696, %v11678, %v9732
        %v11744 = vsel %vm11696, %v11679, %v9734
        %v11745 = vsel %vm11696, %v11680, %v9736
        %v11746 = vsel %vm11696, %v11681, %v9738
        %v11747 = vsel %vm11696, %v11682, %v9740
        %v11748 = vsel %vm11696, %v11683, %v9742
        %v11749 = vsel %vm11696, %v11684, %v9744
        %v11750 = vsel %vm11696, %v11685, %v9746
        %v11751 = vsel %vm11696, %v11686, %v9748
        %v11752 = vsel %vm11696, %v11687, %v9750
        %v11753 = vsel %vm11696, %v11688, %v9752
        %v11754 = vsel %vm11696, %v11689, %v9754
        %v11755 = vsel %vm11696, %v11690, %v9756
        %v11756 = vsel %vm11696, %v11691, %v9758
        %v11757 = vsel %vm11696, %v11692, %v9760
        %v11758 = vsel %vm11696, %v11693, %v9762
        %v11759 = vsel %vm11696, %v11694, %v9764
        %v11760 = vsel %vm11696, %v11695, %v9766
        %vm11761 = vcmask 179200
        %v11762 = vsel %vm11761, %v11697, %v9896
        %v11763 = vsel %vm11761, %v11698, %v9898
        %v11764 = vsel %vm11761, %v11699, %v9900
        %v11765 = vsel %vm11761, %v11700, %v9902
        %v11766 = vsel %vm11761, %v11701, %v9904
        %v11767 = vsel %vm11761, %v11702, %v9906
        %v11768 = vsel %vm11761, %v11703, %v9908
        %v11769 = vsel %vm11761, %v11704, %v9910
        %v11770 = vsel %vm11761, %v11705, %v9912
        %v11771 = vsel %vm11761, %v11706, %v9914
        %v11772 = vsel %vm11761, %v11707, %v9916
        %v11773 = vsel %vm11761, %v11708, %v9918
        %v11774 = vsel %vm11761, %v11709, %v9920
        %v11775 = vsel %vm11761, %v11710, %v9922
        %v11776 = vsel %vm11761, %v11711, %v9924
        %v11777 = vsel %vm11761, %v11712, %v9926
        %v11778 = vsel %vm11761, %v11713, %v9928
        %v11779 = vsel %vm11761, %v11714, %v9930
        %v11780 = vsel %vm11761, %v11715, %v9932
        %v11781 = vsel %vm11761, %v11716, %v9934
        %v11782 = vsel %vm11761, %v11717, %v9936
        %v11783 = vsel %vm11761, %v11718, %v9938
        %v11784 = vsel %vm11761, %v11719, %v9940
        %v11785 = vsel %vm11761, %v11720, %v9942
        %v11786 = vsel %vm11761, %v11721, %v9944
        %v11787 = vsel %vm11761, %v11722, %v9946
        %v11788 = vsel %vm11761, %v11723, %v9948
        %v11789 = vsel %vm11761, %v11724, %v9950
        %v11790 = vsel %vm11761, %v11725, %v9952
        %v11791 = vsel %vm11761, %v11726, %v9954
        %v11792 = vsel %vm11761, %v11727, %v9956
        %v11793 = vsel %vm11761, %v11728, %v9958
        %v11794 = vsel %vm11761, %v11729, %v9960
        %v11795 = vsel %vm11761, %v11730, %v9962
        %v11796 = vsel %vm11761, %v11731, %v9964
        %v11797 = vsel %vm11761, %v11732, %v9966
        %v11798 = vsel %vm11761, %v11733, %v9968
        %v11799 = vsel %vm11761, %v11734, %v9970
        %v11800 = vsel %vm11761, %v11735, %v9972
        %v11801 = vsel %vm11761, %v11736, %v9974
        %v11802 = vsel %vm11761, %v11737, %v9976
        %v11803 = vsel %vm11761, %v11738, %v9978
        %v11804 = vsel %vm11761, %v11739, %v9980
        %v11805 = vsel %vm11761, %v11740, %v9982
        %v11806 = vsel %vm11761, %v11741, %v9984
        %v11807 = vsel %vm11761, %v11742, %v9986
        %v11808 = vsel %vm11761, %v11743, %v9988
        %v11809 = vsel %vm11761, %v11744, %v9990
        %v11810 = vsel %vm11761, %v11745, %v9992
        %v11811 = vsel %vm11761, %v11746, %v9994
        %v11812 = vsel %vm11761, %v11747, %v9996
        %v11813 = vsel %vm11761, %v11748, %v9998
        %v11814 = vsel %vm11761, %v11749, %v10000
        %v11815 = vsel %vm11761, %v11750, %v10002
        %v11816 = vsel %vm11761, %v11751, %v10004
        %v11817 = vsel %vm11761, %v11752, %v10006
        %v11818 = vsel %vm11761, %v11753, %v10008
        %v11819 = vsel %vm11761, %v11754, %v10010
        %v11820 = vsel %vm11761, %v11755, %v10012
        %v11821 = vsel %vm11761, %v11756, %v10014
        %v11822 = vsel %vm11761, %v11757, %v10016
        %v11823 = vsel %vm11761, %v11758, %v10018
        %v11824 = vsel %vm11761, %v11759, %v10020
        %v11825 = vsel %vm11761, %v11760, %v10022
        %vm11826 = vcmask 195584
        %v11827 = vsel %vm11826, %v11762, %v10152
        %v11828 = vsel %vm11826, %v11763, %v10154
        %v11829 = vsel %vm11826, %v11764, %v10156
        %v11830 = vsel %vm11826, %v11765, %v10158
        %v11831 = vsel %vm11826, %v11766, %v10160
        %v11832 = vsel %vm11826, %v11767, %v10162
        %v11833 = vsel %vm11826, %v11768, %v10164
        %v11834 = vsel %vm11826, %v11769, %v10166
        %v11835 = vsel %vm11826, %v11770, %v10168
        %v11836 = vsel %vm11826, %v11771, %v10170
        %v11837 = vsel %vm11826, %v11772, %v10172
        %v11838 = vsel %vm11826, %v11773, %v10174
        %v11839 = vsel %vm11826, %v11774, %v10176
        %v11840 = vsel %vm11826, %v11775, %v10178
        %v11841 = vsel %vm11826, %v11776, %v10180
        %v11842 = vsel %vm11826, %v11777, %v10182
        %v11843 = vsel %vm11826, %v11778, %v10184
        %v11844 = vsel %vm11826, %v11779, %v10186
        %v11845 = vsel %vm11826, %v11780, %v10188
        %v11846 = vsel %vm11826, %v11781, %v10190
        %v11847 = vsel %vm11826, %v11782, %v10192
        %v11848 = vsel %vm11826, %v11783, %v10194
        %v11849 = vsel %vm11826, %v11784, %v10196
        %v11850 = vsel %vm11826, %v11785, %v10198
        %v11851 = vsel %vm11826, %v11786, %v10200
        %v11852 = vsel %vm11826, %v11787, %v10202
        %v11853 = vsel %vm11826, %v11788, %v10204
        %v11854 = vsel %vm11826, %v11789, %v10206
        %v11855 = vsel %vm11826, %v11790, %v10208
        %v11856 = vsel %vm11826, %v11791, %v10210
        %v11857 = vsel %vm11826, %v11792, %v10212
        %v11858 = vsel %vm11826, %v11793, %v10214
        %v11859 = vsel %vm11826, %v11794, %v10216
        %v11860 = vsel %vm11826, %v11795, %v10218
        %v11861 = vsel %vm11826, %v11796, %v10220
        %v11862 = vsel %vm11826, %v11797, %v10222
        %v11863 = vsel %vm11826, %v11798, %v10224
        %v11864 = vsel %vm11826, %v11799, %v10226
        %v11865 = vsel %vm11826, %v11800, %v10228
        %v11866 = vsel %vm11826, %v11801, %v10230
        %v11867 = vsel %vm11826, %v11802, %v10232
        %v11868 = vsel %vm11826, %v11803, %v10234
        %v11869 = vsel %vm11826, %v11804, %v10236
        %v11870 = vsel %vm11826, %v11805, %v10238
        %v11871 = vsel %vm11826, %v11806, %v10240
        %v11872 = vsel %vm11826, %v11807, %v10242
        %v11873 = vsel %vm11826, %v11808, %v10244
        %v11874 = vsel %vm11826, %v11809, %v10246
        %v11875 = vsel %vm11826, %v11810, %v10248
        %v11876 = vsel %vm11826, %v11811, %v10250
        %v11877 = vsel %vm11826, %v11812, %v10252
        %v11878 = vsel %vm11826, %v11813, %v10254
        %v11879 = vsel %vm11826, %v11814, %v10256
        %v11880 = vsel %vm11826, %v11815, %v10258
        %v11881 = vsel %vm11826, %v11816, %v10260
        %v11882 = vsel %vm11826, %v11817, %v10262
        %v11883 = vsel %vm11826, %v11818, %v10264
        %v11884 = vsel %vm11826, %v11819, %v10266
        %v11885 = vsel %vm11826, %v11820, %v10268
        %v11886 = vsel %vm11826, %v11821, %v10270
        %v11887 = vsel %vm11826, %v11822, %v10272
        %v11888 = vsel %vm11826, %v11823, %v10274
        %v11889 = vsel %vm11826, %v11824, %v10276
        %v11890 = vsel %vm11826, %v11825, %v10278
        %vm11891 = vcmask 211968
        %v11892 = vsel %vm11891, %v11827, %v10408
        %v11893 = vsel %vm11891, %v11828, %v10410
        %v11894 = vsel %vm11891, %v11829, %v10412
        %v11895 = vsel %vm11891, %v11830, %v10414
        %v11896 = vsel %vm11891, %v11831, %v10416
        %v11897 = vsel %vm11891, %v11832, %v10418
        %v11898 = vsel %vm11891, %v11833, %v10420
        %v11899 = vsel %vm11891, %v11834, %v10422
        %v11900 = vsel %vm11891, %v11835, %v10424
        %v11901 = vsel %vm11891, %v11836, %v10426
        %v11902 = vsel %vm11891, %v11837, %v10428
        %v11903 = vsel %vm11891, %v11838, %v10430
        %v11904 = vsel %vm11891, %v11839, %v10432
        %v11905 = vsel %vm11891, %v11840, %v10434
        %v11906 = vsel %vm11891, %v11841, %v10436
        %v11907 = vsel %vm11891, %v11842, %v10438
        %v11908 = vsel %vm11891, %v11843, %v10440
        %v11909 = vsel %vm11891, %v11844, %v10442
        %v11910 = vsel %vm11891, %v11845, %v10444
        %v11911 = vsel %vm11891, %v11846, %v10446
        %v11912 = vsel %vm11891, %v11847, %v10448
        %v11913 = vsel %vm11891, %v11848, %v10450
        %v11914 = vsel %vm11891, %v11849, %v10452
        %v11915 = vsel %vm11891, %v11850, %v10454
        %v11916 = vsel %vm11891, %v11851, %v10456
        %v11917 = vsel %vm11891, %v11852, %v10458
        %v11918 = vsel %vm11891, %v11853, %v10460
        %v11919 = vsel %vm11891, %v11854, %v10462
        %v11920 = vsel %vm11891, %v11855, %v10464
        %v11921 = vsel %vm11891, %v11856, %v10466
        %v11922 = vsel %vm11891, %v11857, %v10468
        %v11923 = vsel %vm11891, %v11858, %v10470
        %v11924 = vsel %vm11891, %v11859, %v10472
        %v11925 = vsel %vm11891, %v11860, %v10474
        %v11926 = vsel %vm11891, %v11861, %v10476
        %v11927 = vsel %vm11891, %v11862, %v10478
        %v11928 = vsel %vm11891, %v11863, %v10480
        %v11929 = vsel %vm11891, %v11864, %v10482
        %v11930 = vsel %vm11891, %v11865, %v10484
        %v11931 = vsel %vm11891, %v11866, %v10486
        %v11932 = vsel %vm11891, %v11867, %v10488
        %v11933 = vsel %vm11891, %v11868, %v10490
        %v11934 = vsel %vm11891, %v11869, %v10492
        %v11935 = vsel %vm11891, %v11870, %v10494
        %v11936 = vsel %vm11891, %v11871, %v10496
        %v11937 = vsel %vm11891, %v11872, %v10498
        %v11938 = vsel %vm11891, %v11873, %v10500
        %v11939 = vsel %vm11891, %v11874, %v10502
        %v11940 = vsel %vm11891, %v11875, %v10504
        %v11941 = vsel %vm11891, %v11876, %v10506
        %v11942 = vsel %vm11891, %v11877, %v10508
        %v11943 = vsel %vm11891, %v11878, %v10510
        %v11944 = vsel %vm11891, %v11879, %v10512
        %v11945 = vsel %vm11891, %v11880, %v10514
        %v11946 = vsel %vm11891, %v11881, %v10516
        %v11947 = vsel %vm11891, %v11882, %v10518
        %v11948 = vsel %vm11891, %v11883, %v10520
        %v11949 = vsel %vm11891, %v11884, %v10522
        %v11950 = vsel %vm11891, %v11885, %v10524
        %v11951 = vsel %vm11891, %v11886, %v10526
        %v11952 = vsel %vm11891, %v11887, %v10528
        %v11953 = vsel %vm11891, %v11888, %v10530
        %v11954 = vsel %vm11891, %v11889, %v10532
        %v11955 = vsel %vm11891, %v11890, %v10534
        %vm11956 = vcmask 228352
        %v11957 = vsel %vm11956, %v11892, %v10664
        %v11958 = vsel %vm11956, %v11893, %v10666
        %v11959 = vsel %vm11956, %v11894, %v10668
        %v11960 = vsel %vm11956, %v11895, %v10670
        %v11961 = vsel %vm11956, %v11896, %v10672
        %v11962 = vsel %vm11956, %v11897, %v10674
        %v11963 = vsel %vm11956, %v11898, %v10676
        %v11964 = vsel %vm11956, %v11899, %v10678
        %v11965 = vsel %vm11956, %v11900, %v10680
        %v11966 = vsel %vm11956, %v11901, %v10682
        %v11967 = vsel %vm11956, %v11902, %v10684
        %v11968 = vsel %vm11956, %v11903, %v10686
        %v11969 = vsel %vm11956, %v11904, %v10688
        %v11970 = vsel %vm11956, %v11905, %v10690
        %v11971 = vsel %vm11956, %v11906, %v10692
        %v11972 = vsel %vm11956, %v11907, %v10694
        %v11973 = vsel %vm11956, %v11908, %v10696
        %v11974 = vsel %vm11956, %v11909, %v10698
        %v11975 = vsel %vm11956, %v11910, %v10700
        %v11976 = vsel %vm11956, %v11911, %v10702
        %v11977 = vsel %vm11956, %v11912, %v10704
        %v11978 = vsel %vm11956, %v11913, %v10706
        %v11979 = vsel %vm11956, %v11914, %v10708
        %v11980 = vsel %vm11956, %v11915, %v10710
        %v11981 = vsel %vm11956, %v11916, %v10712
        %v11982 = vsel %vm11956, %v11917, %v10714
        %v11983 = vsel %vm11956, %v11918, %v10716
        %v11984 = vsel %vm11956, %v11919, %v10718
        %v11985 = vsel %vm11956, %v11920, %v10720
        %v11986 = vsel %vm11956, %v11921, %v10722
        %v11987 = vsel %vm11956, %v11922, %v10724
        %v11988 = vsel %vm11956, %v11923, %v10726
        %v11989 = vsel %vm11956, %v11924, %v10728
        %v11990 = vsel %vm11956, %v11925, %v10730
        %v11991 = vsel %vm11956, %v11926, %v10732
        %v11992 = vsel %vm11956, %v11927, %v10734
        %v11993 = vsel %vm11956, %v11928, %v10736
        %v11994 = vsel %vm11956, %v11929, %v10738
        %v11995 = vsel %vm11956, %v11930, %v10740
        %v11996 = vsel %vm11956, %v11931, %v10742
        %v11997 = vsel %vm11956, %v11932, %v10744
        %v11998 = vsel %vm11956, %v11933, %v10746
        %v11999 = vsel %vm11956, %v11934, %v10748
        %v12000 = vsel %vm11956, %v11935, %v10750
        %v12001 = vsel %vm11956, %v11936, %v10752
        %v12002 = vsel %vm11956, %v11937, %v10754
        %v12003 = vsel %vm11956, %v11938, %v10756
        %v12004 = vsel %vm11956, %v11939, %v10758
        %v12005 = vsel %vm11956, %v11940, %v10760
        %v12006 = vsel %vm11956, %v11941, %v10762
        %v12007 = vsel %vm11956, %v11942, %v10764
        %v12008 = vsel %vm11956, %v11943, %v10766
        %v12009 = vsel %vm11956, %v11944, %v10768
        %v12010 = vsel %vm11956, %v11945, %v10770
        %v12011 = vsel %vm11956, %v11946, %v10772
        %v12012 = vsel %vm11956, %v11947, %v10774
        %v12013 = vsel %vm11956, %v11948, %v10776
        %v12014 = vsel %vm11956, %v11949, %v10778
        %v12015 = vsel %vm11956, %v11950, %v10780
        %v12016 = vsel %vm11956, %v11951, %v10782
        %v12017 = vsel %vm11956, %v11952, %v10784
        %v12018 = vsel %vm11956, %v11953, %v10786
        %v12019 = vsel %vm11956, %v11954, %v10788
        %v12020 = vsel %vm11956, %v11955, %v10790
        %vm12021 = vcmask 244736
        %v12022 = vsel %vm12021, %v11957, %v10920
        %v12023 = vsel %vm12021, %v11958, %v10922
        %v12024 = vsel %vm12021, %v11959, %v10924
        %v12025 = vsel %vm12021, %v11960, %v10926
        %v12026 = vsel %vm12021, %v11961, %v10928
        %v12027 = vsel %vm12021, %v11962, %v10930
        %v12028 = vsel %vm12021, %v11963, %v10932
        %v12029 = vsel %vm12021, %v11964, %v10934
        %v12030 = vsel %vm12021, %v11965, %v10936
        %v12031 = vsel %vm12021, %v11966, %v10938
        %v12032 = vsel %vm12021, %v11967, %v10940
        %v12033 = vsel %vm12021, %v11968, %v10942
        %v12034 = vsel %vm12021, %v11969, %v10944
        %v12035 = vsel %vm12021, %v11970, %v10946
        %v12036 = vsel %vm12021, %v11971, %v10948
        %v12037 = vsel %vm12021, %v11972, %v10950
        %v12038 = vsel %vm12021, %v11973, %v10952
        %v12039 = vsel %vm12021, %v11974, %v10954
        %v12040 = vsel %vm12021, %v11975, %v10956
        %v12041 = vsel %vm12021, %v11976, %v10958
        %v12042 = vsel %vm12021, %v11977, %v10960
        %v12043 = vsel %vm12021, %v11978, %v10962
        %v12044 = vsel %vm12021, %v11979, %v10964
        %v12045 = vsel %vm12021, %v11980, %v10966
        %v12046 = vsel %vm12021, %v11981, %v10968
        %v12047 = vsel %vm12021, %v11982, %v10970
        %v12048 = vsel %vm12021, %v11983, %v10972
        %v12049 = vsel %vm12021, %v11984, %v10974
        %v12050 = vsel %vm12021, %v11985, %v10976
        %v12051 = vsel %vm12021, %v11986, %v10978
        %v12052 = vsel %vm12021, %v11987, %v10980
        %v12053 = vsel %vm12021, %v11988, %v10982
        %v12054 = vsel %vm12021, %v11989, %v10984
        %v12055 = vsel %vm12021, %v11990, %v10986
        %v12056 = vsel %vm12021, %v11991, %v10988
        %v12057 = vsel %vm12021, %v11992, %v10990
        %v12058 = vsel %vm12021, %v11993, %v10992
        %v12059 = vsel %vm12021, %v11994, %v10994
        %v12060 = vsel %vm12021, %v11995, %v10996
        %v12061 = vsel %vm12021, %v11996, %v10998
        %v12062 = vsel %vm12021, %v11997, %v11000
        %v12063 = vsel %vm12021, %v11998, %v11002
        %v12064 = vsel %vm12021, %v11999, %v11004
        %v12065 = vsel %vm12021, %v12000, %v11006
        %v12066 = vsel %vm12021, %v12001, %v11008
        %v12067 = vsel %vm12021, %v12002, %v11010
        %v12068 = vsel %vm12021, %v12003, %v11012
        %v12069 = vsel %vm12021, %v12004, %v11014
        %v12070 = vsel %vm12021, %v12005, %v11016
        %v12071 = vsel %vm12021, %v12006, %v11018
        %v12072 = vsel %vm12021, %v12007, %v11020
        %v12073 = vsel %vm12021, %v12008, %v11022
        %v12074 = vsel %vm12021, %v12009, %v11024
        %v12075 = vsel %vm12021, %v12010, %v11026
        %v12076 = vsel %vm12021, %v12011, %v11028
        %v12077 = vsel %vm12021, %v12012, %v11030
        %v12078 = vsel %vm12021, %v12013, %v11032
        %v12079 = vsel %vm12021, %v12014, %v11034
        %v12080 = vsel %vm12021, %v12015, %v11036
        %v12081 = vsel %vm12021, %v12016, %v11038
        %v12082 = vsel %vm12021, %v12017, %v11040
        %v12083 = vsel %vm12021, %v12018, %v11042
        %v12084 = vsel %vm12021, %v12019, %v11044
        %v12085 = vsel %vm12021, %v12020, %v11046
        %vm12086 = vcmask 1040384
        %v12087 = vsel %vm12086, %v12022, 0.0
        %v12088 = vsel %vm12086, %v12023, 0.0
        %v12089 = vsel %vm12086, %v12024, 0.0
        %v12090 = vsel %vm12086, %v12025, 0.0
        %v12091 = vsel %vm12086, %v12026, 0.0
        %v12092 = vsel %vm12086, %v12027, 0.0
        %v12093 = vsel %vm12086, %v12028, 0.0
        %v12094 = vsel %vm12086, %v12029, 0.0
        %v12095 = vsel %vm12086, %v12030, 0.0
        %v12096 = vsel %vm12086, %v12031, 0.0
        %v12097 = vsel %vm12086, %v12032, 0.0
        %v12098 = vsel %vm12086, %v12033, 0.0
        %v12099 = vsel %vm12086, %v12034, 0.0
        %v12100 = vsel %vm12086, %v12035, 0.0
        %v12101 = vsel %vm12086, %v12036, 0.0
        %v12102 = vsel %vm12086, %v12037, 0.0
        %v12103 = vsel %vm12086, %v12038, 0.0
        %v12104 = vsel %vm12086, %v12039, 0.0
        %v12105 = vsel %vm12086, %v12040, 0.0
        %v12106 = vsel %vm12086, %v12041, 0.0
        %v12107 = vsel %vm12086, %v12042, 0.0
        %v12108 = vsel %vm12086, %v12043, 0.0
        %v12109 = vsel %vm12086, %v12044, 0.0
        %v12110 = vsel %vm12086, %v12045, 0.0
        %v12111 = vsel %vm12086, %v12046, 0.0
        %v12112 = vsel %vm12086, %v12047, 0.0
        %v12113 = vsel %vm12086, %v12048, 0.0
        %v12114 = vsel %vm12086, %v12049, 0.0
        %v12115 = vsel %vm12086, %v12050, 0.0
        %v12116 = vsel %vm12086, %v12051, 0.0
        %v12117 = vsel %vm12086, %v12052, 0.0
        %v12118 = vsel %vm12086, %v12053, 0.0
        %v12119 = vsel %vm12086, %v12054, 0.0
        %v12120 = vsel %vm12086, %v12055, 0.0
        %v12121 = vsel %vm12086, %v12056, 0.0
        %v12122 = vsel %vm12086, %v12057, 0.0
        %v12123 = vsel %vm12086, %v12058, 0.0
        %v12124 = vsel %vm12086, %v12059, 0.0
        %v12125 = vsel %vm12086, %v12060, 0.0
        %v12126 = vsel %vm12086, %v12061, 0.0
        %v12127 = vsel %vm12086, %v12062, 0.0
        %v12128 = vsel %vm12086, %v12063, 0.0
        %v12129 = vsel %vm12086, %v12064, 0.0
        %v12130 = vsel %vm12086, %v12065, 0.0
        %v12131 = vsel %vm12086, %v12066, 0.0
        %v12132 = vsel %vm12086, %v12067, 0.0
        %v12133 = vsel %vm12086, %v12068, 0.0
        %v12134 = vsel %vm12086, %v12069, 0.0
        %v12135 = vsel %vm12086, %v12070, 0.0
        %v12136 = vsel %vm12086, %v12071, 0.0
        %v12137 = vsel %vm12086, %v12072, 0.0
        %v12138 = vsel %vm12086, %v12073, 0.0
        %v12139 = vsel %vm12086, %v12074, 0.0
        %v12140 = vsel %vm12086, %v12075, 0.0
        %v12141 = vsel %vm12086, %v12076, 0.0
        %v12142 = vsel %vm12086, %v12077, 0.0
        %v12143 = vsel %vm12086, %v12078, 0.0
        %v12144 = vsel %vm12086, %v12079, 0.0
        %v12145 = vsel %vm12086, %v12080, 0.0
        %v12146 = vsel %vm12086, %v12081, 0.0
        %v12147 = vsel %vm12086, %v12082, 0.0
        %v12148 = vsel %vm12086, %v12083, 0.0
        %v12149 = vsel %vm12086, %v12084, 0.0
        %v12150 = vsel %vm12086, %v12085, 0.0
        %v12215 = vcombine.low %v12087, %v12088
        %v12216 = vcombine.low %v12089, %v12090
        %v12218 = vunpack.c.l.s4 1983009808
        %v12219 = vunpack.c.0.s8 %v12218
        %v12220 = vlaneseq
        %v12221 = vshrl.u32 %v12220, 7
        %v12222 = vsub.s32 %v12219, %v12221
        %v12223 = vrot.slane %v12215, %v12222
        %v12225 = vunpack.c.l.s4 1983009808
        %v12226 = vunpack.c.0.s8 %v12225
        %v12227 = vlaneseq
        %v12228 = vshrl.u32 %v12227, 7
        %v12229 = vsub.s32 %v12226, %v12228
        %v12230 = vrot.slane %v12216, %v12229
        %v12231 = vcombine.low %v12223, %v12230
        %v12232 = vcombine.low %v12091, %v12092
        %v12233 = vcombine.low %v12093, %v12094
        %v12235 = vunpack.c.l.s4 1983009808
        %v12236 = vunpack.c.0.s8 %v12235
        %v12237 = vlaneseq
        %v12238 = vshrl.u32 %v12237, 7
        %v12239 = vsub.s32 %v12236, %v12238
        %v12240 = vrot.slane %v12232, %v12239
        %v12242 = vunpack.c.l.s4 1983009808
        %v12243 = vunpack.c.0.s8 %v12242
        %v12244 = vlaneseq
        %v12245 = vshrl.u32 %v12244, 7
        %v12246 = vsub.s32 %v12243, %v12245
        %v12247 = vrot.slane %v12233, %v12246
        %v12248 = vcombine.low %v12240, %v12247
        %v12249 = vcombine.low %v12095, %v12096
        %v12250 = vcombine.low %v12097, %v12098
        %v12252 = vunpack.c.l.s4 1983009808
        %v12253 = vunpack.c.0.s8 %v12252
        %v12254 = vlaneseq
        %v12255 = vshrl.u32 %v12254, 7
        %v12256 = vsub.s32 %v12253, %v12255
        %v12257 = vrot.slane %v12249, %v12256
        %v12259 = vunpack.c.l.s4 1983009808
        %v12260 = vunpack.c.0.s8 %v12259
        %v12261 = vlaneseq
        %v12262 = vshrl.u32 %v12261, 7
        %v12263 = vsub.s32 %v12260, %v12262
        %v12264 = vrot.slane %v12250, %v12263
        %v12265 = vcombine.low %v12257, %v12264
        %v12266 = vcombine.low %v12099, %v12100
        %v12267 = vcombine.low %v12101, %v12102
        %v12269 = vunpack.c.l.s4 1983009808
        %v12270 = vunpack.c.0.s8 %v12269
        %v12271 = vlaneseq
        %v12272 = vshrl.u32 %v12271, 7
        %v12273 = vsub.s32 %v12270, %v12272
        %v12274 = vrot.slane %v12266, %v12273
        %v12276 = vunpack.c.l.s4 1983009808
        %v12277 = vunpack.c.0.s8 %v12276
        %v12278 = vlaneseq
        %v12279 = vshrl.u32 %v12278, 7
        %v12280 = vsub.s32 %v12277, %v12279
        %v12281 = vrot.slane %v12267, %v12280
        %v12282 = vcombine.low %v12274, %v12281
        %v12283 = vcombine.low %v12103, %v12104
        %v12284 = vcombine.low %v12105, %v12106
        %v12286 = vunpack.c.l.s4 1983009808
        %v12287 = vunpack.c.0.s8 %v12286
        %v12288 = vlaneseq
        %v12289 = vshrl.u32 %v12288, 7
        %v12290 = vsub.s32 %v12287, %v12289
        %v12291 = vrot.slane %v12283, %v12290
        %v12293 = vunpack.c.l.s4 1983009808
        %v12294 = vunpack.c.0.s8 %v12293
        %v12295 = vlaneseq
        %v12296 = vshrl.u32 %v12295, 7
        %v12297 = vsub.s32 %v12294, %v12296
        %v12298 = vrot.slane %v12284, %v12297
        %v12299 = vcombine.low %v12291, %v12298
        %v12300 = vcombine.low %v12107, %v12108
        %v12301 = vcombine.low %v12109, %v12110
        %v12303 = vunpack.c.l.s4 1983009808
        %v12304 = vunpack.c.0.s8 %v12303
        %v12305 = vlaneseq
        %v12306 = vshrl.u32 %v12305, 7
        %v12307 = vsub.s32 %v12304, %v12306
        %v12308 = vrot.slane %v12300, %v12307
        %v12310 = vunpack.c.l.s4 1983009808
        %v12311 = vunpack.c.0.s8 %v12310
        %v12312 = vlaneseq
        %v12313 = vshrl.u32 %v12312, 7
        %v12314 = vsub.s32 %v12311, %v12313
        %v12315 = vrot.slane %v12301, %v12314
        %v12316 = vcombine.low %v12308, %v12315
        %v12317 = vcombine.low %v12111, %v12112
        %v12318 = vcombine.low %v12113, %v12114
        %v12320 = vunpack.c.l.s4 1983009808
        %v12321 = vunpack.c.0.s8 %v12320
        %v12322 = vlaneseq
        %v12323 = vshrl.u32 %v12322, 7
        %v12324 = vsub.s32 %v12321, %v12323
        %v12325 = vrot.slane %v12317, %v12324
        %v12327 = vunpack.c.l.s4 1983009808
        %v12328 = vunpack.c.0.s8 %v12327
        %v12329 = vlaneseq
        %v12330 = vshrl.u32 %v12329, 7
        %v12331 = vsub.s32 %v12328, %v12330
        %v12332 = vrot.slane %v12318, %v12331
        %v12333 = vcombine.low %v12325, %v12332
        %v12334 = vcombine.low %v12115, %v12116
        %v12335 = vcombine.low %v12117, %v12118
        %v12337 = vunpack.c.l.s4 1983009808
        %v12338 = vunpack.c.0.s8 %v12337
        %v12339 = vlaneseq
        %v12340 = vshrl.u32 %v12339, 7
        %v12341 = vsub.s32 %v12338, %v12340
        %v12342 = vrot.slane %v12334, %v12341
        %v12344 = vunpack.c.l.s4 1983009808
        %v12345 = vunpack.c.0.s8 %v12344
        %v12346 = vlaneseq
        %v12347 = vshrl.u32 %v12346, 7
        %v12348 = vsub.s32 %v12345, %v12347
        %v12349 = vrot.slane %v12335, %v12348
        %v12350 = vcombine.low %v12342, %v12349
        %v12351 = vcombine.low %v12119, %v12120
        %v12352 = vcombine.low %v12121, %v12122
        %v12354 = vunpack.c.l.s4 1983009808
        %v12355 = vunpack.c.0.s8 %v12354
        %v12356 = vlaneseq
        %v12357 = vshrl.u32 %v12356, 7
        %v12358 = vsub.s32 %v12355, %v12357
        %v12359 = vrot.slane %v12351, %v12358
        %v12361 = vunpack.c.l.s4 1983009808
        %v12362 = vunpack.c.0.s8 %v12361
        %v12363 = vlaneseq
        %v12364 = vshrl.u32 %v12363, 7
        %v12365 = vsub.s32 %v12362, %v12364
        %v12366 = vrot.slane %v12352, %v12365
        %v12367 = vcombine.low %v12359, %v12366
        %v12368 = vcombine.low %v12123, %v12124
        %v12369 = vcombine.low %v12125, %v12126
        %v12371 = vunpack.c.l.s4 1983009808
        %v12372 = vunpack.c.0.s8 %v12371
        %v12373 = vlaneseq
        %v12374 = vshrl.u32 %v12373, 7
        %v12375 = vsub.s32 %v12372, %v12374
        %v12376 = vrot.slane %v12368, %v12375
        %v12378 = vunpack.c.l.s4 1983009808
        %v12379 = vunpack.c.0.s8 %v12378
        %v12380 = vlaneseq
        %v12381 = vshrl.u32 %v12380, 7
        %v12382 = vsub.s32 %v12379, %v12381
        %v12383 = vrot.slane %v12369, %v12382
        %v12384 = vcombine.low %v12376, %v12383
        %v12385 = vcombine.low %v12127, %v12128
        %v12386 = vcombine.low %v12129, %v12130
        %v12388 = vunpack.c.l.s4 1983009808
        %v12389 = vunpack.c.0.s8 %v12388
        %v12390 = vlaneseq
        %v12391 = vshrl.u32 %v12390, 7
        %v12392 = vsub.s32 %v12389, %v12391
        %v12393 = vrot.slane %v12385, %v12392
        %v12395 = vunpack.c.l.s4 1983009808
        %v12396 = vunpack.c.0.s8 %v12395
        %v12397 = vlaneseq
        %v12398 = vshrl.u32 %v12397, 7
        %v12399 = vsub.s32 %v12396, %v12398
        %v12400 = vrot.slane %v12386, %v12399
        %v12401 = vcombine.low %v12393, %v12400
        %v12402 = vcombine.low %v12131, %v12132
        %v12403 = vcombine.low %v12133, %v12134
        %v12405 = vunpack.c.l.s4 1983009808
        %v12406 = vunpack.c.0.s8 %v12405
        %v12407 = vlaneseq
        %v12408 = vshrl.u32 %v12407, 7
        %v12409 = vsub.s32 %v12406, %v12408
        %v12410 = vrot.slane %v12402, %v12409
        %v12412 = vunpack.c.l.s4 1983009808
        %v12413 = vunpack.c.0.s8 %v12412
        %v12414 = vlaneseq
        %v12415 = vshrl.u32 %v12414, 7
        %v12416 = vsub.s32 %v12413, %v12415
        %v12417 = vrot.slane %v12403, %v12416
        %v12418 = vcombine.low %v12410, %v12417
        %v12419 = vcombine.low %v12135, %v12136
        %v12420 = vcombine.low %v12137, %v12138
        %v12422 = vunpack.c.l.s4 1983009808
        %v12423 = vunpack.c.0.s8 %v12422
        %v12424 = vlaneseq
        %v12425 = vshrl.u32 %v12424, 7
        %v12426 = vsub.s32 %v12423, %v12425
        %v12427 = vrot.slane %v12419, %v12426
        %v12429 = vunpack.c.l.s4 1983009808
        %v12430 = vunpack.c.0.s8 %v12429
        %v12431 = vlaneseq
        %v12432 = vshrl.u32 %v12431, 7
        %v12433 = vsub.s32 %v12430, %v12432
        %v12434 = vrot.slane %v12420, %v12433
        %v12435 = vcombine.low %v12427, %v12434
        %v12436 = vcombine.low %v12139, %v12140
        %v12437 = vcombine.low %v12141, %v12142
        %v12439 = vunpack.c.l.s4 1983009808
        %v12440 = vunpack.c.0.s8 %v12439
        %v12441 = vlaneseq
        %v12442 = vshrl.u32 %v12441, 7
        %v12443 = vsub.s32 %v12440, %v12442
        %v12444 = vrot.slane %v12436, %v12443
        %v12446 = vunpack.c.l.s4 1983009808
        %v12447 = vunpack.c.0.s8 %v12446
        %v12448 = vlaneseq
        %v12449 = vshrl.u32 %v12448, 7
        %v12450 = vsub.s32 %v12447, %v12449
        %v12451 = vrot.slane %v12437, %v12450
        %v12452 = vcombine.low %v12444, %v12451
        %v12453 = vcombine.low %v12143, %v12144
        %v12454 = vcombine.low %v12145, %v12146
        %v12456 = vunpack.c.l.s4 1983009808
        %v12457 = vunpack.c.0.s8 %v12456
        %v12458 = vlaneseq
        %v12459 = vshrl.u32 %v12458, 7
        %v12460 = vsub.s32 %v12457, %v12459
        %v12461 = vrot.slane %v12453, %v12460
        %v12463 = vunpack.c.l.s4 1983009808
        %v12464 = vunpack.c.0.s8 %v12463
        %v12465 = vlaneseq
        %v12466 = vshrl.u32 %v12465, 7
        %v12467 = vsub.s32 %v12464, %v12466
        %v12468 = vrot.slane %v12454, %v12467
        %v12469 = vcombine.low %v12461, %v12468
        %v12470 = vcombine.low %v12147, %v12148
        %v12471 = vcombine.low %v12149, %v12150
        %v12473 = vunpack.c.l.s4 1983009808
        %v12474 = vunpack.c.0.s8 %v12473
        %v12475 = vlaneseq
        %v12476 = vshrl.u32 %v12475, 7
        %v12477 = vsub.s32 %v12474, %v12476
        %v12478 = vrot.slane %v12470, %v12477
        %v12480 = vunpack.c.l.s4 1983009808
        %v12481 = vunpack.c.0.s8 %v12480
        %v12482 = vlaneseq
        %v12483 = vshrl.u32 %v12482, 7
        %v12484 = vsub.s32 %v12481, %v12483
        %v12485 = vrot.slane %v12471, %v12484
        %v12486 = vcombine.low %v12478, %v12485
        %vm12503 = vcmask 261120
        %12504 = vst.msk [vmem:[%s153] sm:$0xff] %vm12503, %v12231
        %12505 = vst.msk [vmem:[%s153 + $0x8] sm:$0xff] %vm12503, %v12248
        %12506 = vst.msk [vmem:[%s153 + $0x10] sm:$0xff] %vm12503, %v12265
        %12507 = vst.msk [vmem:[%s153 + $0x18] sm:$0xff] %vm12503, %v12282
        %12508 = vst.msk [vmem:[%s153 + $0x20] sm:$0xff] %vm12503, %v12299
        %12509 = vst.msk [vmem:[%s153 + $0x28] sm:$0xff] %vm12503, %v12316
        %12510 = vst.msk [vmem:[%s153 + $0x30] sm:$0xff] %vm12503, %v12333
        %12511 = vst.msk [vmem:[%s153 + $0x38] sm:$0xff] %vm12503, %v12350
        %12512 = vst.msk [vmem:[%s153 + $0x40] sm:$0xff] %vm12503, %v12367
        %12513 = vst.msk [vmem:[%s153 + $0x48] sm:$0xff] %vm12503, %v12384
        %12514 = vst.msk [vmem:[%s153 + $0x50] sm:$0xff] %vm12503, %v12401
        %12515 = vst.msk [vmem:[%s153 + $0x58] sm:$0xff] %vm12503, %v12418
        %12516 = vst.msk [vmem:[%s153 + $0x60] sm:$0xff] %vm12503, %v12435
        %12517 = vst.msk [vmem:[%s153 + $0x68] sm:$0xff] %vm12503, %v12452
        %12518 = vst.msk [vmem:[%s153 + $0x70] sm:$0xff] %vm12503, %v12469
        %12519 = vst.msk [vmem:[%s153 + $0x78] sm:$0xff] %vm12503, %v12486
        %s12520 = sand.u32 %s68, 1
        %s12521 = scalar_lea.sflag [#allocation4], %s12520
        %s12522 = sand.u32 %s68, 1
        %s12523 = smul.addr %s12522, 128
        %s12524 = scalar_lea.vmem [#allocation5], %s12523
        // Predicated region
        $region29: #{tpu_custom_call.1} parent=23 // pred_check
          %p12525 = pneg %p78
        $region30: #{tpu_custom_call.1} parent=23 // pred_check_branch
          %12527 = sbr.rel (%p12525) target = $region32
        $region31: #{tpu_custom_call.1} parent=23 // pred_region
          %s12528 = smul.u32 4, %s22
          %s12529 = smul.u32 4, %s23
          %s12531 = ssub.s32 2048, 2048
          %12532 = vsyncadd %s12521, %s12531
          %s12533 = smul.addr %s12528, 4
          %s12534 = sadd.s32 %s12529, %s12533
          %s12535 = smul.addr %s12534, 128
          %s12536 = scalar_lea.hbm %s1, %s12535
          %s12537 = sshll.u32 %s12524, 4
          %s12538 = int_to_ptr.vmem [resolvable:$true] %s12537
          %12543 = dma.vmem_to_hbm [thread:$0]  %s12538, 2048, %s12536, %s12521, 128, 128, 8
        $region32: #{tpu_custom_call.1} parent=23 // pred_fallthru
          _
      $region24: #{tpu_custom_call.1} parent=5 // pred_fallthru
        _
      %p12544 = scmp.le.s32.totalorder 2, %s13
      // Predicated region
      $region33: #{tpu_custom_call.1} parent=5 // pred_check
        %p12545 = pneg %p12544
      $region34: #{tpu_custom_call.1} parent=5 // pred_check_branch
        %12547 = sbr.rel (%p12545) target = $region36
      $region35: #{tpu_custom_call.1} parent=5 // pred_region
        %s12548 = ssub.s32 %s13, 2
        // Predicated region
        $region37: #{tpu_custom_call.1} parent=35 // pred_check
          %p12549 = pneg %p84
        $region38: #{tpu_custom_call.1} parent=35 // pred_check_branch
          %12551 = sbr.rel (%p12549) target = $region40
        $region39: #{tpu_custom_call.1} parent=35 // pred_region
          %s12552 = sand.u32 %s69, 1
          %s12553 = scalar_lea.sflag [#allocation4], %s12552
          %s12554 = sand.u32 %s69, 1
          %s12555 = smul.addr %s12554, 128
          %s12556 = scalar_lea.vmem [#allocation5], %s12555
          %12557 = dma.done %s12553, 2048
        $region40: #{tpu_custom_call.1} parent=35 // pred_fallthru
          _
      $region36: #{tpu_custom_call.1} parent=5 // pred_fallthru
        _
    $region6: #{tpu_custom_call.1} parent=1 // loop_footer
      %s17 = sadd.s32 1, %s13
    $region7: #{tpu_custom_call.1} parent=1 // loop_footer_branch
      %12 = sbr.rel target = $region3
    $region8: #{tpu_custom_call.1} parent=1 // loop_exit
      _
    %12558 = vsyncpa [#allocation3], 1
    %s12559 = scalar_lea.sflag [#allocation3], 1
    %12560 = vsyncpa %s12559, 1
    %12561 = vsyncpa [#allocation4], 1
    %s12562 = scalar_lea.sflag [#allocation4], 1
    %12563 = vsyncpa %s12562, 1

</llo_original>
